<compile_context>
chip_gen: v5e
topology: v5e:2x2
jax: 0.10.0
libtpu: 0.0.40
codegen_flags: <defaults>
</compile_context>

<pallas_src>
import jax
import jax.numpy as jnp
from jax.experimental import pallas as pl
from jax.experimental.pallas import tpu as pltpu

INPUT_SIZE = 110592            # 3 * 192 * 192
HIDDEN_SIZE = 500
HIDDEN_PAD = 512               # padded to a multiple of 128 lanes
OUTPUT_SIZE = 6
TK = 12288                     # K tile: 110592 = 9 * 12288
NUM_H_BLOCKS = 2               # hidden split -> parallel axis (both TCs on v7x)
H_BLOCK = HIDDEN_PAD // NUM_H_BLOCKS   # 256


def mlp_kernel(x_ref, w1_ref, b1_ref, w2_ref, b2_ref, o_ref, acc_ref):
    """grid = (NUM_H_BLOCKS, K // TK).

    j (parallel)  : picks a 256-wide block of the padded hidden dim.
    k (arbitrary) : streams the K=110592 reduction in 12288-wide tiles.
    """
    j = pl.program_id(0)
    k = pl.program_id(1)

    @pl.when(k == 0)
    def _():
        acc_ref[...] = jnp.zeros_like(acc_ref)

    # (B, TK) @ (TK, H_BLOCK) -> (B, H_BLOCK), accumulated in f32 on the MXU.
    acc_ref[...] += jnp.dot(
        x_ref[k], w1_ref[...], preferred_element_type=jnp.float32
    )

    @pl.when(k == pl.num_programs(1) - 1)
    def _():
        h = jnp.maximum(acc_ref[...] + b1_ref[...], 0.0)          # bias1 + ReLU
        scores = jnp.dot(h, w2_ref[...], preferred_element_type=jnp.float32)
        # b2 is added only on hidden block 0 so the wrapper-side sum of the
        # per-block partial scores stays exact.
        bias2 = jnp.where(j == 0, b2_ref[...], 0.0)
        o_ref[0] = (scores + bias2).astype(o_ref.dtype)


def prepare_params(w1, b1, w2, b2):
    """One-time weight prep (run at init time, NOT per forward call).

    Stores W1 as (K, H_PAD) and W2 as (H_PAD, O). Padded hidden units carry
    zero W1 columns, zero b1 entries and zero W2^T rows, so ReLU(0)=0 and they
    contribute nothing to the output.
    """
    h, k = w1.shape
    o = w2.shape[0]
    assert (h, k, o) == (HIDDEN_SIZE, INPUT_SIZE, OUTPUT_SIZE)
    w1p = jnp.zeros((k, HIDDEN_PAD), w1.dtype).at[:, :h].set(w1.T)   # (K, 512)
    b1p = jnp.zeros((1, HIDDEN_PAD), b1.dtype).at[0, :h].set(b1)     # (1, 512)
    w2p = jnp.zeros((HIDDEN_PAD, o), w2.dtype).at[:h, :].set(w2.T)   # (512, 6)
    b2p = b2.reshape(1, o)                                           # (1, 6)
    return w1p, b1p, w2p, b2p


def mlp_baseline_forward(x, w1p, b1p, w2p, b2p, *, tk=TK):
    """x: any shape flattening to (B, 110592) (NCHW ok). Params from prepare_params."""
    x2d = x.reshape(-1, INPUT_SIZE)                 # == torch .view(-1, 110592)
    B, K = x2d.shape
    O = OUTPUT_SIZE
    assert K % tk == 0
    kt = K // tk

    # (KT, B, TK): x3[k] is the (B, TK) slab of K step k. Tiny (884 KB @ B=2),
    # kept fully VMEM-resident (constant index_map) so the kernel indexes it
    # instead of re-DMAing per step.
    x3 = jnp.transpose(x2d.reshape(B, kt, tk), (1, 0, 2))

    cost = pl.CostEstimate(
        flops=2 * B * K * HIDDEN_PAD + 2 * B * HIDDEN_PAD * O,
        transcendentals=0,
        bytes_accessed=(K * HIDDEN_PAD + B * K + HIDDEN_PAD * O
                        + HIDDEN_PAD + O + B * O) * 4,
    )

    partial = pl.pallas_call(
        mlp_kernel,
        out_shape=jax.ShapeDtypeStruct((NUM_H_BLOCKS, B, O), jnp.float32),
        grid_spec=pltpu.PrefetchScalarGridSpec(
            num_scalar_prefetch=0,
            grid=(NUM_H_BLOCKS, kt),
            in_specs=[
                pl.BlockSpec((kt, B, tk), lambda j, k: (0, 0, 0)),   # x (resident)
                pl.BlockSpec((tk, H_BLOCK), lambda j, k: (k, j)),    # W1^T tile
                pl.BlockSpec((1, H_BLOCK), lambda j, k: (0, j)),     # b1 block
                pl.BlockSpec((H_BLOCK, O), lambda j, k: (j, 0)),     # W2^T block
                pl.BlockSpec((1, O), lambda j, k: (0, 0)),           # b2
            ],
            out_specs=pl.BlockSpec((1, B, O), lambda j, k: (j, 0, 0)),
            scratch_shapes=[pltpu.VMEM((B, H_BLOCK), jnp.float32)],
        ),
        compiler_params=pltpu.CompilerParams(
            dimension_semantics=("parallel", "arbitrary"),
            vmem_limit_bytes=40 * 1024 * 1024,
        ),
        cost_estimate=cost,
    )(x3, w1p, b1p, w2p, b2p)

    # Sum the two hidden-block partial scores (b2 was added on block 0 only).
    return partial.sum(axis=0)


def init_params(key):
    """Deterministic nn.Linear-style init: U(-1/sqrt(fan_in), 1/sqrt(fan_in))."""
    k1, k2, k3, k4 = jax.random.split(key, 4)
    bound1 = 1.0 / jnp.sqrt(INPUT_SIZE)
    bound2 = 1.0 / jnp.sqrt(HIDDEN_SIZE)
    w1 = jax.random.uniform(k1, (HIDDEN_SIZE, INPUT_SIZE), jnp.float32,
                            -bound1, bound1)
    b1 = jax.random.uniform(k2, (HIDDEN_SIZE,), jnp.float32, -bound1, bound1)
    w2 = jax.random.uniform(k3, (OUTPUT_SIZE, HIDDEN_SIZE), jnp.float32,
                            -bound2, bound2)
    b2 = jax.random.uniform(k4, (OUTPUT_SIZE,), jnp.float32, -bound2, bound2)
    return w1, b1, w2, b2


if __name__ == "__main__":
    key = jax.random.PRNGKey(0)
    kx, kp = jax.random.split(key)

    # Small batch, NCHW image-like input that flattens to exactly 110592.
    x = jax.random.normal(kx, (2, 3, 192, 192), jnp.float32)
    w1, b1, w2, b2 = init_params(kp)

    # Weight prep happens ONCE here (init time), never inside the forward.
    w1p, b1p, w2p, b2p = jax.block_until_ready(prepare_params(w1, b1, w2, b2))

    out = mlp_baseline_forward(x, w1p, b1p, w2p, b2p)
    out = jax.block_until_ready(out)

    # Plain-JAX reference (same math as the PyTorch forward).
    x2d = x.reshape(-1, INPUT_SIZE)
    ref = jnp.maximum(x2d @ w1.T + b1, 0.0) @ w2.T + b2
    assert out.shape == (2, OUTPUT_SIZE)
    assert jnp.allclose(out, ref, atol=2e-3, rtol=2e-3), (
        float(jnp.max(jnp.abs(out - ref))))

    print("KERNEL_OK")
</pallas_src>

<mosaic_0001>
module attributes {stable_mosaic.version = 11 : i64} {
  func.func @mlp_kernel(%arg0: i32, %arg1: i32, %arg2: memref<9x2x12288xf32, #tpu.memory_space<vmem>>, %arg3: memref<12288x256xf32, #tpu.memory_space<vmem>>, %arg4: memref<1x256xf32, #tpu.memory_space<vmem>>, %arg5: memref<256x6xf32, #tpu.memory_space<vmem>>, %arg6: memref<1x6xf32, #tpu.memory_space<vmem>>, %arg7: memref<1x2x6xf32, #tpu.memory_space<vmem>>, %arg8: memref<2x256xf32, #tpu.memory_space<vmem>>) attributes {dimension_semantics = [#tpu.dimension_semantics<parallel>, #tpu.dimension_semantics<arbitrary>], iteration_bounds = array<i64: 2, 9>, scalar_prefetch = 0 : i64, scratch_operands = 1 : i64, tpu.core_type = #tpu.core_type<tc>, window_params = [{pipeline_mode = #tpu.pipeline_mode<synchronous>, transform_indices = @transform_0, window_bounds = array<i64: 9, 2, 12288>}, {transform_indices = @transform_1, window_bounds = array<i64: 12288, 256>}, {transform_indices = @transform_2, window_bounds = array<i64: 1, 256>}, {transform_indices = @transform_3, window_bounds = array<i64: 256, 6>}, {pipeline_mode = #tpu.pipeline_mode<synchronous>, transform_indices = @transform_4, window_bounds = array<i64: 1, 6>}, {transform_indices = @transform_5, window_bounds = array<i64: 1, 2, 6>}]} {
    %c0_i32 = arith.constant 0 : i32
    %0 = arith.cmpi eq, %arg1, %c0_i32 : i32
    %1 = arith.extui %0 : i1 to i32
    %c0_i32_0 = arith.constant 0 : i32
    %2 = arith.cmpi ne, %1, %c0_i32_0 : i32
    scf.if %2 {
      %cst_9 = arith.constant 0.000000e+00 : f32
      %14 = vector.broadcast %cst_9 : f32 to vector<2x256xf32>
      %c0_10 = arith.constant 0 : index
      %c0_11 = arith.constant 0 : index
      %15 = vector.load %arg8[%c0_10, %c0_11] : memref<2x256xf32, #tpu.memory_space<vmem>>, vector<2x256xf32>
      tpu.vector_store %arg8[%c0_10, %c0_11], %14 {strides = array<i32>} : memref<2x256xf32, #tpu.memory_space<vmem>>, vector<2x256xf32>,
    } else {
    }
    %c0 = arith.constant 0 : index
    %c0_1 = arith.constant 0 : index
    %3 = vector.load %arg8[%c0, %c0_1] : memref<2x256xf32, #tpu.memory_space<vmem>>, vector<2x256xf32>
    %4 = arith.index_cast %arg1 : i32 to index
    %c0_2 = arith.constant 0 : index
    %c0_3 = arith.constant 0 : index
    %5 = vector.load %arg2[%4, %c0_2, %c0_3] : memref<9x2x12288xf32, #tpu.memory_space<vmem>>, vector<1x2x12288xf32>
    %6 = vector.shape_cast %5 : vector<1x2x12288xf32> to vector<2x12288xf32>
    %c0_4 = arith.constant 0 : index
    %c0_5 = arith.constant 0 : index
    %7 = vector.load %arg3[%c0_4, %c0_5] : memref<12288x256xf32, #tpu.memory_space<vmem>>, vector<12288x256xf32>
    %cst = arith.constant dense<0.000000e+00> : vector<2x256xf32>
    %8 = tpu.matmul %6, %7, %cst {dimension_numbers = #tpu.dot_dimension_numbers<[1], [0], [0], [1], [0, 0, 1, 1], [], []>} : vector<2x12288xf32>, vector<12288x256xf32>, vector<2x256xf32> -> vector<2x256xf32>
    %9 = arith.addf %3, %8 : vector<2x256xf32>
    %c0_6 = arith.constant 0 : index
    %c0_7 = arith.constant 0 : index
    %10 = vector.load %arg8[%c0_6, %c0_7] : memref<2x256xf32, #tpu.memory_space<vmem>>, vector<2x256xf32>
    tpu.vector_store %arg8[%c0_6, %c0_7], %9 {strides = array<i32>} : memref<2x256xf32, #tpu.memory_space<vmem>>, vector<2x256xf32>,
    %c8_i32 = arith.constant 8 : i32
    %11 = arith.cmpi eq, %arg1, %c8_i32 : i32
    %12 = arith.extui %11 : i1 to i32
    %c0_i32_8 = arith.constant 0 : i32
    %13 = arith.cmpi ne, %12, %c0_i32_8 : i32
    scf.if %13 {
      %c0_9 = arith.constant 0 : index
      %c0_10 = arith.constant 0 : index
      %14 = vector.load %arg8[%c0_9, %c0_10] : memref<2x256xf32, #tpu.memory_space<vmem>>, vector<2x256xf32>
      %c0_11 = arith.constant 0 : index
      %c0_12 = arith.constant 0 : index
      %15 = vector.load %arg4[%c0_11, %c0_12] : memref<1x256xf32, #tpu.memory_space<vmem>>, vector<1x256xf32>
      %16 = vector.broadcast %15 : vector<1x256xf32> to vector<2x256xf32>
      %17 = arith.addf %14, %16 : vector<2x256xf32>
      %cst_13 = arith.constant 0.000000e+00 : f32
      %18 = vector.broadcast %cst_13 : f32 to vector<2x256xf32>
      %19 = arith.maximumf %17, %18 : vector<2x256xf32>
      %c0_14 = arith.constant 0 : index
      %c0_15 = arith.constant 0 : index
      %20 = vector.load %arg5[%c0_14, %c0_15] : memref<256x6xf32, #tpu.memory_space<vmem>>, vector<256x6xf32>
      %cst_16 = arith.constant dense<0.000000e+00> : vector<2x6xf32>
      %21 = tpu.matmul %19, %20, %cst_16 {dimension_numbers = #tpu.dot_dimension_numbers<[1], [0], [0], [1], [0, 0, 1, 1], [], []>} : vector<2x256xf32>, vector<256x6xf32>, vector<2x6xf32> -> vector<2x6xf32>
      %c0_i32_17 = arith.constant 0 : i32
      %22 = arith.cmpi eq, %arg0, %c0_i32_17 : i32
      %c0_18 = arith.constant 0 : index
      %c0_19 = arith.constant 0 : index
      %23 = vector.load %arg6[%c0_18, %c0_19] : memref<1x6xf32, #tpu.memory_space<vmem>>, vector<1x6xf32>
      %cst_20 = arith.constant 0.000000e+00 : f32
      %24 = vector.broadcast %cst_20 : f32 to vector<1x6xf32>
      %25 = arith.select %22, %23, %24 : vector<1x6xf32>
      %26 = vector.broadcast %25 : vector<1x6xf32> to vector<2x6xf32>
      %27 = arith.addf %21, %26 : vector<2x6xf32>
      %c0_21 = arith.constant 0 : index
      %c0_22 = arith.constant 0 : index
      %c0_23 = arith.constant 0 : index
      %28 = vector.load %arg7[%c0_21, %c0_22, %c0_23] : memref<1x2x6xf32, #tpu.memory_space<vmem>>, vector<1x2x6xf32>
      %29 = vector.shape_cast %28 : vector<1x2x6xf32> to vector<2x6xf32>
      %30 = vector.shape_cast %27 : vector<2x6xf32> to vector<1x2x6xf32>
      tpu.vector_store %arg7[%c0_21, %c0_22, %c0_23], %30 {strides = array<i32>} : memref<1x2x6xf32, #tpu.memory_space<vmem>>, vector<1x2x6xf32>,
    } else {
    }
    return
  }
  func.func @transform_0(%arg0: i32, %arg1: i32) -> (i32, i32, i32) {
    %c0_i32 = arith.constant 0 : i32
    %c0_i32_0 = arith.constant 0 : i32
    %c0_i32_1 = arith.constant 0 : i32
    %c0_i32_2 = arith.constant 0 : i32
    return %c0_i32, %c0_i32_0, %c0_i32_1 : i32, i32, i32
  }
  func.func @transform_1(%arg0: i32, %arg1: i32) -> (i32, i32) {
    %c0_i32 = arith.constant 0 : i32
    return %arg1, %arg0 : i32, i32
  }
  func.func @transform_2(%arg0: i32, %arg1: i32) -> (i32, i32) {
    %c0_i32 = arith.constant 0 : i32
    %c0_i32_0 = arith.constant 0 : i32
    return %c0_i32, %arg0 : i32, i32
  }
  func.func @transform_3(%arg0: i32, %arg1: i32) -> (i32, i32) {
    %c0_i32 = arith.constant 0 : i32
    %c0_i32_0 = arith.constant 0 : i32
    return %arg0, %c0_i32 : i32, i32
  }
  func.func @transform_4(%arg0: i32, %arg1: i32) -> (i32, i32) {
    %c0_i32 = arith.constant 0 : i32
    %c0_i32_0 = arith.constant 0 : i32
    %c0_i32_1 = arith.constant 0 : i32
    return %c0_i32, %c0_i32_0 : i32, i32
  }
  func.func @transform_5(%arg0: i32, %arg1: i32) -> (i32, i32, i32) {
    %c0_i32 = arith.constant 0 : i32
    %c0_i32_0 = arith.constant 0 : i32
    %c0_i32_1 = arith.constant 0 : i32
    return %arg0, %c0_i32, %c0_i32_0 : i32, i32, i32
  }
}

</mosaic_0001>

<llo_original>
// kernel: tpu_custom_call.1
$region0: #{tpu_custom_call.1}
  #allocation0 [shape = 'u32[]', space=smem, size = 0x4, offset = 0x4, fixed_abs, tag = 'smem constant byte address 0x4 - core index']
  #allocation1 [shape = 'u32[72,128]{1,0:T(1,128)}', space=vmem, size = 0x9000, scoped, tag = 'internal scratch']
  #allocation2 [shape = 'f32[2,256]{1,0:T(2,128)}', space=vmem, size = 0x800, scoped, tag = 'scratch operand']
  %s0 = inlined_call_operand.hbm [shape: f32[9,2,12288], index: 0, kind: input, shape index: {}]
  %s1 = inlined_call_operand.hbm [shape: f32[110592,512], index: 1, kind: input, shape index: {}]
  %s2 = inlined_call_operand.hbm [shape: f32[1,512], index: 2, kind: input, shape index: {}]
  %s3 = inlined_call_operand.vmem [shape: f32[512,6], index: 3, kind: input, shape index: {}]
  %s4 = inlined_call_operand.hbm [shape: f32[1,6], index: 4, kind: input, shape index: {}]
  %s5 = inlined_call_operand.hbm [shape: f32[2,2,6], index: 5, kind: output, shape index: {}]
  %s6 = sld [smem:[#allocation0]]
  $region77: #{tpu_custom_call.1} parent=0
    _
  %s8 = ssub.s32 1, %s6
  %s9 = scalar_select 0, %s8, %s6
  $region1: #{tpu_custom_call.1} parent=0
    #allocation3 [shape = 'u8[884736]{0}', space=vmem, size = 0xd8000, scoped, tag = 'input window, operand 0, single buffered']
    #allocation4 [shape = 's32[2]{0}', space=sflag, size = 0x8, scoped, tag = 'scoped memory for tpu_custom_call.1']
    #allocation5 [shape = 's32[2]{0}', space=sflag, size = 0x8, scoped, tag = 'scoped memory for tpu_custom_call.1']
    #allocation6 [shape = 'u8[25165824]{0}', space=vmem, size = 0x1800000, scoped, tag = 'input window, operand 1']
    #allocation7 [shape = 's32[2]{0}', space=sflag, size = 0x8, scoped, tag = 'scoped memory for tpu_custom_call.1']
    #allocation8 [shape = 'u8[2048]{0}', space=vmem, size = 0x800, scoped, tag = 'input window, operand 2']
    #allocation9 [shape = 'u8[512]{0}', space=vmem, size = 0x400, scoped, tag = 'input window, operand 4, single buffered']
    #allocation10 [shape = 's32[1]{0}', space=sflag, size = 0x4, scoped, tag = 'scoped memory for tpu_custom_call.1']
    #allocation11 [shape = 'u8[2048]{0}', space=vmem, size = 0x800, scoped, tag = 'output window, operand 0']
    %10 = vsyncpa [#allocation4], 0
    %11 = vsyncpa [#allocation7], 0
    %s12 = scalar_lea.sflag [#allocation7], 1
    %13 = vsyncpa %s12, 0
    %14 = vsyncpa [#allocation10], 0
    %15 = vsyncpa [#allocation5], 0
    %s16 = scalar_lea.sflag [#allocation5], 1
    %17 = vsyncpa %s16, 0
    loop: start=0, step=1, limit=20
    $region2: #{tpu_custom_call.1} parent=1 // loop_pre_header
      _
    $region3: #{tpu_custom_call.1} parent=1 // loop_header
      %s19 = sphi 0, %s23
      %p20 = scmp.ge.s32.totalorder %s19, 20
      %s26 = sphi 0, %s38
      %s27 = sphi 0, %s34
      %s28 = sphi 0, %s26
      %s29 = sphi 0, %s27
      %s30 = sphi 0, %s28
      %s31 = sphi 0, %s29
      %s39 = sphi 0, %s39
      %s41 = sphi 0, %s39
      %s42 = sphi 0, %s41
      %s56 = sphi 0, %s42
      %s64 = sphi 0, %s66
      %s67 = sphi 0, %s64
      %s68 = sphi 0, %s67
      %s84 = sphi 0, %s68
      %s90 = sphi 0, %s92
      %s93 = sphi 0, %s90
      %s94 = sphi 0, %s93
      %s110 = sphi 0, %s94
      %s116 = sphi 0, %s118
      %s119 = sphi 0, %s116
      %s120 = sphi 0, %s119
      %s136 = sphi 0, %s120
      %s140 = sphi 0, %s140
      %s142 = sphi 0, %s140
      %s143 = sphi 0, %s142
      %s157 = sphi 0, %s143
      %s163 = sphi 0, %s165
      %s166 = sphi 0, %s163
      %s167 = sphi 0, %s166
      %s183 = sphi 0, %s167
    $region4: #{tpu_custom_call.1} parent=1 // loop_header_branch
      %22 = sbr.rel (%p20) target = $region8
    $region5: #{tpu_custom_call.1} parent=1 // loop_body
      %s24 = ssub.s32 %s19, 1
      %s25 = ssub.s32 %s19, 2
      %s32 = sadd.s32 1, %s27
      %p33 = scmp.ge.s32.totalorder %s32, 9
      %s34 = scalar_select %p33, 0, %s32
      %s35 = sadd.s32 1, %s26
      %s36 = scalar_select %p33, %s35, %s26
      %p37 = scmp.ge.s32.totalorder %s36, 2
      %s38 = scalar_select %p37, 0, %s36
      %s40 = sadd.s32 %s39, 1
      %p43 = scmp.eq.s32.totalorder %s19, 17
      %p44 = scmp.ne.s32.totalorder %s39, %s41
      %p45 = scmp.eq.s32.totalorder %s19, 0
      %p46 = por %p44, %p45
      %p47 = scmp.ne.s32.totalorder %s39, %s41
      %p48 = scmp.eq.s32.totalorder %s24, 17
      %p49 = por %p47, %p48
      %p50 = scmp.ne.s32.totalorder %s41, %s42
      %p51 = scmp.eq.s32.totalorder %s24, 0
      %p52 = por %p50, %p51
      %p53 = scmp.ne.s32.totalorder %s41, %s42
      %p54 = scmp.eq.s32.totalorder %s25, 17
      %p55 = por %p53, %p54
      %p57 = scmp.ne.s32.totalorder %s42, %s56
      %p58 = scmp.eq.s32.totalorder %s25, 0
      %p59 = por %p57, %p58
      %s60 = ssub.s32 %s27, %s34
      %s61 = ssub.s32 %s26, %s38
      %s62 = sor.u32 %s60, %s61
      %p63 = scmp.eq.s32.totalorder %s62, 0
      %s65 = sadd.s32 %s64, 1
      %s66 = scalar_select %p63, %s64, %s65
      %p69 = pneg %p63
      %p70 = scmp.eq.s32.totalorder %s19, 17
      %p71 = por %p69, %p70
      %p72 = scmp.ne.s32.totalorder %s64, %s67
      %p73 = scmp.eq.s32.totalorder %s19, 0
      %p74 = por %p72, %p73
      %p75 = scmp.ne.s32.totalorder %s64, %s67
      %p76 = scmp.eq.s32.totalorder %s24, 17
      %p77 = por %p75, %p76
      %p78 = scmp.ne.s32.totalorder %s67, %s68
      %p79 = scmp.eq.s32.totalorder %s24, 0
      %p80 = por %p78, %p79
      %p81 = scmp.ne.s32.totalorder %s67, %s68
      %p82 = scmp.eq.s32.totalorder %s25, 17
      %p83 = por %p81, %p82
      %p85 = scmp.ne.s32.totalorder %s68, %s84
      %p86 = scmp.eq.s32.totalorder %s25, 0
      %p87 = por %p85, %p86
      %s88 = ssub.s32 %s26, %s38
      %p89 = scmp.eq.s32.totalorder %s88, 0
      %s91 = sadd.s32 %s90, 1
      %s92 = scalar_select %p89, %s90, %s91
      %p95 = pneg %p89
      %p96 = scmp.eq.s32.totalorder %s19, 17
      %p97 = por %p95, %p96
      %p98 = scmp.ne.s32.totalorder %s90, %s93
      %p99 = scmp.eq.s32.totalorder %s19, 0
      %p100 = por %p98, %p99
      %p101 = scmp.ne.s32.totalorder %s90, %s93
      %p102 = scmp.eq.s32.totalorder %s24, 17
      %p103 = por %p101, %p102
      %p104 = scmp.ne.s32.totalorder %s93, %s94
      %p105 = scmp.eq.s32.totalorder %s24, 0
      %p106 = por %p104, %p105
      %p107 = scmp.ne.s32.totalorder %s93, %s94
      %p108 = scmp.eq.s32.totalorder %s25, 17
      %p109 = por %p107, %p108
      %p111 = scmp.ne.s32.totalorder %s94, %s110
      %p112 = scmp.eq.s32.totalorder %s25, 0
      %p113 = por %p111, %p112
      %s114 = ssub.s32 %s26, %s38
      %p115 = scmp.eq.s32.totalorder %s114, 0
      %s117 = sadd.s32 %s116, 1
      %s118 = scalar_select %p115, %s116, %s117
      %p121 = pneg %p115
      %p122 = scmp.eq.s32.totalorder %s19, 17
      %p123 = por %p121, %p122
      %p124 = scmp.ne.s32.totalorder %s116, %s119
      %p125 = scmp.eq.s32.totalorder %s19, 0
      %p126 = por %p124, %p125
      %p127 = scmp.ne.s32.totalorder %s116, %s119
      %p128 = scmp.eq.s32.totalorder %s24, 17
      %p129 = por %p127, %p128
      %p130 = scmp.ne.s32.totalorder %s119, %s120
      %p131 = scmp.eq.s32.totalorder %s24, 0
      %p132 = por %p130, %p131
      %p133 = scmp.ne.s32.totalorder %s119, %s120
      %p134 = scmp.eq.s32.totalorder %s25, 17
      %p135 = por %p133, %p134
      %p137 = scmp.ne.s32.totalorder %s120, %s136
      %p138 = scmp.eq.s32.totalorder %s25, 0
      %p139 = por %p137, %p138
      %s141 = sadd.s32 %s140, 1
      %p144 = scmp.eq.s32.totalorder %s19, 17
      %p145 = scmp.ne.s32.totalorder %s140, %s142
      %p146 = scmp.eq.s32.totalorder %s19, 0
      %p147 = por %p145, %p146
      %p148 = scmp.ne.s32.totalorder %s140, %s142
      %p149 = scmp.eq.s32.totalorder %s24, 17
      %p150 = por %p148, %p149
      %p151 = scmp.ne.s32.totalorder %s142, %s143
      %p152 = scmp.eq.s32.totalorder %s24, 0
      %p153 = por %p151, %p152
      %p154 = scmp.ne.s32.totalorder %s142, %s143
      %p155 = scmp.eq.s32.totalorder %s25, 17
      %p156 = por %p154, %p155
      %p158 = scmp.ne.s32.totalorder %s143, %s157
      %p159 = scmp.eq.s32.totalorder %s25, 0
      %p160 = por %p158, %p159
      %s161 = ssub.s32 %s26, %s38
      %p162 = scmp.eq.s32.totalorder %s161, 0
      %s164 = sadd.s32 %s163, 1
      %s165 = scalar_select %p162, %s163, %s164
      %p168 = pneg %p162
      %p169 = scmp.eq.s32.totalorder %s19, 17
      %p170 = por %p168, %p169
      %p171 = scmp.ne.s32.totalorder %s163, %s166
      %p172 = scmp.eq.s32.totalorder %s19, 0
      %p173 = por %p171, %p172
      %p174 = scmp.ne.s32.totalorder %s163, %s166
      %p175 = scmp.eq.s32.totalorder %s24, 17
      %p176 = por %p174, %p175
      %p177 = scmp.ne.s32.totalorder %s166, %s167
      %p178 = scmp.eq.s32.totalorder %s24, 0
      %p179 = por %p177, %p178
      %p180 = scmp.ne.s32.totalorder %s166, %s167
      %p181 = scmp.eq.s32.totalorder %s25, 17
      %p182 = por %p180, %p181
      %p184 = scmp.ne.s32.totalorder %s167, %s183
      %p185 = scmp.eq.s32.totalorder %s25, 0
      %p186 = por %p184, %p185
      %p187 = scmp.le.s32.totalorder 1, %s19
      %p188 = scmp.lt.s32.totalorder %s19, 19
      %p189 = pnand %p187, %p188
      %p190 = pneg %p189
      // Predicated region
      $region9: #{tpu_custom_call.1} parent=5 // pred_check
        _
      $region10: #{tpu_custom_call.1} parent=5 // pred_check_branch
        %192 = sbr.rel (%p189) target = $region12
      $region11: #{tpu_custom_call.1} parent=5 // pred_region
        %s193 = ssub.s32 %s19, 1
        // Predicated region
        $region13: #{tpu_custom_call.1} parent=11 // pred_check
          %p194 = pneg %p52
        $region14: #{tpu_custom_call.1} parent=11 // pred_check_branch
          %196 = sbr.rel (%p194) target = $region16
        $region15: #{tpu_custom_call.1} parent=11 // pred_region
          %198 = vsyncadd [#allocation4], 0
          %s199 = sshll.u32 %s0, 4
          %s200 = int_to_ptr.hbm [resolvable:$true] %s199
          %s201 = sshll.u32 [#allocation3], 4
          %s202 = int_to_ptr.vmem [resolvable:$true] %s201
          %207 = dma.hbm_to_vmem [thread:$0]  %s200, 27648, %s202, [#allocation4], 3072, 3072, 192
        $region16: #{tpu_custom_call.1} parent=11 // pred_fallthru
          _
        // Predicated region
        $region17: #{tpu_custom_call.1} parent=11 // pred_check
          %p208 = pneg %p153
        $region18: #{tpu_custom_call.1} parent=11 // pred_check_branch
          %210 = sbr.rel (%p208) target = $region20
        $region19: #{tpu_custom_call.1} parent=11 // pred_region
          %212 = vsyncadd [#allocation10], 0
          %s214 = sshll.u32 %s4, 4
          %s215 = int_to_ptr.hbm [resolvable:$true] %s214
          %s216 = sshll.u32 [#allocation9], 4
          %s217 = int_to_ptr.vmem [resolvable:$true] %s216
          %219 = dma.hbm_to_vmem [thread:$0]  %s215, 16, %s217, [#allocation10]
        $region20: #{tpu_custom_call.1} parent=11 // pred_fallthru
          _
      $region12: #{tpu_custom_call.1} parent=5 // pred_fallthru
        _
      %p220 = scmp.lt.s32.totalorder %s19, 18
      // Predicated region
      $region21: #{tpu_custom_call.1} parent=5 // pred_check
        %p221 = pneg %p220
      $region22: #{tpu_custom_call.1} parent=5 // pred_check_branch
        %223 = sbr.rel (%p221) target = $region24
      $region23: #{tpu_custom_call.1} parent=5 // pred_region
        // Predicated region
        $region25: #{tpu_custom_call.1} parent=23 // pred_check
          %p224 = pneg %p74
        $region26: #{tpu_custom_call.1} parent=23 // pred_check_branch
          %226 = sbr.rel (%p224) target = $region28
        $region27: #{tpu_custom_call.1} parent=23 // pred_region
          %s227 = sand.u32 %s19, 1
          %s228 = scalar_lea.sflag [#allocation7], %s227
          %s229 = sand.u32 %s64, 1
          %s230 = smul.addr %s229, 24576
          %s231 = scalar_lea.vmem [#allocation6], %s230
          %s232 = smul.u32 1536, %s27
          %s233 = smul.u32 2, %s26
          %235 = vsyncadd %s228, 0
          %s236 = smul.addr %s232, 4
          %s237 = sadd.s32 %s233, %s236
          %s238 = smul.addr %s237, 8
          %s239 = scalar_lea.hbm %s1, %s238
          %s240 = sshll.u32 %s239, 4
          %s241 = int_to_ptr.hbm [resolvable:$true] %s240
          %s242 = sshll.u32 %s231, 4
          %s243 = int_to_ptr.vmem [resolvable:$true] %s242
          %248 = dma.hbm_to_vmem [thread:$0]  %s241, 393216, %s243, %s228, 512, 256, 16
        $region28: #{tpu_custom_call.1} parent=23 // pred_fallthru
          _
        // Predicated region
        $region29: #{tpu_custom_call.1} parent=23 // pred_check
          %p249 = pneg %p100
        $region30: #{tpu_custom_call.1} parent=23 // pred_check_branch
          %251 = sbr.rel (%p249) target = $region32
        $region31: #{tpu_custom_call.1} parent=23 // pred_region
          %s252 = sand.u32 %s19, 1
          %s253 = scalar_lea.sflag [#allocation7], %s252
          %s254 = sand.u32 %s90, 1
          %s255 = smul.addr %s254, 2
          %s256 = scalar_lea.vmem [#allocation8], %s255
          %s257 = smul.u32 2, %s26
          %259 = vsyncadd %s253, 0
          %s260 = scalar_lea.hbm %s2, %s257
          %s262 = sshll.u32 %s260, 4
          %s263 = int_to_ptr.hbm [resolvable:$true] %s262
          %s264 = sshll.u32 %s256, 4
          %s265 = int_to_ptr.vmem [resolvable:$true] %s264
          %267 = dma.hbm_to_vmem [thread:$0]  %s263, 32, %s265, %s253
        $region32: #{tpu_custom_call.1} parent=23 // pred_fallthru
          _
        // Predicated region
        $region33: #{tpu_custom_call.1} parent=23 // pred_check
          %p268 = pneg %p126
        $region34: #{tpu_custom_call.1} parent=23 // pred_check_branch
          %270 = sbr.rel (%p268) target = $region36
        $region35: #{tpu_custom_call.1} parent=23 // pred_region
          %s271 = smul.u32 32, %s26
          %p272 = scmp.lt.s32.totalorder %s271, 63
          %s273 = scalar_select %p272, %s271, 63
          %s274 = smul.addr %s273, 8
          %s275 = scalar_lea.vmem %s3, %s274
          %s276 = smul.u32 32, %s26
        $region36: #{tpu_custom_call.1} parent=23 // pred_fallthru
          _
      $region24: #{tpu_custom_call.1} parent=5 // pred_fallthru
        _
      %p277 = scmp.le.s32.totalorder 1, %s19
      %p278 = scmp.lt.s32.totalorder %s19, 19
      %p279 = pnand %p277, %p278
      %p280 = pneg %p279
      // Predicated region
      $region37: #{tpu_custom_call.1} parent=5 // pred_check
        _
      $region38: #{tpu_custom_call.1} parent=5 // pred_check_branch
        %282 = sbr.rel (%p279) target = $region40
      $region39: #{tpu_custom_call.1} parent=5 // pred_region
        %s283 = ssub.s32 %s19, 1
        // Predicated region
        $region41: #{tpu_custom_call.1} parent=39 // pred_check
          %p284 = pneg %p52
        $region42: #{tpu_custom_call.1} parent=39 // pred_check_branch
          %286 = sbr.rel (%p284) target = $region44
        $region43: #{tpu_custom_call.1} parent=39 // pred_region
          %288 = dma.done [#allocation4], 27648
        $region44: #{tpu_custom_call.1} parent=39 // pred_fallthru
          _
        %s289 = sand.u32 %s24, 1
        %s290 = scalar_lea.sflag [#allocation7], %s289
        %s291 = sand.u32 %s67, 1
        %s292 = smul.addr %s291, 24576
        %s293 = scalar_lea.vmem [#allocation6], %s292
        // Predicated region
        $region45: #{tpu_custom_call.1} parent=39 // pred_check
          %p294 = pneg %p80
        $region46: #{tpu_custom_call.1} parent=39 // pred_check_branch
          %296 = sbr.rel (%p294) target = $region48
        $region47: #{tpu_custom_call.1} parent=39 // pred_region
          %298 = dma.done %s290, 393216
        $region48: #{tpu_custom_call.1} parent=39 // pred_fallthru
          _
        %s299 = sand.u32 %s24, 1
        %s300 = scalar_lea.sflag [#allocation7], %s299
        %s301 = sand.u32 %s93, 1
        %s302 = smul.addr %s301, 2
        %s303 = scalar_lea.vmem [#allocation8], %s302
        // Predicated region
        $region49: #{tpu_custom_call.1} parent=39 // pred_check
          %p304 = pneg %p106
        $region50: #{tpu_custom_call.1} parent=39 // pred_check_branch
          %306 = sbr.rel (%p304) target = $region52
        $region51: #{tpu_custom_call.1} parent=39 // pred_region
          %308 = dma.done %s300, 32
        $region52: #{tpu_custom_call.1} parent=39 // pred_fallthru
          _
        // Predicated region
        $region53: #{tpu_custom_call.1} parent=39 // pred_check
          %p309 = pneg %p153
        $region54: #{tpu_custom_call.1} parent=39 // pred_check_branch
          %311 = sbr.rel (%p309) target = $region56
        $region55: #{tpu_custom_call.1} parent=39 // pred_region
          %313 = dma.done [#allocation10], 16
        $region56: #{tpu_custom_call.1} parent=39 // pred_fallthru
          _
        %p314 = pneg %p52
        %p315 = pneg %p49
        %s316 = sand.u32 %s24, 1
        %s317 = scalar_lea.sflag [#allocation7], %s316
        %s318 = sand.u32 %s67, 1
        %s319 = smul.addr %s318, 24576
        %s320 = scalar_lea.vmem [#allocation6], %s319
        %p321 = pneg %p80
        %p322 = pneg %p77
        %s323 = sand.u32 %s24, 1
        %s324 = scalar_lea.sflag [#allocation7], %s323
        %s325 = sand.u32 %s93, 1
        %s326 = smul.addr %s325, 2
        %s327 = scalar_lea.vmem [#allocation8], %s326
        %p328 = pneg %p106
        %p329 = pneg %p103
        %s330 = smul.u32 32, %s28
        %p331 = scmp.lt.s32.totalorder %s330, 63
        %s332 = scalar_select %p331, %s330, 63
        %s333 = smul.addr %s332, 8
        %s334 = scalar_lea.vmem %s3, %s333
        %p335 = pneg %p132
        %p336 = pneg %p129
        %p337 = pneg %p153
        %p338 = pneg %p150
        %p339 = pneg %p179
        %p340 = pneg %p176
        %s341 = sand.u32 %s166, 1
        %s342 = scalar_lea.sflag [#allocation5], %s341
        %s343 = sand.u32 %s166, 1
        %s344 = smul.addr %s343, 2
        %s345 = scalar_lea.vmem [#allocation11], %s344
        %s346 = smul.u32 1536, %s29
        %s347 = smul.u32 2, %s28
        %s348 = smul.u32 2, %s28
        %s349 = smul.u32 32, %s28
        %p350 = scmp.lt.s32.totalorder %s349, 63
        %s351 = scalar_select %p350, %s349, 63
        %s352 = smul.addr %s351, 8
        %s353 = scalar_lea.vmem %s3, %s352
        %s354 = smul.u32 32, %s28
        %p355 = scmp.eq.s32.totalorder %s29, 0
        // Predicated region
        $region57: #{tpu_custom_call.1} parent=39 // pred_check
          %p356 = pneg %p355
        $region58: #{tpu_custom_call.1} parent=39 // pred_check_branch
          %358 = sbr.rel (%p356) target = $region60
        $region59: #{tpu_custom_call.1} parent=39 // pred_region
          %359 = vst [vmem:[#allocation2] sm:$0xf] 0.0
        $region60: #{tpu_custom_call.1} parent=39 // pred_fallthru
          _
        %v360 = vld [vmem:[#allocation2] sm:$0xf]
        %s361 = smul.u32 %s29, 96
        %s362 = smul.addr %s361, 2
        %s363 = scalar_lea.vmem [#allocation3], %s362
        %v364 = vld [vmem:[%s363] sm:$0xff]
        %v365 = vld [vmem:[%s363 + $0x8] sm:$0xff]
        %v366 = vld [vmem:[%s363 + $0x10] sm:$0xff]
        %v367 = vld [vmem:[%s363 + $0x18] sm:$0xff]
        %v368 = vld [vmem:[%s363 + $0x20] sm:$0xff]
        %v369 = vld [vmem:[%s363 + $0x28] sm:$0xff]
        %v370 = vld [vmem:[%s363 + $0x30] sm:$0xff]
        %v371 = vld [vmem:[%s363 + $0x38] sm:$0xff]
        %v372 = vld [vmem:[%s363 + $0x40] sm:$0xff]
        %v373 = vld [vmem:[%s363 + $0x48] sm:$0xff]
        %v374 = vld [vmem:[%s363 + $0x50] sm:$0xff]
        %v375 = vld [vmem:[%s363 + $0x58] sm:$0xff]
        %v376 = vld [vmem:[%s363 + $0x60] sm:$0xff]
        %v377 = vld [vmem:[%s363 + $0x68] sm:$0xff]
        %v378 = vld [vmem:[%s363 + $0x70] sm:$0xff]
        %v379 = vld [vmem:[%s363 + $0x78] sm:$0xff]
        %v380 = vld [vmem:[%s363 + $0x80] sm:$0xff]
        %v381 = vld [vmem:[%s363 + $0x88] sm:$0xff]
        %v382 = vld [vmem:[%s363 + $0x90] sm:$0xff]
        %v383 = vld [vmem:[%s363 + $0x98] sm:$0xff]
        %v384 = vld [vmem:[%s363 + $0xa0] sm:$0xff]
        %v385 = vld [vmem:[%s363 + $0xa8] sm:$0xff]
        %v386 = vld [vmem:[%s363 + $0xb0] sm:$0xff]
        %v387 = vld [vmem:[%s363 + $0xb8] sm:$0xff]
        %v388 = vld [vmem:[%s293] sm:$0xff]
        %v389 = vld [vmem:[%s293 + $0x8] sm:$0xff]
        %v390 = vld [vmem:[%s293 + $0x10] sm:$0xff]
        %v391 = vld [vmem:[%s293 + $0x18] sm:$0xff]
        %v392 = vld [vmem:[%s293 + $0x20] sm:$0xff]
        %v393 = vld [vmem:[%s293 + $0x28] sm:$0xff]
        %v394 = vld [vmem:[%s293 + $0x30] sm:$0xff]
        %v395 = vld [vmem:[%s293 + $0x38] sm:$0xff]
        %v396 = vld [vmem:[%s293 + $0x40] sm:$0xff]
        %v397 = vld [vmem:[%s293 + $0x48] sm:$0xff]
        %v398 = vld [vmem:[%s293 + $0x50] sm:$0xff]
        %v399 = vld [vmem:[%s293 + $0x58] sm:$0xff]
        %v400 = vld [vmem:[%s293 + $0x60] sm:$0xff]
        %v401 = vld [vmem:[%s293 + $0x68] sm:$0xff]
        %v402 = vld [vmem:[%s293 + $0x70] sm:$0xff]
        %v403 = vld [vmem:[%s293 + $0x78] sm:$0xff]
        %v404 = vld [vmem:[%s293 + $0x80] sm:$0xff]
        %v405 = vld [vmem:[%s293 + $0x88] sm:$0xff]
        %v406 = vld [vmem:[%s293 + $0x90] sm:$0xff]
        %v407 = vld [vmem:[%s293 + $0x98] sm:$0xff]
        %v408 = vld [vmem:[%s293 + $0xa0] sm:$0xff]
        %v409 = vld [vmem:[%s293 + $0xa8] sm:$0xff]
        %v410 = vld [vmem:[%s293 + $0xb0] sm:$0xff]
        %v411 = vld [vmem:[%s293 + $0xb8] sm:$0xff]
        %v412 = vld [vmem:[%s293 + $0xc0] sm:$0xff]
        %v413 = vld [vmem:[%s293 + $0xc8] sm:$0xff]
        %v414 = vld [vmem:[%s293 + $0xd0] sm:$0xff]
        %v415 = vld [vmem:[%s293 + $0xd8] sm:$0xff]
        %v416 = vld [vmem:[%s293 + $0xe0] sm:$0xff]
        %v417 = vld [vmem:[%s293 + $0xe8] sm:$0xff]
        %v418 = vld [vmem:[%s293 + $0xf0] sm:$0xff]
        %v419 = vld [vmem:[%s293 + $0xf8] sm:$0xff]
        %v420 = vld [vmem:[%s293 + $0x100] sm:$0xff]
        %v421 = vld [vmem:[%s293 + $0x108] sm:$0xff]
        %v422 = vld [vmem:[%s293 + $0x110] sm:$0xff]
        %v423 = vld [vmem:[%s293 + $0x118] sm:$0xff]
        %v424 = vld [vmem:[%s293 + $0x120] sm:$0xff]
        %v425 = vld [vmem:[%s293 + $0x128] sm:$0xff]
        %v426 = vld [vmem:[%s293 + $0x130] sm:$0xff]
        %v427 = vld [vmem:[%s293 + $0x138] sm:$0xff]
        %v428 = vld [vmem:[%s293 + $0x140] sm:$0xff]
        %v429 = vld [vmem:[%s293 + $0x148] sm:$0xff]
        %v430 = vld [vmem:[%s293 + $0x150] sm:$0xff]
        %v431 = vld [vmem:[%s293 + $0x158] sm:$0xff]
        %v432 = vld [vmem:[%s293 + $0x160] sm:$0xff]
        %v433 = vld [vmem:[%s293 + $0x168] sm:$0xff]
        %v434 = vld [vmem:[%s293 + $0x170] sm:$0xff]
        %v435 = vld [vmem:[%s293 + $0x178] sm:$0xff]
        %v436 = vld [vmem:[%s293 + $0x180] sm:$0xff]
        %v437 = vld [vmem:[%s293 + $0x188] sm:$0xff]
        %v438 = vld [vmem:[%s293 + $0x190] sm:$0xff]
        %v439 = vld [vmem:[%s293 + $0x198] sm:$0xff]
        %v440 = vld [vmem:[%s293 + $0x1a0] sm:$0xff]
        %v441 = vld [vmem:[%s293 + $0x1a8] sm:$0xff]
        %v442 = vld [vmem:[%s293 + $0x1b0] sm:$0xff]
        %v443 = vld [vmem:[%s293 + $0x1b8] sm:$0xff]
        %v444 = vld [vmem:[%s293 + $0x1c0] sm:$0xff]
        %v445 = vld [vmem:[%s293 + $0x1c8] sm:$0xff]
        %v446 = vld [vmem:[%s293 + $0x1d0] sm:$0xff]
        %v447 = vld [vmem:[%s293 + $0x1d8] sm:$0xff]
        %v448 = vld [vmem:[%s293 + $0x1e0] sm:$0xff]
        %v449 = vld [vmem:[%s293 + $0x1e8] sm:$0xff]
        %v450 = vld [vmem:[%s293 + $0x1f0] sm:$0xff]
        %v451 = vld [vmem:[%s293 + $0x1f8] sm:$0xff]
        %v452 = vld [vmem:[%s293 + $0x200] sm:$0xff]
        %v453 = vld [vmem:[%s293 + $0x208] sm:$0xff]
        %v454 = vld [vmem:[%s293 + $0x210] sm:$0xff]
        %v455 = vld [vmem:[%s293 + $0x218] sm:$0xff]
        %v456 = vld [vmem:[%s293 + $0x220] sm:$0xff]
        %v457 = vld [vmem:[%s293 + $0x228] sm:$0xff]
        %v458 = vld [vmem:[%s293 + $0x230] sm:$0xff]
        %v459 = vld [vmem:[%s293 + $0x238] sm:$0xff]
        %v460 = vld [vmem:[%s293 + $0x240] sm:$0xff]
        %v461 = vld [vmem:[%s293 + $0x248] sm:$0xff]
        %v462 = vld [vmem:[%s293 + $0x250] sm:$0xff]
        %v463 = vld [vmem:[%s293 + $0x258] sm:$0xff]
        %v464 = vld [vmem:[%s293 + $0x260] sm:$0xff]
        %v465 = vld [vmem:[%s293 + $0x268] sm:$0xff]
        %v466 = vld [vmem:[%s293 + $0x270] sm:$0xff]
        %v467 = vld [vmem:[%s293 + $0x278] sm:$0xff]
        %v468 = vld [vmem:[%s293 + $0x280] sm:$0xff]
        %v469 = vld [vmem:[%s293 + $0x288] sm:$0xff]
        %v470 = vld [vmem:[%s293 + $0x290] sm:$0xff]
        %v471 = vld [vmem:[%s293 + $0x298] sm:$0xff]
        %v472 = vld [vmem:[%s293 + $0x2a0] sm:$0xff]
        %v473 = vld [vmem:[%s293 + $0x2a8] sm:$0xff]
        %v474 = vld [vmem:[%s293 + $0x2b0] sm:$0xff]
        %v475 = vld [vmem:[%s293 + $0x2b8] sm:$0xff]
        %v476 = vld [vmem:[%s293 + $0x2c0] sm:$0xff]
        %v477 = vld [vmem:[%s293 + $0x2c8] sm:$0xff]
        %v478 = vld [vmem:[%s293 + $0x2d0] sm:$0xff]
        %v479 = vld [vmem:[%s293 + $0x2d8] sm:$0xff]
        %v480 = vld [vmem:[%s293 + $0x2e0] sm:$0xff]
        %v481 = vld [vmem:[%s293 + $0x2e8] sm:$0xff]
        %v482 = vld [vmem:[%s293 + $0x2f0] sm:$0xff]
        %v483 = vld [vmem:[%s293 + $0x2f8] sm:$0xff]
        %v484 = vld [vmem:[%s293 + $0x300] sm:$0xff]
        %v485 = vld [vmem:[%s293 + $0x308] sm:$0xff]
        %v486 = vld [vmem:[%s293 + $0x310] sm:$0xff]
        %v487 = vld [vmem:[%s293 + $0x318] sm:$0xff]
        %v488 = vld [vmem:[%s293 + $0x320] sm:$0xff]
        %v489 = vld [vmem:[%s293 + $0x328] sm:$0xff]
        %v490 = vld [vmem:[%s293 + $0x330] sm:$0xff]
        %v491 = vld [vmem:[%s293 + $0x338] sm:$0xff]
        %v492 = vld [vmem:[%s293 + $0x340] sm:$0xff]
        %v493 = vld [vmem:[%s293 + $0x348] sm:$0xff]
        %v494 = vld [vmem:[%s293 + $0x350] sm:$0xff]
        %v495 = vld [vmem:[%s293 + $0x358] sm:$0xff]
        %v496 = vld [vmem:[%s293 + $0x360] sm:$0xff]
        %v497 = vld [vmem:[%s293 + $0x368] sm:$0xff]
        %v498 = vld [vmem:[%s293 + $0x370] sm:$0xff]
        %v499 = vld [vmem:[%s293 + $0x378] sm:$0xff]
        %v500 = vld [vmem:[%s293 + $0x380] sm:$0xff]
        %v501 = vld [vmem:[%s293 + $0x388] sm:$0xff]
        %v502 = vld [vmem:[%s293 + $0x390] sm:$0xff]
        %v503 = vld [vmem:[%s293 + $0x398] sm:$0xff]
        %v504 = vld [vmem:[%s293 + $0x3a0] sm:$0xff]
        %v505 = vld [vmem:[%s293 + $0x3a8] sm:$0xff]
        %v506 = vld [vmem:[%s293 + $0x3b0] sm:$0xff]
        %v507 = vld [vmem:[%s293 + $0x3b8] sm:$0xff]
        %v508 = vld [vmem:[%s293 + $0x3c0] sm:$0xff]
        %v509 = vld [vmem:[%s293 + $0x3c8] sm:$0xff]
        %v510 = vld [vmem:[%s293 + $0x3d0] sm:$0xff]
        %v511 = vld [vmem:[%s293 + $0x3d8] sm:$0xff]
        %v512 = vld [vmem:[%s293 + $0x3e0] sm:$0xff]
        %v513 = vld [vmem:[%s293 + $0x3e8] sm:$0xff]
        %v514 = vld [vmem:[%s293 + $0x3f0] sm:$0xff]
        %v515 = vld [vmem:[%s293 + $0x3f8] sm:$0xff]
        %v516 = vld [vmem:[%s293 + $0x400] sm:$0xff]
        %v517 = vld [vmem:[%s293 + $0x408] sm:$0xff]
        %v518 = vld [vmem:[%s293 + $0x410] sm:$0xff]
        %v519 = vld [vmem:[%s293 + $0x418] sm:$0xff]
        %v520 = vld [vmem:[%s293 + $0x420] sm:$0xff]
        %v521 = vld [vmem:[%s293 + $0x428] sm:$0xff]
        %v522 = vld [vmem:[%s293 + $0x430] sm:$0xff]
        %v523 = vld [vmem:[%s293 + $0x438] sm:$0xff]
        %v524 = vld [vmem:[%s293 + $0x440] sm:$0xff]
        %v525 = vld [vmem:[%s293 + $0x448] sm:$0xff]
        %v526 = vld [vmem:[%s293 + $0x450] sm:$0xff]
        %v527 = vld [vmem:[%s293 + $0x458] sm:$0xff]
        %v528 = vld [vmem:[%s293 + $0x460] sm:$0xff]
        %v529 = vld [vmem:[%s293 + $0x468] sm:$0xff]
        %v530 = vld [vmem:[%s293 + $0x470] sm:$0xff]
        %v531 = vld [vmem:[%s293 + $0x478] sm:$0xff]
        %v532 = vld [vmem:[%s293 + $0x480] sm:$0xff]
        %v533 = vld [vmem:[%s293 + $0x488] sm:$0xff]
        %v534 = vld [vmem:[%s293 + $0x490] sm:$0xff]
        %v535 = vld [vmem:[%s293 + $0x498] sm:$0xff]
        %v536 = vld [vmem:[%s293 + $0x4a0] sm:$0xff]
        %v537 = vld [vmem:[%s293 + $0x4a8] sm:$0xff]
        %v538 = vld [vmem:[%s293 + $0x4b0] sm:$0xff]
        %v539 = vld [vmem:[%s293 + $0x4b8] sm:$0xff]
        %v540 = vld [vmem:[%s293 + $0x4c0] sm:$0xff]
        %v541 = vld [vmem:[%s293 + $0x4c8] sm:$0xff]
        %v542 = vld [vmem:[%s293 + $0x4d0] sm:$0xff]
        %v543 = vld [vmem:[%s293 + $0x4d8] sm:$0xff]
        %v544 = vld [vmem:[%s293 + $0x4e0] sm:$0xff]
        %v545 = vld [vmem:[%s293 + $0x4e8] sm:$0xff]
        %v546 = vld [vmem:[%s293 + $0x4f0] sm:$0xff]
        %v547 = vld [vmem:[%s293 + $0x4f8] sm:$0xff]
        %v548 = vld [vmem:[%s293 + $0x500] sm:$0xff]
        %v549 = vld [vmem:[%s293 + $0x508] sm:$0xff]
        %v550 = vld [vmem:[%s293 + $0x510] sm:$0xff]
        %v551 = vld [vmem:[%s293 + $0x518] sm:$0xff]
        %v552 = vld [vmem:[%s293 + $0x520] sm:$0xff]
        %v553 = vld [vmem:[%s293 + $0x528] sm:$0xff]
        %v554 = vld [vmem:[%s293 + $0x530] sm:$0xff]
        %v555 = vld [vmem:[%s293 + $0x538] sm:$0xff]
        %v556 = vld [vmem:[%s293 + $0x540] sm:$0xff]
        %v557 = vld [vmem:[%s293 + $0x548] sm:$0xff]
        %v558 = vld [vmem:[%s293 + $0x550] sm:$0xff]
        %v559 = vld [vmem:[%s293 + $0x558] sm:$0xff]
        %v560 = vld [vmem:[%s293 + $0x560] sm:$0xff]
        %v561 = vld [vmem:[%s293 + $0x568] sm:$0xff]
        %v562 = vld [vmem:[%s293 + $0x570] sm:$0xff]
        %v563 = vld [vmem:[%s293 + $0x578] sm:$0xff]
        %v564 = vld [vmem:[%s293 + $0x580] sm:$0xff]
        %v565 = vld [vmem:[%s293 + $0x588] sm:$0xff]
        %v566 = vld [vmem:[%s293 + $0x590] sm:$0xff]
        %v567 = vld [vmem:[%s293 + $0x598] sm:$0xff]
        %v568 = vld [vmem:[%s293 + $0x5a0] sm:$0xff]
        %v569 = vld [vmem:[%s293 + $0x5a8] sm:$0xff]
        %v570 = vld [vmem:[%s293 + $0x5b0] sm:$0xff]
        %v571 = vld [vmem:[%s293 + $0x5b8] sm:$0xff]
        %v572 = vld [vmem:[%s293 + $0x5c0] sm:$0xff]
        %v573 = vld [vmem:[%s293 + $0x5c8] sm:$0xff]
        %v574 = vld [vmem:[%s293 + $0x5d0] sm:$0xff]
        %v575 = vld [vmem:[%s293 + $0x5d8] sm:$0xff]
        %v576 = vld [vmem:[%s293 + $0x5e0] sm:$0xff]
        %v577 = vld [vmem:[%s293 + $0x5e8] sm:$0xff]
        %v578 = vld [vmem:[%s293 + $0x5f0] sm:$0xff]
        %v579 = vld [vmem:[%s293 + $0x5f8] sm:$0xff]
        %v580 = vld [vmem:[%s293 + $0x600] sm:$0xff]
        %v581 = vld [vmem:[%s293 + $0x608] sm:$0xff]
        %v582 = vld [vmem:[%s293 + $0x610] sm:$0xff]
        %v583 = vld [vmem:[%s293 + $0x618] sm:$0xff]
        %v584 = vld [vmem:[%s293 + $0x620] sm:$0xff]
        %v585 = vld [vmem:[%s293 + $0x628] sm:$0xff]
        %v586 = vld [vmem:[%s293 + $0x630] sm:$0xff]
        %v587 = vld [vmem:[%s293 + $0x638] sm:$0xff]
        %v588 = vld [vmem:[%s293 + $0x640] sm:$0xff]
        %v589 = vld [vmem:[%s293 + $0x648] sm:$0xff]
        %v590 = vld [vmem:[%s293 + $0x650] sm:$0xff]
        %v591 = vld [vmem:[%s293 + $0x658] sm:$0xff]
        %v592 = vld [vmem:[%s293 + $0x660] sm:$0xff]
        %v593 = vld [vmem:[%s293 + $0x668] sm:$0xff]
        %v594 = vld [vmem:[%s293 + $0x670] sm:$0xff]
        %v595 = vld [vmem:[%s293 + $0x678] sm:$0xff]
        %v596 = vld [vmem:[%s293 + $0x680] sm:$0xff]
        %v597 = vld [vmem:[%s293 + $0x688] sm:$0xff]
        %v598 = vld [vmem:[%s293 + $0x690] sm:$0xff]
        %v599 = vld [vmem:[%s293 + $0x698] sm:$0xff]
        %v600 = vld [vmem:[%s293 + $0x6a0] sm:$0xff]
        %v601 = vld [vmem:[%s293 + $0x6a8] sm:$0xff]
        %v602 = vld [vmem:[%s293 + $0x6b0] sm:$0xff]
        %v603 = vld [vmem:[%s293 + $0x6b8] sm:$0xff]
        %v604 = vld [vmem:[%s293 + $0x6c0] sm:$0xff]
        %v605 = vld [vmem:[%s293 + $0x6c8] sm:$0xff]
        %v606 = vld [vmem:[%s293 + $0x6d0] sm:$0xff]
        %v607 = vld [vmem:[%s293 + $0x6d8] sm:$0xff]
        %v608 = vld [vmem:[%s293 + $0x6e0] sm:$0xff]
        %v609 = vld [vmem:[%s293 + $0x6e8] sm:$0xff]
        %v610 = vld [vmem:[%s293 + $0x6f0] sm:$0xff]
        %v611 = vld [vmem:[%s293 + $0x6f8] sm:$0xff]
        %v612 = vld [vmem:[%s293 + $0x700] sm:$0xff]
        %v613 = vld [vmem:[%s293 + $0x708] sm:$0xff]
        %v614 = vld [vmem:[%s293 + $0x710] sm:$0xff]
        %v615 = vld [vmem:[%s293 + $0x718] sm:$0xff]
        %v616 = vld [vmem:[%s293 + $0x720] sm:$0xff]
        %v617 = vld [vmem:[%s293 + $0x728] sm:$0xff]
        %v618 = vld [vmem:[%s293 + $0x730] sm:$0xff]
        %v619 = vld [vmem:[%s293 + $0x738] sm:$0xff]
        %v620 = vld [vmem:[%s293 + $0x740] sm:$0xff]
        %v621 = vld [vmem:[%s293 + $0x748] sm:$0xff]
        %v622 = vld [vmem:[%s293 + $0x750] sm:$0xff]
        %v623 = vld [vmem:[%s293 + $0x758] sm:$0xff]
        %v624 = vld [vmem:[%s293 + $0x760] sm:$0xff]
        %v625 = vld [vmem:[%s293 + $0x768] sm:$0xff]
        %v626 = vld [vmem:[%s293 + $0x770] sm:$0xff]
        %v627 = vld [vmem:[%s293 + $0x778] sm:$0xff]
        %v628 = vld [vmem:[%s293 + $0x780] sm:$0xff]
        %v629 = vld [vmem:[%s293 + $0x788] sm:$0xff]
        %v630 = vld [vmem:[%s293 + $0x790] sm:$0xff]
        %v631 = vld [vmem:[%s293 + $0x798] sm:$0xff]
        %v632 = vld [vmem:[%s293 + $0x7a0] sm:$0xff]
        %v633 = vld [vmem:[%s293 + $0x7a8] sm:$0xff]
        %v634 = vld [vmem:[%s293 + $0x7b0] sm:$0xff]
        %v635 = vld [vmem:[%s293 + $0x7b8] sm:$0xff]
        %v636 = vld [vmem:[%s293 + $0x7c0] sm:$0xff]
        %v637 = vld [vmem:[%s293 + $0x7c8] sm:$0xff]
        %v638 = vld [vmem:[%s293 + $0x7d0] sm:$0xff]
        %v639 = vld [vmem:[%s293 + $0x7d8] sm:$0xff]
        %v640 = vld [vmem:[%s293 + $0x7e0] sm:$0xff]
        %v641 = vld [vmem:[%s293 + $0x7e8] sm:$0xff]
        %v642 = vld [vmem:[%s293 + $0x7f0] sm:$0xff]
        %v643 = vld [vmem:[%s293 + $0x7f8] sm:$0xff]
        %v644 = vld [vmem:[%s293 + $0x800] sm:$0xff]
        %v645 = vld [vmem:[%s293 + $0x808] sm:$0xff]
        %v646 = vld [vmem:[%s293 + $0x810] sm:$0xff]
        %v647 = vld [vmem:[%s293 + $0x818] sm:$0xff]
        %v648 = vld [vmem:[%s293 + $0x820] sm:$0xff]
        %v649 = vld [vmem:[%s293 + $0x828] sm:$0xff]
        %v650 = vld [vmem:[%s293 + $0x830] sm:$0xff]
        %v651 = vld [vmem:[%s293 + $0x838] sm:$0xff]
        %v652 = vld [vmem:[%s293 + $0x840] sm:$0xff]
        %v653 = vld [vmem:[%s293 + $0x848] sm:$0xff]
        %v654 = vld [vmem:[%s293 + $0x850] sm:$0xff]
        %v655 = vld [vmem:[%s293 + $0x858] sm:$0xff]
        %v656 = vld [vmem:[%s293 + $0x860] sm:$0xff]
        %v657 = vld [vmem:[%s293 + $0x868] sm:$0xff]
        %v658 = vld [vmem:[%s293 + $0x870] sm:$0xff]
        %v659 = vld [vmem:[%s293 + $0x878] sm:$0xff]
        %v660 = vld [vmem:[%s293 + $0x880] sm:$0xff]
        %v661 = vld [vmem:[%s293 + $0x888] sm:$0xff]
        %v662 = vld [vmem:[%s293 + $0x890] sm:$0xff]
        %v663 = vld [vmem:[%s293 + $0x898] sm:$0xff]
        %v664 = vld [vmem:[%s293 + $0x8a0] sm:$0xff]
        %v665 = vld [vmem:[%s293 + $0x8a8] sm:$0xff]
        %v666 = vld [vmem:[%s293 + $0x8b0] sm:$0xff]
        %v667 = vld [vmem:[%s293 + $0x8b8] sm:$0xff]
        %v668 = vld [vmem:[%s293 + $0x8c0] sm:$0xff]
        %v669 = vld [vmem:[%s293 + $0x8c8] sm:$0xff]
        %v670 = vld [vmem:[%s293 + $0x8d0] sm:$0xff]
        %v671 = vld [vmem:[%s293 + $0x8d8] sm:$0xff]
        %v672 = vld [vmem:[%s293 + $0x8e0] sm:$0xff]
        %v673 = vld [vmem:[%s293 + $0x8e8] sm:$0xff]
        %v674 = vld [vmem:[%s293 + $0x8f0] sm:$0xff]
        %v675 = vld [vmem:[%s293 + $0x8f8] sm:$0xff]
        %v676 = vld [vmem:[%s293 + $0x900] sm:$0xff]
        %v677 = vld [vmem:[%s293 + $0x908] sm:$0xff]
        %v678 = vld [vmem:[%s293 + $0x910] sm:$0xff]
        %v679 = vld [vmem:[%s293 + $0x918] sm:$0xff]
        %v680 = vld [vmem:[%s293 + $0x920] sm:$0xff]
        %v681 = vld [vmem:[%s293 + $0x928] sm:$0xff]
        %v682 = vld [vmem:[%s293 + $0x930] sm:$0xff]
        %v683 = vld [vmem:[%s293 + $0x938] sm:$0xff]
        %v684 = vld [vmem:[%s293 + $0x940] sm:$0xff]
        %v685 = vld [vmem:[%s293 + $0x948] sm:$0xff]
        %v686 = vld [vmem:[%s293 + $0x950] sm:$0xff]
        %v687 = vld [vmem:[%s293 + $0x958] sm:$0xff]
        %v688 = vld [vmem:[%s293 + $0x960] sm:$0xff]
        %v689 = vld [vmem:[%s293 + $0x968] sm:$0xff]
        %v690 = vld [vmem:[%s293 + $0x970] sm:$0xff]
        %v691 = vld [vmem:[%s293 + $0x978] sm:$0xff]
        %v692 = vld [vmem:[%s293 + $0x980] sm:$0xff]
        %v693 = vld [vmem:[%s293 + $0x988] sm:$0xff]
        %v694 = vld [vmem:[%s293 + $0x990] sm:$0xff]
        %v695 = vld [vmem:[%s293 + $0x998] sm:$0xff]
        %v696 = vld [vmem:[%s293 + $0x9a0] sm:$0xff]
        %v697 = vld [vmem:[%s293 + $0x9a8] sm:$0xff]
        %v698 = vld [vmem:[%s293 + $0x9b0] sm:$0xff]
        %v699 = vld [vmem:[%s293 + $0x9b8] sm:$0xff]
        %v700 = vld [vmem:[%s293 + $0x9c0] sm:$0xff]
        %v701 = vld [vmem:[%s293 + $0x9c8] sm:$0xff]
        %v702 = vld [vmem:[%s293 + $0x9d0] sm:$0xff]
        %v703 = vld [vmem:[%s293 + $0x9d8] sm:$0xff]
        %v704 = vld [vmem:[%s293 + $0x9e0] sm:$0xff]
        %v705 = vld [vmem:[%s293 + $0x9e8] sm:$0xff]
        %v706 = vld [vmem:[%s293 + $0x9f0] sm:$0xff]
        %v707 = vld [vmem:[%s293 + $0x9f8] sm:$0xff]
        %v708 = vld [vmem:[%s293 + $0xa00] sm:$0xff]
        %v709 = vld [vmem:[%s293 + $0xa08] sm:$0xff]
        %v710 = vld [vmem:[%s293 + $0xa10] sm:$0xff]
        %v711 = vld [vmem:[%s293 + $0xa18] sm:$0xff]
        %v712 = vld [vmem:[%s293 + $0xa20] sm:$0xff]
        %v713 = vld [vmem:[%s293 + $0xa28] sm:$0xff]
        %v714 = vld [vmem:[%s293 + $0xa30] sm:$0xff]
        %v715 = vld [vmem:[%s293 + $0xa38] sm:$0xff]
        %v716 = vld [vmem:[%s293 + $0xa40] sm:$0xff]
        %v717 = vld [vmem:[%s293 + $0xa48] sm:$0xff]
        %v718 = vld [vmem:[%s293 + $0xa50] sm:$0xff]
        %v719 = vld [vmem:[%s293 + $0xa58] sm:$0xff]
        %v720 = vld [vmem:[%s293 + $0xa60] sm:$0xff]
        %v721 = vld [vmem:[%s293 + $0xa68] sm:$0xff]
        %v722 = vld [vmem:[%s293 + $0xa70] sm:$0xff]
        %v723 = vld [vmem:[%s293 + $0xa78] sm:$0xff]
        %v724 = vld [vmem:[%s293 + $0xa80] sm:$0xff]
        %v725 = vld [vmem:[%s293 + $0xa88] sm:$0xff]
        %v726 = vld [vmem:[%s293 + $0xa90] sm:$0xff]
        %v727 = vld [vmem:[%s293 + $0xa98] sm:$0xff]
        %v728 = vld [vmem:[%s293 + $0xaa0] sm:$0xff]
        %v729 = vld [vmem:[%s293 + $0xaa8] sm:$0xff]
        %v730 = vld [vmem:[%s293 + $0xab0] sm:$0xff]
        %v731 = vld [vmem:[%s293 + $0xab8] sm:$0xff]
        %v732 = vld [vmem:[%s293 + $0xac0] sm:$0xff]
        %v733 = vld [vmem:[%s293 + $0xac8] sm:$0xff]
        %v734 = vld [vmem:[%s293 + $0xad0] sm:$0xff]
        %v735 = vld [vmem:[%s293 + $0xad8] sm:$0xff]
        %v736 = vld [vmem:[%s293 + $0xae0] sm:$0xff]
        %v737 = vld [vmem:[%s293 + $0xae8] sm:$0xff]
        %v738 = vld [vmem:[%s293 + $0xaf0] sm:$0xff]
        %v739 = vld [vmem:[%s293 + $0xaf8] sm:$0xff]
        %v740 = vld [vmem:[%s293 + $0xb00] sm:$0xff]
        %v741 = vld [vmem:[%s293 + $0xb08] sm:$0xff]
        %v742 = vld [vmem:[%s293 + $0xb10] sm:$0xff]
        %v743 = vld [vmem:[%s293 + $0xb18] sm:$0xff]
        %v744 = vld [vmem:[%s293 + $0xb20] sm:$0xff]
        %v745 = vld [vmem:[%s293 + $0xb28] sm:$0xff]
        %v746 = vld [vmem:[%s293 + $0xb30] sm:$0xff]
        %v747 = vld [vmem:[%s293 + $0xb38] sm:$0xff]
        %v748 = vld [vmem:[%s293 + $0xb40] sm:$0xff]
        %v749 = vld [vmem:[%s293 + $0xb48] sm:$0xff]
        %v750 = vld [vmem:[%s293 + $0xb50] sm:$0xff]
        %v751 = vld [vmem:[%s293 + $0xb58] sm:$0xff]
        %v752 = vld [vmem:[%s293 + $0xb60] sm:$0xff]
        %v753 = vld [vmem:[%s293 + $0xb68] sm:$0xff]
        %v754 = vld [vmem:[%s293 + $0xb70] sm:$0xff]
        %v755 = vld [vmem:[%s293 + $0xb78] sm:$0xff]
        %v756 = vld [vmem:[%s293 + $0xb80] sm:$0xff]
        %v757 = vld [vmem:[%s293 + $0xb88] sm:$0xff]
        %v758 = vld [vmem:[%s293 + $0xb90] sm:$0xff]
        %v759 = vld [vmem:[%s293 + $0xb98] sm:$0xff]
        %v760 = vld [vmem:[%s293 + $0xba0] sm:$0xff]
        %v761 = vld [vmem:[%s293 + $0xba8] sm:$0xff]
        %v762 = vld [vmem:[%s293 + $0xbb0] sm:$0xff]
        %v763 = vld [vmem:[%s293 + $0xbb8] sm:$0xff]
        %v764 = vld [vmem:[%s293 + $0xbc0] sm:$0xff]
        %v765 = vld [vmem:[%s293 + $0xbc8] sm:$0xff]
        %v766 = vld [vmem:[%s293 + $0xbd0] sm:$0xff]
        %v767 = vld [vmem:[%s293 + $0xbd8] sm:$0xff]
        %v768 = vld [vmem:[%s293 + $0xbe0] sm:$0xff]
        %v769 = vld [vmem:[%s293 + $0xbe8] sm:$0xff]
        %v770 = vld [vmem:[%s293 + $0xbf0] sm:$0xff]
        %v771 = vld [vmem:[%s293 + $0xbf8] sm:$0xff]
        %v772 = vld [vmem:[%s293 + $0xc00] sm:$0xff]
        %v773 = vld [vmem:[%s293 + $0xc08] sm:$0xff]
        %v774 = vld [vmem:[%s293 + $0xc10] sm:$0xff]
        %v775 = vld [vmem:[%s293 + $0xc18] sm:$0xff]
        %v776 = vld [vmem:[%s293 + $0xc20] sm:$0xff]
        %v777 = vld [vmem:[%s293 + $0xc28] sm:$0xff]
        %v778 = vld [vmem:[%s293 + $0xc30] sm:$0xff]
        %v779 = vld [vmem:[%s293 + $0xc38] sm:$0xff]
        %v780 = vld [vmem:[%s293 + $0xc40] sm:$0xff]
        %v781 = vld [vmem:[%s293 + $0xc48] sm:$0xff]
        %v782 = vld [vmem:[%s293 + $0xc50] sm:$0xff]
        %v783 = vld [vmem:[%s293 + $0xc58] sm:$0xff]
        %v784 = vld [vmem:[%s293 + $0xc60] sm:$0xff]
        %v785 = vld [vmem:[%s293 + $0xc68] sm:$0xff]
        %v786 = vld [vmem:[%s293 + $0xc70] sm:$0xff]
        %v787 = vld [vmem:[%s293 + $0xc78] sm:$0xff]
        %v788 = vld [vmem:[%s293 + $0xc80] sm:$0xff]
        %v789 = vld [vmem:[%s293 + $0xc88] sm:$0xff]
        %v790 = vld [vmem:[%s293 + $0xc90] sm:$0xff]
        %v791 = vld [vmem:[%s293 + $0xc98] sm:$0xff]
        %v792 = vld [vmem:[%s293 + $0xca0] sm:$0xff]
        %v793 = vld [vmem:[%s293 + $0xca8] sm:$0xff]
        %v794 = vld [vmem:[%s293 + $0xcb0] sm:$0xff]
        %v795 = vld [vmem:[%s293 + $0xcb8] sm:$0xff]
        %v796 = vld [vmem:[%s293 + $0xcc0] sm:$0xff]
        %v797 = vld [vmem:[%s293 + $0xcc8] sm:$0xff]
        %v798 = vld [vmem:[%s293 + $0xcd0] sm:$0xff]
        %v799 = vld [vmem:[%s293 + $0xcd8] sm:$0xff]
        %v800 = vld [vmem:[%s293 + $0xce0] sm:$0xff]
        %v801 = vld [vmem:[%s293 + $0xce8] sm:$0xff]
        %v802 = vld [vmem:[%s293 + $0xcf0] sm:$0xff]
        %v803 = vld [vmem:[%s293 + $0xcf8] sm:$0xff]
        %v804 = vld [vmem:[%s293 + $0xd00] sm:$0xff]
        %v805 = vld [vmem:[%s293 + $0xd08] sm:$0xff]
        %v806 = vld [vmem:[%s293 + $0xd10] sm:$0xff]
        %v807 = vld [vmem:[%s293 + $0xd18] sm:$0xff]
        %v808 = vld [vmem:[%s293 + $0xd20] sm:$0xff]
        %v809 = vld [vmem:[%s293 + $0xd28] sm:$0xff]
        %v810 = vld [vmem:[%s293 + $0xd30] sm:$0xff]
        %v811 = vld [vmem:[%s293 + $0xd38] sm:$0xff]
        %v812 = vld [vmem:[%s293 + $0xd40] sm:$0xff]
        %v813 = vld [vmem:[%s293 + $0xd48] sm:$0xff]
        %v814 = vld [vmem:[%s293 + $0xd50] sm:$0xff]
        %v815 = vld [vmem:[%s293 + $0xd58] sm:$0xff]
        %v816 = vld [vmem:[%s293 + $0xd60] sm:$0xff]
        %v817 = vld [vmem:[%s293 + $0xd68] sm:$0xff]
        %v818 = vld [vmem:[%s293 + $0xd70] sm:$0xff]
        %v819 = vld [vmem:[%s293 + $0xd78] sm:$0xff]
        %v820 = vld [vmem:[%s293 + $0xd80] sm:$0xff]
        %v821 = vld [vmem:[%s293 + $0xd88] sm:$0xff]
        %v822 = vld [vmem:[%s293 + $0xd90] sm:$0xff]
        %v823 = vld [vmem:[%s293 + $0xd98] sm:$0xff]
        %v824 = vld [vmem:[%s293 + $0xda0] sm:$0xff]
        %v825 = vld [vmem:[%s293 + $0xda8] sm:$0xff]
        %v826 = vld [vmem:[%s293 + $0xdb0] sm:$0xff]
        %v827 = vld [vmem:[%s293 + $0xdb8] sm:$0xff]
        %v828 = vld [vmem:[%s293 + $0xdc0] sm:$0xff]
        %v829 = vld [vmem:[%s293 + $0xdc8] sm:$0xff]
        %v830 = vld [vmem:[%s293 + $0xdd0] sm:$0xff]
        %v831 = vld [vmem:[%s293 + $0xdd8] sm:$0xff]
        %v832 = vld [vmem:[%s293 + $0xde0] sm:$0xff]
        %v833 = vld [vmem:[%s293 + $0xde8] sm:$0xff]
        %v834 = vld [vmem:[%s293 + $0xdf0] sm:$0xff]
        %v835 = vld [vmem:[%s293 + $0xdf8] sm:$0xff]
        %v836 = vld [vmem:[%s293 + $0xe00] sm:$0xff]
        %v837 = vld [vmem:[%s293 + $0xe08] sm:$0xff]
        %v838 = vld [vmem:[%s293 + $0xe10] sm:$0xff]
        %v839 = vld [vmem:[%s293 + $0xe18] sm:$0xff]
        %v840 = vld [vmem:[%s293 + $0xe20] sm:$0xff]
        %v841 = vld [vmem:[%s293 + $0xe28] sm:$0xff]
        %v842 = vld [vmem:[%s293 + $0xe30] sm:$0xff]
        %v843 = vld [vmem:[%s293 + $0xe38] sm:$0xff]
        %v844 = vld [vmem:[%s293 + $0xe40] sm:$0xff]
        %v845 = vld [vmem:[%s293 + $0xe48] sm:$0xff]
        %v846 = vld [vmem:[%s293 + $0xe50] sm:$0xff]
        %v847 = vld [vmem:[%s293 + $0xe58] sm:$0xff]
        %v848 = vld [vmem:[%s293 + $0xe60] sm:$0xff]
        %v849 = vld [vmem:[%s293 + $0xe68] sm:$0xff]
        %v850 = vld [vmem:[%s293 + $0xe70] sm:$0xff]
        %v851 = vld [vmem:[%s293 + $0xe78] sm:$0xff]
        %v852 = vld [vmem:[%s293 + $0xe80] sm:$0xff]
        %v853 = vld [vmem:[%s293 + $0xe88] sm:$0xff]
        %v854 = vld [vmem:[%s293 + $0xe90] sm:$0xff]
        %v855 = vld [vmem:[%s293 + $0xe98] sm:$0xff]
        %v856 = vld [vmem:[%s293 + $0xea0] sm:$0xff]
        %v857 = vld [vmem:[%s293 + $0xea8] sm:$0xff]
        %v858 = vld [vmem:[%s293 + $0xeb0] sm:$0xff]
        %v859 = vld [vmem:[%s293 + $0xeb8] sm:$0xff]
        %v860 = vld [vmem:[%s293 + $0xec0] sm:$0xff]
        %v861 = vld [vmem:[%s293 + $0xec8] sm:$0xff]
        %v862 = vld [vmem:[%s293 + $0xed0] sm:$0xff]
        %v863 = vld [vmem:[%s293 + $0xed8] sm:$0xff]
        %v864 = vld [vmem:[%s293 + $0xee0] sm:$0xff]
        %v865 = vld [vmem:[%s293 + $0xee8] sm:$0xff]
        %v866 = vld [vmem:[%s293 + $0xef0] sm:$0xff]
        %v867 = vld [vmem:[%s293 + $0xef8] sm:$0xff]
        %v868 = vld [vmem:[%s293 + $0xf00] sm:$0xff]
        %v869 = vld [vmem:[%s293 + $0xf08] sm:$0xff]
        %v870 = vld [vmem:[%s293 + $0xf10] sm:$0xff]
        %v871 = vld [vmem:[%s293 + $0xf18] sm:$0xff]
        %v872 = vld [vmem:[%s293 + $0xf20] sm:$0xff]
        %v873 = vld [vmem:[%s293 + $0xf28] sm:$0xff]
        %v874 = vld [vmem:[%s293 + $0xf30] sm:$0xff]
        %v875 = vld [vmem:[%s293 + $0xf38] sm:$0xff]
        %v876 = vld [vmem:[%s293 + $0xf40] sm:$0xff]
        %v877 = vld [vmem:[%s293 + $0xf48] sm:$0xff]
        %v878 = vld [vmem:[%s293 + $0xf50] sm:$0xff]
        %v879 = vld [vmem:[%s293 + $0xf58] sm:$0xff]
        %v880 = vld [vmem:[%s293 + $0xf60] sm:$0xff]
        %v881 = vld [vmem:[%s293 + $0xf68] sm:$0xff]
        %v882 = vld [vmem:[%s293 + $0xf70] sm:$0xff]
        %v883 = vld [vmem:[%s293 + $0xf78] sm:$0xff]
        %v884 = vld [vmem:[%s293 + $0xf80] sm:$0xff]
        %v885 = vld [vmem:[%s293 + $0xf88] sm:$0xff]
        %v886 = vld [vmem:[%s293 + $0xf90] sm:$0xff]
        %v887 = vld [vmem:[%s293 + $0xf98] sm:$0xff]
        %v888 = vld [vmem:[%s293 + $0xfa0] sm:$0xff]
        %v889 = vld [vmem:[%s293 + $0xfa8] sm:$0xff]
        %v890 = vld [vmem:[%s293 + $0xfb0] sm:$0xff]
        %v891 = vld [vmem:[%s293 + $0xfb8] sm:$0xff]
        %v892 = vld [vmem:[%s293 + $0xfc0] sm:$0xff]
        %v893 = vld [vmem:[%s293 + $0xfc8] sm:$0xff]
        %v894 = vld [vmem:[%s293 + $0xfd0] sm:$0xff]
        %v895 = vld [vmem:[%s293 + $0xfd8] sm:$0xff]
        %v896 = vld [vmem:[%s293 + $0xfe0] sm:$0xff]
        %v897 = vld [vmem:[%s293 + $0xfe8] sm:$0xff]
        %v898 = vld [vmem:[%s293 + $0xff0] sm:$0xff]
        %v899 = vld [vmem:[%s293 + $0xff8] sm:$0xff]
        %v900 = vld [vmem:[%s293 + $0x1000] sm:$0xff]
        %v901 = vld [vmem:[%s293 + $0x1008] sm:$0xff]
        %v902 = vld [vmem:[%s293 + $0x1010] sm:$0xff]
        %v903 = vld [vmem:[%s293 + $0x1018] sm:$0xff]
        %v904 = vld [vmem:[%s293 + $0x1020] sm:$0xff]
        %v905 = vld [vmem:[%s293 + $0x1028] sm:$0xff]
        %v906 = vld [vmem:[%s293 + $0x1030] sm:$0xff]
        %v907 = vld [vmem:[%s293 + $0x1038] sm:$0xff]
        %v908 = vld [vmem:[%s293 + $0x1040] sm:$0xff]
        %v909 = vld [vmem:[%s293 + $0x1048] sm:$0xff]
        %v910 = vld [vmem:[%s293 + $0x1050] sm:$0xff]
        %v911 = vld [vmem:[%s293 + $0x1058] sm:$0xff]
        %v912 = vld [vmem:[%s293 + $0x1060] sm:$0xff]
        %v913 = vld [vmem:[%s293 + $0x1068] sm:$0xff]
        %v914 = vld [vmem:[%s293 + $0x1070] sm:$0xff]
        %v915 = vld [vmem:[%s293 + $0x1078] sm:$0xff]
        %v916 = vld [vmem:[%s293 + $0x1080] sm:$0xff]
        %v917 = vld [vmem:[%s293 + $0x1088] sm:$0xff]
        %v918 = vld [vmem:[%s293 + $0x1090] sm:$0xff]
        %v919 = vld [vmem:[%s293 + $0x1098] sm:$0xff]
        %v920 = vld [vmem:[%s293 + $0x10a0] sm:$0xff]
        %v921 = vld [vmem:[%s293 + $0x10a8] sm:$0xff]
        %v922 = vld [vmem:[%s293 + $0x10b0] sm:$0xff]
        %v923 = vld [vmem:[%s293 + $0x10b8] sm:$0xff]
        %v924 = vld [vmem:[%s293 + $0x10c0] sm:$0xff]
        %v925 = vld [vmem:[%s293 + $0x10c8] sm:$0xff]
        %v926 = vld [vmem:[%s293 + $0x10d0] sm:$0xff]
        %v927 = vld [vmem:[%s293 + $0x10d8] sm:$0xff]
        %v928 = vld [vmem:[%s293 + $0x10e0] sm:$0xff]
        %v929 = vld [vmem:[%s293 + $0x10e8] sm:$0xff]
        %v930 = vld [vmem:[%s293 + $0x10f0] sm:$0xff]
        %v931 = vld [vmem:[%s293 + $0x10f8] sm:$0xff]
        %v932 = vld [vmem:[%s293 + $0x1100] sm:$0xff]
        %v933 = vld [vmem:[%s293 + $0x1108] sm:$0xff]
        %v934 = vld [vmem:[%s293 + $0x1110] sm:$0xff]
        %v935 = vld [vmem:[%s293 + $0x1118] sm:$0xff]
        %v936 = vld [vmem:[%s293 + $0x1120] sm:$0xff]
        %v937 = vld [vmem:[%s293 + $0x1128] sm:$0xff]
        %v938 = vld [vmem:[%s293 + $0x1130] sm:$0xff]
        %v939 = vld [vmem:[%s293 + $0x1138] sm:$0xff]
        %v940 = vld [vmem:[%s293 + $0x1140] sm:$0xff]
        %v941 = vld [vmem:[%s293 + $0x1148] sm:$0xff]
        %v942 = vld [vmem:[%s293 + $0x1150] sm:$0xff]
        %v943 = vld [vmem:[%s293 + $0x1158] sm:$0xff]
        %v944 = vld [vmem:[%s293 + $0x1160] sm:$0xff]
        %v945 = vld [vmem:[%s293 + $0x1168] sm:$0xff]
        %v946 = vld [vmem:[%s293 + $0x1170] sm:$0xff]
        %v947 = vld [vmem:[%s293 + $0x1178] sm:$0xff]
        %v948 = vld [vmem:[%s293 + $0x1180] sm:$0xff]
        %v949 = vld [vmem:[%s293 + $0x1188] sm:$0xff]
        %v950 = vld [vmem:[%s293 + $0x1190] sm:$0xff]
        %v951 = vld [vmem:[%s293 + $0x1198] sm:$0xff]
        %v952 = vld [vmem:[%s293 + $0x11a0] sm:$0xff]
        %v953 = vld [vmem:[%s293 + $0x11a8] sm:$0xff]
        %v954 = vld [vmem:[%s293 + $0x11b0] sm:$0xff]
        %v955 = vld [vmem:[%s293 + $0x11b8] sm:$0xff]
        %v956 = vld [vmem:[%s293 + $0x11c0] sm:$0xff]
        %v957 = vld [vmem:[%s293 + $0x11c8] sm:$0xff]
        %v958 = vld [vmem:[%s293 + $0x11d0] sm:$0xff]
        %v959 = vld [vmem:[%s293 + $0x11d8] sm:$0xff]
        %v960 = vld [vmem:[%s293 + $0x11e0] sm:$0xff]
        %v961 = vld [vmem:[%s293 + $0x11e8] sm:$0xff]
        %v962 = vld [vmem:[%s293 + $0x11f0] sm:$0xff]
        %v963 = vld [vmem:[%s293 + $0x11f8] sm:$0xff]
        %v964 = vld [vmem:[%s293 + $0x1200] sm:$0xff]
        %v965 = vld [vmem:[%s293 + $0x1208] sm:$0xff]
        %v966 = vld [vmem:[%s293 + $0x1210] sm:$0xff]
        %v967 = vld [vmem:[%s293 + $0x1218] sm:$0xff]
        %v968 = vld [vmem:[%s293 + $0x1220] sm:$0xff]
        %v969 = vld [vmem:[%s293 + $0x1228] sm:$0xff]
        %v970 = vld [vmem:[%s293 + $0x1230] sm:$0xff]
        %v971 = vld [vmem:[%s293 + $0x1238] sm:$0xff]
        %v972 = vld [vmem:[%s293 + $0x1240] sm:$0xff]
        %v973 = vld [vmem:[%s293 + $0x1248] sm:$0xff]
        %v974 = vld [vmem:[%s293 + $0x1250] sm:$0xff]
        %v975 = vld [vmem:[%s293 + $0x1258] sm:$0xff]
        %v976 = vld [vmem:[%s293 + $0x1260] sm:$0xff]
        %v977 = vld [vmem:[%s293 + $0x1268] sm:$0xff]
        %v978 = vld [vmem:[%s293 + $0x1270] sm:$0xff]
        %v979 = vld [vmem:[%s293 + $0x1278] sm:$0xff]
        %v980 = vld [vmem:[%s293 + $0x1280] sm:$0xff]
        %v981 = vld [vmem:[%s293 + $0x1288] sm:$0xff]
        %v982 = vld [vmem:[%s293 + $0x1290] sm:$0xff]
        %v983 = vld [vmem:[%s293 + $0x1298] sm:$0xff]
        %v984 = vld [vmem:[%s293 + $0x12a0] sm:$0xff]
        %v985 = vld [vmem:[%s293 + $0x12a8] sm:$0xff]
        %v986 = vld [vmem:[%s293 + $0x12b0] sm:$0xff]
        %v987 = vld [vmem:[%s293 + $0x12b8] sm:$0xff]
        %v988 = vld [vmem:[%s293 + $0x12c0] sm:$0xff]
        %v989 = vld [vmem:[%s293 + $0x12c8] sm:$0xff]
        %v990 = vld [vmem:[%s293 + $0x12d0] sm:$0xff]
        %v991 = vld [vmem:[%s293 + $0x12d8] sm:$0xff]
        %v992 = vld [vmem:[%s293 + $0x12e0] sm:$0xff]
        %v993 = vld [vmem:[%s293 + $0x12e8] sm:$0xff]
        %v994 = vld [vmem:[%s293 + $0x12f0] sm:$0xff]
        %v995 = vld [vmem:[%s293 + $0x12f8] sm:$0xff]
        %v996 = vld [vmem:[%s293 + $0x1300] sm:$0xff]
        %v997 = vld [vmem:[%s293 + $0x1308] sm:$0xff]
        %v998 = vld [vmem:[%s293 + $0x1310] sm:$0xff]
        %v999 = vld [vmem:[%s293 + $0x1318] sm:$0xff]
        %v1000 = vld [vmem:[%s293 + $0x1320] sm:$0xff]
        %v1001 = vld [vmem:[%s293 + $0x1328] sm:$0xff]
        %v1002 = vld [vmem:[%s293 + $0x1330] sm:$0xff]
        %v1003 = vld [vmem:[%s293 + $0x1338] sm:$0xff]
        %v1004 = vld [vmem:[%s293 + $0x1340] sm:$0xff]
        %v1005 = vld [vmem:[%s293 + $0x1348] sm:$0xff]
        %v1006 = vld [vmem:[%s293 + $0x1350] sm:$0xff]
        %v1007 = vld [vmem:[%s293 + $0x1358] sm:$0xff]
        %v1008 = vld [vmem:[%s293 + $0x1360] sm:$0xff]
        %v1009 = vld [vmem:[%s293 + $0x1368] sm:$0xff]
        %v1010 = vld [vmem:[%s293 + $0x1370] sm:$0xff]
        %v1011 = vld [vmem:[%s293 + $0x1378] sm:$0xff]
        %v1012 = vld [vmem:[%s293 + $0x1380] sm:$0xff]
        %v1013 = vld [vmem:[%s293 + $0x1388] sm:$0xff]
        %v1014 = vld [vmem:[%s293 + $0x1390] sm:$0xff]
        %v1015 = vld [vmem:[%s293 + $0x1398] sm:$0xff]
        %v1016 = vld [vmem:[%s293 + $0x13a0] sm:$0xff]
        %v1017 = vld [vmem:[%s293 + $0x13a8] sm:$0xff]
        %v1018 = vld [vmem:[%s293 + $0x13b0] sm:$0xff]
        %v1019 = vld [vmem:[%s293 + $0x13b8] sm:$0xff]
        %v1020 = vld [vmem:[%s293 + $0x13c0] sm:$0xff]
        %v1021 = vld [vmem:[%s293 + $0x13c8] sm:$0xff]
        %v1022 = vld [vmem:[%s293 + $0x13d0] sm:$0xff]
        %v1023 = vld [vmem:[%s293 + $0x13d8] sm:$0xff]
        %v1024 = vld [vmem:[%s293 + $0x13e0] sm:$0xff]
        %v1025 = vld [vmem:[%s293 + $0x13e8] sm:$0xff]
        %v1026 = vld [vmem:[%s293 + $0x13f0] sm:$0xff]
        %v1027 = vld [vmem:[%s293 + $0x13f8] sm:$0xff]
        %v1028 = vld [vmem:[%s293 + $0x1400] sm:$0xff]
        %v1029 = vld [vmem:[%s293 + $0x1408] sm:$0xff]
        %v1030 = vld [vmem:[%s293 + $0x1410] sm:$0xff]
        %v1031 = vld [vmem:[%s293 + $0x1418] sm:$0xff]
        %v1032 = vld [vmem:[%s293 + $0x1420] sm:$0xff]
        %v1033 = vld [vmem:[%s293 + $0x1428] sm:$0xff]
        %v1034 = vld [vmem:[%s293 + $0x1430] sm:$0xff]
        %v1035 = vld [vmem:[%s293 + $0x1438] sm:$0xff]
        %v1036 = vld [vmem:[%s293 + $0x1440] sm:$0xff]
        %v1037 = vld [vmem:[%s293 + $0x1448] sm:$0xff]
        %v1038 = vld [vmem:[%s293 + $0x1450] sm:$0xff]
        %v1039 = vld [vmem:[%s293 + $0x1458] sm:$0xff]
        %v1040 = vld [vmem:[%s293 + $0x1460] sm:$0xff]
        %v1041 = vld [vmem:[%s293 + $0x1468] sm:$0xff]
        %v1042 = vld [vmem:[%s293 + $0x1470] sm:$0xff]
        %v1043 = vld [vmem:[%s293 + $0x1478] sm:$0xff]
        %v1044 = vld [vmem:[%s293 + $0x1480] sm:$0xff]
        %v1045 = vld [vmem:[%s293 + $0x1488] sm:$0xff]
        %v1046 = vld [vmem:[%s293 + $0x1490] sm:$0xff]
        %v1047 = vld [vmem:[%s293 + $0x1498] sm:$0xff]
        %v1048 = vld [vmem:[%s293 + $0x14a0] sm:$0xff]
        %v1049 = vld [vmem:[%s293 + $0x14a8] sm:$0xff]
        %v1050 = vld [vmem:[%s293 + $0x14b0] sm:$0xff]
        %v1051 = vld [vmem:[%s293 + $0x14b8] sm:$0xff]
        %v1052 = vld [vmem:[%s293 + $0x14c0] sm:$0xff]
        %v1053 = vld [vmem:[%s293 + $0x14c8] sm:$0xff]
        %v1054 = vld [vmem:[%s293 + $0x14d0] sm:$0xff]
        %v1055 = vld [vmem:[%s293 + $0x14d8] sm:$0xff]
        %v1056 = vld [vmem:[%s293 + $0x14e0] sm:$0xff]
        %v1057 = vld [vmem:[%s293 + $0x14e8] sm:$0xff]
        %v1058 = vld [vmem:[%s293 + $0x14f0] sm:$0xff]
        %v1059 = vld [vmem:[%s293 + $0x14f8] sm:$0xff]
        %v1060 = vld [vmem:[%s293 + $0x1500] sm:$0xff]
        %v1061 = vld [vmem:[%s293 + $0x1508] sm:$0xff]
        %v1062 = vld [vmem:[%s293 + $0x1510] sm:$0xff]
        %v1063 = vld [vmem:[%s293 + $0x1518] sm:$0xff]
        %v1064 = vld [vmem:[%s293 + $0x1520] sm:$0xff]
        %v1065 = vld [vmem:[%s293 + $0x1528] sm:$0xff]
        %v1066 = vld [vmem:[%s293 + $0x1530] sm:$0xff]
        %v1067 = vld [vmem:[%s293 + $0x1538] sm:$0xff]
        %v1068 = vld [vmem:[%s293 + $0x1540] sm:$0xff]
        %v1069 = vld [vmem:[%s293 + $0x1548] sm:$0xff]
        %v1070 = vld [vmem:[%s293 + $0x1550] sm:$0xff]
        %v1071 = vld [vmem:[%s293 + $0x1558] sm:$0xff]
        %v1072 = vld [vmem:[%s293 + $0x1560] sm:$0xff]
        %v1073 = vld [vmem:[%s293 + $0x1568] sm:$0xff]
        %v1074 = vld [vmem:[%s293 + $0x1570] sm:$0xff]
        %v1075 = vld [vmem:[%s293 + $0x1578] sm:$0xff]
        %v1076 = vld [vmem:[%s293 + $0x1580] sm:$0xff]
        %v1077 = vld [vmem:[%s293 + $0x1588] sm:$0xff]
        %v1078 = vld [vmem:[%s293 + $0x1590] sm:$0xff]
        %v1079 = vld [vmem:[%s293 + $0x1598] sm:$0xff]
        %v1080 = vld [vmem:[%s293 + $0x15a0] sm:$0xff]
        %v1081 = vld [vmem:[%s293 + $0x15a8] sm:$0xff]
        %v1082 = vld [vmem:[%s293 + $0x15b0] sm:$0xff]
        %v1083 = vld [vmem:[%s293 + $0x15b8] sm:$0xff]
        %v1084 = vld [vmem:[%s293 + $0x15c0] sm:$0xff]
        %v1085 = vld [vmem:[%s293 + $0x15c8] sm:$0xff]
        %v1086 = vld [vmem:[%s293 + $0x15d0] sm:$0xff]
        %v1087 = vld [vmem:[%s293 + $0x15d8] sm:$0xff]
        %v1088 = vld [vmem:[%s293 + $0x15e0] sm:$0xff]
        %v1089 = vld [vmem:[%s293 + $0x15e8] sm:$0xff]
        %v1090 = vld [vmem:[%s293 + $0x15f0] sm:$0xff]
        %v1091 = vld [vmem:[%s293 + $0x15f8] sm:$0xff]
        %v1092 = vld [vmem:[%s293 + $0x1600] sm:$0xff]
        %v1093 = vld [vmem:[%s293 + $0x1608] sm:$0xff]
        %v1094 = vld [vmem:[%s293 + $0x1610] sm:$0xff]
        %v1095 = vld [vmem:[%s293 + $0x1618] sm:$0xff]
        %v1096 = vld [vmem:[%s293 + $0x1620] sm:$0xff]
        %v1097 = vld [vmem:[%s293 + $0x1628] sm:$0xff]
        %v1098 = vld [vmem:[%s293 + $0x1630] sm:$0xff]
        %v1099 = vld [vmem:[%s293 + $0x1638] sm:$0xff]
        %v1100 = vld [vmem:[%s293 + $0x1640] sm:$0xff]
        %v1101 = vld [vmem:[%s293 + $0x1648] sm:$0xff]
        %v1102 = vld [vmem:[%s293 + $0x1650] sm:$0xff]
        %v1103 = vld [vmem:[%s293 + $0x1658] sm:$0xff]
        %v1104 = vld [vmem:[%s293 + $0x1660] sm:$0xff]
        %v1105 = vld [vmem:[%s293 + $0x1668] sm:$0xff]
        %v1106 = vld [vmem:[%s293 + $0x1670] sm:$0xff]
        %v1107 = vld [vmem:[%s293 + $0x1678] sm:$0xff]
        %v1108 = vld [vmem:[%s293 + $0x1680] sm:$0xff]
        %v1109 = vld [vmem:[%s293 + $0x1688] sm:$0xff]
        %v1110 = vld [vmem:[%s293 + $0x1690] sm:$0xff]
        %v1111 = vld [vmem:[%s293 + $0x1698] sm:$0xff]
        %v1112 = vld [vmem:[%s293 + $0x16a0] sm:$0xff]
        %v1113 = vld [vmem:[%s293 + $0x16a8] sm:$0xff]
        %v1114 = vld [vmem:[%s293 + $0x16b0] sm:$0xff]
        %v1115 = vld [vmem:[%s293 + $0x16b8] sm:$0xff]
        %v1116 = vld [vmem:[%s293 + $0x16c0] sm:$0xff]
        %v1117 = vld [vmem:[%s293 + $0x16c8] sm:$0xff]
        %v1118 = vld [vmem:[%s293 + $0x16d0] sm:$0xff]
        %v1119 = vld [vmem:[%s293 + $0x16d8] sm:$0xff]
        %v1120 = vld [vmem:[%s293 + $0x16e0] sm:$0xff]
        %v1121 = vld [vmem:[%s293 + $0x16e8] sm:$0xff]
        %v1122 = vld [vmem:[%s293 + $0x16f0] sm:$0xff]
        %v1123 = vld [vmem:[%s293 + $0x16f8] sm:$0xff]
        %v1124 = vld [vmem:[%s293 + $0x1700] sm:$0xff]
        %v1125 = vld [vmem:[%s293 + $0x1708] sm:$0xff]
        %v1126 = vld [vmem:[%s293 + $0x1710] sm:$0xff]
        %v1127 = vld [vmem:[%s293 + $0x1718] sm:$0xff]
        %v1128 = vld [vmem:[%s293 + $0x1720] sm:$0xff]
        %v1129 = vld [vmem:[%s293 + $0x1728] sm:$0xff]
        %v1130 = vld [vmem:[%s293 + $0x1730] sm:$0xff]
        %v1131 = vld [vmem:[%s293 + $0x1738] sm:$0xff]
        %v1132 = vld [vmem:[%s293 + $0x1740] sm:$0xff]
        %v1133 = vld [vmem:[%s293 + $0x1748] sm:$0xff]
        %v1134 = vld [vmem:[%s293 + $0x1750] sm:$0xff]
        %v1135 = vld [vmem:[%s293 + $0x1758] sm:$0xff]
        %v1136 = vld [vmem:[%s293 + $0x1760] sm:$0xff]
        %v1137 = vld [vmem:[%s293 + $0x1768] sm:$0xff]
        %v1138 = vld [vmem:[%s293 + $0x1770] sm:$0xff]
        %v1139 = vld [vmem:[%s293 + $0x1778] sm:$0xff]
        %v1140 = vld [vmem:[%s293 + $0x1780] sm:$0xff]
        %v1141 = vld [vmem:[%s293 + $0x1788] sm:$0xff]
        %v1142 = vld [vmem:[%s293 + $0x1790] sm:$0xff]
        %v1143 = vld [vmem:[%s293 + $0x1798] sm:$0xff]
        %v1144 = vld [vmem:[%s293 + $0x17a0] sm:$0xff]
        %v1145 = vld [vmem:[%s293 + $0x17a8] sm:$0xff]
        %v1146 = vld [vmem:[%s293 + $0x17b0] sm:$0xff]
        %v1147 = vld [vmem:[%s293 + $0x17b8] sm:$0xff]
        %v1148 = vld [vmem:[%s293 + $0x17c0] sm:$0xff]
        %v1149 = vld [vmem:[%s293 + $0x17c8] sm:$0xff]
        %v1150 = vld [vmem:[%s293 + $0x17d0] sm:$0xff]
        %v1151 = vld [vmem:[%s293 + $0x17d8] sm:$0xff]
        %v1152 = vld [vmem:[%s293 + $0x17e0] sm:$0xff]
        %v1153 = vld [vmem:[%s293 + $0x17e8] sm:$0xff]
        %v1154 = vld [vmem:[%s293 + $0x17f0] sm:$0xff]
        %v1155 = vld [vmem:[%s293 + $0x17f8] sm:$0xff]
        %v1156 = vld [vmem:[%s293 + $0x1800] sm:$0xff]
        %v1157 = vld [vmem:[%s293 + $0x1808] sm:$0xff]
        %v1158 = vld [vmem:[%s293 + $0x1810] sm:$0xff]
        %v1159 = vld [vmem:[%s293 + $0x1818] sm:$0xff]
        %v1160 = vld [vmem:[%s293 + $0x1820] sm:$0xff]
        %v1161 = vld [vmem:[%s293 + $0x1828] sm:$0xff]
        %v1162 = vld [vmem:[%s293 + $0x1830] sm:$0xff]
        %v1163 = vld [vmem:[%s293 + $0x1838] sm:$0xff]
        %v1164 = vld [vmem:[%s293 + $0x1840] sm:$0xff]
        %v1165 = vld [vmem:[%s293 + $0x1848] sm:$0xff]
        %v1166 = vld [vmem:[%s293 + $0x1850] sm:$0xff]
        %v1167 = vld [vmem:[%s293 + $0x1858] sm:$0xff]
        %v1168 = vld [vmem:[%s293 + $0x1860] sm:$0xff]
        %v1169 = vld [vmem:[%s293 + $0x1868] sm:$0xff]
        %v1170 = vld [vmem:[%s293 + $0x1870] sm:$0xff]
        %v1171 = vld [vmem:[%s293 + $0x1878] sm:$0xff]
        %v1172 = vld [vmem:[%s293 + $0x1880] sm:$0xff]
        %v1173 = vld [vmem:[%s293 + $0x1888] sm:$0xff]
        %v1174 = vld [vmem:[%s293 + $0x1890] sm:$0xff]
        %v1175 = vld [vmem:[%s293 + $0x1898] sm:$0xff]
        %v1176 = vld [vmem:[%s293 + $0x18a0] sm:$0xff]
        %v1177 = vld [vmem:[%s293 + $0x18a8] sm:$0xff]
        %v1178 = vld [vmem:[%s293 + $0x18b0] sm:$0xff]
        %v1179 = vld [vmem:[%s293 + $0x18b8] sm:$0xff]
        %v1180 = vld [vmem:[%s293 + $0x18c0] sm:$0xff]
        %v1181 = vld [vmem:[%s293 + $0x18c8] sm:$0xff]
        %v1182 = vld [vmem:[%s293 + $0x18d0] sm:$0xff]
        %v1183 = vld [vmem:[%s293 + $0x18d8] sm:$0xff]
        %v1184 = vld [vmem:[%s293 + $0x18e0] sm:$0xff]
        %v1185 = vld [vmem:[%s293 + $0x18e8] sm:$0xff]
        %v1186 = vld [vmem:[%s293 + $0x18f0] sm:$0xff]
        %v1187 = vld [vmem:[%s293 + $0x18f8] sm:$0xff]
        %v1188 = vld [vmem:[%s293 + $0x1900] sm:$0xff]
        %v1189 = vld [vmem:[%s293 + $0x1908] sm:$0xff]
        %v1190 = vld [vmem:[%s293 + $0x1910] sm:$0xff]
        %v1191 = vld [vmem:[%s293 + $0x1918] sm:$0xff]
        %v1192 = vld [vmem:[%s293 + $0x1920] sm:$0xff]
        %v1193 = vld [vmem:[%s293 + $0x1928] sm:$0xff]
        %v1194 = vld [vmem:[%s293 + $0x1930] sm:$0xff]
        %v1195 = vld [vmem:[%s293 + $0x1938] sm:$0xff]
        %v1196 = vld [vmem:[%s293 + $0x1940] sm:$0xff]
        %v1197 = vld [vmem:[%s293 + $0x1948] sm:$0xff]
        %v1198 = vld [vmem:[%s293 + $0x1950] sm:$0xff]
        %v1199 = vld [vmem:[%s293 + $0x1958] sm:$0xff]
        %v1200 = vld [vmem:[%s293 + $0x1960] sm:$0xff]
        %v1201 = vld [vmem:[%s293 + $0x1968] sm:$0xff]
        %v1202 = vld [vmem:[%s293 + $0x1970] sm:$0xff]
        %v1203 = vld [vmem:[%s293 + $0x1978] sm:$0xff]
        %v1204 = vld [vmem:[%s293 + $0x1980] sm:$0xff]
        %v1205 = vld [vmem:[%s293 + $0x1988] sm:$0xff]
        %v1206 = vld [vmem:[%s293 + $0x1990] sm:$0xff]
        %v1207 = vld [vmem:[%s293 + $0x1998] sm:$0xff]
        %v1208 = vld [vmem:[%s293 + $0x19a0] sm:$0xff]
        %v1209 = vld [vmem:[%s293 + $0x19a8] sm:$0xff]
        %v1210 = vld [vmem:[%s293 + $0x19b0] sm:$0xff]
        %v1211 = vld [vmem:[%s293 + $0x19b8] sm:$0xff]
        %v1212 = vld [vmem:[%s293 + $0x19c0] sm:$0xff]
        %v1213 = vld [vmem:[%s293 + $0x19c8] sm:$0xff]
        %v1214 = vld [vmem:[%s293 + $0x19d0] sm:$0xff]
        %v1215 = vld [vmem:[%s293 + $0x19d8] sm:$0xff]
        %v1216 = vld [vmem:[%s293 + $0x19e0] sm:$0xff]
        %v1217 = vld [vmem:[%s293 + $0x19e8] sm:$0xff]
        %v1218 = vld [vmem:[%s293 + $0x19f0] sm:$0xff]
        %v1219 = vld [vmem:[%s293 + $0x19f8] sm:$0xff]
        %v1220 = vld [vmem:[%s293 + $0x1a00] sm:$0xff]
        %v1221 = vld [vmem:[%s293 + $0x1a08] sm:$0xff]
        %v1222 = vld [vmem:[%s293 + $0x1a10] sm:$0xff]
        %v1223 = vld [vmem:[%s293 + $0x1a18] sm:$0xff]
        %v1224 = vld [vmem:[%s293 + $0x1a20] sm:$0xff]
        %v1225 = vld [vmem:[%s293 + $0x1a28] sm:$0xff]
        %v1226 = vld [vmem:[%s293 + $0x1a30] sm:$0xff]
        %v1227 = vld [vmem:[%s293 + $0x1a38] sm:$0xff]
        %v1228 = vld [vmem:[%s293 + $0x1a40] sm:$0xff]
        %v1229 = vld [vmem:[%s293 + $0x1a48] sm:$0xff]
        %v1230 = vld [vmem:[%s293 + $0x1a50] sm:$0xff]
        %v1231 = vld [vmem:[%s293 + $0x1a58] sm:$0xff]
        %v1232 = vld [vmem:[%s293 + $0x1a60] sm:$0xff]
        %v1233 = vld [vmem:[%s293 + $0x1a68] sm:$0xff]
        %v1234 = vld [vmem:[%s293 + $0x1a70] sm:$0xff]
        %v1235 = vld [vmem:[%s293 + $0x1a78] sm:$0xff]
        %v1236 = vld [vmem:[%s293 + $0x1a80] sm:$0xff]
        %v1237 = vld [vmem:[%s293 + $0x1a88] sm:$0xff]
        %v1238 = vld [vmem:[%s293 + $0x1a90] sm:$0xff]
        %v1239 = vld [vmem:[%s293 + $0x1a98] sm:$0xff]
        %v1240 = vld [vmem:[%s293 + $0x1aa0] sm:$0xff]
        %v1241 = vld [vmem:[%s293 + $0x1aa8] sm:$0xff]
        %v1242 = vld [vmem:[%s293 + $0x1ab0] sm:$0xff]
        %v1243 = vld [vmem:[%s293 + $0x1ab8] sm:$0xff]
        %v1244 = vld [vmem:[%s293 + $0x1ac0] sm:$0xff]
        %v1245 = vld [vmem:[%s293 + $0x1ac8] sm:$0xff]
        %v1246 = vld [vmem:[%s293 + $0x1ad0] sm:$0xff]
        %v1247 = vld [vmem:[%s293 + $0x1ad8] sm:$0xff]
        %v1248 = vld [vmem:[%s293 + $0x1ae0] sm:$0xff]
        %v1249 = vld [vmem:[%s293 + $0x1ae8] sm:$0xff]
        %v1250 = vld [vmem:[%s293 + $0x1af0] sm:$0xff]
        %v1251 = vld [vmem:[%s293 + $0x1af8] sm:$0xff]
        %v1252 = vld [vmem:[%s293 + $0x1b00] sm:$0xff]
        %v1253 = vld [vmem:[%s293 + $0x1b08] sm:$0xff]
        %v1254 = vld [vmem:[%s293 + $0x1b10] sm:$0xff]
        %v1255 = vld [vmem:[%s293 + $0x1b18] sm:$0xff]
        %v1256 = vld [vmem:[%s293 + $0x1b20] sm:$0xff]
        %v1257 = vld [vmem:[%s293 + $0x1b28] sm:$0xff]
        %v1258 = vld [vmem:[%s293 + $0x1b30] sm:$0xff]
        %v1259 = vld [vmem:[%s293 + $0x1b38] sm:$0xff]
        %v1260 = vld [vmem:[%s293 + $0x1b40] sm:$0xff]
        %v1261 = vld [vmem:[%s293 + $0x1b48] sm:$0xff]
        %v1262 = vld [vmem:[%s293 + $0x1b50] sm:$0xff]
        %v1263 = vld [vmem:[%s293 + $0x1b58] sm:$0xff]
        %v1264 = vld [vmem:[%s293 + $0x1b60] sm:$0xff]
        %v1265 = vld [vmem:[%s293 + $0x1b68] sm:$0xff]
        %v1266 = vld [vmem:[%s293 + $0x1b70] sm:$0xff]
        %v1267 = vld [vmem:[%s293 + $0x1b78] sm:$0xff]
        %v1268 = vld [vmem:[%s293 + $0x1b80] sm:$0xff]
        %v1269 = vld [vmem:[%s293 + $0x1b88] sm:$0xff]
        %v1270 = vld [vmem:[%s293 + $0x1b90] sm:$0xff]
        %v1271 = vld [vmem:[%s293 + $0x1b98] sm:$0xff]
        %v1272 = vld [vmem:[%s293 + $0x1ba0] sm:$0xff]
        %v1273 = vld [vmem:[%s293 + $0x1ba8] sm:$0xff]
        %v1274 = vld [vmem:[%s293 + $0x1bb0] sm:$0xff]
        %v1275 = vld [vmem:[%s293 + $0x1bb8] sm:$0xff]
        %v1276 = vld [vmem:[%s293 + $0x1bc0] sm:$0xff]
        %v1277 = vld [vmem:[%s293 + $0x1bc8] sm:$0xff]
        %v1278 = vld [vmem:[%s293 + $0x1bd0] sm:$0xff]
        %v1279 = vld [vmem:[%s293 + $0x1bd8] sm:$0xff]
        %v1280 = vld [vmem:[%s293 + $0x1be0] sm:$0xff]
        %v1281 = vld [vmem:[%s293 + $0x1be8] sm:$0xff]
        %v1282 = vld [vmem:[%s293 + $0x1bf0] sm:$0xff]
        %v1283 = vld [vmem:[%s293 + $0x1bf8] sm:$0xff]
        %v1284 = vld [vmem:[%s293 + $0x1c00] sm:$0xff]
        %v1285 = vld [vmem:[%s293 + $0x1c08] sm:$0xff]
        %v1286 = vld [vmem:[%s293 + $0x1c10] sm:$0xff]
        %v1287 = vld [vmem:[%s293 + $0x1c18] sm:$0xff]
        %v1288 = vld [vmem:[%s293 + $0x1c20] sm:$0xff]
        %v1289 = vld [vmem:[%s293 + $0x1c28] sm:$0xff]
        %v1290 = vld [vmem:[%s293 + $0x1c30] sm:$0xff]
        %v1291 = vld [vmem:[%s293 + $0x1c38] sm:$0xff]
        %v1292 = vld [vmem:[%s293 + $0x1c40] sm:$0xff]
        %v1293 = vld [vmem:[%s293 + $0x1c48] sm:$0xff]
        %v1294 = vld [vmem:[%s293 + $0x1c50] sm:$0xff]
        %v1295 = vld [vmem:[%s293 + $0x1c58] sm:$0xff]
        %v1296 = vld [vmem:[%s293 + $0x1c60] sm:$0xff]
        %v1297 = vld [vmem:[%s293 + $0x1c68] sm:$0xff]
        %v1298 = vld [vmem:[%s293 + $0x1c70] sm:$0xff]
        %v1299 = vld [vmem:[%s293 + $0x1c78] sm:$0xff]
        %v1300 = vld [vmem:[%s293 + $0x1c80] sm:$0xff]
        %v1301 = vld [vmem:[%s293 + $0x1c88] sm:$0xff]
        %v1302 = vld [vmem:[%s293 + $0x1c90] sm:$0xff]
        %v1303 = vld [vmem:[%s293 + $0x1c98] sm:$0xff]
        %v1304 = vld [vmem:[%s293 + $0x1ca0] sm:$0xff]
        %v1305 = vld [vmem:[%s293 + $0x1ca8] sm:$0xff]
        %v1306 = vld [vmem:[%s293 + $0x1cb0] sm:$0xff]
        %v1307 = vld [vmem:[%s293 + $0x1cb8] sm:$0xff]
        %v1308 = vld [vmem:[%s293 + $0x1cc0] sm:$0xff]
        %v1309 = vld [vmem:[%s293 + $0x1cc8] sm:$0xff]
        %v1310 = vld [vmem:[%s293 + $0x1cd0] sm:$0xff]
        %v1311 = vld [vmem:[%s293 + $0x1cd8] sm:$0xff]
        %v1312 = vld [vmem:[%s293 + $0x1ce0] sm:$0xff]
        %v1313 = vld [vmem:[%s293 + $0x1ce8] sm:$0xff]
        %v1314 = vld [vmem:[%s293 + $0x1cf0] sm:$0xff]
        %v1315 = vld [vmem:[%s293 + $0x1cf8] sm:$0xff]
        %v1316 = vld [vmem:[%s293 + $0x1d00] sm:$0xff]
        %v1317 = vld [vmem:[%s293 + $0x1d08] sm:$0xff]
        %v1318 = vld [vmem:[%s293 + $0x1d10] sm:$0xff]
        %v1319 = vld [vmem:[%s293 + $0x1d18] sm:$0xff]
        %v1320 = vld [vmem:[%s293 + $0x1d20] sm:$0xff]
        %v1321 = vld [vmem:[%s293 + $0x1d28] sm:$0xff]
        %v1322 = vld [vmem:[%s293 + $0x1d30] sm:$0xff]
        %v1323 = vld [vmem:[%s293 + $0x1d38] sm:$0xff]
        %v1324 = vld [vmem:[%s293 + $0x1d40] sm:$0xff]
        %v1325 = vld [vmem:[%s293 + $0x1d48] sm:$0xff]
        %v1326 = vld [vmem:[%s293 + $0x1d50] sm:$0xff]
        %v1327 = vld [vmem:[%s293 + $0x1d58] sm:$0xff]
        %v1328 = vld [vmem:[%s293 + $0x1d60] sm:$0xff]
        %v1329 = vld [vmem:[%s293 + $0x1d68] sm:$0xff]
        %v1330 = vld [vmem:[%s293 + $0x1d70] sm:$0xff]
        %v1331 = vld [vmem:[%s293 + $0x1d78] sm:$0xff]
        %v1332 = vld [vmem:[%s293 + $0x1d80] sm:$0xff]
        %v1333 = vld [vmem:[%s293 + $0x1d88] sm:$0xff]
        %v1334 = vld [vmem:[%s293 + $0x1d90] sm:$0xff]
        %v1335 = vld [vmem:[%s293 + $0x1d98] sm:$0xff]
        %v1336 = vld [vmem:[%s293 + $0x1da0] sm:$0xff]
        %v1337 = vld [vmem:[%s293 + $0x1da8] sm:$0xff]
        %v1338 = vld [vmem:[%s293 + $0x1db0] sm:$0xff]
        %v1339 = vld [vmem:[%s293 + $0x1db8] sm:$0xff]
        %v1340 = vld [vmem:[%s293 + $0x1dc0] sm:$0xff]
        %v1341 = vld [vmem:[%s293 + $0x1dc8] sm:$0xff]
        %v1342 = vld [vmem:[%s293 + $0x1dd0] sm:$0xff]
        %v1343 = vld [vmem:[%s293 + $0x1dd8] sm:$0xff]
        %v1344 = vld [vmem:[%s293 + $0x1de0] sm:$0xff]
        %v1345 = vld [vmem:[%s293 + $0x1de8] sm:$0xff]
        %v1346 = vld [vmem:[%s293 + $0x1df0] sm:$0xff]
        %v1347 = vld [vmem:[%s293 + $0x1df8] sm:$0xff]
        %v1348 = vld [vmem:[%s293 + $0x1e00] sm:$0xff]
        %v1349 = vld [vmem:[%s293 + $0x1e08] sm:$0xff]
        %v1350 = vld [vmem:[%s293 + $0x1e10] sm:$0xff]
        %v1351 = vld [vmem:[%s293 + $0x1e18] sm:$0xff]
        %v1352 = vld [vmem:[%s293 + $0x1e20] sm:$0xff]
        %v1353 = vld [vmem:[%s293 + $0x1e28] sm:$0xff]
        %v1354 = vld [vmem:[%s293 + $0x1e30] sm:$0xff]
        %v1355 = vld [vmem:[%s293 + $0x1e38] sm:$0xff]
        %v1356 = vld [vmem:[%s293 + $0x1e40] sm:$0xff]
        %v1357 = vld [vmem:[%s293 + $0x1e48] sm:$0xff]
        %v1358 = vld [vmem:[%s293 + $0x1e50] sm:$0xff]
        %v1359 = vld [vmem:[%s293 + $0x1e58] sm:$0xff]
        %v1360 = vld [vmem:[%s293 + $0x1e60] sm:$0xff]
        %v1361 = vld [vmem:[%s293 + $0x1e68] sm:$0xff]
        %v1362 = vld [vmem:[%s293 + $0x1e70] sm:$0xff]
        %v1363 = vld [vmem:[%s293 + $0x1e78] sm:$0xff]
        %v1364 = vld [vmem:[%s293 + $0x1e80] sm:$0xff]
        %v1365 = vld [vmem:[%s293 + $0x1e88] sm:$0xff]
        %v1366 = vld [vmem:[%s293 + $0x1e90] sm:$0xff]
        %v1367 = vld [vmem:[%s293 + $0x1e98] sm:$0xff]
        %v1368 = vld [vmem:[%s293 + $0x1ea0] sm:$0xff]
        %v1369 = vld [vmem:[%s293 + $0x1ea8] sm:$0xff]
        %v1370 = vld [vmem:[%s293 + $0x1eb0] sm:$0xff]
        %v1371 = vld [vmem:[%s293 + $0x1eb8] sm:$0xff]
        %v1372 = vld [vmem:[%s293 + $0x1ec0] sm:$0xff]
        %v1373 = vld [vmem:[%s293 + $0x1ec8] sm:$0xff]
        %v1374 = vld [vmem:[%s293 + $0x1ed0] sm:$0xff]
        %v1375 = vld [vmem:[%s293 + $0x1ed8] sm:$0xff]
        %v1376 = vld [vmem:[%s293 + $0x1ee0] sm:$0xff]
        %v1377 = vld [vmem:[%s293 + $0x1ee8] sm:$0xff]
        %v1378 = vld [vmem:[%s293 + $0x1ef0] sm:$0xff]
        %v1379 = vld [vmem:[%s293 + $0x1ef8] sm:$0xff]
        %v1380 = vld [vmem:[%s293 + $0x1f00] sm:$0xff]
        %v1381 = vld [vmem:[%s293 + $0x1f08] sm:$0xff]
        %v1382 = vld [vmem:[%s293 + $0x1f10] sm:$0xff]
        %v1383 = vld [vmem:[%s293 + $0x1f18] sm:$0xff]
        %v1384 = vld [vmem:[%s293 + $0x1f20] sm:$0xff]
        %v1385 = vld [vmem:[%s293 + $0x1f28] sm:$0xff]
        %v1386 = vld [vmem:[%s293 + $0x1f30] sm:$0xff]
        %v1387 = vld [vmem:[%s293 + $0x1f38] sm:$0xff]
        %v1388 = vld [vmem:[%s293 + $0x1f40] sm:$0xff]
        %v1389 = vld [vmem:[%s293 + $0x1f48] sm:$0xff]
        %v1390 = vld [vmem:[%s293 + $0x1f50] sm:$0xff]
        %v1391 = vld [vmem:[%s293 + $0x1f58] sm:$0xff]
        %v1392 = vld [vmem:[%s293 + $0x1f60] sm:$0xff]
        %v1393 = vld [vmem:[%s293 + $0x1f68] sm:$0xff]
        %v1394 = vld [vmem:[%s293 + $0x1f70] sm:$0xff]
        %v1395 = vld [vmem:[%s293 + $0x1f78] sm:$0xff]
        %v1396 = vld [vmem:[%s293 + $0x1f80] sm:$0xff]
        %v1397 = vld [vmem:[%s293 + $0x1f88] sm:$0xff]
        %v1398 = vld [vmem:[%s293 + $0x1f90] sm:$0xff]
        %v1399 = vld [vmem:[%s293 + $0x1f98] sm:$0xff]
        %v1400 = vld [vmem:[%s293 + $0x1fa0] sm:$0xff]
        %v1401 = vld [vmem:[%s293 + $0x1fa8] sm:$0xff]
        %v1402 = vld [vmem:[%s293 + $0x1fb0] sm:$0xff]
        %v1403 = vld [vmem:[%s293 + $0x1fb8] sm:$0xff]
        %v1404 = vld [vmem:[%s293 + $0x1fc0] sm:$0xff]
        %v1405 = vld [vmem:[%s293 + $0x1fc8] sm:$0xff]
        %v1406 = vld [vmem:[%s293 + $0x1fd0] sm:$0xff]
        %v1407 = vld [vmem:[%s293 + $0x1fd8] sm:$0xff]
        %v1408 = vld [vmem:[%s293 + $0x1fe0] sm:$0xff]
        %v1409 = vld [vmem:[%s293 + $0x1fe8] sm:$0xff]
        %v1410 = vld [vmem:[%s293 + $0x1ff0] sm:$0xff]
        %v1411 = vld [vmem:[%s293 + $0x1ff8] sm:$0xff]
        %v1412 = vld [vmem:[%s293 + $0x2000] sm:$0xff]
        %v1413 = vld [vmem:[%s293 + $0x2008] sm:$0xff]
        %v1414 = vld [vmem:[%s293 + $0x2010] sm:$0xff]
        %v1415 = vld [vmem:[%s293 + $0x2018] sm:$0xff]
        %v1416 = vld [vmem:[%s293 + $0x2020] sm:$0xff]
        %v1417 = vld [vmem:[%s293 + $0x2028] sm:$0xff]
        %v1418 = vld [vmem:[%s293 + $0x2030] sm:$0xff]
        %v1419 = vld [vmem:[%s293 + $0x2038] sm:$0xff]
        %v1420 = vld [vmem:[%s293 + $0x2040] sm:$0xff]
        %v1421 = vld [vmem:[%s293 + $0x2048] sm:$0xff]
        %v1422 = vld [vmem:[%s293 + $0x2050] sm:$0xff]
        %v1423 = vld [vmem:[%s293 + $0x2058] sm:$0xff]
        %v1424 = vld [vmem:[%s293 + $0x2060] sm:$0xff]
        %v1425 = vld [vmem:[%s293 + $0x2068] sm:$0xff]
        %v1426 = vld [vmem:[%s293 + $0x2070] sm:$0xff]
        %v1427 = vld [vmem:[%s293 + $0x2078] sm:$0xff]
        %v1428 = vld [vmem:[%s293 + $0x2080] sm:$0xff]
        %v1429 = vld [vmem:[%s293 + $0x2088] sm:$0xff]
        %v1430 = vld [vmem:[%s293 + $0x2090] sm:$0xff]
        %v1431 = vld [vmem:[%s293 + $0x2098] sm:$0xff]
        %v1432 = vld [vmem:[%s293 + $0x20a0] sm:$0xff]
        %v1433 = vld [vmem:[%s293 + $0x20a8] sm:$0xff]
        %v1434 = vld [vmem:[%s293 + $0x20b0] sm:$0xff]
        %v1435 = vld [vmem:[%s293 + $0x20b8] sm:$0xff]
        %v1436 = vld [vmem:[%s293 + $0x20c0] sm:$0xff]
        %v1437 = vld [vmem:[%s293 + $0x20c8] sm:$0xff]
        %v1438 = vld [vmem:[%s293 + $0x20d0] sm:$0xff]
        %v1439 = vld [vmem:[%s293 + $0x20d8] sm:$0xff]
        %v1440 = vld [vmem:[%s293 + $0x20e0] sm:$0xff]
        %v1441 = vld [vmem:[%s293 + $0x20e8] sm:$0xff]
        %v1442 = vld [vmem:[%s293 + $0x20f0] sm:$0xff]
        %v1443 = vld [vmem:[%s293 + $0x20f8] sm:$0xff]
        %v1444 = vld [vmem:[%s293 + $0x2100] sm:$0xff]
        %v1445 = vld [vmem:[%s293 + $0x2108] sm:$0xff]
        %v1446 = vld [vmem:[%s293 + $0x2110] sm:$0xff]
        %v1447 = vld [vmem:[%s293 + $0x2118] sm:$0xff]
        %v1448 = vld [vmem:[%s293 + $0x2120] sm:$0xff]
        %v1449 = vld [vmem:[%s293 + $0x2128] sm:$0xff]
        %v1450 = vld [vmem:[%s293 + $0x2130] sm:$0xff]
        %v1451 = vld [vmem:[%s293 + $0x2138] sm:$0xff]
        %v1452 = vld [vmem:[%s293 + $0x2140] sm:$0xff]
        %v1453 = vld [vmem:[%s293 + $0x2148] sm:$0xff]
        %v1454 = vld [vmem:[%s293 + $0x2150] sm:$0xff]
        %v1455 = vld [vmem:[%s293 + $0x2158] sm:$0xff]
        %v1456 = vld [vmem:[%s293 + $0x2160] sm:$0xff]
        %v1457 = vld [vmem:[%s293 + $0x2168] sm:$0xff]
        %v1458 = vld [vmem:[%s293 + $0x2170] sm:$0xff]
        %v1459 = vld [vmem:[%s293 + $0x2178] sm:$0xff]
        %v1460 = vld [vmem:[%s293 + $0x2180] sm:$0xff]
        %v1461 = vld [vmem:[%s293 + $0x2188] sm:$0xff]
        %v1462 = vld [vmem:[%s293 + $0x2190] sm:$0xff]
        %v1463 = vld [vmem:[%s293 + $0x2198] sm:$0xff]
        %v1464 = vld [vmem:[%s293 + $0x21a0] sm:$0xff]
        %v1465 = vld [vmem:[%s293 + $0x21a8] sm:$0xff]
        %v1466 = vld [vmem:[%s293 + $0x21b0] sm:$0xff]
        %v1467 = vld [vmem:[%s293 + $0x21b8] sm:$0xff]
        %v1468 = vld [vmem:[%s293 + $0x21c0] sm:$0xff]
        %v1469 = vld [vmem:[%s293 + $0x21c8] sm:$0xff]
        %v1470 = vld [vmem:[%s293 + $0x21d0] sm:$0xff]
        %v1471 = vld [vmem:[%s293 + $0x21d8] sm:$0xff]
        %v1472 = vld [vmem:[%s293 + $0x21e0] sm:$0xff]
        %v1473 = vld [vmem:[%s293 + $0x21e8] sm:$0xff]
        %v1474 = vld [vmem:[%s293 + $0x21f0] sm:$0xff]
        %v1475 = vld [vmem:[%s293 + $0x21f8] sm:$0xff]
        %v1476 = vld [vmem:[%s293 + $0x2200] sm:$0xff]
        %v1477 = vld [vmem:[%s293 + $0x2208] sm:$0xff]
        %v1478 = vld [vmem:[%s293 + $0x2210] sm:$0xff]
        %v1479 = vld [vmem:[%s293 + $0x2218] sm:$0xff]
        %v1480 = vld [vmem:[%s293 + $0x2220] sm:$0xff]
        %v1481 = vld [vmem:[%s293 + $0x2228] sm:$0xff]
        %v1482 = vld [vmem:[%s293 + $0x2230] sm:$0xff]
        %v1483 = vld [vmem:[%s293 + $0x2238] sm:$0xff]
        %v1484 = vld [vmem:[%s293 + $0x2240] sm:$0xff]
        %v1485 = vld [vmem:[%s293 + $0x2248] sm:$0xff]
        %v1486 = vld [vmem:[%s293 + $0x2250] sm:$0xff]
        %v1487 = vld [vmem:[%s293 + $0x2258] sm:$0xff]
        %v1488 = vld [vmem:[%s293 + $0x2260] sm:$0xff]
        %v1489 = vld [vmem:[%s293 + $0x2268] sm:$0xff]
        %v1490 = vld [vmem:[%s293 + $0x2270] sm:$0xff]
        %v1491 = vld [vmem:[%s293 + $0x2278] sm:$0xff]
        %v1492 = vld [vmem:[%s293 + $0x2280] sm:$0xff]
        %v1493 = vld [vmem:[%s293 + $0x2288] sm:$0xff]
        %v1494 = vld [vmem:[%s293 + $0x2290] sm:$0xff]
        %v1495 = vld [vmem:[%s293 + $0x2298] sm:$0xff]
        %v1496 = vld [vmem:[%s293 + $0x22a0] sm:$0xff]
        %v1497 = vld [vmem:[%s293 + $0x22a8] sm:$0xff]
        %v1498 = vld [vmem:[%s293 + $0x22b0] sm:$0xff]
        %v1499 = vld [vmem:[%s293 + $0x22b8] sm:$0xff]
        %v1500 = vld [vmem:[%s293 + $0x22c0] sm:$0xff]
        %v1501 = vld [vmem:[%s293 + $0x22c8] sm:$0xff]
        %v1502 = vld [vmem:[%s293 + $0x22d0] sm:$0xff]
        %v1503 = vld [vmem:[%s293 + $0x22d8] sm:$0xff]
        %v1504 = vld [vmem:[%s293 + $0x22e0] sm:$0xff]
        %v1505 = vld [vmem:[%s293 + $0x22e8] sm:$0xff]
        %v1506 = vld [vmem:[%s293 + $0x22f0] sm:$0xff]
        %v1507 = vld [vmem:[%s293 + $0x22f8] sm:$0xff]
        %v1508 = vld [vmem:[%s293 + $0x2300] sm:$0xff]
        %v1509 = vld [vmem:[%s293 + $0x2308] sm:$0xff]
        %v1510 = vld [vmem:[%s293 + $0x2310] sm:$0xff]
        %v1511 = vld [vmem:[%s293 + $0x2318] sm:$0xff]
        %v1512 = vld [vmem:[%s293 + $0x2320] sm:$0xff]
        %v1513 = vld [vmem:[%s293 + $0x2328] sm:$0xff]
        %v1514 = vld [vmem:[%s293 + $0x2330] sm:$0xff]
        %v1515 = vld [vmem:[%s293 + $0x2338] sm:$0xff]
        %v1516 = vld [vmem:[%s293 + $0x2340] sm:$0xff]
        %v1517 = vld [vmem:[%s293 + $0x2348] sm:$0xff]
        %v1518 = vld [vmem:[%s293 + $0x2350] sm:$0xff]
        %v1519 = vld [vmem:[%s293 + $0x2358] sm:$0xff]
        %v1520 = vld [vmem:[%s293 + $0x2360] sm:$0xff]
        %v1521 = vld [vmem:[%s293 + $0x2368] sm:$0xff]
        %v1522 = vld [vmem:[%s293 + $0x2370] sm:$0xff]
        %v1523 = vld [vmem:[%s293 + $0x2378] sm:$0xff]
        %v1524 = vld [vmem:[%s293 + $0x2380] sm:$0xff]
        %v1525 = vld [vmem:[%s293 + $0x2388] sm:$0xff]
        %v1526 = vld [vmem:[%s293 + $0x2390] sm:$0xff]
        %v1527 = vld [vmem:[%s293 + $0x2398] sm:$0xff]
        %v1528 = vld [vmem:[%s293 + $0x23a0] sm:$0xff]
        %v1529 = vld [vmem:[%s293 + $0x23a8] sm:$0xff]
        %v1530 = vld [vmem:[%s293 + $0x23b0] sm:$0xff]
        %v1531 = vld [vmem:[%s293 + $0x23b8] sm:$0xff]
        %v1532 = vld [vmem:[%s293 + $0x23c0] sm:$0xff]
        %v1533 = vld [vmem:[%s293 + $0x23c8] sm:$0xff]
        %v1534 = vld [vmem:[%s293 + $0x23d0] sm:$0xff]
        %v1535 = vld [vmem:[%s293 + $0x23d8] sm:$0xff]
        %v1536 = vld [vmem:[%s293 + $0x23e0] sm:$0xff]
        %v1537 = vld [vmem:[%s293 + $0x23e8] sm:$0xff]
        %v1538 = vld [vmem:[%s293 + $0x23f0] sm:$0xff]
        %v1539 = vld [vmem:[%s293 + $0x23f8] sm:$0xff]
        %v1540 = vld [vmem:[%s293 + $0x2400] sm:$0xff]
        %v1541 = vld [vmem:[%s293 + $0x2408] sm:$0xff]
        %v1542 = vld [vmem:[%s293 + $0x2410] sm:$0xff]
        %v1543 = vld [vmem:[%s293 + $0x2418] sm:$0xff]
        %v1544 = vld [vmem:[%s293 + $0x2420] sm:$0xff]
        %v1545 = vld [vmem:[%s293 + $0x2428] sm:$0xff]
        %v1546 = vld [vmem:[%s293 + $0x2430] sm:$0xff]
        %v1547 = vld [vmem:[%s293 + $0x2438] sm:$0xff]
        %v1548 = vld [vmem:[%s293 + $0x2440] sm:$0xff]
        %v1549 = vld [vmem:[%s293 + $0x2448] sm:$0xff]
        %v1550 = vld [vmem:[%s293 + $0x2450] sm:$0xff]
        %v1551 = vld [vmem:[%s293 + $0x2458] sm:$0xff]
        %v1552 = vld [vmem:[%s293 + $0x2460] sm:$0xff]
        %v1553 = vld [vmem:[%s293 + $0x2468] sm:$0xff]
        %v1554 = vld [vmem:[%s293 + $0x2470] sm:$0xff]
        %v1555 = vld [vmem:[%s293 + $0x2478] sm:$0xff]
        %v1556 = vld [vmem:[%s293 + $0x2480] sm:$0xff]
        %v1557 = vld [vmem:[%s293 + $0x2488] sm:$0xff]
        %v1558 = vld [vmem:[%s293 + $0x2490] sm:$0xff]
        %v1559 = vld [vmem:[%s293 + $0x2498] sm:$0xff]
        %v1560 = vld [vmem:[%s293 + $0x24a0] sm:$0xff]
        %v1561 = vld [vmem:[%s293 + $0x24a8] sm:$0xff]
        %v1562 = vld [vmem:[%s293 + $0x24b0] sm:$0xff]
        %v1563 = vld [vmem:[%s293 + $0x24b8] sm:$0xff]
        %v1564 = vld [vmem:[%s293 + $0x24c0] sm:$0xff]
        %v1565 = vld [vmem:[%s293 + $0x24c8] sm:$0xff]
        %v1566 = vld [vmem:[%s293 + $0x24d0] sm:$0xff]
        %v1567 = vld [vmem:[%s293 + $0x24d8] sm:$0xff]
        %v1568 = vld [vmem:[%s293 + $0x24e0] sm:$0xff]
        %v1569 = vld [vmem:[%s293 + $0x24e8] sm:$0xff]
        %v1570 = vld [vmem:[%s293 + $0x24f0] sm:$0xff]
        %v1571 = vld [vmem:[%s293 + $0x24f8] sm:$0xff]
        %v1572 = vld [vmem:[%s293 + $0x2500] sm:$0xff]
        %v1573 = vld [vmem:[%s293 + $0x2508] sm:$0xff]
        %v1574 = vld [vmem:[%s293 + $0x2510] sm:$0xff]
        %v1575 = vld [vmem:[%s293 + $0x2518] sm:$0xff]
        %v1576 = vld [vmem:[%s293 + $0x2520] sm:$0xff]
        %v1577 = vld [vmem:[%s293 + $0x2528] sm:$0xff]
        %v1578 = vld [vmem:[%s293 + $0x2530] sm:$0xff]
        %v1579 = vld [vmem:[%s293 + $0x2538] sm:$0xff]
        %v1580 = vld [vmem:[%s293 + $0x2540] sm:$0xff]
        %v1581 = vld [vmem:[%s293 + $0x2548] sm:$0xff]
        %v1582 = vld [vmem:[%s293 + $0x2550] sm:$0xff]
        %v1583 = vld [vmem:[%s293 + $0x2558] sm:$0xff]
        %v1584 = vld [vmem:[%s293 + $0x2560] sm:$0xff]
        %v1585 = vld [vmem:[%s293 + $0x2568] sm:$0xff]
        %v1586 = vld [vmem:[%s293 + $0x2570] sm:$0xff]
        %v1587 = vld [vmem:[%s293 + $0x2578] sm:$0xff]
        %v1588 = vld [vmem:[%s293 + $0x2580] sm:$0xff]
        %v1589 = vld [vmem:[%s293 + $0x2588] sm:$0xff]
        %v1590 = vld [vmem:[%s293 + $0x2590] sm:$0xff]
        %v1591 = vld [vmem:[%s293 + $0x2598] sm:$0xff]
        %v1592 = vld [vmem:[%s293 + $0x25a0] sm:$0xff]
        %v1593 = vld [vmem:[%s293 + $0x25a8] sm:$0xff]
        %v1594 = vld [vmem:[%s293 + $0x25b0] sm:$0xff]
        %v1595 = vld [vmem:[%s293 + $0x25b8] sm:$0xff]
        %v1596 = vld [vmem:[%s293 + $0x25c0] sm:$0xff]
        %v1597 = vld [vmem:[%s293 + $0x25c8] sm:$0xff]
        %v1598 = vld [vmem:[%s293 + $0x25d0] sm:$0xff]
        %v1599 = vld [vmem:[%s293 + $0x25d8] sm:$0xff]
        %v1600 = vld [vmem:[%s293 + $0x25e0] sm:$0xff]
        %v1601 = vld [vmem:[%s293 + $0x25e8] sm:$0xff]
        %v1602 = vld [vmem:[%s293 + $0x25f0] sm:$0xff]
        %v1603 = vld [vmem:[%s293 + $0x25f8] sm:$0xff]
        %v1604 = vld [vmem:[%s293 + $0x2600] sm:$0xff]
        %v1605 = vld [vmem:[%s293 + $0x2608] sm:$0xff]
        %v1606 = vld [vmem:[%s293 + $0x2610] sm:$0xff]
        %v1607 = vld [vmem:[%s293 + $0x2618] sm:$0xff]
        %v1608 = vld [vmem:[%s293 + $0x2620] sm:$0xff]
        %v1609 = vld [vmem:[%s293 + $0x2628] sm:$0xff]
        %v1610 = vld [vmem:[%s293 + $0x2630] sm:$0xff]
        %v1611 = vld [vmem:[%s293 + $0x2638] sm:$0xff]
        %v1612 = vld [vmem:[%s293 + $0x2640] sm:$0xff]
        %v1613 = vld [vmem:[%s293 + $0x2648] sm:$0xff]
        %v1614 = vld [vmem:[%s293 + $0x2650] sm:$0xff]
        %v1615 = vld [vmem:[%s293 + $0x2658] sm:$0xff]
        %v1616 = vld [vmem:[%s293 + $0x2660] sm:$0xff]
        %v1617 = vld [vmem:[%s293 + $0x2668] sm:$0xff]
        %v1618 = vld [vmem:[%s293 + $0x2670] sm:$0xff]
        %v1619 = vld [vmem:[%s293 + $0x2678] sm:$0xff]
        %v1620 = vld [vmem:[%s293 + $0x2680] sm:$0xff]
        %v1621 = vld [vmem:[%s293 + $0x2688] sm:$0xff]
        %v1622 = vld [vmem:[%s293 + $0x2690] sm:$0xff]
        %v1623 = vld [vmem:[%s293 + $0x2698] sm:$0xff]
        %v1624 = vld [vmem:[%s293 + $0x26a0] sm:$0xff]
        %v1625 = vld [vmem:[%s293 + $0x26a8] sm:$0xff]
        %v1626 = vld [vmem:[%s293 + $0x26b0] sm:$0xff]
        %v1627 = vld [vmem:[%s293 + $0x26b8] sm:$0xff]
        %v1628 = vld [vmem:[%s293 + $0x26c0] sm:$0xff]
        %v1629 = vld [vmem:[%s293 + $0x26c8] sm:$0xff]
        %v1630 = vld [vmem:[%s293 + $0x26d0] sm:$0xff]
        %v1631 = vld [vmem:[%s293 + $0x26d8] sm:$0xff]
        %v1632 = vld [vmem:[%s293 + $0x26e0] sm:$0xff]
        %v1633 = vld [vmem:[%s293 + $0x26e8] sm:$0xff]
        %v1634 = vld [vmem:[%s293 + $0x26f0] sm:$0xff]
        %v1635 = vld [vmem:[%s293 + $0x26f8] sm:$0xff]
        %v1636 = vld [vmem:[%s293 + $0x2700] sm:$0xff]
        %v1637 = vld [vmem:[%s293 + $0x2708] sm:$0xff]
        %v1638 = vld [vmem:[%s293 + $0x2710] sm:$0xff]
        %v1639 = vld [vmem:[%s293 + $0x2718] sm:$0xff]
        %v1640 = vld [vmem:[%s293 + $0x2720] sm:$0xff]
        %v1641 = vld [vmem:[%s293 + $0x2728] sm:$0xff]
        %v1642 = vld [vmem:[%s293 + $0x2730] sm:$0xff]
        %v1643 = vld [vmem:[%s293 + $0x2738] sm:$0xff]
        %v1644 = vld [vmem:[%s293 + $0x2740] sm:$0xff]
        %v1645 = vld [vmem:[%s293 + $0x2748] sm:$0xff]
        %v1646 = vld [vmem:[%s293 + $0x2750] sm:$0xff]
        %v1647 = vld [vmem:[%s293 + $0x2758] sm:$0xff]
        %v1648 = vld [vmem:[%s293 + $0x2760] sm:$0xff]
        %v1649 = vld [vmem:[%s293 + $0x2768] sm:$0xff]
        %v1650 = vld [vmem:[%s293 + $0x2770] sm:$0xff]
        %v1651 = vld [vmem:[%s293 + $0x2778] sm:$0xff]
        %v1652 = vld [vmem:[%s293 + $0x2780] sm:$0xff]
        %v1653 = vld [vmem:[%s293 + $0x2788] sm:$0xff]
        %v1654 = vld [vmem:[%s293 + $0x2790] sm:$0xff]
        %v1655 = vld [vmem:[%s293 + $0x2798] sm:$0xff]
        %v1656 = vld [vmem:[%s293 + $0x27a0] sm:$0xff]
        %v1657 = vld [vmem:[%s293 + $0x27a8] sm:$0xff]
        %v1658 = vld [vmem:[%s293 + $0x27b0] sm:$0xff]
        %v1659 = vld [vmem:[%s293 + $0x27b8] sm:$0xff]
        %v1660 = vld [vmem:[%s293 + $0x27c0] sm:$0xff]
        %v1661 = vld [vmem:[%s293 + $0x27c8] sm:$0xff]
        %v1662 = vld [vmem:[%s293 + $0x27d0] sm:$0xff]
        %v1663 = vld [vmem:[%s293 + $0x27d8] sm:$0xff]
        %v1664 = vld [vmem:[%s293 + $0x27e0] sm:$0xff]
        %v1665 = vld [vmem:[%s293 + $0x27e8] sm:$0xff]
        %v1666 = vld [vmem:[%s293 + $0x27f0] sm:$0xff]
        %v1667 = vld [vmem:[%s293 + $0x27f8] sm:$0xff]
        %v1668 = vld [vmem:[%s293 + $0x2800] sm:$0xff]
        %v1669 = vld [vmem:[%s293 + $0x2808] sm:$0xff]
        %v1670 = vld [vmem:[%s293 + $0x2810] sm:$0xff]
        %v1671 = vld [vmem:[%s293 + $0x2818] sm:$0xff]
        %v1672 = vld [vmem:[%s293 + $0x2820] sm:$0xff]
        %v1673 = vld [vmem:[%s293 + $0x2828] sm:$0xff]
        %v1674 = vld [vmem:[%s293 + $0x2830] sm:$0xff]
        %v1675 = vld [vmem:[%s293 + $0x2838] sm:$0xff]
        %v1676 = vld [vmem:[%s293 + $0x2840] sm:$0xff]
        %v1677 = vld [vmem:[%s293 + $0x2848] sm:$0xff]
        %v1678 = vld [vmem:[%s293 + $0x2850] sm:$0xff]
        %v1679 = vld [vmem:[%s293 + $0x2858] sm:$0xff]
        %v1680 = vld [vmem:[%s293 + $0x2860] sm:$0xff]
        %v1681 = vld [vmem:[%s293 + $0x2868] sm:$0xff]
        %v1682 = vld [vmem:[%s293 + $0x2870] sm:$0xff]
        %v1683 = vld [vmem:[%s293 + $0x2878] sm:$0xff]
        %v1684 = vld [vmem:[%s293 + $0x2880] sm:$0xff]
        %v1685 = vld [vmem:[%s293 + $0x2888] sm:$0xff]
        %v1686 = vld [vmem:[%s293 + $0x2890] sm:$0xff]
        %v1687 = vld [vmem:[%s293 + $0x2898] sm:$0xff]
        %v1688 = vld [vmem:[%s293 + $0x28a0] sm:$0xff]
        %v1689 = vld [vmem:[%s293 + $0x28a8] sm:$0xff]
        %v1690 = vld [vmem:[%s293 + $0x28b0] sm:$0xff]
        %v1691 = vld [vmem:[%s293 + $0x28b8] sm:$0xff]
        %v1692 = vld [vmem:[%s293 + $0x28c0] sm:$0xff]
        %v1693 = vld [vmem:[%s293 + $0x28c8] sm:$0xff]
        %v1694 = vld [vmem:[%s293 + $0x28d0] sm:$0xff]
        %v1695 = vld [vmem:[%s293 + $0x28d8] sm:$0xff]
        %v1696 = vld [vmem:[%s293 + $0x28e0] sm:$0xff]
        %v1697 = vld [vmem:[%s293 + $0x28e8] sm:$0xff]
        %v1698 = vld [vmem:[%s293 + $0x28f0] sm:$0xff]
        %v1699 = vld [vmem:[%s293 + $0x28f8] sm:$0xff]
        %v1700 = vld [vmem:[%s293 + $0x2900] sm:$0xff]
        %v1701 = vld [vmem:[%s293 + $0x2908] sm:$0xff]
        %v1702 = vld [vmem:[%s293 + $0x2910] sm:$0xff]
        %v1703 = vld [vmem:[%s293 + $0x2918] sm:$0xff]
        %v1704 = vld [vmem:[%s293 + $0x2920] sm:$0xff]
        %v1705 = vld [vmem:[%s293 + $0x2928] sm:$0xff]
        %v1706 = vld [vmem:[%s293 + $0x2930] sm:$0xff]
        %v1707 = vld [vmem:[%s293 + $0x2938] sm:$0xff]
        %v1708 = vld [vmem:[%s293 + $0x2940] sm:$0xff]
        %v1709 = vld [vmem:[%s293 + $0x2948] sm:$0xff]
        %v1710 = vld [vmem:[%s293 + $0x2950] sm:$0xff]
        %v1711 = vld [vmem:[%s293 + $0x2958] sm:$0xff]
        %v1712 = vld [vmem:[%s293 + $0x2960] sm:$0xff]
        %v1713 = vld [vmem:[%s293 + $0x2968] sm:$0xff]
        %v1714 = vld [vmem:[%s293 + $0x2970] sm:$0xff]
        %v1715 = vld [vmem:[%s293 + $0x2978] sm:$0xff]
        %v1716 = vld [vmem:[%s293 + $0x2980] sm:$0xff]
        %v1717 = vld [vmem:[%s293 + $0x2988] sm:$0xff]
        %v1718 = vld [vmem:[%s293 + $0x2990] sm:$0xff]
        %v1719 = vld [vmem:[%s293 + $0x2998] sm:$0xff]
        %v1720 = vld [vmem:[%s293 + $0x29a0] sm:$0xff]
        %v1721 = vld [vmem:[%s293 + $0x29a8] sm:$0xff]
        %v1722 = vld [vmem:[%s293 + $0x29b0] sm:$0xff]
        %v1723 = vld [vmem:[%s293 + $0x29b8] sm:$0xff]
        %v1724 = vld [vmem:[%s293 + $0x29c0] sm:$0xff]
        %v1725 = vld [vmem:[%s293 + $0x29c8] sm:$0xff]
        %v1726 = vld [vmem:[%s293 + $0x29d0] sm:$0xff]
        %v1727 = vld [vmem:[%s293 + $0x29d8] sm:$0xff]
        %v1728 = vld [vmem:[%s293 + $0x29e0] sm:$0xff]
        %v1729 = vld [vmem:[%s293 + $0x29e8] sm:$0xff]
        %v1730 = vld [vmem:[%s293 + $0x29f0] sm:$0xff]
        %v1731 = vld [vmem:[%s293 + $0x29f8] sm:$0xff]
        %v1732 = vld [vmem:[%s293 + $0x2a00] sm:$0xff]
        %v1733 = vld [vmem:[%s293 + $0x2a08] sm:$0xff]
        %v1734 = vld [vmem:[%s293 + $0x2a10] sm:$0xff]
        %v1735 = vld [vmem:[%s293 + $0x2a18] sm:$0xff]
        %v1736 = vld [vmem:[%s293 + $0x2a20] sm:$0xff]
        %v1737 = vld [vmem:[%s293 + $0x2a28] sm:$0xff]
        %v1738 = vld [vmem:[%s293 + $0x2a30] sm:$0xff]
        %v1739 = vld [vmem:[%s293 + $0x2a38] sm:$0xff]
        %v1740 = vld [vmem:[%s293 + $0x2a40] sm:$0xff]
        %v1741 = vld [vmem:[%s293 + $0x2a48] sm:$0xff]
        %v1742 = vld [vmem:[%s293 + $0x2a50] sm:$0xff]
        %v1743 = vld [vmem:[%s293 + $0x2a58] sm:$0xff]
        %v1744 = vld [vmem:[%s293 + $0x2a60] sm:$0xff]
        %v1745 = vld [vmem:[%s293 + $0x2a68] sm:$0xff]
        %v1746 = vld [vmem:[%s293 + $0x2a70] sm:$0xff]
        %v1747 = vld [vmem:[%s293 + $0x2a78] sm:$0xff]
        %v1748 = vld [vmem:[%s293 + $0x2a80] sm:$0xff]
        %v1749 = vld [vmem:[%s293 + $0x2a88] sm:$0xff]
        %v1750 = vld [vmem:[%s293 + $0x2a90] sm:$0xff]
        %v1751 = vld [vmem:[%s293 + $0x2a98] sm:$0xff]
        %v1752 = vld [vmem:[%s293 + $0x2aa0] sm:$0xff]
        %v1753 = vld [vmem:[%s293 + $0x2aa8] sm:$0xff]
        %v1754 = vld [vmem:[%s293 + $0x2ab0] sm:$0xff]
        %v1755 = vld [vmem:[%s293 + $0x2ab8] sm:$0xff]
        %v1756 = vld [vmem:[%s293 + $0x2ac0] sm:$0xff]
        %v1757 = vld [vmem:[%s293 + $0x2ac8] sm:$0xff]
        %v1758 = vld [vmem:[%s293 + $0x2ad0] sm:$0xff]
        %v1759 = vld [vmem:[%s293 + $0x2ad8] sm:$0xff]
        %v1760 = vld [vmem:[%s293 + $0x2ae0] sm:$0xff]
        %v1761 = vld [vmem:[%s293 + $0x2ae8] sm:$0xff]
        %v1762 = vld [vmem:[%s293 + $0x2af0] sm:$0xff]
        %v1763 = vld [vmem:[%s293 + $0x2af8] sm:$0xff]
        %v1764 = vld [vmem:[%s293 + $0x2b00] sm:$0xff]
        %v1765 = vld [vmem:[%s293 + $0x2b08] sm:$0xff]
        %v1766 = vld [vmem:[%s293 + $0x2b10] sm:$0xff]
        %v1767 = vld [vmem:[%s293 + $0x2b18] sm:$0xff]
        %v1768 = vld [vmem:[%s293 + $0x2b20] sm:$0xff]
        %v1769 = vld [vmem:[%s293 + $0x2b28] sm:$0xff]
        %v1770 = vld [vmem:[%s293 + $0x2b30] sm:$0xff]
        %v1771 = vld [vmem:[%s293 + $0x2b38] sm:$0xff]
        %v1772 = vld [vmem:[%s293 + $0x2b40] sm:$0xff]
        %v1773 = vld [vmem:[%s293 + $0x2b48] sm:$0xff]
        %v1774 = vld [vmem:[%s293 + $0x2b50] sm:$0xff]
        %v1775 = vld [vmem:[%s293 + $0x2b58] sm:$0xff]
        %v1776 = vld [vmem:[%s293 + $0x2b60] sm:$0xff]
        %v1777 = vld [vmem:[%s293 + $0x2b68] sm:$0xff]
        %v1778 = vld [vmem:[%s293 + $0x2b70] sm:$0xff]
        %v1779 = vld [vmem:[%s293 + $0x2b78] sm:$0xff]
        %v1780 = vld [vmem:[%s293 + $0x2b80] sm:$0xff]
        %v1781 = vld [vmem:[%s293 + $0x2b88] sm:$0xff]
        %v1782 = vld [vmem:[%s293 + $0x2b90] sm:$0xff]
        %v1783 = vld [vmem:[%s293 + $0x2b98] sm:$0xff]
        %v1784 = vld [vmem:[%s293 + $0x2ba0] sm:$0xff]
        %v1785 = vld [vmem:[%s293 + $0x2ba8] sm:$0xff]
        %v1786 = vld [vmem:[%s293 + $0x2bb0] sm:$0xff]
        %v1787 = vld [vmem:[%s293 + $0x2bb8] sm:$0xff]
        %v1788 = vld [vmem:[%s293 + $0x2bc0] sm:$0xff]
        %v1789 = vld [vmem:[%s293 + $0x2bc8] sm:$0xff]
        %v1790 = vld [vmem:[%s293 + $0x2bd0] sm:$0xff]
        %v1791 = vld [vmem:[%s293 + $0x2bd8] sm:$0xff]
        %v1792 = vld [vmem:[%s293 + $0x2be0] sm:$0xff]
        %v1793 = vld [vmem:[%s293 + $0x2be8] sm:$0xff]
        %v1794 = vld [vmem:[%s293 + $0x2bf0] sm:$0xff]
        %v1795 = vld [vmem:[%s293 + $0x2bf8] sm:$0xff]
        %v1796 = vld [vmem:[%s293 + $0x2c00] sm:$0xff]
        %v1797 = vld [vmem:[%s293 + $0x2c08] sm:$0xff]
        %v1798 = vld [vmem:[%s293 + $0x2c10] sm:$0xff]
        %v1799 = vld [vmem:[%s293 + $0x2c18] sm:$0xff]
        %v1800 = vld [vmem:[%s293 + $0x2c20] sm:$0xff]
        %v1801 = vld [vmem:[%s293 + $0x2c28] sm:$0xff]
        %v1802 = vld [vmem:[%s293 + $0x2c30] sm:$0xff]
        %v1803 = vld [vmem:[%s293 + $0x2c38] sm:$0xff]
        %v1804 = vld [vmem:[%s293 + $0x2c40] sm:$0xff]
        %v1805 = vld [vmem:[%s293 + $0x2c48] sm:$0xff]
        %v1806 = vld [vmem:[%s293 + $0x2c50] sm:$0xff]
        %v1807 = vld [vmem:[%s293 + $0x2c58] sm:$0xff]
        %v1808 = vld [vmem:[%s293 + $0x2c60] sm:$0xff]
        %v1809 = vld [vmem:[%s293 + $0x2c68] sm:$0xff]
        %v1810 = vld [vmem:[%s293 + $0x2c70] sm:$0xff]
        %v1811 = vld [vmem:[%s293 + $0x2c78] sm:$0xff]
        %v1812 = vld [vmem:[%s293 + $0x2c80] sm:$0xff]
        %v1813 = vld [vmem:[%s293 + $0x2c88] sm:$0xff]
        %v1814 = vld [vmem:[%s293 + $0x2c90] sm:$0xff]
        %v1815 = vld [vmem:[%s293 + $0x2c98] sm:$0xff]
        %v1816 = vld [vmem:[%s293 + $0x2ca0] sm:$0xff]
        %v1817 = vld [vmem:[%s293 + $0x2ca8] sm:$0xff]
        %v1818 = vld [vmem:[%s293 + $0x2cb0] sm:$0xff]
        %v1819 = vld [vmem:[%s293 + $0x2cb8] sm:$0xff]
        %v1820 = vld [vmem:[%s293 + $0x2cc0] sm:$0xff]
        %v1821 = vld [vmem:[%s293 + $0x2cc8] sm:$0xff]
        %v1822 = vld [vmem:[%s293 + $0x2cd0] sm:$0xff]
        %v1823 = vld [vmem:[%s293 + $0x2cd8] sm:$0xff]
        %v1824 = vld [vmem:[%s293 + $0x2ce0] sm:$0xff]
        %v1825 = vld [vmem:[%s293 + $0x2ce8] sm:$0xff]
        %v1826 = vld [vmem:[%s293 + $0x2cf0] sm:$0xff]
        %v1827 = vld [vmem:[%s293 + $0x2cf8] sm:$0xff]
        %v1828 = vld [vmem:[%s293 + $0x2d00] sm:$0xff]
        %v1829 = vld [vmem:[%s293 + $0x2d08] sm:$0xff]
        %v1830 = vld [vmem:[%s293 + $0x2d10] sm:$0xff]
        %v1831 = vld [vmem:[%s293 + $0x2d18] sm:$0xff]
        %v1832 = vld [vmem:[%s293 + $0x2d20] sm:$0xff]
        %v1833 = vld [vmem:[%s293 + $0x2d28] sm:$0xff]
        %v1834 = vld [vmem:[%s293 + $0x2d30] sm:$0xff]
        %v1835 = vld [vmem:[%s293 + $0x2d38] sm:$0xff]
        %v1836 = vld [vmem:[%s293 + $0x2d40] sm:$0xff]
        %v1837 = vld [vmem:[%s293 + $0x2d48] sm:$0xff]
        %v1838 = vld [vmem:[%s293 + $0x2d50] sm:$0xff]
        %v1839 = vld [vmem:[%s293 + $0x2d58] sm:$0xff]
        %v1840 = vld [vmem:[%s293 + $0x2d60] sm:$0xff]
        %v1841 = vld [vmem:[%s293 + $0x2d68] sm:$0xff]
        %v1842 = vld [vmem:[%s293 + $0x2d70] sm:$0xff]
        %v1843 = vld [vmem:[%s293 + $0x2d78] sm:$0xff]
        %v1844 = vld [vmem:[%s293 + $0x2d80] sm:$0xff]
        %v1845 = vld [vmem:[%s293 + $0x2d88] sm:$0xff]
        %v1846 = vld [vmem:[%s293 + $0x2d90] sm:$0xff]
        %v1847 = vld [vmem:[%s293 + $0x2d98] sm:$0xff]
        %v1848 = vld [vmem:[%s293 + $0x2da0] sm:$0xff]
        %v1849 = vld [vmem:[%s293 + $0x2da8] sm:$0xff]
        %v1850 = vld [vmem:[%s293 + $0x2db0] sm:$0xff]
        %v1851 = vld [vmem:[%s293 + $0x2db8] sm:$0xff]
        %v1852 = vld [vmem:[%s293 + $0x2dc0] sm:$0xff]
        %v1853 = vld [vmem:[%s293 + $0x2dc8] sm:$0xff]
        %v1854 = vld [vmem:[%s293 + $0x2dd0] sm:$0xff]
        %v1855 = vld [vmem:[%s293 + $0x2dd8] sm:$0xff]
        %v1856 = vld [vmem:[%s293 + $0x2de0] sm:$0xff]
        %v1857 = vld [vmem:[%s293 + $0x2de8] sm:$0xff]
        %v1858 = vld [vmem:[%s293 + $0x2df0] sm:$0xff]
        %v1859 = vld [vmem:[%s293 + $0x2df8] sm:$0xff]
        %v1860 = vld [vmem:[%s293 + $0x2e00] sm:$0xff]
        %v1861 = vld [vmem:[%s293 + $0x2e08] sm:$0xff]
        %v1862 = vld [vmem:[%s293 + $0x2e10] sm:$0xff]
        %v1863 = vld [vmem:[%s293 + $0x2e18] sm:$0xff]
        %v1864 = vld [vmem:[%s293 + $0x2e20] sm:$0xff]
        %v1865 = vld [vmem:[%s293 + $0x2e28] sm:$0xff]
        %v1866 = vld [vmem:[%s293 + $0x2e30] sm:$0xff]
        %v1867 = vld [vmem:[%s293 + $0x2e38] sm:$0xff]
        %v1868 = vld [vmem:[%s293 + $0x2e40] sm:$0xff]
        %v1869 = vld [vmem:[%s293 + $0x2e48] sm:$0xff]
        %v1870 = vld [vmem:[%s293 + $0x2e50] sm:$0xff]
        %v1871 = vld [vmem:[%s293 + $0x2e58] sm:$0xff]
        %v1872 = vld [vmem:[%s293 + $0x2e60] sm:$0xff]
        %v1873 = vld [vmem:[%s293 + $0x2e68] sm:$0xff]
        %v1874 = vld [vmem:[%s293 + $0x2e70] sm:$0xff]
        %v1875 = vld [vmem:[%s293 + $0x2e78] sm:$0xff]
        %v1876 = vld [vmem:[%s293 + $0x2e80] sm:$0xff]
        %v1877 = vld [vmem:[%s293 + $0x2e88] sm:$0xff]
        %v1878 = vld [vmem:[%s293 + $0x2e90] sm:$0xff]
        %v1879 = vld [vmem:[%s293 + $0x2e98] sm:$0xff]
        %v1880 = vld [vmem:[%s293 + $0x2ea0] sm:$0xff]
        %v1881 = vld [vmem:[%s293 + $0x2ea8] sm:$0xff]
        %v1882 = vld [vmem:[%s293 + $0x2eb0] sm:$0xff]
        %v1883 = vld [vmem:[%s293 + $0x2eb8] sm:$0xff]
        %v1884 = vld [vmem:[%s293 + $0x2ec0] sm:$0xff]
        %v1885 = vld [vmem:[%s293 + $0x2ec8] sm:$0xff]
        %v1886 = vld [vmem:[%s293 + $0x2ed0] sm:$0xff]
        %v1887 = vld [vmem:[%s293 + $0x2ed8] sm:$0xff]
        %v1888 = vld [vmem:[%s293 + $0x2ee0] sm:$0xff]
        %v1889 = vld [vmem:[%s293 + $0x2ee8] sm:$0xff]
        %v1890 = vld [vmem:[%s293 + $0x2ef0] sm:$0xff]
        %v1891 = vld [vmem:[%s293 + $0x2ef8] sm:$0xff]
        %v1892 = vld [vmem:[%s293 + $0x2f00] sm:$0xff]
        %v1893 = vld [vmem:[%s293 + $0x2f08] sm:$0xff]
        %v1894 = vld [vmem:[%s293 + $0x2f10] sm:$0xff]
        %v1895 = vld [vmem:[%s293 + $0x2f18] sm:$0xff]
        %v1896 = vld [vmem:[%s293 + $0x2f20] sm:$0xff]
        %v1897 = vld [vmem:[%s293 + $0x2f28] sm:$0xff]
        %v1898 = vld [vmem:[%s293 + $0x2f30] sm:$0xff]
        %v1899 = vld [vmem:[%s293 + $0x2f38] sm:$0xff]
        %v1900 = vld [vmem:[%s293 + $0x2f40] sm:$0xff]
        %v1901 = vld [vmem:[%s293 + $0x2f48] sm:$0xff]
        %v1902 = vld [vmem:[%s293 + $0x2f50] sm:$0xff]
        %v1903 = vld [vmem:[%s293 + $0x2f58] sm:$0xff]
        %v1904 = vld [vmem:[%s293 + $0x2f60] sm:$0xff]
        %v1905 = vld [vmem:[%s293 + $0x2f68] sm:$0xff]
        %v1906 = vld [vmem:[%s293 + $0x2f70] sm:$0xff]
        %v1907 = vld [vmem:[%s293 + $0x2f78] sm:$0xff]
        %v1908 = vld [vmem:[%s293 + $0x2f80] sm:$0xff]
        %v1909 = vld [vmem:[%s293 + $0x2f88] sm:$0xff]
        %v1910 = vld [vmem:[%s293 + $0x2f90] sm:$0xff]
        %v1911 = vld [vmem:[%s293 + $0x2f98] sm:$0xff]
        %v1912 = vld [vmem:[%s293 + $0x2fa0] sm:$0xff]
        %v1913 = vld [vmem:[%s293 + $0x2fa8] sm:$0xff]
        %v1914 = vld [vmem:[%s293 + $0x2fb0] sm:$0xff]
        %v1915 = vld [vmem:[%s293 + $0x2fb8] sm:$0xff]
        %v1916 = vld [vmem:[%s293 + $0x2fc0] sm:$0xff]
        %v1917 = vld [vmem:[%s293 + $0x2fc8] sm:$0xff]
        %v1918 = vld [vmem:[%s293 + $0x2fd0] sm:$0xff]
        %v1919 = vld [vmem:[%s293 + $0x2fd8] sm:$0xff]
        %v1920 = vld [vmem:[%s293 + $0x2fe0] sm:$0xff]
        %v1921 = vld [vmem:[%s293 + $0x2fe8] sm:$0xff]
        %v1922 = vld [vmem:[%s293 + $0x2ff0] sm:$0xff]
        %v1923 = vld [vmem:[%s293 + $0x2ff8] sm:$0xff]
        %v1924 = vld [vmem:[%s293 + $0x3000] sm:$0xff]
        %v1925 = vld [vmem:[%s293 + $0x3008] sm:$0xff]
        %v1926 = vld [vmem:[%s293 + $0x3010] sm:$0xff]
        %v1927 = vld [vmem:[%s293 + $0x3018] sm:$0xff]
        %v1928 = vld [vmem:[%s293 + $0x3020] sm:$0xff]
        %v1929 = vld [vmem:[%s293 + $0x3028] sm:$0xff]
        %v1930 = vld [vmem:[%s293 + $0x3030] sm:$0xff]
        %v1931 = vld [vmem:[%s293 + $0x3038] sm:$0xff]
        %v1932 = vld [vmem:[%s293 + $0x3040] sm:$0xff]
        %v1933 = vld [vmem:[%s293 + $0x3048] sm:$0xff]
        %v1934 = vld [vmem:[%s293 + $0x3050] sm:$0xff]
        %v1935 = vld [vmem:[%s293 + $0x3058] sm:$0xff]
        %v1936 = vld [vmem:[%s293 + $0x3060] sm:$0xff]
        %v1937 = vld [vmem:[%s293 + $0x3068] sm:$0xff]
        %v1938 = vld [vmem:[%s293 + $0x3070] sm:$0xff]
        %v1939 = vld [vmem:[%s293 + $0x3078] sm:$0xff]
        %v1940 = vld [vmem:[%s293 + $0x3080] sm:$0xff]
        %v1941 = vld [vmem:[%s293 + $0x3088] sm:$0xff]
        %v1942 = vld [vmem:[%s293 + $0x3090] sm:$0xff]
        %v1943 = vld [vmem:[%s293 + $0x3098] sm:$0xff]
        %v1944 = vld [vmem:[%s293 + $0x30a0] sm:$0xff]
        %v1945 = vld [vmem:[%s293 + $0x30a8] sm:$0xff]
        %v1946 = vld [vmem:[%s293 + $0x30b0] sm:$0xff]
        %v1947 = vld [vmem:[%s293 + $0x30b8] sm:$0xff]
        %v1948 = vld [vmem:[%s293 + $0x30c0] sm:$0xff]
        %v1949 = vld [vmem:[%s293 + $0x30c8] sm:$0xff]
        %v1950 = vld [vmem:[%s293 + $0x30d0] sm:$0xff]
        %v1951 = vld [vmem:[%s293 + $0x30d8] sm:$0xff]
        %v1952 = vld [vmem:[%s293 + $0x30e0] sm:$0xff]
        %v1953 = vld [vmem:[%s293 + $0x30e8] sm:$0xff]
        %v1954 = vld [vmem:[%s293 + $0x30f0] sm:$0xff]
        %v1955 = vld [vmem:[%s293 + $0x30f8] sm:$0xff]
        %v1956 = vld [vmem:[%s293 + $0x3100] sm:$0xff]
        %v1957 = vld [vmem:[%s293 + $0x3108] sm:$0xff]
        %v1958 = vld [vmem:[%s293 + $0x3110] sm:$0xff]
        %v1959 = vld [vmem:[%s293 + $0x3118] sm:$0xff]
        %v1960 = vld [vmem:[%s293 + $0x3120] sm:$0xff]
        %v1961 = vld [vmem:[%s293 + $0x3128] sm:$0xff]
        %v1962 = vld [vmem:[%s293 + $0x3130] sm:$0xff]
        %v1963 = vld [vmem:[%s293 + $0x3138] sm:$0xff]
        %v1964 = vld [vmem:[%s293 + $0x3140] sm:$0xff]
        %v1965 = vld [vmem:[%s293 + $0x3148] sm:$0xff]
        %v1966 = vld [vmem:[%s293 + $0x3150] sm:$0xff]
        %v1967 = vld [vmem:[%s293 + $0x3158] sm:$0xff]
        %v1968 = vld [vmem:[%s293 + $0x3160] sm:$0xff]
        %v1969 = vld [vmem:[%s293 + $0x3168] sm:$0xff]
        %v1970 = vld [vmem:[%s293 + $0x3170] sm:$0xff]
        %v1971 = vld [vmem:[%s293 + $0x3178] sm:$0xff]
        %v1972 = vld [vmem:[%s293 + $0x3180] sm:$0xff]
        %v1973 = vld [vmem:[%s293 + $0x3188] sm:$0xff]
        %v1974 = vld [vmem:[%s293 + $0x3190] sm:$0xff]
        %v1975 = vld [vmem:[%s293 + $0x3198] sm:$0xff]
        %v1976 = vld [vmem:[%s293 + $0x31a0] sm:$0xff]
        %v1977 = vld [vmem:[%s293 + $0x31a8] sm:$0xff]
        %v1978 = vld [vmem:[%s293 + $0x31b0] sm:$0xff]
        %v1979 = vld [vmem:[%s293 + $0x31b8] sm:$0xff]
        %v1980 = vld [vmem:[%s293 + $0x31c0] sm:$0xff]
        %v1981 = vld [vmem:[%s293 + $0x31c8] sm:$0xff]
        %v1982 = vld [vmem:[%s293 + $0x31d0] sm:$0xff]
        %v1983 = vld [vmem:[%s293 + $0x31d8] sm:$0xff]
        %v1984 = vld [vmem:[%s293 + $0x31e0] sm:$0xff]
        %v1985 = vld [vmem:[%s293 + $0x31e8] sm:$0xff]
        %v1986 = vld [vmem:[%s293 + $0x31f0] sm:$0xff]
        %v1987 = vld [vmem:[%s293 + $0x31f8] sm:$0xff]
        %v1988 = vld [vmem:[%s293 + $0x3200] sm:$0xff]
        %v1989 = vld [vmem:[%s293 + $0x3208] sm:$0xff]
        %v1990 = vld [vmem:[%s293 + $0x3210] sm:$0xff]
        %v1991 = vld [vmem:[%s293 + $0x3218] sm:$0xff]
        %v1992 = vld [vmem:[%s293 + $0x3220] sm:$0xff]
        %v1993 = vld [vmem:[%s293 + $0x3228] sm:$0xff]
        %v1994 = vld [vmem:[%s293 + $0x3230] sm:$0xff]
        %v1995 = vld [vmem:[%s293 + $0x3238] sm:$0xff]
        %v1996 = vld [vmem:[%s293 + $0x3240] sm:$0xff]
        %v1997 = vld [vmem:[%s293 + $0x3248] sm:$0xff]
        %v1998 = vld [vmem:[%s293 + $0x3250] sm:$0xff]
        %v1999 = vld [vmem:[%s293 + $0x3258] sm:$0xff]
        %v2000 = vld [vmem:[%s293 + $0x3260] sm:$0xff]
        %v2001 = vld [vmem:[%s293 + $0x3268] sm:$0xff]
        %v2002 = vld [vmem:[%s293 + $0x3270] sm:$0xff]
        %v2003 = vld [vmem:[%s293 + $0x3278] sm:$0xff]
        %v2004 = vld [vmem:[%s293 + $0x3280] sm:$0xff]
        %v2005 = vld [vmem:[%s293 + $0x3288] sm:$0xff]
        %v2006 = vld [vmem:[%s293 + $0x3290] sm:$0xff]
        %v2007 = vld [vmem:[%s293 + $0x3298] sm:$0xff]
        %v2008 = vld [vmem:[%s293 + $0x32a0] sm:$0xff]
        %v2009 = vld [vmem:[%s293 + $0x32a8] sm:$0xff]
        %v2010 = vld [vmem:[%s293 + $0x32b0] sm:$0xff]
        %v2011 = vld [vmem:[%s293 + $0x32b8] sm:$0xff]
        %v2012 = vld [vmem:[%s293 + $0x32c0] sm:$0xff]
        %v2013 = vld [vmem:[%s293 + $0x32c8] sm:$0xff]
        %v2014 = vld [vmem:[%s293 + $0x32d0] sm:$0xff]
        %v2015 = vld [vmem:[%s293 + $0x32d8] sm:$0xff]
        %v2016 = vld [vmem:[%s293 + $0x32e0] sm:$0xff]
        %v2017 = vld [vmem:[%s293 + $0x32e8] sm:$0xff]
        %v2018 = vld [vmem:[%s293 + $0x32f0] sm:$0xff]
        %v2019 = vld [vmem:[%s293 + $0x32f8] sm:$0xff]
        %v2020 = vld [vmem:[%s293 + $0x3300] sm:$0xff]
        %v2021 = vld [vmem:[%s293 + $0x3308] sm:$0xff]
        %v2022 = vld [vmem:[%s293 + $0x3310] sm:$0xff]
        %v2023 = vld [vmem:[%s293 + $0x3318] sm:$0xff]
        %v2024 = vld [vmem:[%s293 + $0x3320] sm:$0xff]
        %v2025 = vld [vmem:[%s293 + $0x3328] sm:$0xff]
        %v2026 = vld [vmem:[%s293 + $0x3330] sm:$0xff]
        %v2027 = vld [vmem:[%s293 + $0x3338] sm:$0xff]
        %v2028 = vld [vmem:[%s293 + $0x3340] sm:$0xff]
        %v2029 = vld [vmem:[%s293 + $0x3348] sm:$0xff]
        %v2030 = vld [vmem:[%s293 + $0x3350] sm:$0xff]
        %v2031 = vld [vmem:[%s293 + $0x3358] sm:$0xff]
        %v2032 = vld [vmem:[%s293 + $0x3360] sm:$0xff]
        %v2033 = vld [vmem:[%s293 + $0x3368] sm:$0xff]
        %v2034 = vld [vmem:[%s293 + $0x3370] sm:$0xff]
        %v2035 = vld [vmem:[%s293 + $0x3378] sm:$0xff]
        %v2036 = vld [vmem:[%s293 + $0x3380] sm:$0xff]
        %v2037 = vld [vmem:[%s293 + $0x3388] sm:$0xff]
        %v2038 = vld [vmem:[%s293 + $0x3390] sm:$0xff]
        %v2039 = vld [vmem:[%s293 + $0x3398] sm:$0xff]
        %v2040 = vld [vmem:[%s293 + $0x33a0] sm:$0xff]
        %v2041 = vld [vmem:[%s293 + $0x33a8] sm:$0xff]
        %v2042 = vld [vmem:[%s293 + $0x33b0] sm:$0xff]
        %v2043 = vld [vmem:[%s293 + $0x33b8] sm:$0xff]
        %v2044 = vld [vmem:[%s293 + $0x33c0] sm:$0xff]
        %v2045 = vld [vmem:[%s293 + $0x33c8] sm:$0xff]
        %v2046 = vld [vmem:[%s293 + $0x33d0] sm:$0xff]
        %v2047 = vld [vmem:[%s293 + $0x33d8] sm:$0xff]
        %v2048 = vld [vmem:[%s293 + $0x33e0] sm:$0xff]
        %v2049 = vld [vmem:[%s293 + $0x33e8] sm:$0xff]
        %v2050 = vld [vmem:[%s293 + $0x33f0] sm:$0xff]
        %v2051 = vld [vmem:[%s293 + $0x33f8] sm:$0xff]
        %v2052 = vld [vmem:[%s293 + $0x3400] sm:$0xff]
        %v2053 = vld [vmem:[%s293 + $0x3408] sm:$0xff]
        %v2054 = vld [vmem:[%s293 + $0x3410] sm:$0xff]
        %v2055 = vld [vmem:[%s293 + $0x3418] sm:$0xff]
        %v2056 = vld [vmem:[%s293 + $0x3420] sm:$0xff]
        %v2057 = vld [vmem:[%s293 + $0x3428] sm:$0xff]
        %v2058 = vld [vmem:[%s293 + $0x3430] sm:$0xff]
        %v2059 = vld [vmem:[%s293 + $0x3438] sm:$0xff]
        %v2060 = vld [vmem:[%s293 + $0x3440] sm:$0xff]
        %v2061 = vld [vmem:[%s293 + $0x3448] sm:$0xff]
        %v2062 = vld [vmem:[%s293 + $0x3450] sm:$0xff]
        %v2063 = vld [vmem:[%s293 + $0x3458] sm:$0xff]
        %v2064 = vld [vmem:[%s293 + $0x3460] sm:$0xff]
        %v2065 = vld [vmem:[%s293 + $0x3468] sm:$0xff]
        %v2066 = vld [vmem:[%s293 + $0x3470] sm:$0xff]
        %v2067 = vld [vmem:[%s293 + $0x3478] sm:$0xff]
        %v2068 = vld [vmem:[%s293 + $0x3480] sm:$0xff]
        %v2069 = vld [vmem:[%s293 + $0x3488] sm:$0xff]
        %v2070 = vld [vmem:[%s293 + $0x3490] sm:$0xff]
        %v2071 = vld [vmem:[%s293 + $0x3498] sm:$0xff]
        %v2072 = vld [vmem:[%s293 + $0x34a0] sm:$0xff]
        %v2073 = vld [vmem:[%s293 + $0x34a8] sm:$0xff]
        %v2074 = vld [vmem:[%s293 + $0x34b0] sm:$0xff]
        %v2075 = vld [vmem:[%s293 + $0x34b8] sm:$0xff]
        %v2076 = vld [vmem:[%s293 + $0x34c0] sm:$0xff]
        %v2077 = vld [vmem:[%s293 + $0x34c8] sm:$0xff]
        %v2078 = vld [vmem:[%s293 + $0x34d0] sm:$0xff]
        %v2079 = vld [vmem:[%s293 + $0x34d8] sm:$0xff]
        %v2080 = vld [vmem:[%s293 + $0x34e0] sm:$0xff]
        %v2081 = vld [vmem:[%s293 + $0x34e8] sm:$0xff]
        %v2082 = vld [vmem:[%s293 + $0x34f0] sm:$0xff]
        %v2083 = vld [vmem:[%s293 + $0x34f8] sm:$0xff]
        %v2084 = vld [vmem:[%s293 + $0x3500] sm:$0xff]
        %v2085 = vld [vmem:[%s293 + $0x3508] sm:$0xff]
        %v2086 = vld [vmem:[%s293 + $0x3510] sm:$0xff]
        %v2087 = vld [vmem:[%s293 + $0x3518] sm:$0xff]
        %v2088 = vld [vmem:[%s293 + $0x3520] sm:$0xff]
        %v2089 = vld [vmem:[%s293 + $0x3528] sm:$0xff]
        %v2090 = vld [vmem:[%s293 + $0x3530] sm:$0xff]
        %v2091 = vld [vmem:[%s293 + $0x3538] sm:$0xff]
        %v2092 = vld [vmem:[%s293 + $0x3540] sm:$0xff]
        %v2093 = vld [vmem:[%s293 + $0x3548] sm:$0xff]
        %v2094 = vld [vmem:[%s293 + $0x3550] sm:$0xff]
        %v2095 = vld [vmem:[%s293 + $0x3558] sm:$0xff]
        %v2096 = vld [vmem:[%s293 + $0x3560] sm:$0xff]
        %v2097 = vld [vmem:[%s293 + $0x3568] sm:$0xff]
        %v2098 = vld [vmem:[%s293 + $0x3570] sm:$0xff]
        %v2099 = vld [vmem:[%s293 + $0x3578] sm:$0xff]
        %v2100 = vld [vmem:[%s293 + $0x3580] sm:$0xff]
        %v2101 = vld [vmem:[%s293 + $0x3588] sm:$0xff]
        %v2102 = vld [vmem:[%s293 + $0x3590] sm:$0xff]
        %v2103 = vld [vmem:[%s293 + $0x3598] sm:$0xff]
        %v2104 = vld [vmem:[%s293 + $0x35a0] sm:$0xff]
        %v2105 = vld [vmem:[%s293 + $0x35a8] sm:$0xff]
        %v2106 = vld [vmem:[%s293 + $0x35b0] sm:$0xff]
        %v2107 = vld [vmem:[%s293 + $0x35b8] sm:$0xff]
        %v2108 = vld [vmem:[%s293 + $0x35c0] sm:$0xff]
        %v2109 = vld [vmem:[%s293 + $0x35c8] sm:$0xff]
        %v2110 = vld [vmem:[%s293 + $0x35d0] sm:$0xff]
        %v2111 = vld [vmem:[%s293 + $0x35d8] sm:$0xff]
        %v2112 = vld [vmem:[%s293 + $0x35e0] sm:$0xff]
        %v2113 = vld [vmem:[%s293 + $0x35e8] sm:$0xff]
        %v2114 = vld [vmem:[%s293 + $0x35f0] sm:$0xff]
        %v2115 = vld [vmem:[%s293 + $0x35f8] sm:$0xff]
        %v2116 = vld [vmem:[%s293 + $0x3600] sm:$0xff]
        %v2117 = vld [vmem:[%s293 + $0x3608] sm:$0xff]
        %v2118 = vld [vmem:[%s293 + $0x3610] sm:$0xff]
        %v2119 = vld [vmem:[%s293 + $0x3618] sm:$0xff]
        %v2120 = vld [vmem:[%s293 + $0x3620] sm:$0xff]
        %v2121 = vld [vmem:[%s293 + $0x3628] sm:$0xff]
        %v2122 = vld [vmem:[%s293 + $0x3630] sm:$0xff]
        %v2123 = vld [vmem:[%s293 + $0x3638] sm:$0xff]
        %v2124 = vld [vmem:[%s293 + $0x3640] sm:$0xff]
        %v2125 = vld [vmem:[%s293 + $0x3648] sm:$0xff]
        %v2126 = vld [vmem:[%s293 + $0x3650] sm:$0xff]
        %v2127 = vld [vmem:[%s293 + $0x3658] sm:$0xff]
        %v2128 = vld [vmem:[%s293 + $0x3660] sm:$0xff]
        %v2129 = vld [vmem:[%s293 + $0x3668] sm:$0xff]
        %v2130 = vld [vmem:[%s293 + $0x3670] sm:$0xff]
        %v2131 = vld [vmem:[%s293 + $0x3678] sm:$0xff]
        %v2132 = vld [vmem:[%s293 + $0x3680] sm:$0xff]
        %v2133 = vld [vmem:[%s293 + $0x3688] sm:$0xff]
        %v2134 = vld [vmem:[%s293 + $0x3690] sm:$0xff]
        %v2135 = vld [vmem:[%s293 + $0x3698] sm:$0xff]
        %v2136 = vld [vmem:[%s293 + $0x36a0] sm:$0xff]
        %v2137 = vld [vmem:[%s293 + $0x36a8] sm:$0xff]
        %v2138 = vld [vmem:[%s293 + $0x36b0] sm:$0xff]
        %v2139 = vld [vmem:[%s293 + $0x36b8] sm:$0xff]
        %v2140 = vld [vmem:[%s293 + $0x36c0] sm:$0xff]
        %v2141 = vld [vmem:[%s293 + $0x36c8] sm:$0xff]
        %v2142 = vld [vmem:[%s293 + $0x36d0] sm:$0xff]
        %v2143 = vld [vmem:[%s293 + $0x36d8] sm:$0xff]
        %v2144 = vld [vmem:[%s293 + $0x36e0] sm:$0xff]
        %v2145 = vld [vmem:[%s293 + $0x36e8] sm:$0xff]
        %v2146 = vld [vmem:[%s293 + $0x36f0] sm:$0xff]
        %v2147 = vld [vmem:[%s293 + $0x36f8] sm:$0xff]
        %v2148 = vld [vmem:[%s293 + $0x3700] sm:$0xff]
        %v2149 = vld [vmem:[%s293 + $0x3708] sm:$0xff]
        %v2150 = vld [vmem:[%s293 + $0x3710] sm:$0xff]
        %v2151 = vld [vmem:[%s293 + $0x3718] sm:$0xff]
        %v2152 = vld [vmem:[%s293 + $0x3720] sm:$0xff]
        %v2153 = vld [vmem:[%s293 + $0x3728] sm:$0xff]
        %v2154 = vld [vmem:[%s293 + $0x3730] sm:$0xff]
        %v2155 = vld [vmem:[%s293 + $0x3738] sm:$0xff]
        %v2156 = vld [vmem:[%s293 + $0x3740] sm:$0xff]
        %v2157 = vld [vmem:[%s293 + $0x3748] sm:$0xff]
        %v2158 = vld [vmem:[%s293 + $0x3750] sm:$0xff]
        %v2159 = vld [vmem:[%s293 + $0x3758] sm:$0xff]
        %v2160 = vld [vmem:[%s293 + $0x3760] sm:$0xff]
        %v2161 = vld [vmem:[%s293 + $0x3768] sm:$0xff]
        %v2162 = vld [vmem:[%s293 + $0x3770] sm:$0xff]
        %v2163 = vld [vmem:[%s293 + $0x3778] sm:$0xff]
        %v2164 = vld [vmem:[%s293 + $0x3780] sm:$0xff]
        %v2165 = vld [vmem:[%s293 + $0x3788] sm:$0xff]
        %v2166 = vld [vmem:[%s293 + $0x3790] sm:$0xff]
        %v2167 = vld [vmem:[%s293 + $0x3798] sm:$0xff]
        %v2168 = vld [vmem:[%s293 + $0x37a0] sm:$0xff]
        %v2169 = vld [vmem:[%s293 + $0x37a8] sm:$0xff]
        %v2170 = vld [vmem:[%s293 + $0x37b0] sm:$0xff]
        %v2171 = vld [vmem:[%s293 + $0x37b8] sm:$0xff]
        %v2172 = vld [vmem:[%s293 + $0x37c0] sm:$0xff]
        %v2173 = vld [vmem:[%s293 + $0x37c8] sm:$0xff]
        %v2174 = vld [vmem:[%s293 + $0x37d0] sm:$0xff]
        %v2175 = vld [vmem:[%s293 + $0x37d8] sm:$0xff]
        %v2176 = vld [vmem:[%s293 + $0x37e0] sm:$0xff]
        %v2177 = vld [vmem:[%s293 + $0x37e8] sm:$0xff]
        %v2178 = vld [vmem:[%s293 + $0x37f0] sm:$0xff]
        %v2179 = vld [vmem:[%s293 + $0x37f8] sm:$0xff]
        %v2180 = vld [vmem:[%s293 + $0x3800] sm:$0xff]
        %v2181 = vld [vmem:[%s293 + $0x3808] sm:$0xff]
        %v2182 = vld [vmem:[%s293 + $0x3810] sm:$0xff]
        %v2183 = vld [vmem:[%s293 + $0x3818] sm:$0xff]
        %v2184 = vld [vmem:[%s293 + $0x3820] sm:$0xff]
        %v2185 = vld [vmem:[%s293 + $0x3828] sm:$0xff]
        %v2186 = vld [vmem:[%s293 + $0x3830] sm:$0xff]
        %v2187 = vld [vmem:[%s293 + $0x3838] sm:$0xff]
        %v2188 = vld [vmem:[%s293 + $0x3840] sm:$0xff]
        %v2189 = vld [vmem:[%s293 + $0x3848] sm:$0xff]
        %v2190 = vld [vmem:[%s293 + $0x3850] sm:$0xff]
        %v2191 = vld [vmem:[%s293 + $0x3858] sm:$0xff]
        %v2192 = vld [vmem:[%s293 + $0x3860] sm:$0xff]
        %v2193 = vld [vmem:[%s293 + $0x3868] sm:$0xff]
        %v2194 = vld [vmem:[%s293 + $0x3870] sm:$0xff]
        %v2195 = vld [vmem:[%s293 + $0x3878] sm:$0xff]
        %v2196 = vld [vmem:[%s293 + $0x3880] sm:$0xff]
        %v2197 = vld [vmem:[%s293 + $0x3888] sm:$0xff]
        %v2198 = vld [vmem:[%s293 + $0x3890] sm:$0xff]
        %v2199 = vld [vmem:[%s293 + $0x3898] sm:$0xff]
        %v2200 = vld [vmem:[%s293 + $0x38a0] sm:$0xff]
        %v2201 = vld [vmem:[%s293 + $0x38a8] sm:$0xff]
        %v2202 = vld [vmem:[%s293 + $0x38b0] sm:$0xff]
        %v2203 = vld [vmem:[%s293 + $0x38b8] sm:$0xff]
        %v2204 = vld [vmem:[%s293 + $0x38c0] sm:$0xff]
        %v2205 = vld [vmem:[%s293 + $0x38c8] sm:$0xff]
        %v2206 = vld [vmem:[%s293 + $0x38d0] sm:$0xff]
        %v2207 = vld [vmem:[%s293 + $0x38d8] sm:$0xff]
        %v2208 = vld [vmem:[%s293 + $0x38e0] sm:$0xff]
        %v2209 = vld [vmem:[%s293 + $0x38e8] sm:$0xff]
        %v2210 = vld [vmem:[%s293 + $0x38f0] sm:$0xff]
        %v2211 = vld [vmem:[%s293 + $0x38f8] sm:$0xff]
        %v2212 = vld [vmem:[%s293 + $0x3900] sm:$0xff]
        %v2213 = vld [vmem:[%s293 + $0x3908] sm:$0xff]
        %v2214 = vld [vmem:[%s293 + $0x3910] sm:$0xff]
        %v2215 = vld [vmem:[%s293 + $0x3918] sm:$0xff]
        %v2216 = vld [vmem:[%s293 + $0x3920] sm:$0xff]
        %v2217 = vld [vmem:[%s293 + $0x3928] sm:$0xff]
        %v2218 = vld [vmem:[%s293 + $0x3930] sm:$0xff]
        %v2219 = vld [vmem:[%s293 + $0x3938] sm:$0xff]
        %v2220 = vld [vmem:[%s293 + $0x3940] sm:$0xff]
        %v2221 = vld [vmem:[%s293 + $0x3948] sm:$0xff]
        %v2222 = vld [vmem:[%s293 + $0x3950] sm:$0xff]
        %v2223 = vld [vmem:[%s293 + $0x3958] sm:$0xff]
        %v2224 = vld [vmem:[%s293 + $0x3960] sm:$0xff]
        %v2225 = vld [vmem:[%s293 + $0x3968] sm:$0xff]
        %v2226 = vld [vmem:[%s293 + $0x3970] sm:$0xff]
        %v2227 = vld [vmem:[%s293 + $0x3978] sm:$0xff]
        %v2228 = vld [vmem:[%s293 + $0x3980] sm:$0xff]
        %v2229 = vld [vmem:[%s293 + $0x3988] sm:$0xff]
        %v2230 = vld [vmem:[%s293 + $0x3990] sm:$0xff]
        %v2231 = vld [vmem:[%s293 + $0x3998] sm:$0xff]
        %v2232 = vld [vmem:[%s293 + $0x39a0] sm:$0xff]
        %v2233 = vld [vmem:[%s293 + $0x39a8] sm:$0xff]
        %v2234 = vld [vmem:[%s293 + $0x39b0] sm:$0xff]
        %v2235 = vld [vmem:[%s293 + $0x39b8] sm:$0xff]
        %v2236 = vld [vmem:[%s293 + $0x39c0] sm:$0xff]
        %v2237 = vld [vmem:[%s293 + $0x39c8] sm:$0xff]
        %v2238 = vld [vmem:[%s293 + $0x39d0] sm:$0xff]
        %v2239 = vld [vmem:[%s293 + $0x39d8] sm:$0xff]
        %v2240 = vld [vmem:[%s293 + $0x39e0] sm:$0xff]
        %v2241 = vld [vmem:[%s293 + $0x39e8] sm:$0xff]
        %v2242 = vld [vmem:[%s293 + $0x39f0] sm:$0xff]
        %v2243 = vld [vmem:[%s293 + $0x39f8] sm:$0xff]
        %v2244 = vld [vmem:[%s293 + $0x3a00] sm:$0xff]
        %v2245 = vld [vmem:[%s293 + $0x3a08] sm:$0xff]
        %v2246 = vld [vmem:[%s293 + $0x3a10] sm:$0xff]
        %v2247 = vld [vmem:[%s293 + $0x3a18] sm:$0xff]
        %v2248 = vld [vmem:[%s293 + $0x3a20] sm:$0xff]
        %v2249 = vld [vmem:[%s293 + $0x3a28] sm:$0xff]
        %v2250 = vld [vmem:[%s293 + $0x3a30] sm:$0xff]
        %v2251 = vld [vmem:[%s293 + $0x3a38] sm:$0xff]
        %v2252 = vld [vmem:[%s293 + $0x3a40] sm:$0xff]
        %v2253 = vld [vmem:[%s293 + $0x3a48] sm:$0xff]
        %v2254 = vld [vmem:[%s293 + $0x3a50] sm:$0xff]
        %v2255 = vld [vmem:[%s293 + $0x3a58] sm:$0xff]
        %v2256 = vld [vmem:[%s293 + $0x3a60] sm:$0xff]
        %v2257 = vld [vmem:[%s293 + $0x3a68] sm:$0xff]
        %v2258 = vld [vmem:[%s293 + $0x3a70] sm:$0xff]
        %v2259 = vld [vmem:[%s293 + $0x3a78] sm:$0xff]
        %v2260 = vld [vmem:[%s293 + $0x3a80] sm:$0xff]
        %v2261 = vld [vmem:[%s293 + $0x3a88] sm:$0xff]
        %v2262 = vld [vmem:[%s293 + $0x3a90] sm:$0xff]
        %v2263 = vld [vmem:[%s293 + $0x3a98] sm:$0xff]
        %v2264 = vld [vmem:[%s293 + $0x3aa0] sm:$0xff]
        %v2265 = vld [vmem:[%s293 + $0x3aa8] sm:$0xff]
        %v2266 = vld [vmem:[%s293 + $0x3ab0] sm:$0xff]
        %v2267 = vld [vmem:[%s293 + $0x3ab8] sm:$0xff]
        %v2268 = vld [vmem:[%s293 + $0x3ac0] sm:$0xff]
        %v2269 = vld [vmem:[%s293 + $0x3ac8] sm:$0xff]
        %v2270 = vld [vmem:[%s293 + $0x3ad0] sm:$0xff]
        %v2271 = vld [vmem:[%s293 + $0x3ad8] sm:$0xff]
        %v2272 = vld [vmem:[%s293 + $0x3ae0] sm:$0xff]
        %v2273 = vld [vmem:[%s293 + $0x3ae8] sm:$0xff]
        %v2274 = vld [vmem:[%s293 + $0x3af0] sm:$0xff]
        %v2275 = vld [vmem:[%s293 + $0x3af8] sm:$0xff]
        %v2276 = vld [vmem:[%s293 + $0x3b00] sm:$0xff]
        %v2277 = vld [vmem:[%s293 + $0x3b08] sm:$0xff]
        %v2278 = vld [vmem:[%s293 + $0x3b10] sm:$0xff]
        %v2279 = vld [vmem:[%s293 + $0x3b18] sm:$0xff]
        %v2280 = vld [vmem:[%s293 + $0x3b20] sm:$0xff]
        %v2281 = vld [vmem:[%s293 + $0x3b28] sm:$0xff]
        %v2282 = vld [vmem:[%s293 + $0x3b30] sm:$0xff]
        %v2283 = vld [vmem:[%s293 + $0x3b38] sm:$0xff]
        %v2284 = vld [vmem:[%s293 + $0x3b40] sm:$0xff]
        %v2285 = vld [vmem:[%s293 + $0x3b48] sm:$0xff]
        %v2286 = vld [vmem:[%s293 + $0x3b50] sm:$0xff]
        %v2287 = vld [vmem:[%s293 + $0x3b58] sm:$0xff]
        %v2288 = vld [vmem:[%s293 + $0x3b60] sm:$0xff]
        %v2289 = vld [vmem:[%s293 + $0x3b68] sm:$0xff]
        %v2290 = vld [vmem:[%s293 + $0x3b70] sm:$0xff]
        %v2291 = vld [vmem:[%s293 + $0x3b78] sm:$0xff]
        %v2292 = vld [vmem:[%s293 + $0x3b80] sm:$0xff]
        %v2293 = vld [vmem:[%s293 + $0x3b88] sm:$0xff]
        %v2294 = vld [vmem:[%s293 + $0x3b90] sm:$0xff]
        %v2295 = vld [vmem:[%s293 + $0x3b98] sm:$0xff]
        %v2296 = vld [vmem:[%s293 + $0x3ba0] sm:$0xff]
        %v2297 = vld [vmem:[%s293 + $0x3ba8] sm:$0xff]
        %v2298 = vld [vmem:[%s293 + $0x3bb0] sm:$0xff]
        %v2299 = vld [vmem:[%s293 + $0x3bb8] sm:$0xff]
        %v2300 = vld [vmem:[%s293 + $0x3bc0] sm:$0xff]
        %v2301 = vld [vmem:[%s293 + $0x3bc8] sm:$0xff]
        %v2302 = vld [vmem:[%s293 + $0x3bd0] sm:$0xff]
        %v2303 = vld [vmem:[%s293 + $0x3bd8] sm:$0xff]
        %v2304 = vld [vmem:[%s293 + $0x3be0] sm:$0xff]
        %v2305 = vld [vmem:[%s293 + $0x3be8] sm:$0xff]
        %v2306 = vld [vmem:[%s293 + $0x3bf0] sm:$0xff]
        %v2307 = vld [vmem:[%s293 + $0x3bf8] sm:$0xff]
        %v2308 = vld [vmem:[%s293 + $0x3c00] sm:$0xff]
        %v2309 = vld [vmem:[%s293 + $0x3c08] sm:$0xff]
        %v2310 = vld [vmem:[%s293 + $0x3c10] sm:$0xff]
        %v2311 = vld [vmem:[%s293 + $0x3c18] sm:$0xff]
        %v2312 = vld [vmem:[%s293 + $0x3c20] sm:$0xff]
        %v2313 = vld [vmem:[%s293 + $0x3c28] sm:$0xff]
        %v2314 = vld [vmem:[%s293 + $0x3c30] sm:$0xff]
        %v2315 = vld [vmem:[%s293 + $0x3c38] sm:$0xff]
        %v2316 = vld [vmem:[%s293 + $0x3c40] sm:$0xff]
        %v2317 = vld [vmem:[%s293 + $0x3c48] sm:$0xff]
        %v2318 = vld [vmem:[%s293 + $0x3c50] sm:$0xff]
        %v2319 = vld [vmem:[%s293 + $0x3c58] sm:$0xff]
        %v2320 = vld [vmem:[%s293 + $0x3c60] sm:$0xff]
        %v2321 = vld [vmem:[%s293 + $0x3c68] sm:$0xff]
        %v2322 = vld [vmem:[%s293 + $0x3c70] sm:$0xff]
        %v2323 = vld [vmem:[%s293 + $0x3c78] sm:$0xff]
        %v2324 = vld [vmem:[%s293 + $0x3c80] sm:$0xff]
        %v2325 = vld [vmem:[%s293 + $0x3c88] sm:$0xff]
        %v2326 = vld [vmem:[%s293 + $0x3c90] sm:$0xff]
        %v2327 = vld [vmem:[%s293 + $0x3c98] sm:$0xff]
        %v2328 = vld [vmem:[%s293 + $0x3ca0] sm:$0xff]
        %v2329 = vld [vmem:[%s293 + $0x3ca8] sm:$0xff]
        %v2330 = vld [vmem:[%s293 + $0x3cb0] sm:$0xff]
        %v2331 = vld [vmem:[%s293 + $0x3cb8] sm:$0xff]
        %v2332 = vld [vmem:[%s293 + $0x3cc0] sm:$0xff]
        %v2333 = vld [vmem:[%s293 + $0x3cc8] sm:$0xff]
        %v2334 = vld [vmem:[%s293 + $0x3cd0] sm:$0xff]
        %v2335 = vld [vmem:[%s293 + $0x3cd8] sm:$0xff]
        %v2336 = vld [vmem:[%s293 + $0x3ce0] sm:$0xff]
        %v2337 = vld [vmem:[%s293 + $0x3ce8] sm:$0xff]
        %v2338 = vld [vmem:[%s293 + $0x3cf0] sm:$0xff]
        %v2339 = vld [vmem:[%s293 + $0x3cf8] sm:$0xff]
        %v2340 = vld [vmem:[%s293 + $0x3d00] sm:$0xff]
        %v2341 = vld [vmem:[%s293 + $0x3d08] sm:$0xff]
        %v2342 = vld [vmem:[%s293 + $0x3d10] sm:$0xff]
        %v2343 = vld [vmem:[%s293 + $0x3d18] sm:$0xff]
        %v2344 = vld [vmem:[%s293 + $0x3d20] sm:$0xff]
        %v2345 = vld [vmem:[%s293 + $0x3d28] sm:$0xff]
        %v2346 = vld [vmem:[%s293 + $0x3d30] sm:$0xff]
        %v2347 = vld [vmem:[%s293 + $0x3d38] sm:$0xff]
        %v2348 = vld [vmem:[%s293 + $0x3d40] sm:$0xff]
        %v2349 = vld [vmem:[%s293 + $0x3d48] sm:$0xff]
        %v2350 = vld [vmem:[%s293 + $0x3d50] sm:$0xff]
        %v2351 = vld [vmem:[%s293 + $0x3d58] sm:$0xff]
        %v2352 = vld [vmem:[%s293 + $0x3d60] sm:$0xff]
        %v2353 = vld [vmem:[%s293 + $0x3d68] sm:$0xff]
        %v2354 = vld [vmem:[%s293 + $0x3d70] sm:$0xff]
        %v2355 = vld [vmem:[%s293 + $0x3d78] sm:$0xff]
        %v2356 = vld [vmem:[%s293 + $0x3d80] sm:$0xff]
        %v2357 = vld [vmem:[%s293 + $0x3d88] sm:$0xff]
        %v2358 = vld [vmem:[%s293 + $0x3d90] sm:$0xff]
        %v2359 = vld [vmem:[%s293 + $0x3d98] sm:$0xff]
        %v2360 = vld [vmem:[%s293 + $0x3da0] sm:$0xff]
        %v2361 = vld [vmem:[%s293 + $0x3da8] sm:$0xff]
        %v2362 = vld [vmem:[%s293 + $0x3db0] sm:$0xff]
        %v2363 = vld [vmem:[%s293 + $0x3db8] sm:$0xff]
        %v2364 = vld [vmem:[%s293 + $0x3dc0] sm:$0xff]
        %v2365 = vld [vmem:[%s293 + $0x3dc8] sm:$0xff]
        %v2366 = vld [vmem:[%s293 + $0x3dd0] sm:$0xff]
        %v2367 = vld [vmem:[%s293 + $0x3dd8] sm:$0xff]
        %v2368 = vld [vmem:[%s293 + $0x3de0] sm:$0xff]
        %v2369 = vld [vmem:[%s293 + $0x3de8] sm:$0xff]
        %v2370 = vld [vmem:[%s293 + $0x3df0] sm:$0xff]
        %v2371 = vld [vmem:[%s293 + $0x3df8] sm:$0xff]
        %v2372 = vld [vmem:[%s293 + $0x3e00] sm:$0xff]
        %v2373 = vld [vmem:[%s293 + $0x3e08] sm:$0xff]
        %v2374 = vld [vmem:[%s293 + $0x3e10] sm:$0xff]
        %v2375 = vld [vmem:[%s293 + $0x3e18] sm:$0xff]
        %v2376 = vld [vmem:[%s293 + $0x3e20] sm:$0xff]
        %v2377 = vld [vmem:[%s293 + $0x3e28] sm:$0xff]
        %v2378 = vld [vmem:[%s293 + $0x3e30] sm:$0xff]
        %v2379 = vld [vmem:[%s293 + $0x3e38] sm:$0xff]
        %v2380 = vld [vmem:[%s293 + $0x3e40] sm:$0xff]
        %v2381 = vld [vmem:[%s293 + $0x3e48] sm:$0xff]
        %v2382 = vld [vmem:[%s293 + $0x3e50] sm:$0xff]
        %v2383 = vld [vmem:[%s293 + $0x3e58] sm:$0xff]
        %v2384 = vld [vmem:[%s293 + $0x3e60] sm:$0xff]
        %v2385 = vld [vmem:[%s293 + $0x3e68] sm:$0xff]
        %v2386 = vld [vmem:[%s293 + $0x3e70] sm:$0xff]
        %v2387 = vld [vmem:[%s293 + $0x3e78] sm:$0xff]
        %v2388 = vld [vmem:[%s293 + $0x3e80] sm:$0xff]
        %v2389 = vld [vmem:[%s293 + $0x3e88] sm:$0xff]
        %v2390 = vld [vmem:[%s293 + $0x3e90] sm:$0xff]
        %v2391 = vld [vmem:[%s293 + $0x3e98] sm:$0xff]
        %v2392 = vld [vmem:[%s293 + $0x3ea0] sm:$0xff]
        %v2393 = vld [vmem:[%s293 + $0x3ea8] sm:$0xff]
        %v2394 = vld [vmem:[%s293 + $0x3eb0] sm:$0xff]
        %v2395 = vld [vmem:[%s293 + $0x3eb8] sm:$0xff]
        %v2396 = vld [vmem:[%s293 + $0x3ec0] sm:$0xff]
        %v2397 = vld [vmem:[%s293 + $0x3ec8] sm:$0xff]
        %v2398 = vld [vmem:[%s293 + $0x3ed0] sm:$0xff]
        %v2399 = vld [vmem:[%s293 + $0x3ed8] sm:$0xff]
        %v2400 = vld [vmem:[%s293 + $0x3ee0] sm:$0xff]
        %v2401 = vld [vmem:[%s293 + $0x3ee8] sm:$0xff]
        %v2402 = vld [vmem:[%s293 + $0x3ef0] sm:$0xff]
        %v2403 = vld [vmem:[%s293 + $0x3ef8] sm:$0xff]
        %v2404 = vld [vmem:[%s293 + $0x3f00] sm:$0xff]
        %v2405 = vld [vmem:[%s293 + $0x3f08] sm:$0xff]
        %v2406 = vld [vmem:[%s293 + $0x3f10] sm:$0xff]
        %v2407 = vld [vmem:[%s293 + $0x3f18] sm:$0xff]
        %v2408 = vld [vmem:[%s293 + $0x3f20] sm:$0xff]
        %v2409 = vld [vmem:[%s293 + $0x3f28] sm:$0xff]
        %v2410 = vld [vmem:[%s293 + $0x3f30] sm:$0xff]
        %v2411 = vld [vmem:[%s293 + $0x3f38] sm:$0xff]
        %v2412 = vld [vmem:[%s293 + $0x3f40] sm:$0xff]
        %v2413 = vld [vmem:[%s293 + $0x3f48] sm:$0xff]
        %v2414 = vld [vmem:[%s293 + $0x3f50] sm:$0xff]
        %v2415 = vld [vmem:[%s293 + $0x3f58] sm:$0xff]
        %v2416 = vld [vmem:[%s293 + $0x3f60] sm:$0xff]
        %v2417 = vld [vmem:[%s293 + $0x3f68] sm:$0xff]
        %v2418 = vld [vmem:[%s293 + $0x3f70] sm:$0xff]
        %v2419 = vld [vmem:[%s293 + $0x3f78] sm:$0xff]
        %v2420 = vld [vmem:[%s293 + $0x3f80] sm:$0xff]
        %v2421 = vld [vmem:[%s293 + $0x3f88] sm:$0xff]
        %v2422 = vld [vmem:[%s293 + $0x3f90] sm:$0xff]
        %v2423 = vld [vmem:[%s293 + $0x3f98] sm:$0xff]
        %v2424 = vld [vmem:[%s293 + $0x3fa0] sm:$0xff]
        %v2425 = vld [vmem:[%s293 + $0x3fa8] sm:$0xff]
        %v2426 = vld [vmem:[%s293 + $0x3fb0] sm:$0xff]
        %v2427 = vld [vmem:[%s293 + $0x3fb8] sm:$0xff]
        %v2428 = vld [vmem:[%s293 + $0x3fc0] sm:$0xff]
        %v2429 = vld [vmem:[%s293 + $0x3fc8] sm:$0xff]
        %v2430 = vld [vmem:[%s293 + $0x3fd0] sm:$0xff]
        %v2431 = vld [vmem:[%s293 + $0x3fd8] sm:$0xff]
        %v2432 = vld [vmem:[%s293 + $0x3fe0] sm:$0xff]
        %v2433 = vld [vmem:[%s293 + $0x3fe8] sm:$0xff]
        %v2434 = vld [vmem:[%s293 + $0x3ff0] sm:$0xff]
        %v2435 = vld [vmem:[%s293 + $0x3ff8] sm:$0xff]
        %v2436 = vld [vmem:[%s293 + $0x4000] sm:$0xff]
        %v2437 = vld [vmem:[%s293 + $0x4008] sm:$0xff]
        %v2438 = vld [vmem:[%s293 + $0x4010] sm:$0xff]
        %v2439 = vld [vmem:[%s293 + $0x4018] sm:$0xff]
        %v2440 = vld [vmem:[%s293 + $0x4020] sm:$0xff]
        %v2441 = vld [vmem:[%s293 + $0x4028] sm:$0xff]
        %v2442 = vld [vmem:[%s293 + $0x4030] sm:$0xff]
        %v2443 = vld [vmem:[%s293 + $0x4038] sm:$0xff]
        %v2444 = vld [vmem:[%s293 + $0x4040] sm:$0xff]
        %v2445 = vld [vmem:[%s293 + $0x4048] sm:$0xff]
        %v2446 = vld [vmem:[%s293 + $0x4050] sm:$0xff]
        %v2447 = vld [vmem:[%s293 + $0x4058] sm:$0xff]
        %v2448 = vld [vmem:[%s293 + $0x4060] sm:$0xff]
        %v2449 = vld [vmem:[%s293 + $0x4068] sm:$0xff]
        %v2450 = vld [vmem:[%s293 + $0x4070] sm:$0xff]
        %v2451 = vld [vmem:[%s293 + $0x4078] sm:$0xff]
        %v2452 = vld [vmem:[%s293 + $0x4080] sm:$0xff]
        %v2453 = vld [vmem:[%s293 + $0x4088] sm:$0xff]
        %v2454 = vld [vmem:[%s293 + $0x4090] sm:$0xff]
        %v2455 = vld [vmem:[%s293 + $0x4098] sm:$0xff]
        %v2456 = vld [vmem:[%s293 + $0x40a0] sm:$0xff]
        %v2457 = vld [vmem:[%s293 + $0x40a8] sm:$0xff]
        %v2458 = vld [vmem:[%s293 + $0x40b0] sm:$0xff]
        %v2459 = vld [vmem:[%s293 + $0x40b8] sm:$0xff]
        %v2460 = vld [vmem:[%s293 + $0x40c0] sm:$0xff]
        %v2461 = vld [vmem:[%s293 + $0x40c8] sm:$0xff]
        %v2462 = vld [vmem:[%s293 + $0x40d0] sm:$0xff]
        %v2463 = vld [vmem:[%s293 + $0x40d8] sm:$0xff]
        %v2464 = vld [vmem:[%s293 + $0x40e0] sm:$0xff]
        %v2465 = vld [vmem:[%s293 + $0x40e8] sm:$0xff]
        %v2466 = vld [vmem:[%s293 + $0x40f0] sm:$0xff]
        %v2467 = vld [vmem:[%s293 + $0x40f8] sm:$0xff]
        %v2468 = vld [vmem:[%s293 + $0x4100] sm:$0xff]
        %v2469 = vld [vmem:[%s293 + $0x4108] sm:$0xff]
        %v2470 = vld [vmem:[%s293 + $0x4110] sm:$0xff]
        %v2471 = vld [vmem:[%s293 + $0x4118] sm:$0xff]
        %v2472 = vld [vmem:[%s293 + $0x4120] sm:$0xff]
        %v2473 = vld [vmem:[%s293 + $0x4128] sm:$0xff]
        %v2474 = vld [vmem:[%s293 + $0x4130] sm:$0xff]
        %v2475 = vld [vmem:[%s293 + $0x4138] sm:$0xff]
        %v2476 = vld [vmem:[%s293 + $0x4140] sm:$0xff]
        %v2477 = vld [vmem:[%s293 + $0x4148] sm:$0xff]
        %v2478 = vld [vmem:[%s293 + $0x4150] sm:$0xff]
        %v2479 = vld [vmem:[%s293 + $0x4158] sm:$0xff]
        %v2480 = vld [vmem:[%s293 + $0x4160] sm:$0xff]
        %v2481 = vld [vmem:[%s293 + $0x4168] sm:$0xff]
        %v2482 = vld [vmem:[%s293 + $0x4170] sm:$0xff]
        %v2483 = vld [vmem:[%s293 + $0x4178] sm:$0xff]
        %v2484 = vld [vmem:[%s293 + $0x4180] sm:$0xff]
        %v2485 = vld [vmem:[%s293 + $0x4188] sm:$0xff]
        %v2486 = vld [vmem:[%s293 + $0x4190] sm:$0xff]
        %v2487 = vld [vmem:[%s293 + $0x4198] sm:$0xff]
        %v2488 = vld [vmem:[%s293 + $0x41a0] sm:$0xff]
        %v2489 = vld [vmem:[%s293 + $0x41a8] sm:$0xff]
        %v2490 = vld [vmem:[%s293 + $0x41b0] sm:$0xff]
        %v2491 = vld [vmem:[%s293 + $0x41b8] sm:$0xff]
        %v2492 = vld [vmem:[%s293 + $0x41c0] sm:$0xff]
        %v2493 = vld [vmem:[%s293 + $0x41c8] sm:$0xff]
        %v2494 = vld [vmem:[%s293 + $0x41d0] sm:$0xff]
        %v2495 = vld [vmem:[%s293 + $0x41d8] sm:$0xff]
        %v2496 = vld [vmem:[%s293 + $0x41e0] sm:$0xff]
        %v2497 = vld [vmem:[%s293 + $0x41e8] sm:$0xff]
        %v2498 = vld [vmem:[%s293 + $0x41f0] sm:$0xff]
        %v2499 = vld [vmem:[%s293 + $0x41f8] sm:$0xff]
        %v2500 = vld [vmem:[%s293 + $0x4200] sm:$0xff]
        %v2501 = vld [vmem:[%s293 + $0x4208] sm:$0xff]
        %v2502 = vld [vmem:[%s293 + $0x4210] sm:$0xff]
        %v2503 = vld [vmem:[%s293 + $0x4218] sm:$0xff]
        %v2504 = vld [vmem:[%s293 + $0x4220] sm:$0xff]
        %v2505 = vld [vmem:[%s293 + $0x4228] sm:$0xff]
        %v2506 = vld [vmem:[%s293 + $0x4230] sm:$0xff]
        %v2507 = vld [vmem:[%s293 + $0x4238] sm:$0xff]
        %v2508 = vld [vmem:[%s293 + $0x4240] sm:$0xff]
        %v2509 = vld [vmem:[%s293 + $0x4248] sm:$0xff]
        %v2510 = vld [vmem:[%s293 + $0x4250] sm:$0xff]
        %v2511 = vld [vmem:[%s293 + $0x4258] sm:$0xff]
        %v2512 = vld [vmem:[%s293 + $0x4260] sm:$0xff]
        %v2513 = vld [vmem:[%s293 + $0x4268] sm:$0xff]
        %v2514 = vld [vmem:[%s293 + $0x4270] sm:$0xff]
        %v2515 = vld [vmem:[%s293 + $0x4278] sm:$0xff]
        %v2516 = vld [vmem:[%s293 + $0x4280] sm:$0xff]
        %v2517 = vld [vmem:[%s293 + $0x4288] sm:$0xff]
        %v2518 = vld [vmem:[%s293 + $0x4290] sm:$0xff]
        %v2519 = vld [vmem:[%s293 + $0x4298] sm:$0xff]
        %v2520 = vld [vmem:[%s293 + $0x42a0] sm:$0xff]
        %v2521 = vld [vmem:[%s293 + $0x42a8] sm:$0xff]
        %v2522 = vld [vmem:[%s293 + $0x42b0] sm:$0xff]
        %v2523 = vld [vmem:[%s293 + $0x42b8] sm:$0xff]
        %v2524 = vld [vmem:[%s293 + $0x42c0] sm:$0xff]
        %v2525 = vld [vmem:[%s293 + $0x42c8] sm:$0xff]
        %v2526 = vld [vmem:[%s293 + $0x42d0] sm:$0xff]
        %v2527 = vld [vmem:[%s293 + $0x42d8] sm:$0xff]
        %v2528 = vld [vmem:[%s293 + $0x42e0] sm:$0xff]
        %v2529 = vld [vmem:[%s293 + $0x42e8] sm:$0xff]
        %v2530 = vld [vmem:[%s293 + $0x42f0] sm:$0xff]
        %v2531 = vld [vmem:[%s293 + $0x42f8] sm:$0xff]
        %v2532 = vld [vmem:[%s293 + $0x4300] sm:$0xff]
        %v2533 = vld [vmem:[%s293 + $0x4308] sm:$0xff]
        %v2534 = vld [vmem:[%s293 + $0x4310] sm:$0xff]
        %v2535 = vld [vmem:[%s293 + $0x4318] sm:$0xff]
        %v2536 = vld [vmem:[%s293 + $0x4320] sm:$0xff]
        %v2537 = vld [vmem:[%s293 + $0x4328] sm:$0xff]
        %v2538 = vld [vmem:[%s293 + $0x4330] sm:$0xff]
        %v2539 = vld [vmem:[%s293 + $0x4338] sm:$0xff]
        %v2540 = vld [vmem:[%s293 + $0x4340] sm:$0xff]
        %v2541 = vld [vmem:[%s293 + $0x4348] sm:$0xff]
        %v2542 = vld [vmem:[%s293 + $0x4350] sm:$0xff]
        %v2543 = vld [vmem:[%s293 + $0x4358] sm:$0xff]
        %v2544 = vld [vmem:[%s293 + $0x4360] sm:$0xff]
        %v2545 = vld [vmem:[%s293 + $0x4368] sm:$0xff]
        %v2546 = vld [vmem:[%s293 + $0x4370] sm:$0xff]
        %v2547 = vld [vmem:[%s293 + $0x4378] sm:$0xff]
        %v2548 = vld [vmem:[%s293 + $0x4380] sm:$0xff]
        %v2549 = vld [vmem:[%s293 + $0x4388] sm:$0xff]
        %v2550 = vld [vmem:[%s293 + $0x4390] sm:$0xff]
        %v2551 = vld [vmem:[%s293 + $0x4398] sm:$0xff]
        %v2552 = vld [vmem:[%s293 + $0x43a0] sm:$0xff]
        %v2553 = vld [vmem:[%s293 + $0x43a8] sm:$0xff]
        %v2554 = vld [vmem:[%s293 + $0x43b0] sm:$0xff]
        %v2555 = vld [vmem:[%s293 + $0x43b8] sm:$0xff]
        %v2556 = vld [vmem:[%s293 + $0x43c0] sm:$0xff]
        %v2557 = vld [vmem:[%s293 + $0x43c8] sm:$0xff]
        %v2558 = vld [vmem:[%s293 + $0x43d0] sm:$0xff]
        %v2559 = vld [vmem:[%s293 + $0x43d8] sm:$0xff]
        %v2560 = vld [vmem:[%s293 + $0x43e0] sm:$0xff]
        %v2561 = vld [vmem:[%s293 + $0x43e8] sm:$0xff]
        %v2562 = vld [vmem:[%s293 + $0x43f0] sm:$0xff]
        %v2563 = vld [vmem:[%s293 + $0x43f8] sm:$0xff]
        %v2564 = vld [vmem:[%s293 + $0x4400] sm:$0xff]
        %v2565 = vld [vmem:[%s293 + $0x4408] sm:$0xff]
        %v2566 = vld [vmem:[%s293 + $0x4410] sm:$0xff]
        %v2567 = vld [vmem:[%s293 + $0x4418] sm:$0xff]
        %v2568 = vld [vmem:[%s293 + $0x4420] sm:$0xff]
        %v2569 = vld [vmem:[%s293 + $0x4428] sm:$0xff]
        %v2570 = vld [vmem:[%s293 + $0x4430] sm:$0xff]
        %v2571 = vld [vmem:[%s293 + $0x4438] sm:$0xff]
        %v2572 = vld [vmem:[%s293 + $0x4440] sm:$0xff]
        %v2573 = vld [vmem:[%s293 + $0x4448] sm:$0xff]
        %v2574 = vld [vmem:[%s293 + $0x4450] sm:$0xff]
        %v2575 = vld [vmem:[%s293 + $0x4458] sm:$0xff]
        %v2576 = vld [vmem:[%s293 + $0x4460] sm:$0xff]
        %v2577 = vld [vmem:[%s293 + $0x4468] sm:$0xff]
        %v2578 = vld [vmem:[%s293 + $0x4470] sm:$0xff]
        %v2579 = vld [vmem:[%s293 + $0x4478] sm:$0xff]
        %v2580 = vld [vmem:[%s293 + $0x4480] sm:$0xff]
        %v2581 = vld [vmem:[%s293 + $0x4488] sm:$0xff]
        %v2582 = vld [vmem:[%s293 + $0x4490] sm:$0xff]
        %v2583 = vld [vmem:[%s293 + $0x4498] sm:$0xff]
        %v2584 = vld [vmem:[%s293 + $0x44a0] sm:$0xff]
        %v2585 = vld [vmem:[%s293 + $0x44a8] sm:$0xff]
        %v2586 = vld [vmem:[%s293 + $0x44b0] sm:$0xff]
        %v2587 = vld [vmem:[%s293 + $0x44b8] sm:$0xff]
        %v2588 = vld [vmem:[%s293 + $0x44c0] sm:$0xff]
        %v2589 = vld [vmem:[%s293 + $0x44c8] sm:$0xff]
        %v2590 = vld [vmem:[%s293 + $0x44d0] sm:$0xff]
        %v2591 = vld [vmem:[%s293 + $0x44d8] sm:$0xff]
        %v2592 = vld [vmem:[%s293 + $0x44e0] sm:$0xff]
        %v2593 = vld [vmem:[%s293 + $0x44e8] sm:$0xff]
        %v2594 = vld [vmem:[%s293 + $0x44f0] sm:$0xff]
        %v2595 = vld [vmem:[%s293 + $0x44f8] sm:$0xff]
        %v2596 = vld [vmem:[%s293 + $0x4500] sm:$0xff]
        %v2597 = vld [vmem:[%s293 + $0x4508] sm:$0xff]
        %v2598 = vld [vmem:[%s293 + $0x4510] sm:$0xff]
        %v2599 = vld [vmem:[%s293 + $0x4518] sm:$0xff]
        %v2600 = vld [vmem:[%s293 + $0x4520] sm:$0xff]
        %v2601 = vld [vmem:[%s293 + $0x4528] sm:$0xff]
        %v2602 = vld [vmem:[%s293 + $0x4530] sm:$0xff]
        %v2603 = vld [vmem:[%s293 + $0x4538] sm:$0xff]
        %v2604 = vld [vmem:[%s293 + $0x4540] sm:$0xff]
        %v2605 = vld [vmem:[%s293 + $0x4548] sm:$0xff]
        %v2606 = vld [vmem:[%s293 + $0x4550] sm:$0xff]
        %v2607 = vld [vmem:[%s293 + $0x4558] sm:$0xff]
        %v2608 = vld [vmem:[%s293 + $0x4560] sm:$0xff]
        %v2609 = vld [vmem:[%s293 + $0x4568] sm:$0xff]
        %v2610 = vld [vmem:[%s293 + $0x4570] sm:$0xff]
        %v2611 = vld [vmem:[%s293 + $0x4578] sm:$0xff]
        %v2612 = vld [vmem:[%s293 + $0x4580] sm:$0xff]
        %v2613 = vld [vmem:[%s293 + $0x4588] sm:$0xff]
        %v2614 = vld [vmem:[%s293 + $0x4590] sm:$0xff]
        %v2615 = vld [vmem:[%s293 + $0x4598] sm:$0xff]
        %v2616 = vld [vmem:[%s293 + $0x45a0] sm:$0xff]
        %v2617 = vld [vmem:[%s293 + $0x45a8] sm:$0xff]
        %v2618 = vld [vmem:[%s293 + $0x45b0] sm:$0xff]
        %v2619 = vld [vmem:[%s293 + $0x45b8] sm:$0xff]
        %v2620 = vld [vmem:[%s293 + $0x45c0] sm:$0xff]
        %v2621 = vld [vmem:[%s293 + $0x45c8] sm:$0xff]
        %v2622 = vld [vmem:[%s293 + $0x45d0] sm:$0xff]
        %v2623 = vld [vmem:[%s293 + $0x45d8] sm:$0xff]
        %v2624 = vld [vmem:[%s293 + $0x45e0] sm:$0xff]
        %v2625 = vld [vmem:[%s293 + $0x45e8] sm:$0xff]
        %v2626 = vld [vmem:[%s293 + $0x45f0] sm:$0xff]
        %v2627 = vld [vmem:[%s293 + $0x45f8] sm:$0xff]
        %v2628 = vld [vmem:[%s293 + $0x4600] sm:$0xff]
        %v2629 = vld [vmem:[%s293 + $0x4608] sm:$0xff]
        %v2630 = vld [vmem:[%s293 + $0x4610] sm:$0xff]
        %v2631 = vld [vmem:[%s293 + $0x4618] sm:$0xff]
        %v2632 = vld [vmem:[%s293 + $0x4620] sm:$0xff]
        %v2633 = vld [vmem:[%s293 + $0x4628] sm:$0xff]
        %v2634 = vld [vmem:[%s293 + $0x4630] sm:$0xff]
        %v2635 = vld [vmem:[%s293 + $0x4638] sm:$0xff]
        %v2636 = vld [vmem:[%s293 + $0x4640] sm:$0xff]
        %v2637 = vld [vmem:[%s293 + $0x4648] sm:$0xff]
        %v2638 = vld [vmem:[%s293 + $0x4650] sm:$0xff]
        %v2639 = vld [vmem:[%s293 + $0x4658] sm:$0xff]
        %v2640 = vld [vmem:[%s293 + $0x4660] sm:$0xff]
        %v2641 = vld [vmem:[%s293 + $0x4668] sm:$0xff]
        %v2642 = vld [vmem:[%s293 + $0x4670] sm:$0xff]
        %v2643 = vld [vmem:[%s293 + $0x4678] sm:$0xff]
        %v2644 = vld [vmem:[%s293 + $0x4680] sm:$0xff]
        %v2645 = vld [vmem:[%s293 + $0x4688] sm:$0xff]
        %v2646 = vld [vmem:[%s293 + $0x4690] sm:$0xff]
        %v2647 = vld [vmem:[%s293 + $0x4698] sm:$0xff]
        %v2648 = vld [vmem:[%s293 + $0x46a0] sm:$0xff]
        %v2649 = vld [vmem:[%s293 + $0x46a8] sm:$0xff]
        %v2650 = vld [vmem:[%s293 + $0x46b0] sm:$0xff]
        %v2651 = vld [vmem:[%s293 + $0x46b8] sm:$0xff]
        %v2652 = vld [vmem:[%s293 + $0x46c0] sm:$0xff]
        %v2653 = vld [vmem:[%s293 + $0x46c8] sm:$0xff]
        %v2654 = vld [vmem:[%s293 + $0x46d0] sm:$0xff]
        %v2655 = vld [vmem:[%s293 + $0x46d8] sm:$0xff]
        %v2656 = vld [vmem:[%s293 + $0x46e0] sm:$0xff]
        %v2657 = vld [vmem:[%s293 + $0x46e8] sm:$0xff]
        %v2658 = vld [vmem:[%s293 + $0x46f0] sm:$0xff]
        %v2659 = vld [vmem:[%s293 + $0x46f8] sm:$0xff]
        %v2660 = vld [vmem:[%s293 + $0x4700] sm:$0xff]
        %v2661 = vld [vmem:[%s293 + $0x4708] sm:$0xff]
        %v2662 = vld [vmem:[%s293 + $0x4710] sm:$0xff]
        %v2663 = vld [vmem:[%s293 + $0x4718] sm:$0xff]
        %v2664 = vld [vmem:[%s293 + $0x4720] sm:$0xff]
        %v2665 = vld [vmem:[%s293 + $0x4728] sm:$0xff]
        %v2666 = vld [vmem:[%s293 + $0x4730] sm:$0xff]
        %v2667 = vld [vmem:[%s293 + $0x4738] sm:$0xff]
        %v2668 = vld [vmem:[%s293 + $0x4740] sm:$0xff]
        %v2669 = vld [vmem:[%s293 + $0x4748] sm:$0xff]
        %v2670 = vld [vmem:[%s293 + $0x4750] sm:$0xff]
        %v2671 = vld [vmem:[%s293 + $0x4758] sm:$0xff]
        %v2672 = vld [vmem:[%s293 + $0x4760] sm:$0xff]
        %v2673 = vld [vmem:[%s293 + $0x4768] sm:$0xff]
        %v2674 = vld [vmem:[%s293 + $0x4770] sm:$0xff]
        %v2675 = vld [vmem:[%s293 + $0x4778] sm:$0xff]
        %v2676 = vld [vmem:[%s293 + $0x4780] sm:$0xff]
        %v2677 = vld [vmem:[%s293 + $0x4788] sm:$0xff]
        %v2678 = vld [vmem:[%s293 + $0x4790] sm:$0xff]
        %v2679 = vld [vmem:[%s293 + $0x4798] sm:$0xff]
        %v2680 = vld [vmem:[%s293 + $0x47a0] sm:$0xff]
        %v2681 = vld [vmem:[%s293 + $0x47a8] sm:$0xff]
        %v2682 = vld [vmem:[%s293 + $0x47b0] sm:$0xff]
        %v2683 = vld [vmem:[%s293 + $0x47b8] sm:$0xff]
        %v2684 = vld [vmem:[%s293 + $0x47c0] sm:$0xff]
        %v2685 = vld [vmem:[%s293 + $0x47c8] sm:$0xff]
        %v2686 = vld [vmem:[%s293 + $0x47d0] sm:$0xff]
        %v2687 = vld [vmem:[%s293 + $0x47d8] sm:$0xff]
        %v2688 = vld [vmem:[%s293 + $0x47e0] sm:$0xff]
        %v2689 = vld [vmem:[%s293 + $0x47e8] sm:$0xff]
        %v2690 = vld [vmem:[%s293 + $0x47f0] sm:$0xff]
        %v2691 = vld [vmem:[%s293 + $0x47f8] sm:$0xff]
        %v2692 = vld [vmem:[%s293 + $0x4800] sm:$0xff]
        %v2693 = vld [vmem:[%s293 + $0x4808] sm:$0xff]
        %v2694 = vld [vmem:[%s293 + $0x4810] sm:$0xff]
        %v2695 = vld [vmem:[%s293 + $0x4818] sm:$0xff]
        %v2696 = vld [vmem:[%s293 + $0x4820] sm:$0xff]
        %v2697 = vld [vmem:[%s293 + $0x4828] sm:$0xff]
        %v2698 = vld [vmem:[%s293 + $0x4830] sm:$0xff]
        %v2699 = vld [vmem:[%s293 + $0x4838] sm:$0xff]
        %v2700 = vld [vmem:[%s293 + $0x4840] sm:$0xff]
        %v2701 = vld [vmem:[%s293 + $0x4848] sm:$0xff]
        %v2702 = vld [vmem:[%s293 + $0x4850] sm:$0xff]
        %v2703 = vld [vmem:[%s293 + $0x4858] sm:$0xff]
        %v2704 = vld [vmem:[%s293 + $0x4860] sm:$0xff]
        %v2705 = vld [vmem:[%s293 + $0x4868] sm:$0xff]
        %v2706 = vld [vmem:[%s293 + $0x4870] sm:$0xff]
        %v2707 = vld [vmem:[%s293 + $0x4878] sm:$0xff]
        %v2708 = vld [vmem:[%s293 + $0x4880] sm:$0xff]
        %v2709 = vld [vmem:[%s293 + $0x4888] sm:$0xff]
        %v2710 = vld [vmem:[%s293 + $0x4890] sm:$0xff]
        %v2711 = vld [vmem:[%s293 + $0x4898] sm:$0xff]
        %v2712 = vld [vmem:[%s293 + $0x48a0] sm:$0xff]
        %v2713 = vld [vmem:[%s293 + $0x48a8] sm:$0xff]
        %v2714 = vld [vmem:[%s293 + $0x48b0] sm:$0xff]
        %v2715 = vld [vmem:[%s293 + $0x48b8] sm:$0xff]
        %v2716 = vld [vmem:[%s293 + $0x48c0] sm:$0xff]
        %v2717 = vld [vmem:[%s293 + $0x48c8] sm:$0xff]
        %v2718 = vld [vmem:[%s293 + $0x48d0] sm:$0xff]
        %v2719 = vld [vmem:[%s293 + $0x48d8] sm:$0xff]
        %v2720 = vld [vmem:[%s293 + $0x48e0] sm:$0xff]
        %v2721 = vld [vmem:[%s293 + $0x48e8] sm:$0xff]
        %v2722 = vld [vmem:[%s293 + $0x48f0] sm:$0xff]
        %v2723 = vld [vmem:[%s293 + $0x48f8] sm:$0xff]
        %v2724 = vld [vmem:[%s293 + $0x4900] sm:$0xff]
        %v2725 = vld [vmem:[%s293 + $0x4908] sm:$0xff]
        %v2726 = vld [vmem:[%s293 + $0x4910] sm:$0xff]
        %v2727 = vld [vmem:[%s293 + $0x4918] sm:$0xff]
        %v2728 = vld [vmem:[%s293 + $0x4920] sm:$0xff]
        %v2729 = vld [vmem:[%s293 + $0x4928] sm:$0xff]
        %v2730 = vld [vmem:[%s293 + $0x4930] sm:$0xff]
        %v2731 = vld [vmem:[%s293 + $0x4938] sm:$0xff]
        %v2732 = vld [vmem:[%s293 + $0x4940] sm:$0xff]
        %v2733 = vld [vmem:[%s293 + $0x4948] sm:$0xff]
        %v2734 = vld [vmem:[%s293 + $0x4950] sm:$0xff]
        %v2735 = vld [vmem:[%s293 + $0x4958] sm:$0xff]
        %v2736 = vld [vmem:[%s293 + $0x4960] sm:$0xff]
        %v2737 = vld [vmem:[%s293 + $0x4968] sm:$0xff]
        %v2738 = vld [vmem:[%s293 + $0x4970] sm:$0xff]
        %v2739 = vld [vmem:[%s293 + $0x4978] sm:$0xff]
        %v2740 = vld [vmem:[%s293 + $0x4980] sm:$0xff]
        %v2741 = vld [vmem:[%s293 + $0x4988] sm:$0xff]
        %v2742 = vld [vmem:[%s293 + $0x4990] sm:$0xff]
        %v2743 = vld [vmem:[%s293 + $0x4998] sm:$0xff]
        %v2744 = vld [vmem:[%s293 + $0x49a0] sm:$0xff]
        %v2745 = vld [vmem:[%s293 + $0x49a8] sm:$0xff]
        %v2746 = vld [vmem:[%s293 + $0x49b0] sm:$0xff]
        %v2747 = vld [vmem:[%s293 + $0x49b8] sm:$0xff]
        %v2748 = vld [vmem:[%s293 + $0x49c0] sm:$0xff]
        %v2749 = vld [vmem:[%s293 + $0x49c8] sm:$0xff]
        %v2750 = vld [vmem:[%s293 + $0x49d0] sm:$0xff]
        %v2751 = vld [vmem:[%s293 + $0x49d8] sm:$0xff]
        %v2752 = vld [vmem:[%s293 + $0x49e0] sm:$0xff]
        %v2753 = vld [vmem:[%s293 + $0x49e8] sm:$0xff]
        %v2754 = vld [vmem:[%s293 + $0x49f0] sm:$0xff]
        %v2755 = vld [vmem:[%s293 + $0x49f8] sm:$0xff]
        %v2756 = vld [vmem:[%s293 + $0x4a00] sm:$0xff]
        %v2757 = vld [vmem:[%s293 + $0x4a08] sm:$0xff]
        %v2758 = vld [vmem:[%s293 + $0x4a10] sm:$0xff]
        %v2759 = vld [vmem:[%s293 + $0x4a18] sm:$0xff]
        %v2760 = vld [vmem:[%s293 + $0x4a20] sm:$0xff]
        %v2761 = vld [vmem:[%s293 + $0x4a28] sm:$0xff]
        %v2762 = vld [vmem:[%s293 + $0x4a30] sm:$0xff]
        %v2763 = vld [vmem:[%s293 + $0x4a38] sm:$0xff]
        %v2764 = vld [vmem:[%s293 + $0x4a40] sm:$0xff]
        %v2765 = vld [vmem:[%s293 + $0x4a48] sm:$0xff]
        %v2766 = vld [vmem:[%s293 + $0x4a50] sm:$0xff]
        %v2767 = vld [vmem:[%s293 + $0x4a58] sm:$0xff]
        %v2768 = vld [vmem:[%s293 + $0x4a60] sm:$0xff]
        %v2769 = vld [vmem:[%s293 + $0x4a68] sm:$0xff]
        %v2770 = vld [vmem:[%s293 + $0x4a70] sm:$0xff]
        %v2771 = vld [vmem:[%s293 + $0x4a78] sm:$0xff]
        %v2772 = vld [vmem:[%s293 + $0x4a80] sm:$0xff]
        %v2773 = vld [vmem:[%s293 + $0x4a88] sm:$0xff]
        %v2774 = vld [vmem:[%s293 + $0x4a90] sm:$0xff]
        %v2775 = vld [vmem:[%s293 + $0x4a98] sm:$0xff]
        %v2776 = vld [vmem:[%s293 + $0x4aa0] sm:$0xff]
        %v2777 = vld [vmem:[%s293 + $0x4aa8] sm:$0xff]
        %v2778 = vld [vmem:[%s293 + $0x4ab0] sm:$0xff]
        %v2779 = vld [vmem:[%s293 + $0x4ab8] sm:$0xff]
        %v2780 = vld [vmem:[%s293 + $0x4ac0] sm:$0xff]
        %v2781 = vld [vmem:[%s293 + $0x4ac8] sm:$0xff]
        %v2782 = vld [vmem:[%s293 + $0x4ad0] sm:$0xff]
        %v2783 = vld [vmem:[%s293 + $0x4ad8] sm:$0xff]
        %v2784 = vld [vmem:[%s293 + $0x4ae0] sm:$0xff]
        %v2785 = vld [vmem:[%s293 + $0x4ae8] sm:$0xff]
        %v2786 = vld [vmem:[%s293 + $0x4af0] sm:$0xff]
        %v2787 = vld [vmem:[%s293 + $0x4af8] sm:$0xff]
        %v2788 = vld [vmem:[%s293 + $0x4b00] sm:$0xff]
        %v2789 = vld [vmem:[%s293 + $0x4b08] sm:$0xff]
        %v2790 = vld [vmem:[%s293 + $0x4b10] sm:$0xff]
        %v2791 = vld [vmem:[%s293 + $0x4b18] sm:$0xff]
        %v2792 = vld [vmem:[%s293 + $0x4b20] sm:$0xff]
        %v2793 = vld [vmem:[%s293 + $0x4b28] sm:$0xff]
        %v2794 = vld [vmem:[%s293 + $0x4b30] sm:$0xff]
        %v2795 = vld [vmem:[%s293 + $0x4b38] sm:$0xff]
        %v2796 = vld [vmem:[%s293 + $0x4b40] sm:$0xff]
        %v2797 = vld [vmem:[%s293 + $0x4b48] sm:$0xff]
        %v2798 = vld [vmem:[%s293 + $0x4b50] sm:$0xff]
        %v2799 = vld [vmem:[%s293 + $0x4b58] sm:$0xff]
        %v2800 = vld [vmem:[%s293 + $0x4b60] sm:$0xff]
        %v2801 = vld [vmem:[%s293 + $0x4b68] sm:$0xff]
        %v2802 = vld [vmem:[%s293 + $0x4b70] sm:$0xff]
        %v2803 = vld [vmem:[%s293 + $0x4b78] sm:$0xff]
        %v2804 = vld [vmem:[%s293 + $0x4b80] sm:$0xff]
        %v2805 = vld [vmem:[%s293 + $0x4b88] sm:$0xff]
        %v2806 = vld [vmem:[%s293 + $0x4b90] sm:$0xff]
        %v2807 = vld [vmem:[%s293 + $0x4b98] sm:$0xff]
        %v2808 = vld [vmem:[%s293 + $0x4ba0] sm:$0xff]
        %v2809 = vld [vmem:[%s293 + $0x4ba8] sm:$0xff]
        %v2810 = vld [vmem:[%s293 + $0x4bb0] sm:$0xff]
        %v2811 = vld [vmem:[%s293 + $0x4bb8] sm:$0xff]
        %v2812 = vld [vmem:[%s293 + $0x4bc0] sm:$0xff]
        %v2813 = vld [vmem:[%s293 + $0x4bc8] sm:$0xff]
        %v2814 = vld [vmem:[%s293 + $0x4bd0] sm:$0xff]
        %v2815 = vld [vmem:[%s293 + $0x4bd8] sm:$0xff]
        %v2816 = vld [vmem:[%s293 + $0x4be0] sm:$0xff]
        %v2817 = vld [vmem:[%s293 + $0x4be8] sm:$0xff]
        %v2818 = vld [vmem:[%s293 + $0x4bf0] sm:$0xff]
        %v2819 = vld [vmem:[%s293 + $0x4bf8] sm:$0xff]
        %v2820 = vld [vmem:[%s293 + $0x4c00] sm:$0xff]
        %v2821 = vld [vmem:[%s293 + $0x4c08] sm:$0xff]
        %v2822 = vld [vmem:[%s293 + $0x4c10] sm:$0xff]
        %v2823 = vld [vmem:[%s293 + $0x4c18] sm:$0xff]
        %v2824 = vld [vmem:[%s293 + $0x4c20] sm:$0xff]
        %v2825 = vld [vmem:[%s293 + $0x4c28] sm:$0xff]
        %v2826 = vld [vmem:[%s293 + $0x4c30] sm:$0xff]
        %v2827 = vld [vmem:[%s293 + $0x4c38] sm:$0xff]
        %v2828 = vld [vmem:[%s293 + $0x4c40] sm:$0xff]
        %v2829 = vld [vmem:[%s293 + $0x4c48] sm:$0xff]
        %v2830 = vld [vmem:[%s293 + $0x4c50] sm:$0xff]
        %v2831 = vld [vmem:[%s293 + $0x4c58] sm:$0xff]
        %v2832 = vld [vmem:[%s293 + $0x4c60] sm:$0xff]
        %v2833 = vld [vmem:[%s293 + $0x4c68] sm:$0xff]
        %v2834 = vld [vmem:[%s293 + $0x4c70] sm:$0xff]
        %v2835 = vld [vmem:[%s293 + $0x4c78] sm:$0xff]
        %v2836 = vld [vmem:[%s293 + $0x4c80] sm:$0xff]
        %v2837 = vld [vmem:[%s293 + $0x4c88] sm:$0xff]
        %v2838 = vld [vmem:[%s293 + $0x4c90] sm:$0xff]
        %v2839 = vld [vmem:[%s293 + $0x4c98] sm:$0xff]
        %v2840 = vld [vmem:[%s293 + $0x4ca0] sm:$0xff]
        %v2841 = vld [vmem:[%s293 + $0x4ca8] sm:$0xff]
        %v2842 = vld [vmem:[%s293 + $0x4cb0] sm:$0xff]
        %v2843 = vld [vmem:[%s293 + $0x4cb8] sm:$0xff]
        %v2844 = vld [vmem:[%s293 + $0x4cc0] sm:$0xff]
        %v2845 = vld [vmem:[%s293 + $0x4cc8] sm:$0xff]
        %v2846 = vld [vmem:[%s293 + $0x4cd0] sm:$0xff]
        %v2847 = vld [vmem:[%s293 + $0x4cd8] sm:$0xff]
        %v2848 = vld [vmem:[%s293 + $0x4ce0] sm:$0xff]
        %v2849 = vld [vmem:[%s293 + $0x4ce8] sm:$0xff]
        %v2850 = vld [vmem:[%s293 + $0x4cf0] sm:$0xff]
        %v2851 = vld [vmem:[%s293 + $0x4cf8] sm:$0xff]
        %v2852 = vld [vmem:[%s293 + $0x4d00] sm:$0xff]
        %v2853 = vld [vmem:[%s293 + $0x4d08] sm:$0xff]
        %v2854 = vld [vmem:[%s293 + $0x4d10] sm:$0xff]
        %v2855 = vld [vmem:[%s293 + $0x4d18] sm:$0xff]
        %v2856 = vld [vmem:[%s293 + $0x4d20] sm:$0xff]
        %v2857 = vld [vmem:[%s293 + $0x4d28] sm:$0xff]
        %v2858 = vld [vmem:[%s293 + $0x4d30] sm:$0xff]
        %v2859 = vld [vmem:[%s293 + $0x4d38] sm:$0xff]
        %v2860 = vld [vmem:[%s293 + $0x4d40] sm:$0xff]
        %v2861 = vld [vmem:[%s293 + $0x4d48] sm:$0xff]
        %v2862 = vld [vmem:[%s293 + $0x4d50] sm:$0xff]
        %v2863 = vld [vmem:[%s293 + $0x4d58] sm:$0xff]
        %v2864 = vld [vmem:[%s293 + $0x4d60] sm:$0xff]
        %v2865 = vld [vmem:[%s293 + $0x4d68] sm:$0xff]
        %v2866 = vld [vmem:[%s293 + $0x4d70] sm:$0xff]
        %v2867 = vld [vmem:[%s293 + $0x4d78] sm:$0xff]
        %v2868 = vld [vmem:[%s293 + $0x4d80] sm:$0xff]
        %v2869 = vld [vmem:[%s293 + $0x4d88] sm:$0xff]
        %v2870 = vld [vmem:[%s293 + $0x4d90] sm:$0xff]
        %v2871 = vld [vmem:[%s293 + $0x4d98] sm:$0xff]
        %v2872 = vld [vmem:[%s293 + $0x4da0] sm:$0xff]
        %v2873 = vld [vmem:[%s293 + $0x4da8] sm:$0xff]
        %v2874 = vld [vmem:[%s293 + $0x4db0] sm:$0xff]
        %v2875 = vld [vmem:[%s293 + $0x4db8] sm:$0xff]
        %v2876 = vld [vmem:[%s293 + $0x4dc0] sm:$0xff]
        %v2877 = vld [vmem:[%s293 + $0x4dc8] sm:$0xff]
        %v2878 = vld [vmem:[%s293 + $0x4dd0] sm:$0xff]
        %v2879 = vld [vmem:[%s293 + $0x4dd8] sm:$0xff]
        %v2880 = vld [vmem:[%s293 + $0x4de0] sm:$0xff]
        %v2881 = vld [vmem:[%s293 + $0x4de8] sm:$0xff]
        %v2882 = vld [vmem:[%s293 + $0x4df0] sm:$0xff]
        %v2883 = vld [vmem:[%s293 + $0x4df8] sm:$0xff]
        %v2884 = vld [vmem:[%s293 + $0x4e00] sm:$0xff]
        %v2885 = vld [vmem:[%s293 + $0x4e08] sm:$0xff]
        %v2886 = vld [vmem:[%s293 + $0x4e10] sm:$0xff]
        %v2887 = vld [vmem:[%s293 + $0x4e18] sm:$0xff]
        %v2888 = vld [vmem:[%s293 + $0x4e20] sm:$0xff]
        %v2889 = vld [vmem:[%s293 + $0x4e28] sm:$0xff]
        %v2890 = vld [vmem:[%s293 + $0x4e30] sm:$0xff]
        %v2891 = vld [vmem:[%s293 + $0x4e38] sm:$0xff]
        %v2892 = vld [vmem:[%s293 + $0x4e40] sm:$0xff]
        %v2893 = vld [vmem:[%s293 + $0x4e48] sm:$0xff]
        %v2894 = vld [vmem:[%s293 + $0x4e50] sm:$0xff]
        %v2895 = vld [vmem:[%s293 + $0x4e58] sm:$0xff]
        %v2896 = vld [vmem:[%s293 + $0x4e60] sm:$0xff]
        %v2897 = vld [vmem:[%s293 + $0x4e68] sm:$0xff]
        %v2898 = vld [vmem:[%s293 + $0x4e70] sm:$0xff]
        %v2899 = vld [vmem:[%s293 + $0x4e78] sm:$0xff]
        %v2900 = vld [vmem:[%s293 + $0x4e80] sm:$0xff]
        %v2901 = vld [vmem:[%s293 + $0x4e88] sm:$0xff]
        %v2902 = vld [vmem:[%s293 + $0x4e90] sm:$0xff]
        %v2903 = vld [vmem:[%s293 + $0x4e98] sm:$0xff]
        %v2904 = vld [vmem:[%s293 + $0x4ea0] sm:$0xff]
        %v2905 = vld [vmem:[%s293 + $0x4ea8] sm:$0xff]
        %v2906 = vld [vmem:[%s293 + $0x4eb0] sm:$0xff]
        %v2907 = vld [vmem:[%s293 + $0x4eb8] sm:$0xff]
        %v2908 = vld [vmem:[%s293 + $0x4ec0] sm:$0xff]
        %v2909 = vld [vmem:[%s293 + $0x4ec8] sm:$0xff]
        %v2910 = vld [vmem:[%s293 + $0x4ed0] sm:$0xff]
        %v2911 = vld [vmem:[%s293 + $0x4ed8] sm:$0xff]
        %v2912 = vld [vmem:[%s293 + $0x4ee0] sm:$0xff]
        %v2913 = vld [vmem:[%s293 + $0x4ee8] sm:$0xff]
        %v2914 = vld [vmem:[%s293 + $0x4ef0] sm:$0xff]
        %v2915 = vld [vmem:[%s293 + $0x4ef8] sm:$0xff]
        %v2916 = vld [vmem:[%s293 + $0x4f00] sm:$0xff]
        %v2917 = vld [vmem:[%s293 + $0x4f08] sm:$0xff]
        %v2918 = vld [vmem:[%s293 + $0x4f10] sm:$0xff]
        %v2919 = vld [vmem:[%s293 + $0x4f18] sm:$0xff]
        %v2920 = vld [vmem:[%s293 + $0x4f20] sm:$0xff]
        %v2921 = vld [vmem:[%s293 + $0x4f28] sm:$0xff]
        %v2922 = vld [vmem:[%s293 + $0x4f30] sm:$0xff]
        %v2923 = vld [vmem:[%s293 + $0x4f38] sm:$0xff]
        %v2924 = vld [vmem:[%s293 + $0x4f40] sm:$0xff]
        %v2925 = vld [vmem:[%s293 + $0x4f48] sm:$0xff]
        %v2926 = vld [vmem:[%s293 + $0x4f50] sm:$0xff]
        %v2927 = vld [vmem:[%s293 + $0x4f58] sm:$0xff]
        %v2928 = vld [vmem:[%s293 + $0x4f60] sm:$0xff]
        %v2929 = vld [vmem:[%s293 + $0x4f68] sm:$0xff]
        %v2930 = vld [vmem:[%s293 + $0x4f70] sm:$0xff]
        %v2931 = vld [vmem:[%s293 + $0x4f78] sm:$0xff]
        %v2932 = vld [vmem:[%s293 + $0x4f80] sm:$0xff]
        %v2933 = vld [vmem:[%s293 + $0x4f88] sm:$0xff]
        %v2934 = vld [vmem:[%s293 + $0x4f90] sm:$0xff]
        %v2935 = vld [vmem:[%s293 + $0x4f98] sm:$0xff]
        %v2936 = vld [vmem:[%s293 + $0x4fa0] sm:$0xff]
        %v2937 = vld [vmem:[%s293 + $0x4fa8] sm:$0xff]
        %v2938 = vld [vmem:[%s293 + $0x4fb0] sm:$0xff]
        %v2939 = vld [vmem:[%s293 + $0x4fb8] sm:$0xff]
        %v2940 = vld [vmem:[%s293 + $0x4fc0] sm:$0xff]
        %v2941 = vld [vmem:[%s293 + $0x4fc8] sm:$0xff]
        %v2942 = vld [vmem:[%s293 + $0x4fd0] sm:$0xff]
        %v2943 = vld [vmem:[%s293 + $0x4fd8] sm:$0xff]
        %v2944 = vld [vmem:[%s293 + $0x4fe0] sm:$0xff]
        %v2945 = vld [vmem:[%s293 + $0x4fe8] sm:$0xff]
        %v2946 = vld [vmem:[%s293 + $0x4ff0] sm:$0xff]
        %v2947 = vld [vmem:[%s293 + $0x4ff8] sm:$0xff]
        %v2948 = vld [vmem:[%s293 + $0x5000] sm:$0xff]
        %v2949 = vld [vmem:[%s293 + $0x5008] sm:$0xff]
        %v2950 = vld [vmem:[%s293 + $0x5010] sm:$0xff]
        %v2951 = vld [vmem:[%s293 + $0x5018] sm:$0xff]
        %v2952 = vld [vmem:[%s293 + $0x5020] sm:$0xff]
        %v2953 = vld [vmem:[%s293 + $0x5028] sm:$0xff]
        %v2954 = vld [vmem:[%s293 + $0x5030] sm:$0xff]
        %v2955 = vld [vmem:[%s293 + $0x5038] sm:$0xff]
        %v2956 = vld [vmem:[%s293 + $0x5040] sm:$0xff]
        %v2957 = vld [vmem:[%s293 + $0x5048] sm:$0xff]
        %v2958 = vld [vmem:[%s293 + $0x5050] sm:$0xff]
        %v2959 = vld [vmem:[%s293 + $0x5058] sm:$0xff]
        %v2960 = vld [vmem:[%s293 + $0x5060] sm:$0xff]
        %v2961 = vld [vmem:[%s293 + $0x5068] sm:$0xff]
        %v2962 = vld [vmem:[%s293 + $0x5070] sm:$0xff]
        %v2963 = vld [vmem:[%s293 + $0x5078] sm:$0xff]
        %v2964 = vld [vmem:[%s293 + $0x5080] sm:$0xff]
        %v2965 = vld [vmem:[%s293 + $0x5088] sm:$0xff]
        %v2966 = vld [vmem:[%s293 + $0x5090] sm:$0xff]
        %v2967 = vld [vmem:[%s293 + $0x5098] sm:$0xff]
        %v2968 = vld [vmem:[%s293 + $0x50a0] sm:$0xff]
        %v2969 = vld [vmem:[%s293 + $0x50a8] sm:$0xff]
        %v2970 = vld [vmem:[%s293 + $0x50b0] sm:$0xff]
        %v2971 = vld [vmem:[%s293 + $0x50b8] sm:$0xff]
        %v2972 = vld [vmem:[%s293 + $0x50c0] sm:$0xff]
        %v2973 = vld [vmem:[%s293 + $0x50c8] sm:$0xff]
        %v2974 = vld [vmem:[%s293 + $0x50d0] sm:$0xff]
        %v2975 = vld [vmem:[%s293 + $0x50d8] sm:$0xff]
        %v2976 = vld [vmem:[%s293 + $0x50e0] sm:$0xff]
        %v2977 = vld [vmem:[%s293 + $0x50e8] sm:$0xff]
        %v2978 = vld [vmem:[%s293 + $0x50f0] sm:$0xff]
        %v2979 = vld [vmem:[%s293 + $0x50f8] sm:$0xff]
        %v2980 = vld [vmem:[%s293 + $0x5100] sm:$0xff]
        %v2981 = vld [vmem:[%s293 + $0x5108] sm:$0xff]
        %v2982 = vld [vmem:[%s293 + $0x5110] sm:$0xff]
        %v2983 = vld [vmem:[%s293 + $0x5118] sm:$0xff]
        %v2984 = vld [vmem:[%s293 + $0x5120] sm:$0xff]
        %v2985 = vld [vmem:[%s293 + $0x5128] sm:$0xff]
        %v2986 = vld [vmem:[%s293 + $0x5130] sm:$0xff]
        %v2987 = vld [vmem:[%s293 + $0x5138] sm:$0xff]
        %v2988 = vld [vmem:[%s293 + $0x5140] sm:$0xff]
        %v2989 = vld [vmem:[%s293 + $0x5148] sm:$0xff]
        %v2990 = vld [vmem:[%s293 + $0x5150] sm:$0xff]
        %v2991 = vld [vmem:[%s293 + $0x5158] sm:$0xff]
        %v2992 = vld [vmem:[%s293 + $0x5160] sm:$0xff]
        %v2993 = vld [vmem:[%s293 + $0x5168] sm:$0xff]
        %v2994 = vld [vmem:[%s293 + $0x5170] sm:$0xff]
        %v2995 = vld [vmem:[%s293 + $0x5178] sm:$0xff]
        %v2996 = vld [vmem:[%s293 + $0x5180] sm:$0xff]
        %v2997 = vld [vmem:[%s293 + $0x5188] sm:$0xff]
        %v2998 = vld [vmem:[%s293 + $0x5190] sm:$0xff]
        %v2999 = vld [vmem:[%s293 + $0x5198] sm:$0xff]
        %v3000 = vld [vmem:[%s293 + $0x51a0] sm:$0xff]
        %v3001 = vld [vmem:[%s293 + $0x51a8] sm:$0xff]
        %v3002 = vld [vmem:[%s293 + $0x51b0] sm:$0xff]
        %v3003 = vld [vmem:[%s293 + $0x51b8] sm:$0xff]
        %v3004 = vld [vmem:[%s293 + $0x51c0] sm:$0xff]
        %v3005 = vld [vmem:[%s293 + $0x51c8] sm:$0xff]
        %v3006 = vld [vmem:[%s293 + $0x51d0] sm:$0xff]
        %v3007 = vld [vmem:[%s293 + $0x51d8] sm:$0xff]
        %v3008 = vld [vmem:[%s293 + $0x51e0] sm:$0xff]
        %v3009 = vld [vmem:[%s293 + $0x51e8] sm:$0xff]
        %v3010 = vld [vmem:[%s293 + $0x51f0] sm:$0xff]
        %v3011 = vld [vmem:[%s293 + $0x51f8] sm:$0xff]
        %v3012 = vld [vmem:[%s293 + $0x5200] sm:$0xff]
        %v3013 = vld [vmem:[%s293 + $0x5208] sm:$0xff]
        %v3014 = vld [vmem:[%s293 + $0x5210] sm:$0xff]
        %v3015 = vld [vmem:[%s293 + $0x5218] sm:$0xff]
        %v3016 = vld [vmem:[%s293 + $0x5220] sm:$0xff]
        %v3017 = vld [vmem:[%s293 + $0x5228] sm:$0xff]
        %v3018 = vld [vmem:[%s293 + $0x5230] sm:$0xff]
        %v3019 = vld [vmem:[%s293 + $0x5238] sm:$0xff]
        %v3020 = vld [vmem:[%s293 + $0x5240] sm:$0xff]
        %v3021 = vld [vmem:[%s293 + $0x5248] sm:$0xff]
        %v3022 = vld [vmem:[%s293 + $0x5250] sm:$0xff]
        %v3023 = vld [vmem:[%s293 + $0x5258] sm:$0xff]
        %v3024 = vld [vmem:[%s293 + $0x5260] sm:$0xff]
        %v3025 = vld [vmem:[%s293 + $0x5268] sm:$0xff]
        %v3026 = vld [vmem:[%s293 + $0x5270] sm:$0xff]
        %v3027 = vld [vmem:[%s293 + $0x5278] sm:$0xff]
        %v3028 = vld [vmem:[%s293 + $0x5280] sm:$0xff]
        %v3029 = vld [vmem:[%s293 + $0x5288] sm:$0xff]
        %v3030 = vld [vmem:[%s293 + $0x5290] sm:$0xff]
        %v3031 = vld [vmem:[%s293 + $0x5298] sm:$0xff]
        %v3032 = vld [vmem:[%s293 + $0x52a0] sm:$0xff]
        %v3033 = vld [vmem:[%s293 + $0x52a8] sm:$0xff]
        %v3034 = vld [vmem:[%s293 + $0x52b0] sm:$0xff]
        %v3035 = vld [vmem:[%s293 + $0x52b8] sm:$0xff]
        %v3036 = vld [vmem:[%s293 + $0x52c0] sm:$0xff]
        %v3037 = vld [vmem:[%s293 + $0x52c8] sm:$0xff]
        %v3038 = vld [vmem:[%s293 + $0x52d0] sm:$0xff]
        %v3039 = vld [vmem:[%s293 + $0x52d8] sm:$0xff]
        %v3040 = vld [vmem:[%s293 + $0x52e0] sm:$0xff]
        %v3041 = vld [vmem:[%s293 + $0x52e8] sm:$0xff]
        %v3042 = vld [vmem:[%s293 + $0x52f0] sm:$0xff]
        %v3043 = vld [vmem:[%s293 + $0x52f8] sm:$0xff]
        %v3044 = vld [vmem:[%s293 + $0x5300] sm:$0xff]
        %v3045 = vld [vmem:[%s293 + $0x5308] sm:$0xff]
        %v3046 = vld [vmem:[%s293 + $0x5310] sm:$0xff]
        %v3047 = vld [vmem:[%s293 + $0x5318] sm:$0xff]
        %v3048 = vld [vmem:[%s293 + $0x5320] sm:$0xff]
        %v3049 = vld [vmem:[%s293 + $0x5328] sm:$0xff]
        %v3050 = vld [vmem:[%s293 + $0x5330] sm:$0xff]
        %v3051 = vld [vmem:[%s293 + $0x5338] sm:$0xff]
        %v3052 = vld [vmem:[%s293 + $0x5340] sm:$0xff]
        %v3053 = vld [vmem:[%s293 + $0x5348] sm:$0xff]
        %v3054 = vld [vmem:[%s293 + $0x5350] sm:$0xff]
        %v3055 = vld [vmem:[%s293 + $0x5358] sm:$0xff]
        %v3056 = vld [vmem:[%s293 + $0x5360] sm:$0xff]
        %v3057 = vld [vmem:[%s293 + $0x5368] sm:$0xff]
        %v3058 = vld [vmem:[%s293 + $0x5370] sm:$0xff]
        %v3059 = vld [vmem:[%s293 + $0x5378] sm:$0xff]
        %v3060 = vld [vmem:[%s293 + $0x5380] sm:$0xff]
        %v3061 = vld [vmem:[%s293 + $0x5388] sm:$0xff]
        %v3062 = vld [vmem:[%s293 + $0x5390] sm:$0xff]
        %v3063 = vld [vmem:[%s293 + $0x5398] sm:$0xff]
        %v3064 = vld [vmem:[%s293 + $0x53a0] sm:$0xff]
        %v3065 = vld [vmem:[%s293 + $0x53a8] sm:$0xff]
        %v3066 = vld [vmem:[%s293 + $0x53b0] sm:$0xff]
        %v3067 = vld [vmem:[%s293 + $0x53b8] sm:$0xff]
        %v3068 = vld [vmem:[%s293 + $0x53c0] sm:$0xff]
        %v3069 = vld [vmem:[%s293 + $0x53c8] sm:$0xff]
        %v3070 = vld [vmem:[%s293 + $0x53d0] sm:$0xff]
        %v3071 = vld [vmem:[%s293 + $0x53d8] sm:$0xff]
        %v3072 = vld [vmem:[%s293 + $0x53e0] sm:$0xff]
        %v3073 = vld [vmem:[%s293 + $0x53e8] sm:$0xff]
        %v3074 = vld [vmem:[%s293 + $0x53f0] sm:$0xff]
        %v3075 = vld [vmem:[%s293 + $0x53f8] sm:$0xff]
        %v3076 = vld [vmem:[%s293 + $0x5400] sm:$0xff]
        %v3077 = vld [vmem:[%s293 + $0x5408] sm:$0xff]
        %v3078 = vld [vmem:[%s293 + $0x5410] sm:$0xff]
        %v3079 = vld [vmem:[%s293 + $0x5418] sm:$0xff]
        %v3080 = vld [vmem:[%s293 + $0x5420] sm:$0xff]
        %v3081 = vld [vmem:[%s293 + $0x5428] sm:$0xff]
        %v3082 = vld [vmem:[%s293 + $0x5430] sm:$0xff]
        %v3083 = vld [vmem:[%s293 + $0x5438] sm:$0xff]
        %v3084 = vld [vmem:[%s293 + $0x5440] sm:$0xff]
        %v3085 = vld [vmem:[%s293 + $0x5448] sm:$0xff]
        %v3086 = vld [vmem:[%s293 + $0x5450] sm:$0xff]
        %v3087 = vld [vmem:[%s293 + $0x5458] sm:$0xff]
        %v3088 = vld [vmem:[%s293 + $0x5460] sm:$0xff]
        %v3089 = vld [vmem:[%s293 + $0x5468] sm:$0xff]
        %v3090 = vld [vmem:[%s293 + $0x5470] sm:$0xff]
        %v3091 = vld [vmem:[%s293 + $0x5478] sm:$0xff]
        %v3092 = vld [vmem:[%s293 + $0x5480] sm:$0xff]
        %v3093 = vld [vmem:[%s293 + $0x5488] sm:$0xff]
        %v3094 = vld [vmem:[%s293 + $0x5490] sm:$0xff]
        %v3095 = vld [vmem:[%s293 + $0x5498] sm:$0xff]
        %v3096 = vld [vmem:[%s293 + $0x54a0] sm:$0xff]
        %v3097 = vld [vmem:[%s293 + $0x54a8] sm:$0xff]
        %v3098 = vld [vmem:[%s293 + $0x54b0] sm:$0xff]
        %v3099 = vld [vmem:[%s293 + $0x54b8] sm:$0xff]
        %v3100 = vld [vmem:[%s293 + $0x54c0] sm:$0xff]
        %v3101 = vld [vmem:[%s293 + $0x54c8] sm:$0xff]
        %v3102 = vld [vmem:[%s293 + $0x54d0] sm:$0xff]
        %v3103 = vld [vmem:[%s293 + $0x54d8] sm:$0xff]
        %v3104 = vld [vmem:[%s293 + $0x54e0] sm:$0xff]
        %v3105 = vld [vmem:[%s293 + $0x54e8] sm:$0xff]
        %v3106 = vld [vmem:[%s293 + $0x54f0] sm:$0xff]
        %v3107 = vld [vmem:[%s293 + $0x54f8] sm:$0xff]
        %v3108 = vld [vmem:[%s293 + $0x5500] sm:$0xff]
        %v3109 = vld [vmem:[%s293 + $0x5508] sm:$0xff]
        %v3110 = vld [vmem:[%s293 + $0x5510] sm:$0xff]
        %v3111 = vld [vmem:[%s293 + $0x5518] sm:$0xff]
        %v3112 = vld [vmem:[%s293 + $0x5520] sm:$0xff]
        %v3113 = vld [vmem:[%s293 + $0x5528] sm:$0xff]
        %v3114 = vld [vmem:[%s293 + $0x5530] sm:$0xff]
        %v3115 = vld [vmem:[%s293 + $0x5538] sm:$0xff]
        %v3116 = vld [vmem:[%s293 + $0x5540] sm:$0xff]
        %v3117 = vld [vmem:[%s293 + $0x5548] sm:$0xff]
        %v3118 = vld [vmem:[%s293 + $0x5550] sm:$0xff]
        %v3119 = vld [vmem:[%s293 + $0x5558] sm:$0xff]
        %v3120 = vld [vmem:[%s293 + $0x5560] sm:$0xff]
        %v3121 = vld [vmem:[%s293 + $0x5568] sm:$0xff]
        %v3122 = vld [vmem:[%s293 + $0x5570] sm:$0xff]
        %v3123 = vld [vmem:[%s293 + $0x5578] sm:$0xff]
        %v3124 = vld [vmem:[%s293 + $0x5580] sm:$0xff]
        %v3125 = vld [vmem:[%s293 + $0x5588] sm:$0xff]
        %v3126 = vld [vmem:[%s293 + $0x5590] sm:$0xff]
        %v3127 = vld [vmem:[%s293 + $0x5598] sm:$0xff]
        %v3128 = vld [vmem:[%s293 + $0x55a0] sm:$0xff]
        %v3129 = vld [vmem:[%s293 + $0x55a8] sm:$0xff]
        %v3130 = vld [vmem:[%s293 + $0x55b0] sm:$0xff]
        %v3131 = vld [vmem:[%s293 + $0x55b8] sm:$0xff]
        %v3132 = vld [vmem:[%s293 + $0x55c0] sm:$0xff]
        %v3133 = vld [vmem:[%s293 + $0x55c8] sm:$0xff]
        %v3134 = vld [vmem:[%s293 + $0x55d0] sm:$0xff]
        %v3135 = vld [vmem:[%s293 + $0x55d8] sm:$0xff]
        %v3136 = vld [vmem:[%s293 + $0x55e0] sm:$0xff]
        %v3137 = vld [vmem:[%s293 + $0x55e8] sm:$0xff]
        %v3138 = vld [vmem:[%s293 + $0x55f0] sm:$0xff]
        %v3139 = vld [vmem:[%s293 + $0x55f8] sm:$0xff]
        %v3140 = vld [vmem:[%s293 + $0x5600] sm:$0xff]
        %v3141 = vld [vmem:[%s293 + $0x5608] sm:$0xff]
        %v3142 = vld [vmem:[%s293 + $0x5610] sm:$0xff]
        %v3143 = vld [vmem:[%s293 + $0x5618] sm:$0xff]
        %v3144 = vld [vmem:[%s293 + $0x5620] sm:$0xff]
        %v3145 = vld [vmem:[%s293 + $0x5628] sm:$0xff]
        %v3146 = vld [vmem:[%s293 + $0x5630] sm:$0xff]
        %v3147 = vld [vmem:[%s293 + $0x5638] sm:$0xff]
        %v3148 = vld [vmem:[%s293 + $0x5640] sm:$0xff]
        %v3149 = vld [vmem:[%s293 + $0x5648] sm:$0xff]
        %v3150 = vld [vmem:[%s293 + $0x5650] sm:$0xff]
        %v3151 = vld [vmem:[%s293 + $0x5658] sm:$0xff]
        %v3152 = vld [vmem:[%s293 + $0x5660] sm:$0xff]
        %v3153 = vld [vmem:[%s293 + $0x5668] sm:$0xff]
        %v3154 = vld [vmem:[%s293 + $0x5670] sm:$0xff]
        %v3155 = vld [vmem:[%s293 + $0x5678] sm:$0xff]
        %v3156 = vld [vmem:[%s293 + $0x5680] sm:$0xff]
        %v3157 = vld [vmem:[%s293 + $0x5688] sm:$0xff]
        %v3158 = vld [vmem:[%s293 + $0x5690] sm:$0xff]
        %v3159 = vld [vmem:[%s293 + $0x5698] sm:$0xff]
        %v3160 = vld [vmem:[%s293 + $0x56a0] sm:$0xff]
        %v3161 = vld [vmem:[%s293 + $0x56a8] sm:$0xff]
        %v3162 = vld [vmem:[%s293 + $0x56b0] sm:$0xff]
        %v3163 = vld [vmem:[%s293 + $0x56b8] sm:$0xff]
        %v3164 = vld [vmem:[%s293 + $0x56c0] sm:$0xff]
        %v3165 = vld [vmem:[%s293 + $0x56c8] sm:$0xff]
        %v3166 = vld [vmem:[%s293 + $0x56d0] sm:$0xff]
        %v3167 = vld [vmem:[%s293 + $0x56d8] sm:$0xff]
        %v3168 = vld [vmem:[%s293 + $0x56e0] sm:$0xff]
        %v3169 = vld [vmem:[%s293 + $0x56e8] sm:$0xff]
        %v3170 = vld [vmem:[%s293 + $0x56f0] sm:$0xff]
        %v3171 = vld [vmem:[%s293 + $0x56f8] sm:$0xff]
        %v3172 = vld [vmem:[%s293 + $0x5700] sm:$0xff]
        %v3173 = vld [vmem:[%s293 + $0x5708] sm:$0xff]
        %v3174 = vld [vmem:[%s293 + $0x5710] sm:$0xff]
        %v3175 = vld [vmem:[%s293 + $0x5718] sm:$0xff]
        %v3176 = vld [vmem:[%s293 + $0x5720] sm:$0xff]
        %v3177 = vld [vmem:[%s293 + $0x5728] sm:$0xff]
        %v3178 = vld [vmem:[%s293 + $0x5730] sm:$0xff]
        %v3179 = vld [vmem:[%s293 + $0x5738] sm:$0xff]
        %v3180 = vld [vmem:[%s293 + $0x5740] sm:$0xff]
        %v3181 = vld [vmem:[%s293 + $0x5748] sm:$0xff]
        %v3182 = vld [vmem:[%s293 + $0x5750] sm:$0xff]
        %v3183 = vld [vmem:[%s293 + $0x5758] sm:$0xff]
        %v3184 = vld [vmem:[%s293 + $0x5760] sm:$0xff]
        %v3185 = vld [vmem:[%s293 + $0x5768] sm:$0xff]
        %v3186 = vld [vmem:[%s293 + $0x5770] sm:$0xff]
        %v3187 = vld [vmem:[%s293 + $0x5778] sm:$0xff]
        %v3188 = vld [vmem:[%s293 + $0x5780] sm:$0xff]
        %v3189 = vld [vmem:[%s293 + $0x5788] sm:$0xff]
        %v3190 = vld [vmem:[%s293 + $0x5790] sm:$0xff]
        %v3191 = vld [vmem:[%s293 + $0x5798] sm:$0xff]
        %v3192 = vld [vmem:[%s293 + $0x57a0] sm:$0xff]
        %v3193 = vld [vmem:[%s293 + $0x57a8] sm:$0xff]
        %v3194 = vld [vmem:[%s293 + $0x57b0] sm:$0xff]
        %v3195 = vld [vmem:[%s293 + $0x57b8] sm:$0xff]
        %v3196 = vld [vmem:[%s293 + $0x57c0] sm:$0xff]
        %v3197 = vld [vmem:[%s293 + $0x57c8] sm:$0xff]
        %v3198 = vld [vmem:[%s293 + $0x57d0] sm:$0xff]
        %v3199 = vld [vmem:[%s293 + $0x57d8] sm:$0xff]
        %v3200 = vld [vmem:[%s293 + $0x57e0] sm:$0xff]
        %v3201 = vld [vmem:[%s293 + $0x57e8] sm:$0xff]
        %v3202 = vld [vmem:[%s293 + $0x57f0] sm:$0xff]
        %v3203 = vld [vmem:[%s293 + $0x57f8] sm:$0xff]
        %v3204 = vld [vmem:[%s293 + $0x5800] sm:$0xff]
        %v3205 = vld [vmem:[%s293 + $0x5808] sm:$0xff]
        %v3206 = vld [vmem:[%s293 + $0x5810] sm:$0xff]
        %v3207 = vld [vmem:[%s293 + $0x5818] sm:$0xff]
        %v3208 = vld [vmem:[%s293 + $0x5820] sm:$0xff]
        %v3209 = vld [vmem:[%s293 + $0x5828] sm:$0xff]
        %v3210 = vld [vmem:[%s293 + $0x5830] sm:$0xff]
        %v3211 = vld [vmem:[%s293 + $0x5838] sm:$0xff]
        %v3212 = vld [vmem:[%s293 + $0x5840] sm:$0xff]
        %v3213 = vld [vmem:[%s293 + $0x5848] sm:$0xff]
        %v3214 = vld [vmem:[%s293 + $0x5850] sm:$0xff]
        %v3215 = vld [vmem:[%s293 + $0x5858] sm:$0xff]
        %v3216 = vld [vmem:[%s293 + $0x5860] sm:$0xff]
        %v3217 = vld [vmem:[%s293 + $0x5868] sm:$0xff]
        %v3218 = vld [vmem:[%s293 + $0x5870] sm:$0xff]
        %v3219 = vld [vmem:[%s293 + $0x5878] sm:$0xff]
        %v3220 = vld [vmem:[%s293 + $0x5880] sm:$0xff]
        %v3221 = vld [vmem:[%s293 + $0x5888] sm:$0xff]
        %v3222 = vld [vmem:[%s293 + $0x5890] sm:$0xff]
        %v3223 = vld [vmem:[%s293 + $0x5898] sm:$0xff]
        %v3224 = vld [vmem:[%s293 + $0x58a0] sm:$0xff]
        %v3225 = vld [vmem:[%s293 + $0x58a8] sm:$0xff]
        %v3226 = vld [vmem:[%s293 + $0x58b0] sm:$0xff]
        %v3227 = vld [vmem:[%s293 + $0x58b8] sm:$0xff]
        %v3228 = vld [vmem:[%s293 + $0x58c0] sm:$0xff]
        %v3229 = vld [vmem:[%s293 + $0x58c8] sm:$0xff]
        %v3230 = vld [vmem:[%s293 + $0x58d0] sm:$0xff]
        %v3231 = vld [vmem:[%s293 + $0x58d8] sm:$0xff]
        %v3232 = vld [vmem:[%s293 + $0x58e0] sm:$0xff]
        %v3233 = vld [vmem:[%s293 + $0x58e8] sm:$0xff]
        %v3234 = vld [vmem:[%s293 + $0x58f0] sm:$0xff]
        %v3235 = vld [vmem:[%s293 + $0x58f8] sm:$0xff]
        %v3236 = vld [vmem:[%s293 + $0x5900] sm:$0xff]
        %v3237 = vld [vmem:[%s293 + $0x5908] sm:$0xff]
        %v3238 = vld [vmem:[%s293 + $0x5910] sm:$0xff]
        %v3239 = vld [vmem:[%s293 + $0x5918] sm:$0xff]
        %v3240 = vld [vmem:[%s293 + $0x5920] sm:$0xff]
        %v3241 = vld [vmem:[%s293 + $0x5928] sm:$0xff]
        %v3242 = vld [vmem:[%s293 + $0x5930] sm:$0xff]
        %v3243 = vld [vmem:[%s293 + $0x5938] sm:$0xff]
        %v3244 = vld [vmem:[%s293 + $0x5940] sm:$0xff]
        %v3245 = vld [vmem:[%s293 + $0x5948] sm:$0xff]
        %v3246 = vld [vmem:[%s293 + $0x5950] sm:$0xff]
        %v3247 = vld [vmem:[%s293 + $0x5958] sm:$0xff]
        %v3248 = vld [vmem:[%s293 + $0x5960] sm:$0xff]
        %v3249 = vld [vmem:[%s293 + $0x5968] sm:$0xff]
        %v3250 = vld [vmem:[%s293 + $0x5970] sm:$0xff]
        %v3251 = vld [vmem:[%s293 + $0x5978] sm:$0xff]
        %v3252 = vld [vmem:[%s293 + $0x5980] sm:$0xff]
        %v3253 = vld [vmem:[%s293 + $0x5988] sm:$0xff]
        %v3254 = vld [vmem:[%s293 + $0x5990] sm:$0xff]
        %v3255 = vld [vmem:[%s293 + $0x5998] sm:$0xff]
        %v3256 = vld [vmem:[%s293 + $0x59a0] sm:$0xff]
        %v3257 = vld [vmem:[%s293 + $0x59a8] sm:$0xff]
        %v3258 = vld [vmem:[%s293 + $0x59b0] sm:$0xff]
        %v3259 = vld [vmem:[%s293 + $0x59b8] sm:$0xff]
        %v3260 = vld [vmem:[%s293 + $0x59c0] sm:$0xff]
        %v3261 = vld [vmem:[%s293 + $0x59c8] sm:$0xff]
        %v3262 = vld [vmem:[%s293 + $0x59d0] sm:$0xff]
        %v3263 = vld [vmem:[%s293 + $0x59d8] sm:$0xff]
        %v3264 = vld [vmem:[%s293 + $0x59e0] sm:$0xff]
        %v3265 = vld [vmem:[%s293 + $0x59e8] sm:$0xff]
        %v3266 = vld [vmem:[%s293 + $0x59f0] sm:$0xff]
        %v3267 = vld [vmem:[%s293 + $0x59f8] sm:$0xff]
        %v3268 = vld [vmem:[%s293 + $0x5a00] sm:$0xff]
        %v3269 = vld [vmem:[%s293 + $0x5a08] sm:$0xff]
        %v3270 = vld [vmem:[%s293 + $0x5a10] sm:$0xff]
        %v3271 = vld [vmem:[%s293 + $0x5a18] sm:$0xff]
        %v3272 = vld [vmem:[%s293 + $0x5a20] sm:$0xff]
        %v3273 = vld [vmem:[%s293 + $0x5a28] sm:$0xff]
        %v3274 = vld [vmem:[%s293 + $0x5a30] sm:$0xff]
        %v3275 = vld [vmem:[%s293 + $0x5a38] sm:$0xff]
        %v3276 = vld [vmem:[%s293 + $0x5a40] sm:$0xff]
        %v3277 = vld [vmem:[%s293 + $0x5a48] sm:$0xff]
        %v3278 = vld [vmem:[%s293 + $0x5a50] sm:$0xff]
        %v3279 = vld [vmem:[%s293 + $0x5a58] sm:$0xff]
        %v3280 = vld [vmem:[%s293 + $0x5a60] sm:$0xff]
        %v3281 = vld [vmem:[%s293 + $0x5a68] sm:$0xff]
        %v3282 = vld [vmem:[%s293 + $0x5a70] sm:$0xff]
        %v3283 = vld [vmem:[%s293 + $0x5a78] sm:$0xff]
        %v3284 = vld [vmem:[%s293 + $0x5a80] sm:$0xff]
        %v3285 = vld [vmem:[%s293 + $0x5a88] sm:$0xff]
        %v3286 = vld [vmem:[%s293 + $0x5a90] sm:$0xff]
        %v3287 = vld [vmem:[%s293 + $0x5a98] sm:$0xff]
        %v3288 = vld [vmem:[%s293 + $0x5aa0] sm:$0xff]
        %v3289 = vld [vmem:[%s293 + $0x5aa8] sm:$0xff]
        %v3290 = vld [vmem:[%s293 + $0x5ab0] sm:$0xff]
        %v3291 = vld [vmem:[%s293 + $0x5ab8] sm:$0xff]
        %v3292 = vld [vmem:[%s293 + $0x5ac0] sm:$0xff]
        %v3293 = vld [vmem:[%s293 + $0x5ac8] sm:$0xff]
        %v3294 = vld [vmem:[%s293 + $0x5ad0] sm:$0xff]
        %v3295 = vld [vmem:[%s293 + $0x5ad8] sm:$0xff]
        %v3296 = vld [vmem:[%s293 + $0x5ae0] sm:$0xff]
        %v3297 = vld [vmem:[%s293 + $0x5ae8] sm:$0xff]
        %v3298 = vld [vmem:[%s293 + $0x5af0] sm:$0xff]
        %v3299 = vld [vmem:[%s293 + $0x5af8] sm:$0xff]
        %v3300 = vld [vmem:[%s293 + $0x5b00] sm:$0xff]
        %v3301 = vld [vmem:[%s293 + $0x5b08] sm:$0xff]
        %v3302 = vld [vmem:[%s293 + $0x5b10] sm:$0xff]
        %v3303 = vld [vmem:[%s293 + $0x5b18] sm:$0xff]
        %v3304 = vld [vmem:[%s293 + $0x5b20] sm:$0xff]
        %v3305 = vld [vmem:[%s293 + $0x5b28] sm:$0xff]
        %v3306 = vld [vmem:[%s293 + $0x5b30] sm:$0xff]
        %v3307 = vld [vmem:[%s293 + $0x5b38] sm:$0xff]
        %v3308 = vld [vmem:[%s293 + $0x5b40] sm:$0xff]
        %v3309 = vld [vmem:[%s293 + $0x5b48] sm:$0xff]
        %v3310 = vld [vmem:[%s293 + $0x5b50] sm:$0xff]
        %v3311 = vld [vmem:[%s293 + $0x5b58] sm:$0xff]
        %v3312 = vld [vmem:[%s293 + $0x5b60] sm:$0xff]
        %v3313 = vld [vmem:[%s293 + $0x5b68] sm:$0xff]
        %v3314 = vld [vmem:[%s293 + $0x5b70] sm:$0xff]
        %v3315 = vld [vmem:[%s293 + $0x5b78] sm:$0xff]
        %v3316 = vld [vmem:[%s293 + $0x5b80] sm:$0xff]
        %v3317 = vld [vmem:[%s293 + $0x5b88] sm:$0xff]
        %v3318 = vld [vmem:[%s293 + $0x5b90] sm:$0xff]
        %v3319 = vld [vmem:[%s293 + $0x5b98] sm:$0xff]
        %v3320 = vld [vmem:[%s293 + $0x5ba0] sm:$0xff]
        %v3321 = vld [vmem:[%s293 + $0x5ba8] sm:$0xff]
        %v3322 = vld [vmem:[%s293 + $0x5bb0] sm:$0xff]
        %v3323 = vld [vmem:[%s293 + $0x5bb8] sm:$0xff]
        %v3324 = vld [vmem:[%s293 + $0x5bc0] sm:$0xff]
        %v3325 = vld [vmem:[%s293 + $0x5bc8] sm:$0xff]
        %v3326 = vld [vmem:[%s293 + $0x5bd0] sm:$0xff]
        %v3327 = vld [vmem:[%s293 + $0x5bd8] sm:$0xff]
        %v3328 = vld [vmem:[%s293 + $0x5be0] sm:$0xff]
        %v3329 = vld [vmem:[%s293 + $0x5be8] sm:$0xff]
        %v3330 = vld [vmem:[%s293 + $0x5bf0] sm:$0xff]
        %v3331 = vld [vmem:[%s293 + $0x5bf8] sm:$0xff]
        %v3332 = vld [vmem:[%s293 + $0x5c00] sm:$0xff]
        %v3333 = vld [vmem:[%s293 + $0x5c08] sm:$0xff]
        %v3334 = vld [vmem:[%s293 + $0x5c10] sm:$0xff]
        %v3335 = vld [vmem:[%s293 + $0x5c18] sm:$0xff]
        %v3336 = vld [vmem:[%s293 + $0x5c20] sm:$0xff]
        %v3337 = vld [vmem:[%s293 + $0x5c28] sm:$0xff]
        %v3338 = vld [vmem:[%s293 + $0x5c30] sm:$0xff]
        %v3339 = vld [vmem:[%s293 + $0x5c38] sm:$0xff]
        %v3340 = vld [vmem:[%s293 + $0x5c40] sm:$0xff]
        %v3341 = vld [vmem:[%s293 + $0x5c48] sm:$0xff]
        %v3342 = vld [vmem:[%s293 + $0x5c50] sm:$0xff]
        %v3343 = vld [vmem:[%s293 + $0x5c58] sm:$0xff]
        %v3344 = vld [vmem:[%s293 + $0x5c60] sm:$0xff]
        %v3345 = vld [vmem:[%s293 + $0x5c68] sm:$0xff]
        %v3346 = vld [vmem:[%s293 + $0x5c70] sm:$0xff]
        %v3347 = vld [vmem:[%s293 + $0x5c78] sm:$0xff]
        %v3348 = vld [vmem:[%s293 + $0x5c80] sm:$0xff]
        %v3349 = vld [vmem:[%s293 + $0x5c88] sm:$0xff]
        %v3350 = vld [vmem:[%s293 + $0x5c90] sm:$0xff]
        %v3351 = vld [vmem:[%s293 + $0x5c98] sm:$0xff]
        %v3352 = vld [vmem:[%s293 + $0x5ca0] sm:$0xff]
        %v3353 = vld [vmem:[%s293 + $0x5ca8] sm:$0xff]
        %v3354 = vld [vmem:[%s293 + $0x5cb0] sm:$0xff]
        %v3355 = vld [vmem:[%s293 + $0x5cb8] sm:$0xff]
        %v3356 = vld [vmem:[%s293 + $0x5cc0] sm:$0xff]
        %v3357 = vld [vmem:[%s293 + $0x5cc8] sm:$0xff]
        %v3358 = vld [vmem:[%s293 + $0x5cd0] sm:$0xff]
        %v3359 = vld [vmem:[%s293 + $0x5cd8] sm:$0xff]
        %v3360 = vld [vmem:[%s293 + $0x5ce0] sm:$0xff]
        %v3361 = vld [vmem:[%s293 + $0x5ce8] sm:$0xff]
        %v3362 = vld [vmem:[%s293 + $0x5cf0] sm:$0xff]
        %v3363 = vld [vmem:[%s293 + $0x5cf8] sm:$0xff]
        %v3364 = vld [vmem:[%s293 + $0x5d00] sm:$0xff]
        %v3365 = vld [vmem:[%s293 + $0x5d08] sm:$0xff]
        %v3366 = vld [vmem:[%s293 + $0x5d10] sm:$0xff]
        %v3367 = vld [vmem:[%s293 + $0x5d18] sm:$0xff]
        %v3368 = vld [vmem:[%s293 + $0x5d20] sm:$0xff]
        %v3369 = vld [vmem:[%s293 + $0x5d28] sm:$0xff]
        %v3370 = vld [vmem:[%s293 + $0x5d30] sm:$0xff]
        %v3371 = vld [vmem:[%s293 + $0x5d38] sm:$0xff]
        %v3372 = vld [vmem:[%s293 + $0x5d40] sm:$0xff]
        %v3373 = vld [vmem:[%s293 + $0x5d48] sm:$0xff]
        %v3374 = vld [vmem:[%s293 + $0x5d50] sm:$0xff]
        %v3375 = vld [vmem:[%s293 + $0x5d58] sm:$0xff]
        %v3376 = vld [vmem:[%s293 + $0x5d60] sm:$0xff]
        %v3377 = vld [vmem:[%s293 + $0x5d68] sm:$0xff]
        %v3378 = vld [vmem:[%s293 + $0x5d70] sm:$0xff]
        %v3379 = vld [vmem:[%s293 + $0x5d78] sm:$0xff]
        %v3380 = vld [vmem:[%s293 + $0x5d80] sm:$0xff]
        %v3381 = vld [vmem:[%s293 + $0x5d88] sm:$0xff]
        %v3382 = vld [vmem:[%s293 + $0x5d90] sm:$0xff]
        %v3383 = vld [vmem:[%s293 + $0x5d98] sm:$0xff]
        %v3384 = vld [vmem:[%s293 + $0x5da0] sm:$0xff]
        %v3385 = vld [vmem:[%s293 + $0x5da8] sm:$0xff]
        %v3386 = vld [vmem:[%s293 + $0x5db0] sm:$0xff]
        %v3387 = vld [vmem:[%s293 + $0x5db8] sm:$0xff]
        %v3388 = vld [vmem:[%s293 + $0x5dc0] sm:$0xff]
        %v3389 = vld [vmem:[%s293 + $0x5dc8] sm:$0xff]
        %v3390 = vld [vmem:[%s293 + $0x5dd0] sm:$0xff]
        %v3391 = vld [vmem:[%s293 + $0x5dd8] sm:$0xff]
        %v3392 = vld [vmem:[%s293 + $0x5de0] sm:$0xff]
        %v3393 = vld [vmem:[%s293 + $0x5de8] sm:$0xff]
        %v3394 = vld [vmem:[%s293 + $0x5df0] sm:$0xff]
        %v3395 = vld [vmem:[%s293 + $0x5df8] sm:$0xff]
        %v3396 = vld [vmem:[%s293 + $0x5e00] sm:$0xff]
        %v3397 = vld [vmem:[%s293 + $0x5e08] sm:$0xff]
        %v3398 = vld [vmem:[%s293 + $0x5e10] sm:$0xff]
        %v3399 = vld [vmem:[%s293 + $0x5e18] sm:$0xff]
        %v3400 = vld [vmem:[%s293 + $0x5e20] sm:$0xff]
        %v3401 = vld [vmem:[%s293 + $0x5e28] sm:$0xff]
        %v3402 = vld [vmem:[%s293 + $0x5e30] sm:$0xff]
        %v3403 = vld [vmem:[%s293 + $0x5e38] sm:$0xff]
        %v3404 = vld [vmem:[%s293 + $0x5e40] sm:$0xff]
        %v3405 = vld [vmem:[%s293 + $0x5e48] sm:$0xff]
        %v3406 = vld [vmem:[%s293 + $0x5e50] sm:$0xff]
        %v3407 = vld [vmem:[%s293 + $0x5e58] sm:$0xff]
        %v3408 = vld [vmem:[%s293 + $0x5e60] sm:$0xff]
        %v3409 = vld [vmem:[%s293 + $0x5e68] sm:$0xff]
        %v3410 = vld [vmem:[%s293 + $0x5e70] sm:$0xff]
        %v3411 = vld [vmem:[%s293 + $0x5e78] sm:$0xff]
        %v3412 = vld [vmem:[%s293 + $0x5e80] sm:$0xff]
        %v3413 = vld [vmem:[%s293 + $0x5e88] sm:$0xff]
        %v3414 = vld [vmem:[%s293 + $0x5e90] sm:$0xff]
        %v3415 = vld [vmem:[%s293 + $0x5e98] sm:$0xff]
        %v3416 = vld [vmem:[%s293 + $0x5ea0] sm:$0xff]
        %v3417 = vld [vmem:[%s293 + $0x5ea8] sm:$0xff]
        %v3418 = vld [vmem:[%s293 + $0x5eb0] sm:$0xff]
        %v3419 = vld [vmem:[%s293 + $0x5eb8] sm:$0xff]
        %v3420 = vld [vmem:[%s293 + $0x5ec0] sm:$0xff]
        %v3421 = vld [vmem:[%s293 + $0x5ec8] sm:$0xff]
        %v3422 = vld [vmem:[%s293 + $0x5ed0] sm:$0xff]
        %v3423 = vld [vmem:[%s293 + $0x5ed8] sm:$0xff]
        %v3424 = vld [vmem:[%s293 + $0x5ee0] sm:$0xff]
        %v3425 = vld [vmem:[%s293 + $0x5ee8] sm:$0xff]
        %v3426 = vld [vmem:[%s293 + $0x5ef0] sm:$0xff]
        %v3427 = vld [vmem:[%s293 + $0x5ef8] sm:$0xff]
        %v3428 = vld [vmem:[%s293 + $0x5f00] sm:$0xff]
        %v3429 = vld [vmem:[%s293 + $0x5f08] sm:$0xff]
        %v3430 = vld [vmem:[%s293 + $0x5f10] sm:$0xff]
        %v3431 = vld [vmem:[%s293 + $0x5f18] sm:$0xff]
        %v3432 = vld [vmem:[%s293 + $0x5f20] sm:$0xff]
        %v3433 = vld [vmem:[%s293 + $0x5f28] sm:$0xff]
        %v3434 = vld [vmem:[%s293 + $0x5f30] sm:$0xff]
        %v3435 = vld [vmem:[%s293 + $0x5f38] sm:$0xff]
        %v3436 = vld [vmem:[%s293 + $0x5f40] sm:$0xff]
        %v3437 = vld [vmem:[%s293 + $0x5f48] sm:$0xff]
        %v3438 = vld [vmem:[%s293 + $0x5f50] sm:$0xff]
        %v3439 = vld [vmem:[%s293 + $0x5f58] sm:$0xff]
        %v3440 = vld [vmem:[%s293 + $0x5f60] sm:$0xff]
        %v3441 = vld [vmem:[%s293 + $0x5f68] sm:$0xff]
        %v3442 = vld [vmem:[%s293 + $0x5f70] sm:$0xff]
        %v3443 = vld [vmem:[%s293 + $0x5f78] sm:$0xff]
        %v3444 = vld [vmem:[%s293 + $0x5f80] sm:$0xff]
        %v3445 = vld [vmem:[%s293 + $0x5f88] sm:$0xff]
        %v3446 = vld [vmem:[%s293 + $0x5f90] sm:$0xff]
        %v3447 = vld [vmem:[%s293 + $0x5f98] sm:$0xff]
        %v3448 = vld [vmem:[%s293 + $0x5fa0] sm:$0xff]
        %v3449 = vld [vmem:[%s293 + $0x5fa8] sm:$0xff]
        %v3450 = vld [vmem:[%s293 + $0x5fb0] sm:$0xff]
        %v3451 = vld [vmem:[%s293 + $0x5fb8] sm:$0xff]
        %v3452 = vld [vmem:[%s293 + $0x5fc0] sm:$0xff]
        %v3453 = vld [vmem:[%s293 + $0x5fc8] sm:$0xff]
        %v3454 = vld [vmem:[%s293 + $0x5fd0] sm:$0xff]
        %v3455 = vld [vmem:[%s293 + $0x5fd8] sm:$0xff]
        %v3456 = vld [vmem:[%s293 + $0x5fe0] sm:$0xff]
        %v3457 = vld [vmem:[%s293 + $0x5fe8] sm:$0xff]
        %v3458 = vld [vmem:[%s293 + $0x5ff0] sm:$0xff]
        %v3459 = vld [vmem:[%s293 + $0x5ff8] sm:$0xff]
        %3484 = vst [vmem:[#allocation1] ss:$4 sm:$0xff] %v364
        %s3485 = scalar_lea.vmem [#allocation1], 32
        %3486 = vst [vmem:[%s3485] ss:$4 sm:$0xff] %v365
        %v3487 = vld.sshfl [vmem:[#allocation1] sm:$0xff pattern:$0x73625140]
        %v3488 = vld.sshfl [vmem:[#allocation1 + $0x8] sm:$0xff pattern:$0x73625140]
        %v3489 = vld.sshfl [vmem:[#allocation1 + $0x10] sm:$0xff pattern:$0x73625140]
        %v3490 = vld.sshfl [vmem:[#allocation1 + $0x18] sm:$0xff pattern:$0x73625140]
        %v3491 = vld.sshfl [vmem:[#allocation1 + $0x20] sm:$0xff pattern:$0x73625140]
        %v3492 = vld.sshfl [vmem:[#allocation1 + $0x28] sm:$0xff pattern:$0x73625140]
        %v3493 = vld.sshfl [vmem:[#allocation1 + $0x30] sm:$0xff pattern:$0x73625140]
        %v3494 = vld.sshfl [vmem:[#allocation1 + $0x38] sm:$0xff pattern:$0x73625140]
        %3495 = vst [vmem:[#allocation1] ss:$4 sm:$0xff] %v366
        %3496 = vst [vmem:[%s3485] ss:$4 sm:$0xff] %v367
        %v3497 = vld.sshfl [vmem:[#allocation1] sm:$0xff pattern:$0x73625140]
        %v3498 = vld.sshfl [vmem:[#allocation1 + $0x8] sm:$0xff pattern:$0x73625140]
        %v3499 = vld.sshfl [vmem:[#allocation1 + $0x10] sm:$0xff pattern:$0x73625140]
        %v3500 = vld.sshfl [vmem:[#allocation1 + $0x18] sm:$0xff pattern:$0x73625140]
        %v3501 = vld.sshfl [vmem:[#allocation1 + $0x20] sm:$0xff pattern:$0x73625140]
        %v3502 = vld.sshfl [vmem:[#allocation1 + $0x28] sm:$0xff pattern:$0x73625140]
        %v3503 = vld.sshfl [vmem:[#allocation1 + $0x30] sm:$0xff pattern:$0x73625140]
        %v3504 = vld.sshfl [vmem:[#allocation1 + $0x38] sm:$0xff pattern:$0x73625140]
        %3505 = vst [vmem:[#allocation1] ss:$4 sm:$0xff] %v368
        %3506 = vst [vmem:[%s3485] ss:$4 sm:$0xff] %v369
        %v3507 = vld.sshfl [vmem:[#allocation1] sm:$0xff pattern:$0x73625140]
        %v3508 = vld.sshfl [vmem:[#allocation1 + $0x8] sm:$0xff pattern:$0x73625140]
        %v3509 = vld.sshfl [vmem:[#allocation1 + $0x10] sm:$0xff pattern:$0x73625140]
        %v3510 = vld.sshfl [vmem:[#allocation1 + $0x18] sm:$0xff pattern:$0x73625140]
        %v3511 = vld.sshfl [vmem:[#allocation1 + $0x20] sm:$0xff pattern:$0x73625140]
        %v3512 = vld.sshfl [vmem:[#allocation1 + $0x28] sm:$0xff pattern:$0x73625140]
        %v3513 = vld.sshfl [vmem:[#allocation1 + $0x30] sm:$0xff pattern:$0x73625140]
        %v3514 = vld.sshfl [vmem:[#allocation1 + $0x38] sm:$0xff pattern:$0x73625140]
        %3515 = vst [vmem:[#allocation1] ss:$4 sm:$0xff] %v370
        %3516 = vst [vmem:[%s3485] ss:$4 sm:$0xff] %v371
        %v3517 = vld.sshfl [vmem:[#allocation1] sm:$0xff pattern:$0x73625140]
        %v3518 = vld.sshfl [vmem:[#allocation1 + $0x8] sm:$0xff pattern:$0x73625140]
        %v3519 = vld.sshfl [vmem:[#allocation1 + $0x10] sm:$0xff pattern:$0x73625140]
        %v3520 = vld.sshfl [vmem:[#allocation1 + $0x18] sm:$0xff pattern:$0x73625140]
        %v3521 = vld.sshfl [vmem:[#allocation1 + $0x20] sm:$0xff pattern:$0x73625140]
        %v3522 = vld.sshfl [vmem:[#allocation1 + $0x28] sm:$0xff pattern:$0x73625140]
        %v3523 = vld.sshfl [vmem:[#allocation1 + $0x30] sm:$0xff pattern:$0x73625140]
        %v3524 = vld.sshfl [vmem:[#allocation1 + $0x38] sm:$0xff pattern:$0x73625140]
        %3525 = vst [vmem:[#allocation1] ss:$4 sm:$0xff] %v372
        %3526 = vst [vmem:[%s3485] ss:$4 sm:$0xff] %v373
        %v3527 = vld.sshfl [vmem:[#allocation1] sm:$0xff pattern:$0x73625140]
        %v3528 = vld.sshfl [vmem:[#allocation1 + $0x8] sm:$0xff pattern:$0x73625140]
        %v3529 = vld.sshfl [vmem:[#allocation1 + $0x10] sm:$0xff pattern:$0x73625140]
        %v3530 = vld.sshfl [vmem:[#allocation1 + $0x18] sm:$0xff pattern:$0x73625140]
        %v3531 = vld.sshfl [vmem:[#allocation1 + $0x20] sm:$0xff pattern:$0x73625140]
        %v3532 = vld.sshfl [vmem:[#allocation1 + $0x28] sm:$0xff pattern:$0x73625140]
        %v3533 = vld.sshfl [vmem:[#allocation1 + $0x30] sm:$0xff pattern:$0x73625140]
        %v3534 = vld.sshfl [vmem:[#allocation1 + $0x38] sm:$0xff pattern:$0x73625140]
        %3535 = vst [vmem:[#allocation1] ss:$4 sm:$0xff] %v374
        %3536 = vst [vmem:[%s3485] ss:$4 sm:$0xff] %v375
        %v3537 = vld.sshfl [vmem:[#allocation1] sm:$0xff pattern:$0x73625140]
        %v3538 = vld.sshfl [vmem:[#allocation1 + $0x8] sm:$0xff pattern:$0x73625140]
        %v3539 = vld.sshfl [vmem:[#allocation1 + $0x10] sm:$0xff pattern:$0x73625140]
        %v3540 = vld.sshfl [vmem:[#allocation1 + $0x18] sm:$0xff pattern:$0x73625140]
        %v3541 = vld.sshfl [vmem:[#allocation1 + $0x20] sm:$0xff pattern:$0x73625140]
        %v3542 = vld.sshfl [vmem:[#allocation1 + $0x28] sm:$0xff pattern:$0x73625140]
        %v3543 = vld.sshfl [vmem:[#allocation1 + $0x30] sm:$0xff pattern:$0x73625140]
        %v3544 = vld.sshfl [vmem:[#allocation1 + $0x38] sm:$0xff pattern:$0x73625140]
        %3545 = vst [vmem:[#allocation1] ss:$4 sm:$0xff] %v376
        %3546 = vst [vmem:[%s3485] ss:$4 sm:$0xff] %v377
        %v3547 = vld.sshfl [vmem:[#allocation1] sm:$0xff pattern:$0x73625140]
        %v3548 = vld.sshfl [vmem:[#allocation1 + $0x8] sm:$0xff pattern:$0x73625140]
        %v3549 = vld.sshfl [vmem:[#allocation1 + $0x10] sm:$0xff pattern:$0x73625140]
        %v3550 = vld.sshfl [vmem:[#allocation1 + $0x18] sm:$0xff pattern:$0x73625140]
        %v3551 = vld.sshfl [vmem:[#allocation1 + $0x20] sm:$0xff pattern:$0x73625140]
        %v3552 = vld.sshfl [vmem:[#allocation1 + $0x28] sm:$0xff pattern:$0x73625140]
        %v3553 = vld.sshfl [vmem:[#allocation1 + $0x30] sm:$0xff pattern:$0x73625140]
        %v3554 = vld.sshfl [vmem:[#allocation1 + $0x38] sm:$0xff pattern:$0x73625140]
        %3555 = vst [vmem:[#allocation1] ss:$4 sm:$0xff] %v378
        %3556 = vst [vmem:[%s3485] ss:$4 sm:$0xff] %v379
        %v3557 = vld.sshfl [vmem:[#allocation1] sm:$0xff pattern:$0x73625140]
        %v3558 = vld.sshfl [vmem:[#allocation1 + $0x8] sm:$0xff pattern:$0x73625140]
        %v3559 = vld.sshfl [vmem:[#allocation1 + $0x10] sm:$0xff pattern:$0x73625140]
        %v3560 = vld.sshfl [vmem:[#allocation1 + $0x18] sm:$0xff pattern:$0x73625140]
        %v3561 = vld.sshfl [vmem:[#allocation1 + $0x20] sm:$0xff pattern:$0x73625140]
        %v3562 = vld.sshfl [vmem:[#allocation1 + $0x28] sm:$0xff pattern:$0x73625140]
        %v3563 = vld.sshfl [vmem:[#allocation1 + $0x30] sm:$0xff pattern:$0x73625140]
        %v3564 = vld.sshfl [vmem:[#allocation1 + $0x38] sm:$0xff pattern:$0x73625140]
        %3565 = vst [vmem:[#allocation1] ss:$4 sm:$0xff] %v380
        %3566 = vst [vmem:[%s3485] ss:$4 sm:$0xff] %v381
        %v3567 = vld.sshfl [vmem:[#allocation1] sm:$0xff pattern:$0x73625140]
        %v3568 = vld.sshfl [vmem:[#allocation1 + $0x8] sm:$0xff pattern:$0x73625140]
        %v3569 = vld.sshfl [vmem:[#allocation1 + $0x10] sm:$0xff pattern:$0x73625140]
        %v3570 = vld.sshfl [vmem:[#allocation1 + $0x18] sm:$0xff pattern:$0x73625140]
        %v3571 = vld.sshfl [vmem:[#allocation1 + $0x20] sm:$0xff pattern:$0x73625140]
        %v3572 = vld.sshfl [vmem:[#allocation1 + $0x28] sm:$0xff pattern:$0x73625140]
        %v3573 = vld.sshfl [vmem:[#allocation1 + $0x30] sm:$0xff pattern:$0x73625140]
        %v3574 = vld.sshfl [vmem:[#allocation1 + $0x38] sm:$0xff pattern:$0x73625140]
        %3575 = vst [vmem:[#allocation1] ss:$4 sm:$0xff] %v382
        %3576 = vst [vmem:[%s3485] ss:$4 sm:$0xff] %v383
        %v3577 = vld.sshfl [vmem:[#allocation1] sm:$0xff pattern:$0x73625140]
        %v3578 = vld.sshfl [vmem:[#allocation1 + $0x8] sm:$0xff pattern:$0x73625140]
        %v3579 = vld.sshfl [vmem:[#allocation1 + $0x10] sm:$0xff pattern:$0x73625140]
        %v3580 = vld.sshfl [vmem:[#allocation1 + $0x18] sm:$0xff pattern:$0x73625140]
        %v3581 = vld.sshfl [vmem:[#allocation1 + $0x20] sm:$0xff pattern:$0x73625140]
        %v3582 = vld.sshfl [vmem:[#allocation1 + $0x28] sm:$0xff pattern:$0x73625140]
        %v3583 = vld.sshfl [vmem:[#allocation1 + $0x30] sm:$0xff pattern:$0x73625140]
        %v3584 = vld.sshfl [vmem:[#allocation1 + $0x38] sm:$0xff pattern:$0x73625140]
        %3585 = vst [vmem:[#allocation1] ss:$4 sm:$0xff] %v384
        %3586 = vst [vmem:[%s3485] ss:$4 sm:$0xff] %v385
        %v3587 = vld.sshfl [vmem:[#allocation1] sm:$0xff pattern:$0x73625140]
        %v3588 = vld.sshfl [vmem:[#allocation1 + $0x8] sm:$0xff pattern:$0x73625140]
        %v3589 = vld.sshfl [vmem:[#allocation1 + $0x10] sm:$0xff pattern:$0x73625140]
        %v3590 = vld.sshfl [vmem:[#allocation1 + $0x18] sm:$0xff pattern:$0x73625140]
        %v3591 = vld.sshfl [vmem:[#allocation1 + $0x20] sm:$0xff pattern:$0x73625140]
        %v3592 = vld.sshfl [vmem:[#allocation1 + $0x28] sm:$0xff pattern:$0x73625140]
        %v3593 = vld.sshfl [vmem:[#allocation1 + $0x30] sm:$0xff pattern:$0x73625140]
        %v3594 = vld.sshfl [vmem:[#allocation1 + $0x38] sm:$0xff pattern:$0x73625140]
        %3595 = vst [vmem:[#allocation1] ss:$4 sm:$0xff] %v386
        %3596 = vst [vmem:[%s3485] ss:$4 sm:$0xff] %v387
        %v3597 = vld.sshfl [vmem:[#allocation1] sm:$0xff pattern:$0x73625140]
        %v3598 = vld.sshfl [vmem:[#allocation1 + $0x8] sm:$0xff pattern:$0x73625140]
        %v3599 = vld.sshfl [vmem:[#allocation1 + $0x10] sm:$0xff pattern:$0x73625140]
        %v3600 = vld.sshfl [vmem:[#allocation1 + $0x18] sm:$0xff pattern:$0x73625140]
        %v3601 = vld.sshfl [vmem:[#allocation1 + $0x20] sm:$0xff pattern:$0x73625140]
        %v3602 = vld.sshfl [vmem:[#allocation1 + $0x28] sm:$0xff pattern:$0x73625140]
        %v3603 = vld.sshfl [vmem:[#allocation1 + $0x30] sm:$0xff pattern:$0x73625140]
        %v3604 = vld.sshfl [vmem:[#allocation1 + $0x38] sm:$0xff pattern:$0x73625140]
        %3701 = vmatpush.msra.mxu0 %v418
        %3702 = vmatpush.msra.mxu0 %v416
        %3703 = vmatpush.msra.mxu0 %v414
        %3704 = vmatpush.msra.mxu0 %v412
        %3705 = vmatpush.msra.mxu0 %v410
        %3706 = vmatpush.msra.mxu0 %v408
        %3707 = vmatpush.msra.mxu0 %v406
        %3708 = vmatpush.msra.mxu0 %v404
        %3709 = vmatpush.msra.mxu0 %v402
        %3710 = vmatpush.msra.mxu0 %v400
        %3711 = vmatpush.msra.mxu0 %v398
        %3712 = vmatpush.msra.mxu0 %v396
        %3713 = vmatpush.msra.mxu0 %v394
        %3714 = vmatpush.msra.mxu0 %v392
        %3715 = vmatpush.msra.mxu0 %v390
        %3716 = vmatpush.msra.mxu0 %v388
        %3717 = vmatmul.f32.gmra.mxu0 %v3487
        %v3718 = vpop.f32.mrf.mxu0
        %v3719 = vadd.f32 0.0, %v3718
        %3720 = vdwg.mxu0
        %3721 = vmatpush.msra.mxu0 %v450
        %3722 = vmatpush.msra.mxu0 %v448
        %3723 = vmatpush.msra.mxu0 %v446
        %3724 = vmatpush.msra.mxu0 %v444
        %3725 = vmatpush.msra.mxu0 %v442
        %3726 = vmatpush.msra.mxu0 %v440
        %3727 = vmatpush.msra.mxu0 %v438
        %3728 = vmatpush.msra.mxu0 %v436
        %3729 = vmatpush.msra.mxu0 %v434
        %3730 = vmatpush.msra.mxu0 %v432
        %3731 = vmatpush.msra.mxu0 %v430
        %3732 = vmatpush.msra.mxu0 %v428
        %3733 = vmatpush.msra.mxu0 %v426
        %3734 = vmatpush.msra.mxu0 %v424
        %3735 = vmatpush.msra.mxu0 %v422
        %3736 = vmatpush.msra.mxu0 %v420
        %3737 = vmatmul.f32.gmra.mxu0 %v3488
        %v3738 = vpop.f32.mrf.mxu0
        %v3739 = vadd.f32 %v3719, %v3738
        %3740 = vdwg.mxu0
        %3741 = vmatpush.msra.mxu0 %v482
        %3742 = vmatpush.msra.mxu0 %v480
        %3743 = vmatpush.msra.mxu0 %v478
        %3744 = vmatpush.msra.mxu0 %v476
        %3745 = vmatpush.msra.mxu0 %v474
        %3746 = vmatpush.msra.mxu0 %v472
        %3747 = vmatpush.msra.mxu0 %v470
        %3748 = vmatpush.msra.mxu0 %v468
        %3749 = vmatpush.msra.mxu0 %v466
        %3750 = vmatpush.msra.mxu0 %v464
        %3751 = vmatpush.msra.mxu0 %v462
        %3752 = vmatpush.msra.mxu0 %v460
        %3753 = vmatpush.msra.mxu0 %v458
        %3754 = vmatpush.msra.mxu0 %v456
        %3755 = vmatpush.msra.mxu0 %v454
        %3756 = vmatpush.msra.mxu0 %v452
        %3757 = vmatmul.f32.gmra.mxu0 %v3489
        %v3758 = vpop.f32.mrf.mxu0
        %v3759 = vadd.f32 %v3739, %v3758
        %3760 = vdwg.mxu0
        %3761 = vmatpush.msra.mxu0 %v514
        %3762 = vmatpush.msra.mxu0 %v512
        %3763 = vmatpush.msra.mxu0 %v510
        %3764 = vmatpush.msra.mxu0 %v508
        %3765 = vmatpush.msra.mxu0 %v506
        %3766 = vmatpush.msra.mxu0 %v504
        %3767 = vmatpush.msra.mxu0 %v502
        %3768 = vmatpush.msra.mxu0 %v500
        %3769 = vmatpush.msra.mxu0 %v498
        %3770 = vmatpush.msra.mxu0 %v496
        %3771 = vmatpush.msra.mxu0 %v494
        %3772 = vmatpush.msra.mxu0 %v492
        %3773 = vmatpush.msra.mxu0 %v490
        %3774 = vmatpush.msra.mxu0 %v488
        %3775 = vmatpush.msra.mxu0 %v486
        %3776 = vmatpush.msra.mxu0 %v484
        %3777 = vmatmul.f32.gmra.mxu0 %v3490
        %v3778 = vpop.f32.mrf.mxu0
        %v3779 = vadd.f32 %v3759, %v3778
        %3780 = vdwg.mxu0
        %3781 = vmatpush.msra.mxu0 %v546
        %3782 = vmatpush.msra.mxu0 %v544
        %3783 = vmatpush.msra.mxu0 %v542
        %3784 = vmatpush.msra.mxu0 %v540
        %3785 = vmatpush.msra.mxu0 %v538
        %3786 = vmatpush.msra.mxu0 %v536
        %3787 = vmatpush.msra.mxu0 %v534
        %3788 = vmatpush.msra.mxu0 %v532
        %3789 = vmatpush.msra.mxu0 %v530
        %3790 = vmatpush.msra.mxu0 %v528
        %3791 = vmatpush.msra.mxu0 %v526
        %3792 = vmatpush.msra.mxu0 %v524
        %3793 = vmatpush.msra.mxu0 %v522
        %3794 = vmatpush.msra.mxu0 %v520
        %3795 = vmatpush.msra.mxu0 %v518
        %3796 = vmatpush.msra.mxu0 %v516
        %3797 = vmatmul.f32.gmra.mxu0 %v3491
        %v3798 = vpop.f32.mrf.mxu0
        %v3799 = vadd.f32 %v3779, %v3798
        %3800 = vdwg.mxu0
        %3801 = vmatpush.msra.mxu0 %v578
        %3802 = vmatpush.msra.mxu0 %v576
        %3803 = vmatpush.msra.mxu0 %v574
        %3804 = vmatpush.msra.mxu0 %v572
        %3805 = vmatpush.msra.mxu0 %v570
        %3806 = vmatpush.msra.mxu0 %v568
        %3807 = vmatpush.msra.mxu0 %v566
        %3808 = vmatpush.msra.mxu0 %v564
        %3809 = vmatpush.msra.mxu0 %v562
        %3810 = vmatpush.msra.mxu0 %v560
        %3811 = vmatpush.msra.mxu0 %v558
        %3812 = vmatpush.msra.mxu0 %v556
        %3813 = vmatpush.msra.mxu0 %v554
        %3814 = vmatpush.msra.mxu0 %v552
        %3815 = vmatpush.msra.mxu0 %v550
        %3816 = vmatpush.msra.mxu0 %v548
        %3817 = vmatmul.f32.gmra.mxu0 %v3492
        %v3818 = vpop.f32.mrf.mxu0
        %v3819 = vadd.f32 %v3799, %v3818
        %3820 = vdwg.mxu0
        %3821 = vmatpush.msra.mxu0 %v610
        %3822 = vmatpush.msra.mxu0 %v608
        %3823 = vmatpush.msra.mxu0 %v606
        %3824 = vmatpush.msra.mxu0 %v604
        %3825 = vmatpush.msra.mxu0 %v602
        %3826 = vmatpush.msra.mxu0 %v600
        %3827 = vmatpush.msra.mxu0 %v598
        %3828 = vmatpush.msra.mxu0 %v596
        %3829 = vmatpush.msra.mxu0 %v594
        %3830 = vmatpush.msra.mxu0 %v592
        %3831 = vmatpush.msra.mxu0 %v590
        %3832 = vmatpush.msra.mxu0 %v588
        %3833 = vmatpush.msra.mxu0 %v586
        %3834 = vmatpush.msra.mxu0 %v584
        %3835 = vmatpush.msra.mxu0 %v582
        %3836 = vmatpush.msra.mxu0 %v580
        %3837 = vmatmul.f32.gmra.mxu0 %v3493
        %v3838 = vpop.f32.mrf.mxu0
        %v3839 = vadd.f32 %v3819, %v3838
        %3840 = vdwg.mxu0
        %3841 = vmatpush.msra.mxu0 %v642
        %3842 = vmatpush.msra.mxu0 %v640
        %3843 = vmatpush.msra.mxu0 %v638
        %3844 = vmatpush.msra.mxu0 %v636
        %3845 = vmatpush.msra.mxu0 %v634
        %3846 = vmatpush.msra.mxu0 %v632
        %3847 = vmatpush.msra.mxu0 %v630
        %3848 = vmatpush.msra.mxu0 %v628
        %3849 = vmatpush.msra.mxu0 %v626
        %3850 = vmatpush.msra.mxu0 %v624
        %3851 = vmatpush.msra.mxu0 %v622
        %3852 = vmatpush.msra.mxu0 %v620
        %3853 = vmatpush.msra.mxu0 %v618
        %3854 = vmatpush.msra.mxu0 %v616
        %3855 = vmatpush.msra.mxu0 %v614
        %3856 = vmatpush.msra.mxu0 %v612
        %3857 = vmatmul.f32.gmra.mxu0 %v3494
        %v3858 = vpop.f32.mrf.mxu0
        %v3859 = vadd.f32 %v3839, %v3858
        %3860 = vdwg.mxu0
        %3861 = vmatpush.msra.mxu0 %v674
        %3862 = vmatpush.msra.mxu0 %v672
        %3863 = vmatpush.msra.mxu0 %v670
        %3864 = vmatpush.msra.mxu0 %v668
        %3865 = vmatpush.msra.mxu0 %v666
        %3866 = vmatpush.msra.mxu0 %v664
        %3867 = vmatpush.msra.mxu0 %v662
        %3868 = vmatpush.msra.mxu0 %v660
        %3869 = vmatpush.msra.mxu0 %v658
        %3870 = vmatpush.msra.mxu0 %v656
        %3871 = vmatpush.msra.mxu0 %v654
        %3872 = vmatpush.msra.mxu0 %v652
        %3873 = vmatpush.msra.mxu0 %v650
        %3874 = vmatpush.msra.mxu0 %v648
        %3875 = vmatpush.msra.mxu0 %v646
        %3876 = vmatpush.msra.mxu0 %v644
        %3877 = vmatmul.f32.gmra.mxu0 %v3497
        %v3878 = vpop.f32.mrf.mxu0
        %v3879 = vadd.f32 %v3859, %v3878
        %3880 = vdwg.mxu0
        %3881 = vmatpush.msra.mxu0 %v706
        %3882 = vmatpush.msra.mxu0 %v704
        %3883 = vmatpush.msra.mxu0 %v702
        %3884 = vmatpush.msra.mxu0 %v700
        %3885 = vmatpush.msra.mxu0 %v698
        %3886 = vmatpush.msra.mxu0 %v696
        %3887 = vmatpush.msra.mxu0 %v694
        %3888 = vmatpush.msra.mxu0 %v692
        %3889 = vmatpush.msra.mxu0 %v690
        %3890 = vmatpush.msra.mxu0 %v688
        %3891 = vmatpush.msra.mxu0 %v686
        %3892 = vmatpush.msra.mxu0 %v684
        %3893 = vmatpush.msra.mxu0 %v682
        %3894 = vmatpush.msra.mxu0 %v680
        %3895 = vmatpush.msra.mxu0 %v678
        %3896 = vmatpush.msra.mxu0 %v676
        %3897 = vmatmul.f32.gmra.mxu0 %v3498
        %v3898 = vpop.f32.mrf.mxu0
        %v3899 = vadd.f32 %v3879, %v3898
        %3900 = vdwg.mxu0
        %3901 = vmatpush.msra.mxu0 %v738
        %3902 = vmatpush.msra.mxu0 %v736
        %3903 = vmatpush.msra.mxu0 %v734
        %3904 = vmatpush.msra.mxu0 %v732
        %3905 = vmatpush.msra.mxu0 %v730
        %3906 = vmatpush.msra.mxu0 %v728
        %3907 = vmatpush.msra.mxu0 %v726
        %3908 = vmatpush.msra.mxu0 %v724
        %3909 = vmatpush.msra.mxu0 %v722
        %3910 = vmatpush.msra.mxu0 %v720
        %3911 = vmatpush.msra.mxu0 %v718
        %3912 = vmatpush.msra.mxu0 %v716
        %3913 = vmatpush.msra.mxu0 %v714
        %3914 = vmatpush.msra.mxu0 %v712
        %3915 = vmatpush.msra.mxu0 %v710
        %3916 = vmatpush.msra.mxu0 %v708
        %3917 = vmatmul.f32.gmra.mxu0 %v3499
        %v3918 = vpop.f32.mrf.mxu0
        %v3919 = vadd.f32 %v3899, %v3918
        %3920 = vdwg.mxu0
        %3921 = vmatpush.msra.mxu0 %v770
        %3922 = vmatpush.msra.mxu0 %v768
        %3923 = vmatpush.msra.mxu0 %v766
        %3924 = vmatpush.msra.mxu0 %v764
        %3925 = vmatpush.msra.mxu0 %v762
        %3926 = vmatpush.msra.mxu0 %v760
        %3927 = vmatpush.msra.mxu0 %v758
        %3928 = vmatpush.msra.mxu0 %v756
        %3929 = vmatpush.msra.mxu0 %v754
        %3930 = vmatpush.msra.mxu0 %v752
        %3931 = vmatpush.msra.mxu0 %v750
        %3932 = vmatpush.msra.mxu0 %v748
        %3933 = vmatpush.msra.mxu0 %v746
        %3934 = vmatpush.msra.mxu0 %v744
        %3935 = vmatpush.msra.mxu0 %v742
        %3936 = vmatpush.msra.mxu0 %v740
        %3937 = vmatmul.f32.gmra.mxu0 %v3500
        %v3938 = vpop.f32.mrf.mxu0
        %v3939 = vadd.f32 %v3919, %v3938
        %3940 = vdwg.mxu0
        %3941 = vmatpush.msra.mxu0 %v802
        %3942 = vmatpush.msra.mxu0 %v800
        %3943 = vmatpush.msra.mxu0 %v798
        %3944 = vmatpush.msra.mxu0 %v796
        %3945 = vmatpush.msra.mxu0 %v794
        %3946 = vmatpush.msra.mxu0 %v792
        %3947 = vmatpush.msra.mxu0 %v790
        %3948 = vmatpush.msra.mxu0 %v788
        %3949 = vmatpush.msra.mxu0 %v786
        %3950 = vmatpush.msra.mxu0 %v784
        %3951 = vmatpush.msra.mxu0 %v782
        %3952 = vmatpush.msra.mxu0 %v780
        %3953 = vmatpush.msra.mxu0 %v778
        %3954 = vmatpush.msra.mxu0 %v776
        %3955 = vmatpush.msra.mxu0 %v774
        %3956 = vmatpush.msra.mxu0 %v772
        %3957 = vmatmul.f32.gmra.mxu0 %v3501
        %v3958 = vpop.f32.mrf.mxu0
        %v3959 = vadd.f32 %v3939, %v3958
        %3960 = vdwg.mxu0
        %3961 = vmatpush.msra.mxu0 %v834
        %3962 = vmatpush.msra.mxu0 %v832
        %3963 = vmatpush.msra.mxu0 %v830
        %3964 = vmatpush.msra.mxu0 %v828
        %3965 = vmatpush.msra.mxu0 %v826
        %3966 = vmatpush.msra.mxu0 %v824
        %3967 = vmatpush.msra.mxu0 %v822
        %3968 = vmatpush.msra.mxu0 %v820
        %3969 = vmatpush.msra.mxu0 %v818
        %3970 = vmatpush.msra.mxu0 %v816
        %3971 = vmatpush.msra.mxu0 %v814
        %3972 = vmatpush.msra.mxu0 %v812
        %3973 = vmatpush.msra.mxu0 %v810
        %3974 = vmatpush.msra.mxu0 %v808
        %3975 = vmatpush.msra.mxu0 %v806
        %3976 = vmatpush.msra.mxu0 %v804
        %3977 = vmatmul.f32.gmra.mxu0 %v3502
        %v3978 = vpop.f32.mrf.mxu0
        %v3979 = vadd.f32 %v3959, %v3978
        %3980 = vdwg.mxu0
        %3981 = vmatpush.msra.mxu0 %v866
        %3982 = vmatpush.msra.mxu0 %v864
        %3983 = vmatpush.msra.mxu0 %v862
        %3984 = vmatpush.msra.mxu0 %v860
        %3985 = vmatpush.msra.mxu0 %v858
        %3986 = vmatpush.msra.mxu0 %v856
        %3987 = vmatpush.msra.mxu0 %v854
        %3988 = vmatpush.msra.mxu0 %v852
        %3989 = vmatpush.msra.mxu0 %v850
        %3990 = vmatpush.msra.mxu0 %v848
        %3991 = vmatpush.msra.mxu0 %v846
        %3992 = vmatpush.msra.mxu0 %v844
        %3993 = vmatpush.msra.mxu0 %v842
        %3994 = vmatpush.msra.mxu0 %v840
        %3995 = vmatpush.msra.mxu0 %v838
        %3996 = vmatpush.msra.mxu0 %v836
        %3997 = vmatmul.f32.gmra.mxu0 %v3503
        %v3998 = vpop.f32.mrf.mxu0
        %v3999 = vadd.f32 %v3979, %v3998
        %4000 = vdwg.mxu0
        %4001 = vmatpush.msra.mxu0 %v898
        %4002 = vmatpush.msra.mxu0 %v896
        %4003 = vmatpush.msra.mxu0 %v894
        %4004 = vmatpush.msra.mxu0 %v892
        %4005 = vmatpush.msra.mxu0 %v890
        %4006 = vmatpush.msra.mxu0 %v888
        %4007 = vmatpush.msra.mxu0 %v886
        %4008 = vmatpush.msra.mxu0 %v884
        %4009 = vmatpush.msra.mxu0 %v882
        %4010 = vmatpush.msra.mxu0 %v880
        %4011 = vmatpush.msra.mxu0 %v878
        %4012 = vmatpush.msra.mxu0 %v876
        %4013 = vmatpush.msra.mxu0 %v874
        %4014 = vmatpush.msra.mxu0 %v872
        %4015 = vmatpush.msra.mxu0 %v870
        %4016 = vmatpush.msra.mxu0 %v868
        %4017 = vmatmul.f32.gmra.mxu0 %v3504
        %v4018 = vpop.f32.mrf.mxu0
        %v4019 = vadd.f32 %v3999, %v4018
        %4020 = vdwg.mxu0
        %4021 = vmatpush.msra.mxu0 %v930
        %4022 = vmatpush.msra.mxu0 %v928
        %4023 = vmatpush.msra.mxu0 %v926
        %4024 = vmatpush.msra.mxu0 %v924
        %4025 = vmatpush.msra.mxu0 %v922
        %4026 = vmatpush.msra.mxu0 %v920
        %4027 = vmatpush.msra.mxu0 %v918
        %4028 = vmatpush.msra.mxu0 %v916
        %4029 = vmatpush.msra.mxu0 %v914
        %4030 = vmatpush.msra.mxu0 %v912
        %4031 = vmatpush.msra.mxu0 %v910
        %4032 = vmatpush.msra.mxu0 %v908
        %4033 = vmatpush.msra.mxu0 %v906
        %4034 = vmatpush.msra.mxu0 %v904
        %4035 = vmatpush.msra.mxu0 %v902
        %4036 = vmatpush.msra.mxu0 %v900
        %4037 = vmatmul.f32.gmra.mxu0 %v3507
        %v4038 = vpop.f32.mrf.mxu0
        %v4039 = vadd.f32 %v4019, %v4038
        %4040 = vdwg.mxu0
        %4041 = vmatpush.msra.mxu0 %v962
        %4042 = vmatpush.msra.mxu0 %v960
        %4043 = vmatpush.msra.mxu0 %v958
        %4044 = vmatpush.msra.mxu0 %v956
        %4045 = vmatpush.msra.mxu0 %v954
        %4046 = vmatpush.msra.mxu0 %v952
        %4047 = vmatpush.msra.mxu0 %v950
        %4048 = vmatpush.msra.mxu0 %v948
        %4049 = vmatpush.msra.mxu0 %v946
        %4050 = vmatpush.msra.mxu0 %v944
        %4051 = vmatpush.msra.mxu0 %v942
        %4052 = vmatpush.msra.mxu0 %v940
        %4053 = vmatpush.msra.mxu0 %v938
        %4054 = vmatpush.msra.mxu0 %v936
        %4055 = vmatpush.msra.mxu0 %v934
        %4056 = vmatpush.msra.mxu0 %v932
        %4057 = vmatmul.f32.gmra.mxu0 %v3508
        %v4058 = vpop.f32.mrf.mxu0
        %v4059 = vadd.f32 %v4039, %v4058
        %4060 = vdwg.mxu0
        %4061 = vmatpush.msra.mxu0 %v994
        %4062 = vmatpush.msra.mxu0 %v992
        %4063 = vmatpush.msra.mxu0 %v990
        %4064 = vmatpush.msra.mxu0 %v988
        %4065 = vmatpush.msra.mxu0 %v986
        %4066 = vmatpush.msra.mxu0 %v984
        %4067 = vmatpush.msra.mxu0 %v982
        %4068 = vmatpush.msra.mxu0 %v980
        %4069 = vmatpush.msra.mxu0 %v978
        %4070 = vmatpush.msra.mxu0 %v976
        %4071 = vmatpush.msra.mxu0 %v974
        %4072 = vmatpush.msra.mxu0 %v972
        %4073 = vmatpush.msra.mxu0 %v970
        %4074 = vmatpush.msra.mxu0 %v968
        %4075 = vmatpush.msra.mxu0 %v966
        %4076 = vmatpush.msra.mxu0 %v964
        %4077 = vmatmul.f32.gmra.mxu0 %v3509
        %v4078 = vpop.f32.mrf.mxu0
        %v4079 = vadd.f32 %v4059, %v4078
        %4080 = vdwg.mxu0
        %4081 = vmatpush.msra.mxu0 %v1026
        %4082 = vmatpush.msra.mxu0 %v1024
        %4083 = vmatpush.msra.mxu0 %v1022
        %4084 = vmatpush.msra.mxu0 %v1020
        %4085 = vmatpush.msra.mxu0 %v1018
        %4086 = vmatpush.msra.mxu0 %v1016
        %4087 = vmatpush.msra.mxu0 %v1014
        %4088 = vmatpush.msra.mxu0 %v1012
        %4089 = vmatpush.msra.mxu0 %v1010
        %4090 = vmatpush.msra.mxu0 %v1008
        %4091 = vmatpush.msra.mxu0 %v1006
        %4092 = vmatpush.msra.mxu0 %v1004
        %4093 = vmatpush.msra.mxu0 %v1002
        %4094 = vmatpush.msra.mxu0 %v1000
        %4095 = vmatpush.msra.mxu0 %v998
        %4096 = vmatpush.msra.mxu0 %v996
        %4097 = vmatmul.f32.gmra.mxu0 %v3510
        %v4098 = vpop.f32.mrf.mxu0
        %v4099 = vadd.f32 %v4079, %v4098
        %4100 = vdwg.mxu0
        %4101 = vmatpush.msra.mxu0 %v1058
        %4102 = vmatpush.msra.mxu0 %v1056
        %4103 = vmatpush.msra.mxu0 %v1054
        %4104 = vmatpush.msra.mxu0 %v1052
        %4105 = vmatpush.msra.mxu0 %v1050
        %4106 = vmatpush.msra.mxu0 %v1048
        %4107 = vmatpush.msra.mxu0 %v1046
        %4108 = vmatpush.msra.mxu0 %v1044
        %4109 = vmatpush.msra.mxu0 %v1042
        %4110 = vmatpush.msra.mxu0 %v1040
        %4111 = vmatpush.msra.mxu0 %v1038
        %4112 = vmatpush.msra.mxu0 %v1036
        %4113 = vmatpush.msra.mxu0 %v1034
        %4114 = vmatpush.msra.mxu0 %v1032
        %4115 = vmatpush.msra.mxu0 %v1030
        %4116 = vmatpush.msra.mxu0 %v1028
        %4117 = vmatmul.f32.gmra.mxu0 %v3511
        %v4118 = vpop.f32.mrf.mxu0
        %v4119 = vadd.f32 %v4099, %v4118
        %4120 = vdwg.mxu0
        %4121 = vmatpush.msra.mxu0 %v1090
        %4122 = vmatpush.msra.mxu0 %v1088
        %4123 = vmatpush.msra.mxu0 %v1086
        %4124 = vmatpush.msra.mxu0 %v1084
        %4125 = vmatpush.msra.mxu0 %v1082
        %4126 = vmatpush.msra.mxu0 %v1080
        %4127 = vmatpush.msra.mxu0 %v1078
        %4128 = vmatpush.msra.mxu0 %v1076
        %4129 = vmatpush.msra.mxu0 %v1074
        %4130 = vmatpush.msra.mxu0 %v1072
        %4131 = vmatpush.msra.mxu0 %v1070
        %4132 = vmatpush.msra.mxu0 %v1068
        %4133 = vmatpush.msra.mxu0 %v1066
        %4134 = vmatpush.msra.mxu0 %v1064
        %4135 = vmatpush.msra.mxu0 %v1062
        %4136 = vmatpush.msra.mxu0 %v1060
        %4137 = vmatmul.f32.gmra.mxu0 %v3512
        %v4138 = vpop.f32.mrf.mxu0
        %v4139 = vadd.f32 %v4119, %v4138
        %4140 = vdwg.mxu0
        %4141 = vmatpush.msra.mxu0 %v1122
        %4142 = vmatpush.msra.mxu0 %v1120
        %4143 = vmatpush.msra.mxu0 %v1118
        %4144 = vmatpush.msra.mxu0 %v1116
        %4145 = vmatpush.msra.mxu0 %v1114
        %4146 = vmatpush.msra.mxu0 %v1112
        %4147 = vmatpush.msra.mxu0 %v1110
        %4148 = vmatpush.msra.mxu0 %v1108
        %4149 = vmatpush.msra.mxu0 %v1106
        %4150 = vmatpush.msra.mxu0 %v1104
        %4151 = vmatpush.msra.mxu0 %v1102
        %4152 = vmatpush.msra.mxu0 %v1100
        %4153 = vmatpush.msra.mxu0 %v1098
        %4154 = vmatpush.msra.mxu0 %v1096
        %4155 = vmatpush.msra.mxu0 %v1094
        %4156 = vmatpush.msra.mxu0 %v1092
        %4157 = vmatmul.f32.gmra.mxu0 %v3513
        %v4158 = vpop.f32.mrf.mxu0
        %v4159 = vadd.f32 %v4139, %v4158
        %4160 = vdwg.mxu0
        %4161 = vmatpush.msra.mxu0 %v1154
        %4162 = vmatpush.msra.mxu0 %v1152
        %4163 = vmatpush.msra.mxu0 %v1150
        %4164 = vmatpush.msra.mxu0 %v1148
        %4165 = vmatpush.msra.mxu0 %v1146
        %4166 = vmatpush.msra.mxu0 %v1144
        %4167 = vmatpush.msra.mxu0 %v1142
        %4168 = vmatpush.msra.mxu0 %v1140
        %4169 = vmatpush.msra.mxu0 %v1138
        %4170 = vmatpush.msra.mxu0 %v1136
        %4171 = vmatpush.msra.mxu0 %v1134
        %4172 = vmatpush.msra.mxu0 %v1132
        %4173 = vmatpush.msra.mxu0 %v1130
        %4174 = vmatpush.msra.mxu0 %v1128
        %4175 = vmatpush.msra.mxu0 %v1126
        %4176 = vmatpush.msra.mxu0 %v1124
        %4177 = vmatmul.f32.gmra.mxu0 %v3514
        %v4178 = vpop.f32.mrf.mxu0
        %v4179 = vadd.f32 %v4159, %v4178
        %4180 = vdwg.mxu0
        %4181 = vmatpush.msra.mxu0 %v1186
        %4182 = vmatpush.msra.mxu0 %v1184
        %4183 = vmatpush.msra.mxu0 %v1182
        %4184 = vmatpush.msra.mxu0 %v1180
        %4185 = vmatpush.msra.mxu0 %v1178
        %4186 = vmatpush.msra.mxu0 %v1176
        %4187 = vmatpush.msra.mxu0 %v1174
        %4188 = vmatpush.msra.mxu0 %v1172
        %4189 = vmatpush.msra.mxu0 %v1170
        %4190 = vmatpush.msra.mxu0 %v1168
        %4191 = vmatpush.msra.mxu0 %v1166
        %4192 = vmatpush.msra.mxu0 %v1164
        %4193 = vmatpush.msra.mxu0 %v1162
        %4194 = vmatpush.msra.mxu0 %v1160
        %4195 = vmatpush.msra.mxu0 %v1158
        %4196 = vmatpush.msra.mxu0 %v1156
        %4197 = vmatmul.f32.gmra.mxu0 %v3517
        %v4198 = vpop.f32.mrf.mxu0
        %v4199 = vadd.f32 %v4179, %v4198
        %4200 = vdwg.mxu0
        %4201 = vmatpush.msra.mxu0 %v1218
        %4202 = vmatpush.msra.mxu0 %v1216
        %4203 = vmatpush.msra.mxu0 %v1214
        %4204 = vmatpush.msra.mxu0 %v1212
        %4205 = vmatpush.msra.mxu0 %v1210
        %4206 = vmatpush.msra.mxu0 %v1208
        %4207 = vmatpush.msra.mxu0 %v1206
        %4208 = vmatpush.msra.mxu0 %v1204
        %4209 = vmatpush.msra.mxu0 %v1202
        %4210 = vmatpush.msra.mxu0 %v1200
        %4211 = vmatpush.msra.mxu0 %v1198
        %4212 = vmatpush.msra.mxu0 %v1196
        %4213 = vmatpush.msra.mxu0 %v1194
        %4214 = vmatpush.msra.mxu0 %v1192
        %4215 = vmatpush.msra.mxu0 %v1190
        %4216 = vmatpush.msra.mxu0 %v1188
        %4217 = vmatmul.f32.gmra.mxu0 %v3518
        %v4218 = vpop.f32.mrf.mxu0
        %v4219 = vadd.f32 %v4199, %v4218
        %4220 = vdwg.mxu0
        %4221 = vmatpush.msra.mxu0 %v1250
        %4222 = vmatpush.msra.mxu0 %v1248
        %4223 = vmatpush.msra.mxu0 %v1246
        %4224 = vmatpush.msra.mxu0 %v1244
        %4225 = vmatpush.msra.mxu0 %v1242
        %4226 = vmatpush.msra.mxu0 %v1240
        %4227 = vmatpush.msra.mxu0 %v1238
        %4228 = vmatpush.msra.mxu0 %v1236
        %4229 = vmatpush.msra.mxu0 %v1234
        %4230 = vmatpush.msra.mxu0 %v1232
        %4231 = vmatpush.msra.mxu0 %v1230
        %4232 = vmatpush.msra.mxu0 %v1228
        %4233 = vmatpush.msra.mxu0 %v1226
        %4234 = vmatpush.msra.mxu0 %v1224
        %4235 = vmatpush.msra.mxu0 %v1222
        %4236 = vmatpush.msra.mxu0 %v1220
        %4237 = vmatmul.f32.gmra.mxu0 %v3519
        %v4238 = vpop.f32.mrf.mxu0
        %v4239 = vadd.f32 %v4219, %v4238
        %4240 = vdwg.mxu0
        %4241 = vmatpush.msra.mxu0 %v1282
        %4242 = vmatpush.msra.mxu0 %v1280
        %4243 = vmatpush.msra.mxu0 %v1278
        %4244 = vmatpush.msra.mxu0 %v1276
        %4245 = vmatpush.msra.mxu0 %v1274
        %4246 = vmatpush.msra.mxu0 %v1272
        %4247 = vmatpush.msra.mxu0 %v1270
        %4248 = vmatpush.msra.mxu0 %v1268
        %4249 = vmatpush.msra.mxu0 %v1266
        %4250 = vmatpush.msra.mxu0 %v1264
        %4251 = vmatpush.msra.mxu0 %v1262
        %4252 = vmatpush.msra.mxu0 %v1260
        %4253 = vmatpush.msra.mxu0 %v1258
        %4254 = vmatpush.msra.mxu0 %v1256
        %4255 = vmatpush.msra.mxu0 %v1254
        %4256 = vmatpush.msra.mxu0 %v1252
        %4257 = vmatmul.f32.gmra.mxu0 %v3520
        %v4258 = vpop.f32.mrf.mxu0
        %v4259 = vadd.f32 %v4239, %v4258
        %4260 = vdwg.mxu0
        %4261 = vmatpush.msra.mxu0 %v1314
        %4262 = vmatpush.msra.mxu0 %v1312
        %4263 = vmatpush.msra.mxu0 %v1310
        %4264 = vmatpush.msra.mxu0 %v1308
        %4265 = vmatpush.msra.mxu0 %v1306
        %4266 = vmatpush.msra.mxu0 %v1304
        %4267 = vmatpush.msra.mxu0 %v1302
        %4268 = vmatpush.msra.mxu0 %v1300
        %4269 = vmatpush.msra.mxu0 %v1298
        %4270 = vmatpush.msra.mxu0 %v1296
        %4271 = vmatpush.msra.mxu0 %v1294
        %4272 = vmatpush.msra.mxu0 %v1292
        %4273 = vmatpush.msra.mxu0 %v1290
        %4274 = vmatpush.msra.mxu0 %v1288
        %4275 = vmatpush.msra.mxu0 %v1286
        %4276 = vmatpush.msra.mxu0 %v1284
        %4277 = vmatmul.f32.gmra.mxu0 %v3521
        %v4278 = vpop.f32.mrf.mxu0
        %v4279 = vadd.f32 %v4259, %v4278
        %4280 = vdwg.mxu0
        %4281 = vmatpush.msra.mxu0 %v1346
        %4282 = vmatpush.msra.mxu0 %v1344
        %4283 = vmatpush.msra.mxu0 %v1342
        %4284 = vmatpush.msra.mxu0 %v1340
        %4285 = vmatpush.msra.mxu0 %v1338
        %4286 = vmatpush.msra.mxu0 %v1336
        %4287 = vmatpush.msra.mxu0 %v1334
        %4288 = vmatpush.msra.mxu0 %v1332
        %4289 = vmatpush.msra.mxu0 %v1330
        %4290 = vmatpush.msra.mxu0 %v1328
        %4291 = vmatpush.msra.mxu0 %v1326
        %4292 = vmatpush.msra.mxu0 %v1324
        %4293 = vmatpush.msra.mxu0 %v1322
        %4294 = vmatpush.msra.mxu0 %v1320
        %4295 = vmatpush.msra.mxu0 %v1318
        %4296 = vmatpush.msra.mxu0 %v1316
        %4297 = vmatmul.f32.gmra.mxu0 %v3522
        %v4298 = vpop.f32.mrf.mxu0
        %v4299 = vadd.f32 %v4279, %v4298
        %4300 = vdwg.mxu0
        %4301 = vmatpush.msra.mxu0 %v1378
        %4302 = vmatpush.msra.mxu0 %v1376
        %4303 = vmatpush.msra.mxu0 %v1374
        %4304 = vmatpush.msra.mxu0 %v1372
        %4305 = vmatpush.msra.mxu0 %v1370
        %4306 = vmatpush.msra.mxu0 %v1368
        %4307 = vmatpush.msra.mxu0 %v1366
        %4308 = vmatpush.msra.mxu0 %v1364
        %4309 = vmatpush.msra.mxu0 %v1362
        %4310 = vmatpush.msra.mxu0 %v1360
        %4311 = vmatpush.msra.mxu0 %v1358
        %4312 = vmatpush.msra.mxu0 %v1356
        %4313 = vmatpush.msra.mxu0 %v1354
        %4314 = vmatpush.msra.mxu0 %v1352
        %4315 = vmatpush.msra.mxu0 %v1350
        %4316 = vmatpush.msra.mxu0 %v1348
        %4317 = vmatmul.f32.gmra.mxu0 %v3523
        %v4318 = vpop.f32.mrf.mxu0
        %v4319 = vadd.f32 %v4299, %v4318
        %4320 = vdwg.mxu0
        %4321 = vmatpush.msra.mxu0 %v1410
        %4322 = vmatpush.msra.mxu0 %v1408
        %4323 = vmatpush.msra.mxu0 %v1406
        %4324 = vmatpush.msra.mxu0 %v1404
        %4325 = vmatpush.msra.mxu0 %v1402
        %4326 = vmatpush.msra.mxu0 %v1400
        %4327 = vmatpush.msra.mxu0 %v1398
        %4328 = vmatpush.msra.mxu0 %v1396
        %4329 = vmatpush.msra.mxu0 %v1394
        %4330 = vmatpush.msra.mxu0 %v1392
        %4331 = vmatpush.msra.mxu0 %v1390
        %4332 = vmatpush.msra.mxu0 %v1388
        %4333 = vmatpush.msra.mxu0 %v1386
        %4334 = vmatpush.msra.mxu0 %v1384
        %4335 = vmatpush.msra.mxu0 %v1382
        %4336 = vmatpush.msra.mxu0 %v1380
        %4337 = vmatmul.f32.gmra.mxu0 %v3524
        %v4338 = vpop.f32.mrf.mxu0
        %v4339 = vadd.f32 %v4319, %v4338
        %4340 = vdwg.mxu0
        %4341 = vmatpush.msra.mxu0 %v1442
        %4342 = vmatpush.msra.mxu0 %v1440
        %4343 = vmatpush.msra.mxu0 %v1438
        %4344 = vmatpush.msra.mxu0 %v1436
        %4345 = vmatpush.msra.mxu0 %v1434
        %4346 = vmatpush.msra.mxu0 %v1432
        %4347 = vmatpush.msra.mxu0 %v1430
        %4348 = vmatpush.msra.mxu0 %v1428
        %4349 = vmatpush.msra.mxu0 %v1426
        %4350 = vmatpush.msra.mxu0 %v1424
        %4351 = vmatpush.msra.mxu0 %v1422
        %4352 = vmatpush.msra.mxu0 %v1420
        %4353 = vmatpush.msra.mxu0 %v1418
        %4354 = vmatpush.msra.mxu0 %v1416
        %4355 = vmatpush.msra.mxu0 %v1414
        %4356 = vmatpush.msra.mxu0 %v1412
        %4357 = vmatmul.f32.gmra.mxu0 %v3527
        %v4358 = vpop.f32.mrf.mxu0
        %v4359 = vadd.f32 %v4339, %v4358
        %4360 = vdwg.mxu0
        %4361 = vmatpush.msra.mxu0 %v1474
        %4362 = vmatpush.msra.mxu0 %v1472
        %4363 = vmatpush.msra.mxu0 %v1470
        %4364 = vmatpush.msra.mxu0 %v1468
        %4365 = vmatpush.msra.mxu0 %v1466
        %4366 = vmatpush.msra.mxu0 %v1464
        %4367 = vmatpush.msra.mxu0 %v1462
        %4368 = vmatpush.msra.mxu0 %v1460
        %4369 = vmatpush.msra.mxu0 %v1458
        %4370 = vmatpush.msra.mxu0 %v1456
        %4371 = vmatpush.msra.mxu0 %v1454
        %4372 = vmatpush.msra.mxu0 %v1452
        %4373 = vmatpush.msra.mxu0 %v1450
        %4374 = vmatpush.msra.mxu0 %v1448
        %4375 = vmatpush.msra.mxu0 %v1446
        %4376 = vmatpush.msra.mxu0 %v1444
        %4377 = vmatmul.f32.gmra.mxu0 %v3528
        %v4378 = vpop.f32.mrf.mxu0
        %v4379 = vadd.f32 %v4359, %v4378
        %4380 = vdwg.mxu0
        %4381 = vmatpush.msra.mxu0 %v1506
        %4382 = vmatpush.msra.mxu0 %v1504
        %4383 = vmatpush.msra.mxu0 %v1502
        %4384 = vmatpush.msra.mxu0 %v1500
        %4385 = vmatpush.msra.mxu0 %v1498
        %4386 = vmatpush.msra.mxu0 %v1496
        %4387 = vmatpush.msra.mxu0 %v1494
        %4388 = vmatpush.msra.mxu0 %v1492
        %4389 = vmatpush.msra.mxu0 %v1490
        %4390 = vmatpush.msra.mxu0 %v1488
        %4391 = vmatpush.msra.mxu0 %v1486
        %4392 = vmatpush.msra.mxu0 %v1484
        %4393 = vmatpush.msra.mxu0 %v1482
        %4394 = vmatpush.msra.mxu0 %v1480
        %4395 = vmatpush.msra.mxu0 %v1478
        %4396 = vmatpush.msra.mxu0 %v1476
        %4397 = vmatmul.f32.gmra.mxu0 %v3529
        %v4398 = vpop.f32.mrf.mxu0
        %v4399 = vadd.f32 %v4379, %v4398
        %4400 = vdwg.mxu0
        %4401 = vmatpush.msra.mxu0 %v1538
        %4402 = vmatpush.msra.mxu0 %v1536
        %4403 = vmatpush.msra.mxu0 %v1534
        %4404 = vmatpush.msra.mxu0 %v1532
        %4405 = vmatpush.msra.mxu0 %v1530
        %4406 = vmatpush.msra.mxu0 %v1528
        %4407 = vmatpush.msra.mxu0 %v1526
        %4408 = vmatpush.msra.mxu0 %v1524
        %4409 = vmatpush.msra.mxu0 %v1522
        %4410 = vmatpush.msra.mxu0 %v1520
        %4411 = vmatpush.msra.mxu0 %v1518
        %4412 = vmatpush.msra.mxu0 %v1516
        %4413 = vmatpush.msra.mxu0 %v1514
        %4414 = vmatpush.msra.mxu0 %v1512
        %4415 = vmatpush.msra.mxu0 %v1510
        %4416 = vmatpush.msra.mxu0 %v1508
        %4417 = vmatmul.f32.gmra.mxu0 %v3530
        %v4418 = vpop.f32.mrf.mxu0
        %v4419 = vadd.f32 %v4399, %v4418
        %4420 = vdwg.mxu0
        %4421 = vmatpush.msra.mxu0 %v1570
        %4422 = vmatpush.msra.mxu0 %v1568
        %4423 = vmatpush.msra.mxu0 %v1566
        %4424 = vmatpush.msra.mxu0 %v1564
        %4425 = vmatpush.msra.mxu0 %v1562
        %4426 = vmatpush.msra.mxu0 %v1560
        %4427 = vmatpush.msra.mxu0 %v1558
        %4428 = vmatpush.msra.mxu0 %v1556
        %4429 = vmatpush.msra.mxu0 %v1554
        %4430 = vmatpush.msra.mxu0 %v1552
        %4431 = vmatpush.msra.mxu0 %v1550
        %4432 = vmatpush.msra.mxu0 %v1548
        %4433 = vmatpush.msra.mxu0 %v1546
        %4434 = vmatpush.msra.mxu0 %v1544
        %4435 = vmatpush.msra.mxu0 %v1542
        %4436 = vmatpush.msra.mxu0 %v1540
        %4437 = vmatmul.f32.gmra.mxu0 %v3531
        %v4438 = vpop.f32.mrf.mxu0
        %v4439 = vadd.f32 %v4419, %v4438
        %4440 = vdwg.mxu0
        %4441 = vmatpush.msra.mxu0 %v1602
        %4442 = vmatpush.msra.mxu0 %v1600
        %4443 = vmatpush.msra.mxu0 %v1598
        %4444 = vmatpush.msra.mxu0 %v1596
        %4445 = vmatpush.msra.mxu0 %v1594
        %4446 = vmatpush.msra.mxu0 %v1592
        %4447 = vmatpush.msra.mxu0 %v1590
        %4448 = vmatpush.msra.mxu0 %v1588
        %4449 = vmatpush.msra.mxu0 %v1586
        %4450 = vmatpush.msra.mxu0 %v1584
        %4451 = vmatpush.msra.mxu0 %v1582
        %4452 = vmatpush.msra.mxu0 %v1580
        %4453 = vmatpush.msra.mxu0 %v1578
        %4454 = vmatpush.msra.mxu0 %v1576
        %4455 = vmatpush.msra.mxu0 %v1574
        %4456 = vmatpush.msra.mxu0 %v1572
        %4457 = vmatmul.f32.gmra.mxu0 %v3532
        %v4458 = vpop.f32.mrf.mxu0
        %v4459 = vadd.f32 %v4439, %v4458
        %4460 = vdwg.mxu0
        %4461 = vmatpush.msra.mxu0 %v1634
        %4462 = vmatpush.msra.mxu0 %v1632
        %4463 = vmatpush.msra.mxu0 %v1630
        %4464 = vmatpush.msra.mxu0 %v1628
        %4465 = vmatpush.msra.mxu0 %v1626
        %4466 = vmatpush.msra.mxu0 %v1624
        %4467 = vmatpush.msra.mxu0 %v1622
        %4468 = vmatpush.msra.mxu0 %v1620
        %4469 = vmatpush.msra.mxu0 %v1618
        %4470 = vmatpush.msra.mxu0 %v1616
        %4471 = vmatpush.msra.mxu0 %v1614
        %4472 = vmatpush.msra.mxu0 %v1612
        %4473 = vmatpush.msra.mxu0 %v1610
        %4474 = vmatpush.msra.mxu0 %v1608
        %4475 = vmatpush.msra.mxu0 %v1606
        %4476 = vmatpush.msra.mxu0 %v1604
        %4477 = vmatmul.f32.gmra.mxu0 %v3533
        %v4478 = vpop.f32.mrf.mxu0
        %v4479 = vadd.f32 %v4459, %v4478
        %4480 = vdwg.mxu0
        %4481 = vmatpush.msra.mxu0 %v1666
        %4482 = vmatpush.msra.mxu0 %v1664
        %4483 = vmatpush.msra.mxu0 %v1662
        %4484 = vmatpush.msra.mxu0 %v1660
        %4485 = vmatpush.msra.mxu0 %v1658
        %4486 = vmatpush.msra.mxu0 %v1656
        %4487 = vmatpush.msra.mxu0 %v1654
        %4488 = vmatpush.msra.mxu0 %v1652
        %4489 = vmatpush.msra.mxu0 %v1650
        %4490 = vmatpush.msra.mxu0 %v1648
        %4491 = vmatpush.msra.mxu0 %v1646
        %4492 = vmatpush.msra.mxu0 %v1644
        %4493 = vmatpush.msra.mxu0 %v1642
        %4494 = vmatpush.msra.mxu0 %v1640
        %4495 = vmatpush.msra.mxu0 %v1638
        %4496 = vmatpush.msra.mxu0 %v1636
        %4497 = vmatmul.f32.gmra.mxu0 %v3534
        %v4498 = vpop.f32.mrf.mxu0
        %v4499 = vadd.f32 %v4479, %v4498
        %4500 = vdwg.mxu0
        %4501 = vmatpush.msra.mxu0 %v1698
        %4502 = vmatpush.msra.mxu0 %v1696
        %4503 = vmatpush.msra.mxu0 %v1694
        %4504 = vmatpush.msra.mxu0 %v1692
        %4505 = vmatpush.msra.mxu0 %v1690
        %4506 = vmatpush.msra.mxu0 %v1688
        %4507 = vmatpush.msra.mxu0 %v1686
        %4508 = vmatpush.msra.mxu0 %v1684
        %4509 = vmatpush.msra.mxu0 %v1682
        %4510 = vmatpush.msra.mxu0 %v1680
        %4511 = vmatpush.msra.mxu0 %v1678
        %4512 = vmatpush.msra.mxu0 %v1676
        %4513 = vmatpush.msra.mxu0 %v1674
        %4514 = vmatpush.msra.mxu0 %v1672
        %4515 = vmatpush.msra.mxu0 %v1670
        %4516 = vmatpush.msra.mxu0 %v1668
        %4517 = vmatmul.f32.gmra.mxu0 %v3537
        %v4518 = vpop.f32.mrf.mxu0
        %v4519 = vadd.f32 %v4499, %v4518
        %4520 = vdwg.mxu0
        %4521 = vmatpush.msra.mxu0 %v1730
        %4522 = vmatpush.msra.mxu0 %v1728
        %4523 = vmatpush.msra.mxu0 %v1726
        %4524 = vmatpush.msra.mxu0 %v1724
        %4525 = vmatpush.msra.mxu0 %v1722
        %4526 = vmatpush.msra.mxu0 %v1720
        %4527 = vmatpush.msra.mxu0 %v1718
        %4528 = vmatpush.msra.mxu0 %v1716
        %4529 = vmatpush.msra.mxu0 %v1714
        %4530 = vmatpush.msra.mxu0 %v1712
        %4531 = vmatpush.msra.mxu0 %v1710
        %4532 = vmatpush.msra.mxu0 %v1708
        %4533 = vmatpush.msra.mxu0 %v1706
        %4534 = vmatpush.msra.mxu0 %v1704
        %4535 = vmatpush.msra.mxu0 %v1702
        %4536 = vmatpush.msra.mxu0 %v1700
        %4537 = vmatmul.f32.gmra.mxu0 %v3538
        %v4538 = vpop.f32.mrf.mxu0
        %v4539 = vadd.f32 %v4519, %v4538
        %4540 = vdwg.mxu0
        %4541 = vmatpush.msra.mxu0 %v1762
        %4542 = vmatpush.msra.mxu0 %v1760
        %4543 = vmatpush.msra.mxu0 %v1758
        %4544 = vmatpush.msra.mxu0 %v1756
        %4545 = vmatpush.msra.mxu0 %v1754
        %4546 = vmatpush.msra.mxu0 %v1752
        %4547 = vmatpush.msra.mxu0 %v1750
        %4548 = vmatpush.msra.mxu0 %v1748
        %4549 = vmatpush.msra.mxu0 %v1746
        %4550 = vmatpush.msra.mxu0 %v1744
        %4551 = vmatpush.msra.mxu0 %v1742
        %4552 = vmatpush.msra.mxu0 %v1740
        %4553 = vmatpush.msra.mxu0 %v1738
        %4554 = vmatpush.msra.mxu0 %v1736
        %4555 = vmatpush.msra.mxu0 %v1734
        %4556 = vmatpush.msra.mxu0 %v1732
        %4557 = vmatmul.f32.gmra.mxu0 %v3539
        %v4558 = vpop.f32.mrf.mxu0
        %v4559 = vadd.f32 %v4539, %v4558
        %4560 = vdwg.mxu0
        %4561 = vmatpush.msra.mxu0 %v1794
        %4562 = vmatpush.msra.mxu0 %v1792
        %4563 = vmatpush.msra.mxu0 %v1790
        %4564 = vmatpush.msra.mxu0 %v1788
        %4565 = vmatpush.msra.mxu0 %v1786
        %4566 = vmatpush.msra.mxu0 %v1784
        %4567 = vmatpush.msra.mxu0 %v1782
        %4568 = vmatpush.msra.mxu0 %v1780
        %4569 = vmatpush.msra.mxu0 %v1778
        %4570 = vmatpush.msra.mxu0 %v1776
        %4571 = vmatpush.msra.mxu0 %v1774
        %4572 = vmatpush.msra.mxu0 %v1772
        %4573 = vmatpush.msra.mxu0 %v1770
        %4574 = vmatpush.msra.mxu0 %v1768
        %4575 = vmatpush.msra.mxu0 %v1766
        %4576 = vmatpush.msra.mxu0 %v1764
        %4577 = vmatmul.f32.gmra.mxu0 %v3540
        %v4578 = vpop.f32.mrf.mxu0
        %v4579 = vadd.f32 %v4559, %v4578
        %4580 = vdwg.mxu0
        %4581 = vmatpush.msra.mxu0 %v1826
        %4582 = vmatpush.msra.mxu0 %v1824
        %4583 = vmatpush.msra.mxu0 %v1822
        %4584 = vmatpush.msra.mxu0 %v1820
        %4585 = vmatpush.msra.mxu0 %v1818
        %4586 = vmatpush.msra.mxu0 %v1816
        %4587 = vmatpush.msra.mxu0 %v1814
        %4588 = vmatpush.msra.mxu0 %v1812
        %4589 = vmatpush.msra.mxu0 %v1810
        %4590 = vmatpush.msra.mxu0 %v1808
        %4591 = vmatpush.msra.mxu0 %v1806
        %4592 = vmatpush.msra.mxu0 %v1804
        %4593 = vmatpush.msra.mxu0 %v1802
        %4594 = vmatpush.msra.mxu0 %v1800
        %4595 = vmatpush.msra.mxu0 %v1798
        %4596 = vmatpush.msra.mxu0 %v1796
        %4597 = vmatmul.f32.gmra.mxu0 %v3541
        %v4598 = vpop.f32.mrf.mxu0
        %v4599 = vadd.f32 %v4579, %v4598
        %4600 = vdwg.mxu0
        %4601 = vmatpush.msra.mxu0 %v1858
        %4602 = vmatpush.msra.mxu0 %v1856
        %4603 = vmatpush.msra.mxu0 %v1854
        %4604 = vmatpush.msra.mxu0 %v1852
        %4605 = vmatpush.msra.mxu0 %v1850
        %4606 = vmatpush.msra.mxu0 %v1848
        %4607 = vmatpush.msra.mxu0 %v1846
        %4608 = vmatpush.msra.mxu0 %v1844
        %4609 = vmatpush.msra.mxu0 %v1842
        %4610 = vmatpush.msra.mxu0 %v1840
        %4611 = vmatpush.msra.mxu0 %v1838
        %4612 = vmatpush.msra.mxu0 %v1836
        %4613 = vmatpush.msra.mxu0 %v1834
        %4614 = vmatpush.msra.mxu0 %v1832
        %4615 = vmatpush.msra.mxu0 %v1830
        %4616 = vmatpush.msra.mxu0 %v1828
        %4617 = vmatmul.f32.gmra.mxu0 %v3542
        %v4618 = vpop.f32.mrf.mxu0
        %v4619 = vadd.f32 %v4599, %v4618
        %4620 = vdwg.mxu0
        %4621 = vmatpush.msra.mxu0 %v1890
        %4622 = vmatpush.msra.mxu0 %v1888
        %4623 = vmatpush.msra.mxu0 %v1886
        %4624 = vmatpush.msra.mxu0 %v1884
        %4625 = vmatpush.msra.mxu0 %v1882
        %4626 = vmatpush.msra.mxu0 %v1880
        %4627 = vmatpush.msra.mxu0 %v1878
        %4628 = vmatpush.msra.mxu0 %v1876
        %4629 = vmatpush.msra.mxu0 %v1874
        %4630 = vmatpush.msra.mxu0 %v1872
        %4631 = vmatpush.msra.mxu0 %v1870
        %4632 = vmatpush.msra.mxu0 %v1868
        %4633 = vmatpush.msra.mxu0 %v1866
        %4634 = vmatpush.msra.mxu0 %v1864
        %4635 = vmatpush.msra.mxu0 %v1862
        %4636 = vmatpush.msra.mxu0 %v1860
        %4637 = vmatmul.f32.gmra.mxu0 %v3543
        %v4638 = vpop.f32.mrf.mxu0
        %v4639 = vadd.f32 %v4619, %v4638
        %4640 = vdwg.mxu0
        %4641 = vmatpush.msra.mxu0 %v1922
        %4642 = vmatpush.msra.mxu0 %v1920
        %4643 = vmatpush.msra.mxu0 %v1918
        %4644 = vmatpush.msra.mxu0 %v1916
        %4645 = vmatpush.msra.mxu0 %v1914
        %4646 = vmatpush.msra.mxu0 %v1912
        %4647 = vmatpush.msra.mxu0 %v1910
        %4648 = vmatpush.msra.mxu0 %v1908
        %4649 = vmatpush.msra.mxu0 %v1906
        %4650 = vmatpush.msra.mxu0 %v1904
        %4651 = vmatpush.msra.mxu0 %v1902
        %4652 = vmatpush.msra.mxu0 %v1900
        %4653 = vmatpush.msra.mxu0 %v1898
        %4654 = vmatpush.msra.mxu0 %v1896
        %4655 = vmatpush.msra.mxu0 %v1894
        %4656 = vmatpush.msra.mxu0 %v1892
        %4657 = vmatmul.f32.gmra.mxu0 %v3544
        %v4658 = vpop.f32.mrf.mxu0
        %v4659 = vadd.f32 %v4639, %v4658
        %4660 = vdwg.mxu0
        %4661 = vmatpush.msra.mxu0 %v1954
        %4662 = vmatpush.msra.mxu0 %v1952
        %4663 = vmatpush.msra.mxu0 %v1950
        %4664 = vmatpush.msra.mxu0 %v1948
        %4665 = vmatpush.msra.mxu0 %v1946
        %4666 = vmatpush.msra.mxu0 %v1944
        %4667 = vmatpush.msra.mxu0 %v1942
        %4668 = vmatpush.msra.mxu0 %v1940
        %4669 = vmatpush.msra.mxu0 %v1938
        %4670 = vmatpush.msra.mxu0 %v1936
        %4671 = vmatpush.msra.mxu0 %v1934
        %4672 = vmatpush.msra.mxu0 %v1932
        %4673 = vmatpush.msra.mxu0 %v1930
        %4674 = vmatpush.msra.mxu0 %v1928
        %4675 = vmatpush.msra.mxu0 %v1926
        %4676 = vmatpush.msra.mxu0 %v1924
        %4677 = vmatmul.f32.gmra.mxu0 %v3547
        %v4678 = vpop.f32.mrf.mxu0
        %v4679 = vadd.f32 %v4659, %v4678
        %4680 = vdwg.mxu0
        %4681 = vmatpush.msra.mxu0 %v1986
        %4682 = vmatpush.msra.mxu0 %v1984
        %4683 = vmatpush.msra.mxu0 %v1982
        %4684 = vmatpush.msra.mxu0 %v1980
        %4685 = vmatpush.msra.mxu0 %v1978
        %4686 = vmatpush.msra.mxu0 %v1976
        %4687 = vmatpush.msra.mxu0 %v1974
        %4688 = vmatpush.msra.mxu0 %v1972
        %4689 = vmatpush.msra.mxu0 %v1970
        %4690 = vmatpush.msra.mxu0 %v1968
        %4691 = vmatpush.msra.mxu0 %v1966
        %4692 = vmatpush.msra.mxu0 %v1964
        %4693 = vmatpush.msra.mxu0 %v1962
        %4694 = vmatpush.msra.mxu0 %v1960
        %4695 = vmatpush.msra.mxu0 %v1958
        %4696 = vmatpush.msra.mxu0 %v1956
        %4697 = vmatmul.f32.gmra.mxu0 %v3548
        %v4698 = vpop.f32.mrf.mxu0
        %v4699 = vadd.f32 %v4679, %v4698
        %4700 = vdwg.mxu0
        %4701 = vmatpush.msra.mxu0 %v2018
        %4702 = vmatpush.msra.mxu0 %v2016
        %4703 = vmatpush.msra.mxu0 %v2014
        %4704 = vmatpush.msra.mxu0 %v2012
        %4705 = vmatpush.msra.mxu0 %v2010
        %4706 = vmatpush.msra.mxu0 %v2008
        %4707 = vmatpush.msra.mxu0 %v2006
        %4708 = vmatpush.msra.mxu0 %v2004
        %4709 = vmatpush.msra.mxu0 %v2002
        %4710 = vmatpush.msra.mxu0 %v2000
        %4711 = vmatpush.msra.mxu0 %v1998
        %4712 = vmatpush.msra.mxu0 %v1996
        %4713 = vmatpush.msra.mxu0 %v1994
        %4714 = vmatpush.msra.mxu0 %v1992
        %4715 = vmatpush.msra.mxu0 %v1990
        %4716 = vmatpush.msra.mxu0 %v1988
        %4717 = vmatmul.f32.gmra.mxu0 %v3549
        %v4718 = vpop.f32.mrf.mxu0
        %v4719 = vadd.f32 %v4699, %v4718
        %4720 = vdwg.mxu0
        %4721 = vmatpush.msra.mxu0 %v2050
        %4722 = vmatpush.msra.mxu0 %v2048
        %4723 = vmatpush.msra.mxu0 %v2046
        %4724 = vmatpush.msra.mxu0 %v2044
        %4725 = vmatpush.msra.mxu0 %v2042
        %4726 = vmatpush.msra.mxu0 %v2040
        %4727 = vmatpush.msra.mxu0 %v2038
        %4728 = vmatpush.msra.mxu0 %v2036
        %4729 = vmatpush.msra.mxu0 %v2034
        %4730 = vmatpush.msra.mxu0 %v2032
        %4731 = vmatpush.msra.mxu0 %v2030
        %4732 = vmatpush.msra.mxu0 %v2028
        %4733 = vmatpush.msra.mxu0 %v2026
        %4734 = vmatpush.msra.mxu0 %v2024
        %4735 = vmatpush.msra.mxu0 %v2022
        %4736 = vmatpush.msra.mxu0 %v2020
        %4737 = vmatmul.f32.gmra.mxu0 %v3550
        %v4738 = vpop.f32.mrf.mxu0
        %v4739 = vadd.f32 %v4719, %v4738
        %4740 = vdwg.mxu0
        %4741 = vmatpush.msra.mxu0 %v2082
        %4742 = vmatpush.msra.mxu0 %v2080
        %4743 = vmatpush.msra.mxu0 %v2078
        %4744 = vmatpush.msra.mxu0 %v2076
        %4745 = vmatpush.msra.mxu0 %v2074
        %4746 = vmatpush.msra.mxu0 %v2072
        %4747 = vmatpush.msra.mxu0 %v2070
        %4748 = vmatpush.msra.mxu0 %v2068
        %4749 = vmatpush.msra.mxu0 %v2066
        %4750 = vmatpush.msra.mxu0 %v2064
        %4751 = vmatpush.msra.mxu0 %v2062
        %4752 = vmatpush.msra.mxu0 %v2060
        %4753 = vmatpush.msra.mxu0 %v2058
        %4754 = vmatpush.msra.mxu0 %v2056
        %4755 = vmatpush.msra.mxu0 %v2054
        %4756 = vmatpush.msra.mxu0 %v2052
        %4757 = vmatmul.f32.gmra.mxu0 %v3551
        %v4758 = vpop.f32.mrf.mxu0
        %v4759 = vadd.f32 %v4739, %v4758
        %4760 = vdwg.mxu0
        %4761 = vmatpush.msra.mxu0 %v2114
        %4762 = vmatpush.msra.mxu0 %v2112
        %4763 = vmatpush.msra.mxu0 %v2110
        %4764 = vmatpush.msra.mxu0 %v2108
        %4765 = vmatpush.msra.mxu0 %v2106
        %4766 = vmatpush.msra.mxu0 %v2104
        %4767 = vmatpush.msra.mxu0 %v2102
        %4768 = vmatpush.msra.mxu0 %v2100
        %4769 = vmatpush.msra.mxu0 %v2098
        %4770 = vmatpush.msra.mxu0 %v2096
        %4771 = vmatpush.msra.mxu0 %v2094
        %4772 = vmatpush.msra.mxu0 %v2092
        %4773 = vmatpush.msra.mxu0 %v2090
        %4774 = vmatpush.msra.mxu0 %v2088
        %4775 = vmatpush.msra.mxu0 %v2086
        %4776 = vmatpush.msra.mxu0 %v2084
        %4777 = vmatmul.f32.gmra.mxu0 %v3552
        %v4778 = vpop.f32.mrf.mxu0
        %v4779 = vadd.f32 %v4759, %v4778
        %4780 = vdwg.mxu0
        %4781 = vmatpush.msra.mxu0 %v2146
        %4782 = vmatpush.msra.mxu0 %v2144
        %4783 = vmatpush.msra.mxu0 %v2142
        %4784 = vmatpush.msra.mxu0 %v2140
        %4785 = vmatpush.msra.mxu0 %v2138
        %4786 = vmatpush.msra.mxu0 %v2136
        %4787 = vmatpush.msra.mxu0 %v2134
        %4788 = vmatpush.msra.mxu0 %v2132
        %4789 = vmatpush.msra.mxu0 %v2130
        %4790 = vmatpush.msra.mxu0 %v2128
        %4791 = vmatpush.msra.mxu0 %v2126
        %4792 = vmatpush.msra.mxu0 %v2124
        %4793 = vmatpush.msra.mxu0 %v2122
        %4794 = vmatpush.msra.mxu0 %v2120
        %4795 = vmatpush.msra.mxu0 %v2118
        %4796 = vmatpush.msra.mxu0 %v2116
        %4797 = vmatmul.f32.gmra.mxu0 %v3553
        %v4798 = vpop.f32.mrf.mxu0
        %v4799 = vadd.f32 %v4779, %v4798
        %4800 = vdwg.mxu0
        %4801 = vmatpush.msra.mxu0 %v2178
        %4802 = vmatpush.msra.mxu0 %v2176
        %4803 = vmatpush.msra.mxu0 %v2174
        %4804 = vmatpush.msra.mxu0 %v2172
        %4805 = vmatpush.msra.mxu0 %v2170
        %4806 = vmatpush.msra.mxu0 %v2168
        %4807 = vmatpush.msra.mxu0 %v2166
        %4808 = vmatpush.msra.mxu0 %v2164
        %4809 = vmatpush.msra.mxu0 %v2162
        %4810 = vmatpush.msra.mxu0 %v2160
        %4811 = vmatpush.msra.mxu0 %v2158
        %4812 = vmatpush.msra.mxu0 %v2156
        %4813 = vmatpush.msra.mxu0 %v2154
        %4814 = vmatpush.msra.mxu0 %v2152
        %4815 = vmatpush.msra.mxu0 %v2150
        %4816 = vmatpush.msra.mxu0 %v2148
        %4817 = vmatmul.f32.gmra.mxu0 %v3554
        %v4818 = vpop.f32.mrf.mxu0
        %v4819 = vadd.f32 %v4799, %v4818
        %4820 = vdwg.mxu0
        %4821 = vmatpush.msra.mxu0 %v2210
        %4822 = vmatpush.msra.mxu0 %v2208
        %4823 = vmatpush.msra.mxu0 %v2206
        %4824 = vmatpush.msra.mxu0 %v2204
        %4825 = vmatpush.msra.mxu0 %v2202
        %4826 = vmatpush.msra.mxu0 %v2200
        %4827 = vmatpush.msra.mxu0 %v2198
        %4828 = vmatpush.msra.mxu0 %v2196
        %4829 = vmatpush.msra.mxu0 %v2194
        %4830 = vmatpush.msra.mxu0 %v2192
        %4831 = vmatpush.msra.mxu0 %v2190
        %4832 = vmatpush.msra.mxu0 %v2188
        %4833 = vmatpush.msra.mxu0 %v2186
        %4834 = vmatpush.msra.mxu0 %v2184
        %4835 = vmatpush.msra.mxu0 %v2182
        %4836 = vmatpush.msra.mxu0 %v2180
        %4837 = vmatmul.f32.gmra.mxu0 %v3557
        %v4838 = vpop.f32.mrf.mxu0
        %v4839 = vadd.f32 %v4819, %v4838
        %4840 = vdwg.mxu0
        %4841 = vmatpush.msra.mxu0 %v2242
        %4842 = vmatpush.msra.mxu0 %v2240
        %4843 = vmatpush.msra.mxu0 %v2238
        %4844 = vmatpush.msra.mxu0 %v2236
        %4845 = vmatpush.msra.mxu0 %v2234
        %4846 = vmatpush.msra.mxu0 %v2232
        %4847 = vmatpush.msra.mxu0 %v2230
        %4848 = vmatpush.msra.mxu0 %v2228
        %4849 = vmatpush.msra.mxu0 %v2226
        %4850 = vmatpush.msra.mxu0 %v2224
        %4851 = vmatpush.msra.mxu0 %v2222
        %4852 = vmatpush.msra.mxu0 %v2220
        %4853 = vmatpush.msra.mxu0 %v2218
        %4854 = vmatpush.msra.mxu0 %v2216
        %4855 = vmatpush.msra.mxu0 %v2214
        %4856 = vmatpush.msra.mxu0 %v2212
        %4857 = vmatmul.f32.gmra.mxu0 %v3558
        %v4858 = vpop.f32.mrf.mxu0
        %v4859 = vadd.f32 %v4839, %v4858
        %4860 = vdwg.mxu0
        %4861 = vmatpush.msra.mxu0 %v2274
        %4862 = vmatpush.msra.mxu0 %v2272
        %4863 = vmatpush.msra.mxu0 %v2270
        %4864 = vmatpush.msra.mxu0 %v2268
        %4865 = vmatpush.msra.mxu0 %v2266
        %4866 = vmatpush.msra.mxu0 %v2264
        %4867 = vmatpush.msra.mxu0 %v2262
        %4868 = vmatpush.msra.mxu0 %v2260
        %4869 = vmatpush.msra.mxu0 %v2258
        %4870 = vmatpush.msra.mxu0 %v2256
        %4871 = vmatpush.msra.mxu0 %v2254
        %4872 = vmatpush.msra.mxu0 %v2252
        %4873 = vmatpush.msra.mxu0 %v2250
        %4874 = vmatpush.msra.mxu0 %v2248
        %4875 = vmatpush.msra.mxu0 %v2246
        %4876 = vmatpush.msra.mxu0 %v2244
        %4877 = vmatmul.f32.gmra.mxu0 %v3559
        %v4878 = vpop.f32.mrf.mxu0
        %v4879 = vadd.f32 %v4859, %v4878
        %4880 = vdwg.mxu0
        %4881 = vmatpush.msra.mxu0 %v2306
        %4882 = vmatpush.msra.mxu0 %v2304
        %4883 = vmatpush.msra.mxu0 %v2302
        %4884 = vmatpush.msra.mxu0 %v2300
        %4885 = vmatpush.msra.mxu0 %v2298
        %4886 = vmatpush.msra.mxu0 %v2296
        %4887 = vmatpush.msra.mxu0 %v2294
        %4888 = vmatpush.msra.mxu0 %v2292
        %4889 = vmatpush.msra.mxu0 %v2290
        %4890 = vmatpush.msra.mxu0 %v2288
        %4891 = vmatpush.msra.mxu0 %v2286
        %4892 = vmatpush.msra.mxu0 %v2284
        %4893 = vmatpush.msra.mxu0 %v2282
        %4894 = vmatpush.msra.mxu0 %v2280
        %4895 = vmatpush.msra.mxu0 %v2278
        %4896 = vmatpush.msra.mxu0 %v2276
        %4897 = vmatmul.f32.gmra.mxu0 %v3560
        %v4898 = vpop.f32.mrf.mxu0
        %v4899 = vadd.f32 %v4879, %v4898
        %4900 = vdwg.mxu0
        %4901 = vmatpush.msra.mxu0 %v2338
        %4902 = vmatpush.msra.mxu0 %v2336
        %4903 = vmatpush.msra.mxu0 %v2334
        %4904 = vmatpush.msra.mxu0 %v2332
        %4905 = vmatpush.msra.mxu0 %v2330
        %4906 = vmatpush.msra.mxu0 %v2328
        %4907 = vmatpush.msra.mxu0 %v2326
        %4908 = vmatpush.msra.mxu0 %v2324
        %4909 = vmatpush.msra.mxu0 %v2322
        %4910 = vmatpush.msra.mxu0 %v2320
        %4911 = vmatpush.msra.mxu0 %v2318
        %4912 = vmatpush.msra.mxu0 %v2316
        %4913 = vmatpush.msra.mxu0 %v2314
        %4914 = vmatpush.msra.mxu0 %v2312
        %4915 = vmatpush.msra.mxu0 %v2310
        %4916 = vmatpush.msra.mxu0 %v2308
        %4917 = vmatmul.f32.gmra.mxu0 %v3561
        %v4918 = vpop.f32.mrf.mxu0
        %v4919 = vadd.f32 %v4899, %v4918
        %4920 = vdwg.mxu0
        %4921 = vmatpush.msra.mxu0 %v2370
        %4922 = vmatpush.msra.mxu0 %v2368
        %4923 = vmatpush.msra.mxu0 %v2366
        %4924 = vmatpush.msra.mxu0 %v2364
        %4925 = vmatpush.msra.mxu0 %v2362
        %4926 = vmatpush.msra.mxu0 %v2360
        %4927 = vmatpush.msra.mxu0 %v2358
        %4928 = vmatpush.msra.mxu0 %v2356
        %4929 = vmatpush.msra.mxu0 %v2354
        %4930 = vmatpush.msra.mxu0 %v2352
        %4931 = vmatpush.msra.mxu0 %v2350
        %4932 = vmatpush.msra.mxu0 %v2348
        %4933 = vmatpush.msra.mxu0 %v2346
        %4934 = vmatpush.msra.mxu0 %v2344
        %4935 = vmatpush.msra.mxu0 %v2342
        %4936 = vmatpush.msra.mxu0 %v2340
        %4937 = vmatmul.f32.gmra.mxu0 %v3562
        %v4938 = vpop.f32.mrf.mxu0
        %v4939 = vadd.f32 %v4919, %v4938
        %4940 = vdwg.mxu0
        %4941 = vmatpush.msra.mxu0 %v2402
        %4942 = vmatpush.msra.mxu0 %v2400
        %4943 = vmatpush.msra.mxu0 %v2398
        %4944 = vmatpush.msra.mxu0 %v2396
        %4945 = vmatpush.msra.mxu0 %v2394
        %4946 = vmatpush.msra.mxu0 %v2392
        %4947 = vmatpush.msra.mxu0 %v2390
        %4948 = vmatpush.msra.mxu0 %v2388
        %4949 = vmatpush.msra.mxu0 %v2386
        %4950 = vmatpush.msra.mxu0 %v2384
        %4951 = vmatpush.msra.mxu0 %v2382
        %4952 = vmatpush.msra.mxu0 %v2380
        %4953 = vmatpush.msra.mxu0 %v2378
        %4954 = vmatpush.msra.mxu0 %v2376
        %4955 = vmatpush.msra.mxu0 %v2374
        %4956 = vmatpush.msra.mxu0 %v2372
        %4957 = vmatmul.f32.gmra.mxu0 %v3563
        %v4958 = vpop.f32.mrf.mxu0
        %v4959 = vadd.f32 %v4939, %v4958
        %4960 = vdwg.mxu0
        %4961 = vmatpush.msra.mxu0 %v2434
        %4962 = vmatpush.msra.mxu0 %v2432
        %4963 = vmatpush.msra.mxu0 %v2430
        %4964 = vmatpush.msra.mxu0 %v2428
        %4965 = vmatpush.msra.mxu0 %v2426
        %4966 = vmatpush.msra.mxu0 %v2424
        %4967 = vmatpush.msra.mxu0 %v2422
        %4968 = vmatpush.msra.mxu0 %v2420
        %4969 = vmatpush.msra.mxu0 %v2418
        %4970 = vmatpush.msra.mxu0 %v2416
        %4971 = vmatpush.msra.mxu0 %v2414
        %4972 = vmatpush.msra.mxu0 %v2412
        %4973 = vmatpush.msra.mxu0 %v2410
        %4974 = vmatpush.msra.mxu0 %v2408
        %4975 = vmatpush.msra.mxu0 %v2406
        %4976 = vmatpush.msra.mxu0 %v2404
        %4977 = vmatmul.f32.gmra.mxu0 %v3564
        %v4978 = vpop.f32.mrf.mxu0
        %v4979 = vadd.f32 %v4959, %v4978
        %4980 = vdwg.mxu0
        %4981 = vmatpush.msra.mxu0 %v2466
        %4982 = vmatpush.msra.mxu0 %v2464
        %4983 = vmatpush.msra.mxu0 %v2462
        %4984 = vmatpush.msra.mxu0 %v2460
        %4985 = vmatpush.msra.mxu0 %v2458
        %4986 = vmatpush.msra.mxu0 %v2456
        %4987 = vmatpush.msra.mxu0 %v2454
        %4988 = vmatpush.msra.mxu0 %v2452
        %4989 = vmatpush.msra.mxu0 %v2450
        %4990 = vmatpush.msra.mxu0 %v2448
        %4991 = vmatpush.msra.mxu0 %v2446
        %4992 = vmatpush.msra.mxu0 %v2444
        %4993 = vmatpush.msra.mxu0 %v2442
        %4994 = vmatpush.msra.mxu0 %v2440
        %4995 = vmatpush.msra.mxu0 %v2438
        %4996 = vmatpush.msra.mxu0 %v2436
        %4997 = vmatmul.f32.gmra.mxu0 %v3567
        %v4998 = vpop.f32.mrf.mxu0
        %v4999 = vadd.f32 %v4979, %v4998
        %5000 = vdwg.mxu0
        %5001 = vmatpush.msra.mxu0 %v2498
        %5002 = vmatpush.msra.mxu0 %v2496
        %5003 = vmatpush.msra.mxu0 %v2494
        %5004 = vmatpush.msra.mxu0 %v2492
        %5005 = vmatpush.msra.mxu0 %v2490
        %5006 = vmatpush.msra.mxu0 %v2488
        %5007 = vmatpush.msra.mxu0 %v2486
        %5008 = vmatpush.msra.mxu0 %v2484
        %5009 = vmatpush.msra.mxu0 %v2482
        %5010 = vmatpush.msra.mxu0 %v2480
        %5011 = vmatpush.msra.mxu0 %v2478
        %5012 = vmatpush.msra.mxu0 %v2476
        %5013 = vmatpush.msra.mxu0 %v2474
        %5014 = vmatpush.msra.mxu0 %v2472
        %5015 = vmatpush.msra.mxu0 %v2470
        %5016 = vmatpush.msra.mxu0 %v2468
        %5017 = vmatmul.f32.gmra.mxu0 %v3568
        %v5018 = vpop.f32.mrf.mxu0
        %v5019 = vadd.f32 %v4999, %v5018
        %5020 = vdwg.mxu0
        %5021 = vmatpush.msra.mxu0 %v2530
        %5022 = vmatpush.msra.mxu0 %v2528
        %5023 = vmatpush.msra.mxu0 %v2526
        %5024 = vmatpush.msra.mxu0 %v2524
        %5025 = vmatpush.msra.mxu0 %v2522
        %5026 = vmatpush.msra.mxu0 %v2520
        %5027 = vmatpush.msra.mxu0 %v2518
        %5028 = vmatpush.msra.mxu0 %v2516
        %5029 = vmatpush.msra.mxu0 %v2514
        %5030 = vmatpush.msra.mxu0 %v2512
        %5031 = vmatpush.msra.mxu0 %v2510
        %5032 = vmatpush.msra.mxu0 %v2508
        %5033 = vmatpush.msra.mxu0 %v2506
        %5034 = vmatpush.msra.mxu0 %v2504
        %5035 = vmatpush.msra.mxu0 %v2502
        %5036 = vmatpush.msra.mxu0 %v2500
        %5037 = vmatmul.f32.gmra.mxu0 %v3569
        %v5038 = vpop.f32.mrf.mxu0
        %v5039 = vadd.f32 %v5019, %v5038
        %5040 = vdwg.mxu0
        %5041 = vmatpush.msra.mxu0 %v2562
        %5042 = vmatpush.msra.mxu0 %v2560
        %5043 = vmatpush.msra.mxu0 %v2558
        %5044 = vmatpush.msra.mxu0 %v2556
        %5045 = vmatpush.msra.mxu0 %v2554
        %5046 = vmatpush.msra.mxu0 %v2552
        %5047 = vmatpush.msra.mxu0 %v2550
        %5048 = vmatpush.msra.mxu0 %v2548
        %5049 = vmatpush.msra.mxu0 %v2546
        %5050 = vmatpush.msra.mxu0 %v2544
        %5051 = vmatpush.msra.mxu0 %v2542
        %5052 = vmatpush.msra.mxu0 %v2540
        %5053 = vmatpush.msra.mxu0 %v2538
        %5054 = vmatpush.msra.mxu0 %v2536
        %5055 = vmatpush.msra.mxu0 %v2534
        %5056 = vmatpush.msra.mxu0 %v2532
        %5057 = vmatmul.f32.gmra.mxu0 %v3570
        %v5058 = vpop.f32.mrf.mxu0
        %v5059 = vadd.f32 %v5039, %v5058
        %5060 = vdwg.mxu0
        %5061 = vmatpush.msra.mxu0 %v2594
        %5062 = vmatpush.msra.mxu0 %v2592
        %5063 = vmatpush.msra.mxu0 %v2590
        %5064 = vmatpush.msra.mxu0 %v2588
        %5065 = vmatpush.msra.mxu0 %v2586
        %5066 = vmatpush.msra.mxu0 %v2584
        %5067 = vmatpush.msra.mxu0 %v2582
        %5068 = vmatpush.msra.mxu0 %v2580
        %5069 = vmatpush.msra.mxu0 %v2578
        %5070 = vmatpush.msra.mxu0 %v2576
        %5071 = vmatpush.msra.mxu0 %v2574
        %5072 = vmatpush.msra.mxu0 %v2572
        %5073 = vmatpush.msra.mxu0 %v2570
        %5074 = vmatpush.msra.mxu0 %v2568
        %5075 = vmatpush.msra.mxu0 %v2566
        %5076 = vmatpush.msra.mxu0 %v2564
        %5077 = vmatmul.f32.gmra.mxu0 %v3571
        %v5078 = vpop.f32.mrf.mxu0
        %v5079 = vadd.f32 %v5059, %v5078
        %5080 = vdwg.mxu0
        %5081 = vmatpush.msra.mxu0 %v2626
        %5082 = vmatpush.msra.mxu0 %v2624
        %5083 = vmatpush.msra.mxu0 %v2622
        %5084 = vmatpush.msra.mxu0 %v2620
        %5085 = vmatpush.msra.mxu0 %v2618
        %5086 = vmatpush.msra.mxu0 %v2616
        %5087 = vmatpush.msra.mxu0 %v2614
        %5088 = vmatpush.msra.mxu0 %v2612
        %5089 = vmatpush.msra.mxu0 %v2610
        %5090 = vmatpush.msra.mxu0 %v2608
        %5091 = vmatpush.msra.mxu0 %v2606
        %5092 = vmatpush.msra.mxu0 %v2604
        %5093 = vmatpush.msra.mxu0 %v2602
        %5094 = vmatpush.msra.mxu0 %v2600
        %5095 = vmatpush.msra.mxu0 %v2598
        %5096 = vmatpush.msra.mxu0 %v2596
        %5097 = vmatmul.f32.gmra.mxu0 %v3572
        %v5098 = vpop.f32.mrf.mxu0
        %v5099 = vadd.f32 %v5079, %v5098
        %5100 = vdwg.mxu0
        %5101 = vmatpush.msra.mxu0 %v2658
        %5102 = vmatpush.msra.mxu0 %v2656
        %5103 = vmatpush.msra.mxu0 %v2654
        %5104 = vmatpush.msra.mxu0 %v2652
        %5105 = vmatpush.msra.mxu0 %v2650
        %5106 = vmatpush.msra.mxu0 %v2648
        %5107 = vmatpush.msra.mxu0 %v2646
        %5108 = vmatpush.msra.mxu0 %v2644
        %5109 = vmatpush.msra.mxu0 %v2642
        %5110 = vmatpush.msra.mxu0 %v2640
        %5111 = vmatpush.msra.mxu0 %v2638
        %5112 = vmatpush.msra.mxu0 %v2636
        %5113 = vmatpush.msra.mxu0 %v2634
        %5114 = vmatpush.msra.mxu0 %v2632
        %5115 = vmatpush.msra.mxu0 %v2630
        %5116 = vmatpush.msra.mxu0 %v2628
        %5117 = vmatmul.f32.gmra.mxu0 %v3573
        %v5118 = vpop.f32.mrf.mxu0
        %v5119 = vadd.f32 %v5099, %v5118
        %5120 = vdwg.mxu0
        %5121 = vmatpush.msra.mxu0 %v2690
        %5122 = vmatpush.msra.mxu0 %v2688
        %5123 = vmatpush.msra.mxu0 %v2686
        %5124 = vmatpush.msra.mxu0 %v2684
        %5125 = vmatpush.msra.mxu0 %v2682
        %5126 = vmatpush.msra.mxu0 %v2680
        %5127 = vmatpush.msra.mxu0 %v2678
        %5128 = vmatpush.msra.mxu0 %v2676
        %5129 = vmatpush.msra.mxu0 %v2674
        %5130 = vmatpush.msra.mxu0 %v2672
        %5131 = vmatpush.msra.mxu0 %v2670
        %5132 = vmatpush.msra.mxu0 %v2668
        %5133 = vmatpush.msra.mxu0 %v2666
        %5134 = vmatpush.msra.mxu0 %v2664
        %5135 = vmatpush.msra.mxu0 %v2662
        %5136 = vmatpush.msra.mxu0 %v2660
        %5137 = vmatmul.f32.gmra.mxu0 %v3574
        %v5138 = vpop.f32.mrf.mxu0
        %v5139 = vadd.f32 %v5119, %v5138
        %5140 = vdwg.mxu0
        %5141 = vmatpush.msra.mxu0 %v2722
        %5142 = vmatpush.msra.mxu0 %v2720
        %5143 = vmatpush.msra.mxu0 %v2718
        %5144 = vmatpush.msra.mxu0 %v2716
        %5145 = vmatpush.msra.mxu0 %v2714
        %5146 = vmatpush.msra.mxu0 %v2712
        %5147 = vmatpush.msra.mxu0 %v2710
        %5148 = vmatpush.msra.mxu0 %v2708
        %5149 = vmatpush.msra.mxu0 %v2706
        %5150 = vmatpush.msra.mxu0 %v2704
        %5151 = vmatpush.msra.mxu0 %v2702
        %5152 = vmatpush.msra.mxu0 %v2700
        %5153 = vmatpush.msra.mxu0 %v2698
        %5154 = vmatpush.msra.mxu0 %v2696
        %5155 = vmatpush.msra.mxu0 %v2694
        %5156 = vmatpush.msra.mxu0 %v2692
        %5157 = vmatmul.f32.gmra.mxu0 %v3577
        %v5158 = vpop.f32.mrf.mxu0
        %v5159 = vadd.f32 %v5139, %v5158
        %5160 = vdwg.mxu0
        %5161 = vmatpush.msra.mxu0 %v2754
        %5162 = vmatpush.msra.mxu0 %v2752
        %5163 = vmatpush.msra.mxu0 %v2750
        %5164 = vmatpush.msra.mxu0 %v2748
        %5165 = vmatpush.msra.mxu0 %v2746
        %5166 = vmatpush.msra.mxu0 %v2744
        %5167 = vmatpush.msra.mxu0 %v2742
        %5168 = vmatpush.msra.mxu0 %v2740
        %5169 = vmatpush.msra.mxu0 %v2738
        %5170 = vmatpush.msra.mxu0 %v2736
        %5171 = vmatpush.msra.mxu0 %v2734
        %5172 = vmatpush.msra.mxu0 %v2732
        %5173 = vmatpush.msra.mxu0 %v2730
        %5174 = vmatpush.msra.mxu0 %v2728
        %5175 = vmatpush.msra.mxu0 %v2726
        %5176 = vmatpush.msra.mxu0 %v2724
        %5177 = vmatmul.f32.gmra.mxu0 %v3578
        %v5178 = vpop.f32.mrf.mxu0
        %v5179 = vadd.f32 %v5159, %v5178
        %5180 = vdwg.mxu0
        %5181 = vmatpush.msra.mxu0 %v2786
        %5182 = vmatpush.msra.mxu0 %v2784
        %5183 = vmatpush.msra.mxu0 %v2782
        %5184 = vmatpush.msra.mxu0 %v2780
        %5185 = vmatpush.msra.mxu0 %v2778
        %5186 = vmatpush.msra.mxu0 %v2776
        %5187 = vmatpush.msra.mxu0 %v2774
        %5188 = vmatpush.msra.mxu0 %v2772
        %5189 = vmatpush.msra.mxu0 %v2770
        %5190 = vmatpush.msra.mxu0 %v2768
        %5191 = vmatpush.msra.mxu0 %v2766
        %5192 = vmatpush.msra.mxu0 %v2764
        %5193 = vmatpush.msra.mxu0 %v2762
        %5194 = vmatpush.msra.mxu0 %v2760
        %5195 = vmatpush.msra.mxu0 %v2758
        %5196 = vmatpush.msra.mxu0 %v2756
        %5197 = vmatmul.f32.gmra.mxu0 %v3579
        %v5198 = vpop.f32.mrf.mxu0
        %v5199 = vadd.f32 %v5179, %v5198
        %5200 = vdwg.mxu0
        %5201 = vmatpush.msra.mxu0 %v2818
        %5202 = vmatpush.msra.mxu0 %v2816
        %5203 = vmatpush.msra.mxu0 %v2814
        %5204 = vmatpush.msra.mxu0 %v2812
        %5205 = vmatpush.msra.mxu0 %v2810
        %5206 = vmatpush.msra.mxu0 %v2808
        %5207 = vmatpush.msra.mxu0 %v2806
        %5208 = vmatpush.msra.mxu0 %v2804
        %5209 = vmatpush.msra.mxu0 %v2802
        %5210 = vmatpush.msra.mxu0 %v2800
        %5211 = vmatpush.msra.mxu0 %v2798
        %5212 = vmatpush.msra.mxu0 %v2796
        %5213 = vmatpush.msra.mxu0 %v2794
        %5214 = vmatpush.msra.mxu0 %v2792
        %5215 = vmatpush.msra.mxu0 %v2790
        %5216 = vmatpush.msra.mxu0 %v2788
        %5217 = vmatmul.f32.gmra.mxu0 %v3580
        %v5218 = vpop.f32.mrf.mxu0
        %v5219 = vadd.f32 %v5199, %v5218
        %5220 = vdwg.mxu0
        %5221 = vmatpush.msra.mxu0 %v2850
        %5222 = vmatpush.msra.mxu0 %v2848
        %5223 = vmatpush.msra.mxu0 %v2846
        %5224 = vmatpush.msra.mxu0 %v2844
        %5225 = vmatpush.msra.mxu0 %v2842
        %5226 = vmatpush.msra.mxu0 %v2840
        %5227 = vmatpush.msra.mxu0 %v2838
        %5228 = vmatpush.msra.mxu0 %v2836
        %5229 = vmatpush.msra.mxu0 %v2834
        %5230 = vmatpush.msra.mxu0 %v2832
        %5231 = vmatpush.msra.mxu0 %v2830
        %5232 = vmatpush.msra.mxu0 %v2828
        %5233 = vmatpush.msra.mxu0 %v2826
        %5234 = vmatpush.msra.mxu0 %v2824
        %5235 = vmatpush.msra.mxu0 %v2822
        %5236 = vmatpush.msra.mxu0 %v2820
        %5237 = vmatmul.f32.gmra.mxu0 %v3581
        %v5238 = vpop.f32.mrf.mxu0
        %v5239 = vadd.f32 %v5219, %v5238
        %5240 = vdwg.mxu0
        %5241 = vmatpush.msra.mxu0 %v2882
        %5242 = vmatpush.msra.mxu0 %v2880
        %5243 = vmatpush.msra.mxu0 %v2878
        %5244 = vmatpush.msra.mxu0 %v2876
        %5245 = vmatpush.msra.mxu0 %v2874
        %5246 = vmatpush.msra.mxu0 %v2872
        %5247 = vmatpush.msra.mxu0 %v2870
        %5248 = vmatpush.msra.mxu0 %v2868
        %5249 = vmatpush.msra.mxu0 %v2866
        %5250 = vmatpush.msra.mxu0 %v2864
        %5251 = vmatpush.msra.mxu0 %v2862
        %5252 = vmatpush.msra.mxu0 %v2860
        %5253 = vmatpush.msra.mxu0 %v2858
        %5254 = vmatpush.msra.mxu0 %v2856
        %5255 = vmatpush.msra.mxu0 %v2854
        %5256 = vmatpush.msra.mxu0 %v2852
        %5257 = vmatmul.f32.gmra.mxu0 %v3582
        %v5258 = vpop.f32.mrf.mxu0
        %v5259 = vadd.f32 %v5239, %v5258
        %5260 = vdwg.mxu0
        %5261 = vmatpush.msra.mxu0 %v2914
        %5262 = vmatpush.msra.mxu0 %v2912
        %5263 = vmatpush.msra.mxu0 %v2910
        %5264 = vmatpush.msra.mxu0 %v2908
        %5265 = vmatpush.msra.mxu0 %v2906
        %5266 = vmatpush.msra.mxu0 %v2904
        %5267 = vmatpush.msra.mxu0 %v2902
        %5268 = vmatpush.msra.mxu0 %v2900
        %5269 = vmatpush.msra.mxu0 %v2898
        %5270 = vmatpush.msra.mxu0 %v2896
        %5271 = vmatpush.msra.mxu0 %v2894
        %5272 = vmatpush.msra.mxu0 %v2892
        %5273 = vmatpush.msra.mxu0 %v2890
        %5274 = vmatpush.msra.mxu0 %v2888
        %5275 = vmatpush.msra.mxu0 %v2886
        %5276 = vmatpush.msra.mxu0 %v2884
        %5277 = vmatmul.f32.gmra.mxu0 %v3583
        %v5278 = vpop.f32.mrf.mxu0
        %v5279 = vadd.f32 %v5259, %v5278
        %5280 = vdwg.mxu0
        %5281 = vmatpush.msra.mxu0 %v2946
        %5282 = vmatpush.msra.mxu0 %v2944
        %5283 = vmatpush.msra.mxu0 %v2942
        %5284 = vmatpush.msra.mxu0 %v2940
        %5285 = vmatpush.msra.mxu0 %v2938
        %5286 = vmatpush.msra.mxu0 %v2936
        %5287 = vmatpush.msra.mxu0 %v2934
        %5288 = vmatpush.msra.mxu0 %v2932
        %5289 = vmatpush.msra.mxu0 %v2930
        %5290 = vmatpush.msra.mxu0 %v2928
        %5291 = vmatpush.msra.mxu0 %v2926
        %5292 = vmatpush.msra.mxu0 %v2924
        %5293 = vmatpush.msra.mxu0 %v2922
        %5294 = vmatpush.msra.mxu0 %v2920
        %5295 = vmatpush.msra.mxu0 %v2918
        %5296 = vmatpush.msra.mxu0 %v2916
        %5297 = vmatmul.f32.gmra.mxu0 %v3584
        %v5298 = vpop.f32.mrf.mxu0
        %v5299 = vadd.f32 %v5279, %v5298
        %5300 = vdwg.mxu0
        %5301 = vmatpush.msra.mxu0 %v2978
        %5302 = vmatpush.msra.mxu0 %v2976
        %5303 = vmatpush.msra.mxu0 %v2974
        %5304 = vmatpush.msra.mxu0 %v2972
        %5305 = vmatpush.msra.mxu0 %v2970
        %5306 = vmatpush.msra.mxu0 %v2968
        %5307 = vmatpush.msra.mxu0 %v2966
        %5308 = vmatpush.msra.mxu0 %v2964
        %5309 = vmatpush.msra.mxu0 %v2962
        %5310 = vmatpush.msra.mxu0 %v2960
        %5311 = vmatpush.msra.mxu0 %v2958
        %5312 = vmatpush.msra.mxu0 %v2956
        %5313 = vmatpush.msra.mxu0 %v2954
        %5314 = vmatpush.msra.mxu0 %v2952
        %5315 = vmatpush.msra.mxu0 %v2950
        %5316 = vmatpush.msra.mxu0 %v2948
        %5317 = vmatmul.f32.gmra.mxu0 %v3587
        %v5318 = vpop.f32.mrf.mxu0
        %v5319 = vadd.f32 %v5299, %v5318
        %5320 = vdwg.mxu0
        %5321 = vmatpush.msra.mxu0 %v3010
        %5322 = vmatpush.msra.mxu0 %v3008
        %5323 = vmatpush.msra.mxu0 %v3006
        %5324 = vmatpush.msra.mxu0 %v3004
        %5325 = vmatpush.msra.mxu0 %v3002
        %5326 = vmatpush.msra.mxu0 %v3000
        %5327 = vmatpush.msra.mxu0 %v2998
        %5328 = vmatpush.msra.mxu0 %v2996
        %5329 = vmatpush.msra.mxu0 %v2994
        %5330 = vmatpush.msra.mxu0 %v2992
        %5331 = vmatpush.msra.mxu0 %v2990
        %5332 = vmatpush.msra.mxu0 %v2988
        %5333 = vmatpush.msra.mxu0 %v2986
        %5334 = vmatpush.msra.mxu0 %v2984
        %5335 = vmatpush.msra.mxu0 %v2982
        %5336 = vmatpush.msra.mxu0 %v2980
        %5337 = vmatmul.f32.gmra.mxu0 %v3588
        %v5338 = vpop.f32.mrf.mxu0
        %v5339 = vadd.f32 %v5319, %v5338
        %5340 = vdwg.mxu0
        %5341 = vmatpush.msra.mxu0 %v3042
        %5342 = vmatpush.msra.mxu0 %v3040
        %5343 = vmatpush.msra.mxu0 %v3038
        %5344 = vmatpush.msra.mxu0 %v3036
        %5345 = vmatpush.msra.mxu0 %v3034
        %5346 = vmatpush.msra.mxu0 %v3032
        %5347 = vmatpush.msra.mxu0 %v3030
        %5348 = vmatpush.msra.mxu0 %v3028
        %5349 = vmatpush.msra.mxu0 %v3026
        %5350 = vmatpush.msra.mxu0 %v3024
        %5351 = vmatpush.msra.mxu0 %v3022
        %5352 = vmatpush.msra.mxu0 %v3020
        %5353 = vmatpush.msra.mxu0 %v3018
        %5354 = vmatpush.msra.mxu0 %v3016
        %5355 = vmatpush.msra.mxu0 %v3014
        %5356 = vmatpush.msra.mxu0 %v3012
        %5357 = vmatmul.f32.gmra.mxu0 %v3589
        %v5358 = vpop.f32.mrf.mxu0
        %v5359 = vadd.f32 %v5339, %v5358
        %5360 = vdwg.mxu0
        %5361 = vmatpush.msra.mxu0 %v3074
        %5362 = vmatpush.msra.mxu0 %v3072
        %5363 = vmatpush.msra.mxu0 %v3070
        %5364 = vmatpush.msra.mxu0 %v3068
        %5365 = vmatpush.msra.mxu0 %v3066
        %5366 = vmatpush.msra.mxu0 %v3064
        %5367 = vmatpush.msra.mxu0 %v3062
        %5368 = vmatpush.msra.mxu0 %v3060
        %5369 = vmatpush.msra.mxu0 %v3058
        %5370 = vmatpush.msra.mxu0 %v3056
        %5371 = vmatpush.msra.mxu0 %v3054
        %5372 = vmatpush.msra.mxu0 %v3052
        %5373 = vmatpush.msra.mxu0 %v3050
        %5374 = vmatpush.msra.mxu0 %v3048
        %5375 = vmatpush.msra.mxu0 %v3046
        %5376 = vmatpush.msra.mxu0 %v3044
        %5377 = vmatmul.f32.gmra.mxu0 %v3590
        %v5378 = vpop.f32.mrf.mxu0
        %v5379 = vadd.f32 %v5359, %v5378
        %5380 = vdwg.mxu0
        %5381 = vmatpush.msra.mxu0 %v3106
        %5382 = vmatpush.msra.mxu0 %v3104
        %5383 = vmatpush.msra.mxu0 %v3102
        %5384 = vmatpush.msra.mxu0 %v3100
        %5385 = vmatpush.msra.mxu0 %v3098
        %5386 = vmatpush.msra.mxu0 %v3096
        %5387 = vmatpush.msra.mxu0 %v3094
        %5388 = vmatpush.msra.mxu0 %v3092
        %5389 = vmatpush.msra.mxu0 %v3090
        %5390 = vmatpush.msra.mxu0 %v3088
        %5391 = vmatpush.msra.mxu0 %v3086
        %5392 = vmatpush.msra.mxu0 %v3084
        %5393 = vmatpush.msra.mxu0 %v3082
        %5394 = vmatpush.msra.mxu0 %v3080
        %5395 = vmatpush.msra.mxu0 %v3078
        %5396 = vmatpush.msra.mxu0 %v3076
        %5397 = vmatmul.f32.gmra.mxu0 %v3591
        %v5398 = vpop.f32.mrf.mxu0
        %v5399 = vadd.f32 %v5379, %v5398
        %5400 = vdwg.mxu0
        %5401 = vmatpush.msra.mxu0 %v3138
        %5402 = vmatpush.msra.mxu0 %v3136
        %5403 = vmatpush.msra.mxu0 %v3134
        %5404 = vmatpush.msra.mxu0 %v3132
        %5405 = vmatpush.msra.mxu0 %v3130
        %5406 = vmatpush.msra.mxu0 %v3128
        %5407 = vmatpush.msra.mxu0 %v3126
        %5408 = vmatpush.msra.mxu0 %v3124
        %5409 = vmatpush.msra.mxu0 %v3122
        %5410 = vmatpush.msra.mxu0 %v3120
        %5411 = vmatpush.msra.mxu0 %v3118
        %5412 = vmatpush.msra.mxu0 %v3116
        %5413 = vmatpush.msra.mxu0 %v3114
        %5414 = vmatpush.msra.mxu0 %v3112
        %5415 = vmatpush.msra.mxu0 %v3110
        %5416 = vmatpush.msra.mxu0 %v3108
        %5417 = vmatmul.f32.gmra.mxu0 %v3592
        %v5418 = vpop.f32.mrf.mxu0
        %v5419 = vadd.f32 %v5399, %v5418
        %5420 = vdwg.mxu0
        %5421 = vmatpush.msra.mxu0 %v3170
        %5422 = vmatpush.msra.mxu0 %v3168
        %5423 = vmatpush.msra.mxu0 %v3166
        %5424 = vmatpush.msra.mxu0 %v3164
        %5425 = vmatpush.msra.mxu0 %v3162
        %5426 = vmatpush.msra.mxu0 %v3160
        %5427 = vmatpush.msra.mxu0 %v3158
        %5428 = vmatpush.msra.mxu0 %v3156
        %5429 = vmatpush.msra.mxu0 %v3154
        %5430 = vmatpush.msra.mxu0 %v3152
        %5431 = vmatpush.msra.mxu0 %v3150
        %5432 = vmatpush.msra.mxu0 %v3148
        %5433 = vmatpush.msra.mxu0 %v3146
        %5434 = vmatpush.msra.mxu0 %v3144
        %5435 = vmatpush.msra.mxu0 %v3142
        %5436 = vmatpush.msra.mxu0 %v3140
        %5437 = vmatmul.f32.gmra.mxu0 %v3593
        %v5438 = vpop.f32.mrf.mxu0
        %v5439 = vadd.f32 %v5419, %v5438
        %5440 = vdwg.mxu0
        %5441 = vmatpush.msra.mxu0 %v3202
        %5442 = vmatpush.msra.mxu0 %v3200
        %5443 = vmatpush.msra.mxu0 %v3198
        %5444 = vmatpush.msra.mxu0 %v3196
        %5445 = vmatpush.msra.mxu0 %v3194
        %5446 = vmatpush.msra.mxu0 %v3192
        %5447 = vmatpush.msra.mxu0 %v3190
        %5448 = vmatpush.msra.mxu0 %v3188
        %5449 = vmatpush.msra.mxu0 %v3186
        %5450 = vmatpush.msra.mxu0 %v3184
        %5451 = vmatpush.msra.mxu0 %v3182
        %5452 = vmatpush.msra.mxu0 %v3180
        %5453 = vmatpush.msra.mxu0 %v3178
        %5454 = vmatpush.msra.mxu0 %v3176
        %5455 = vmatpush.msra.mxu0 %v3174
        %5456 = vmatpush.msra.mxu0 %v3172
        %5457 = vmatmul.f32.gmra.mxu0 %v3594
        %v5458 = vpop.f32.mrf.mxu0
        %v5459 = vadd.f32 %v5439, %v5458
        %5460 = vdwg.mxu0
        %5461 = vmatpush.msra.mxu0 %v3234
        %5462 = vmatpush.msra.mxu0 %v3232
        %5463 = vmatpush.msra.mxu0 %v3230
        %5464 = vmatpush.msra.mxu0 %v3228
        %5465 = vmatpush.msra.mxu0 %v3226
        %5466 = vmatpush.msra.mxu0 %v3224
        %5467 = vmatpush.msra.mxu0 %v3222
        %5468 = vmatpush.msra.mxu0 %v3220
        %5469 = vmatpush.msra.mxu0 %v3218
        %5470 = vmatpush.msra.mxu0 %v3216
        %5471 = vmatpush.msra.mxu0 %v3214
        %5472 = vmatpush.msra.mxu0 %v3212
        %5473 = vmatpush.msra.mxu0 %v3210
        %5474 = vmatpush.msra.mxu0 %v3208
        %5475 = vmatpush.msra.mxu0 %v3206
        %5476 = vmatpush.msra.mxu0 %v3204
        %5477 = vmatmul.f32.gmra.mxu0 %v3597
        %v5478 = vpop.f32.mrf.mxu0
        %v5479 = vadd.f32 %v5459, %v5478
        %5480 = vdwg.mxu0
        %5481 = vmatpush.msra.mxu0 %v3266
        %5482 = vmatpush.msra.mxu0 %v3264
        %5483 = vmatpush.msra.mxu0 %v3262
        %5484 = vmatpush.msra.mxu0 %v3260
        %5485 = vmatpush.msra.mxu0 %v3258
        %5486 = vmatpush.msra.mxu0 %v3256
        %5487 = vmatpush.msra.mxu0 %v3254
        %5488 = vmatpush.msra.mxu0 %v3252
        %5489 = vmatpush.msra.mxu0 %v3250
        %5490 = vmatpush.msra.mxu0 %v3248
        %5491 = vmatpush.msra.mxu0 %v3246
        %5492 = vmatpush.msra.mxu0 %v3244
        %5493 = vmatpush.msra.mxu0 %v3242
        %5494 = vmatpush.msra.mxu0 %v3240
        %5495 = vmatpush.msra.mxu0 %v3238
        %5496 = vmatpush.msra.mxu0 %v3236
        %5497 = vmatmul.f32.gmra.mxu0 %v3598
        %v5498 = vpop.f32.mrf.mxu0
        %v5499 = vadd.f32 %v5479, %v5498
        %5500 = vdwg.mxu0
        %5501 = vmatpush.msra.mxu0 %v3298
        %5502 = vmatpush.msra.mxu0 %v3296
        %5503 = vmatpush.msra.mxu0 %v3294
        %5504 = vmatpush.msra.mxu0 %v3292
        %5505 = vmatpush.msra.mxu0 %v3290
        %5506 = vmatpush.msra.mxu0 %v3288
        %5507 = vmatpush.msra.mxu0 %v3286
        %5508 = vmatpush.msra.mxu0 %v3284
        %5509 = vmatpush.msra.mxu0 %v3282
        %5510 = vmatpush.msra.mxu0 %v3280
        %5511 = vmatpush.msra.mxu0 %v3278
        %5512 = vmatpush.msra.mxu0 %v3276
        %5513 = vmatpush.msra.mxu0 %v3274
        %5514 = vmatpush.msra.mxu0 %v3272
        %5515 = vmatpush.msra.mxu0 %v3270
        %5516 = vmatpush.msra.mxu0 %v3268
        %5517 = vmatmul.f32.gmra.mxu0 %v3599
        %v5518 = vpop.f32.mrf.mxu0
        %v5519 = vadd.f32 %v5499, %v5518
        %5520 = vdwg.mxu0
        %5521 = vmatpush.msra.mxu0 %v3330
        %5522 = vmatpush.msra.mxu0 %v3328
        %5523 = vmatpush.msra.mxu0 %v3326
        %5524 = vmatpush.msra.mxu0 %v3324
        %5525 = vmatpush.msra.mxu0 %v3322
        %5526 = vmatpush.msra.mxu0 %v3320
        %5527 = vmatpush.msra.mxu0 %v3318
        %5528 = vmatpush.msra.mxu0 %v3316
        %5529 = vmatpush.msra.mxu0 %v3314
        %5530 = vmatpush.msra.mxu0 %v3312
        %5531 = vmatpush.msra.mxu0 %v3310
        %5532 = vmatpush.msra.mxu0 %v3308
        %5533 = vmatpush.msra.mxu0 %v3306
        %5534 = vmatpush.msra.mxu0 %v3304
        %5535 = vmatpush.msra.mxu0 %v3302
        %5536 = vmatpush.msra.mxu0 %v3300
        %5537 = vmatmul.f32.gmra.mxu0 %v3600
        %v5538 = vpop.f32.mrf.mxu0
        %v5539 = vadd.f32 %v5519, %v5538
        %5540 = vdwg.mxu0
        %5541 = vmatpush.msra.mxu0 %v3362
        %5542 = vmatpush.msra.mxu0 %v3360
        %5543 = vmatpush.msra.mxu0 %v3358
        %5544 = vmatpush.msra.mxu0 %v3356
        %5545 = vmatpush.msra.mxu0 %v3354
        %5546 = vmatpush.msra.mxu0 %v3352
        %5547 = vmatpush.msra.mxu0 %v3350
        %5548 = vmatpush.msra.mxu0 %v3348
        %5549 = vmatpush.msra.mxu0 %v3346
        %5550 = vmatpush.msra.mxu0 %v3344
        %5551 = vmatpush.msra.mxu0 %v3342
        %5552 = vmatpush.msra.mxu0 %v3340
        %5553 = vmatpush.msra.mxu0 %v3338
        %5554 = vmatpush.msra.mxu0 %v3336
        %5555 = vmatpush.msra.mxu0 %v3334
        %5556 = vmatpush.msra.mxu0 %v3332
        %5557 = vmatmul.f32.gmra.mxu0 %v3601
        %v5558 = vpop.f32.mrf.mxu0
        %v5559 = vadd.f32 %v5539, %v5558
        %5560 = vdwg.mxu0
        %5561 = vmatpush.msra.mxu0 %v3394
        %5562 = vmatpush.msra.mxu0 %v3392
        %5563 = vmatpush.msra.mxu0 %v3390
        %5564 = vmatpush.msra.mxu0 %v3388
        %5565 = vmatpush.msra.mxu0 %v3386
        %5566 = vmatpush.msra.mxu0 %v3384
        %5567 = vmatpush.msra.mxu0 %v3382
        %5568 = vmatpush.msra.mxu0 %v3380
        %5569 = vmatpush.msra.mxu0 %v3378
        %5570 = vmatpush.msra.mxu0 %v3376
        %5571 = vmatpush.msra.mxu0 %v3374
        %5572 = vmatpush.msra.mxu0 %v3372
        %5573 = vmatpush.msra.mxu0 %v3370
        %5574 = vmatpush.msra.mxu0 %v3368
        %5575 = vmatpush.msra.mxu0 %v3366
        %5576 = vmatpush.msra.mxu0 %v3364
        %5577 = vmatmul.f32.gmra.mxu0 %v3602
        %v5578 = vpop.f32.mrf.mxu0
        %v5579 = vadd.f32 %v5559, %v5578
        %5580 = vdwg.mxu0
        %5581 = vmatpush.msra.mxu0 %v3426
        %5582 = vmatpush.msra.mxu0 %v3424
        %5583 = vmatpush.msra.mxu0 %v3422
        %5584 = vmatpush.msra.mxu0 %v3420
        %5585 = vmatpush.msra.mxu0 %v3418
        %5586 = vmatpush.msra.mxu0 %v3416
        %5587 = vmatpush.msra.mxu0 %v3414
        %5588 = vmatpush.msra.mxu0 %v3412
        %5589 = vmatpush.msra.mxu0 %v3410
        %5590 = vmatpush.msra.mxu0 %v3408
        %5591 = vmatpush.msra.mxu0 %v3406
        %5592 = vmatpush.msra.mxu0 %v3404
        %5593 = vmatpush.msra.mxu0 %v3402
        %5594 = vmatpush.msra.mxu0 %v3400
        %5595 = vmatpush.msra.mxu0 %v3398
        %5596 = vmatpush.msra.mxu0 %v3396
        %5597 = vmatmul.f32.gmra.mxu0 %v3603
        %v5598 = vpop.f32.mrf.mxu0
        %v5599 = vadd.f32 %v5579, %v5598
        %5600 = vdwg.mxu0
        %5601 = vmatpush.msra.mxu0 %v3458
        %5602 = vmatpush.msra.mxu0 %v3456
        %5603 = vmatpush.msra.mxu0 %v3454
        %5604 = vmatpush.msra.mxu0 %v3452
        %5605 = vmatpush.msra.mxu0 %v3450
        %5606 = vmatpush.msra.mxu0 %v3448
        %5607 = vmatpush.msra.mxu0 %v3446
        %5608 = vmatpush.msra.mxu0 %v3444
        %5609 = vmatpush.msra.mxu0 %v3442
        %5610 = vmatpush.msra.mxu0 %v3440
        %5611 = vmatpush.msra.mxu0 %v3438
        %5612 = vmatpush.msra.mxu0 %v3436
        %5613 = vmatpush.msra.mxu0 %v3434
        %5614 = vmatpush.msra.mxu0 %v3432
        %5615 = vmatpush.msra.mxu0 %v3430
        %5616 = vmatpush.msra.mxu0 %v3428
        %5617 = vmatmul.f32.gmra.mxu0 %v3604
        %v5618 = vpop.f32.mrf.mxu0
        %v5619 = vadd.f32 %v5599, %v5618
        %5620 = vdwg.mxu0
        %5621 = vmatpush.msra.mxu0 %v419
        %5622 = vmatpush.msra.mxu0 %v417
        %5623 = vmatpush.msra.mxu0 %v415
        %5624 = vmatpush.msra.mxu0 %v413
        %5625 = vmatpush.msra.mxu0 %v411
        %5626 = vmatpush.msra.mxu0 %v409
        %5627 = vmatpush.msra.mxu0 %v407
        %5628 = vmatpush.msra.mxu0 %v405
        %5629 = vmatpush.msra.mxu0 %v403
        %5630 = vmatpush.msra.mxu0 %v401
        %5631 = vmatpush.msra.mxu0 %v399
        %5632 = vmatpush.msra.mxu0 %v397
        %5633 = vmatpush.msra.mxu0 %v395
        %5634 = vmatpush.msra.mxu0 %v393
        %5635 = vmatpush.msra.mxu0 %v391
        %5636 = vmatpush.msra.mxu0 %v389
        %5637 = vmatmul.f32.gmra.mxu0 %v3487
        %v5638 = vpop.f32.mrf.mxu0
        %v5639 = vadd.f32 0.0, %v5638
        %5640 = vdwg.mxu0
        %5641 = vmatpush.msra.mxu0 %v451
        %5642 = vmatpush.msra.mxu0 %v449
        %5643 = vmatpush.msra.mxu0 %v447
        %5644 = vmatpush.msra.mxu0 %v445
        %5645 = vmatpush.msra.mxu0 %v443
        %5646 = vmatpush.msra.mxu0 %v441
        %5647 = vmatpush.msra.mxu0 %v439
        %5648 = vmatpush.msra.mxu0 %v437
        %5649 = vmatpush.msra.mxu0 %v435
        %5650 = vmatpush.msra.mxu0 %v433
        %5651 = vmatpush.msra.mxu0 %v431
        %5652 = vmatpush.msra.mxu0 %v429
        %5653 = vmatpush.msra.mxu0 %v427
        %5654 = vmatpush.msra.mxu0 %v425
        %5655 = vmatpush.msra.mxu0 %v423
        %5656 = vmatpush.msra.mxu0 %v421
        %5657 = vmatmul.f32.gmra.mxu0 %v3488
        %v5658 = vpop.f32.mrf.mxu0
        %v5659 = vadd.f32 %v5639, %v5658
        %5660 = vdwg.mxu0
        %5661 = vmatpush.msra.mxu0 %v483
        %5662 = vmatpush.msra.mxu0 %v481
        %5663 = vmatpush.msra.mxu0 %v479
        %5664 = vmatpush.msra.mxu0 %v477
        %5665 = vmatpush.msra.mxu0 %v475
        %5666 = vmatpush.msra.mxu0 %v473
        %5667 = vmatpush.msra.mxu0 %v471
        %5668 = vmatpush.msra.mxu0 %v469
        %5669 = vmatpush.msra.mxu0 %v467
        %5670 = vmatpush.msra.mxu0 %v465
        %5671 = vmatpush.msra.mxu0 %v463
        %5672 = vmatpush.msra.mxu0 %v461
        %5673 = vmatpush.msra.mxu0 %v459
        %5674 = vmatpush.msra.mxu0 %v457
        %5675 = vmatpush.msra.mxu0 %v455
        %5676 = vmatpush.msra.mxu0 %v453
        %5677 = vmatmul.f32.gmra.mxu0 %v3489
        %v5678 = vpop.f32.mrf.mxu0
        %v5679 = vadd.f32 %v5659, %v5678
        %5680 = vdwg.mxu0
        %5681 = vmatpush.msra.mxu0 %v515
        %5682 = vmatpush.msra.mxu0 %v513
        %5683 = vmatpush.msra.mxu0 %v511
        %5684 = vmatpush.msra.mxu0 %v509
        %5685 = vmatpush.msra.mxu0 %v507
        %5686 = vmatpush.msra.mxu0 %v505
        %5687 = vmatpush.msra.mxu0 %v503
        %5688 = vmatpush.msra.mxu0 %v501
        %5689 = vmatpush.msra.mxu0 %v499
        %5690 = vmatpush.msra.mxu0 %v497
        %5691 = vmatpush.msra.mxu0 %v495
        %5692 = vmatpush.msra.mxu0 %v493
        %5693 = vmatpush.msra.mxu0 %v491
        %5694 = vmatpush.msra.mxu0 %v489
        %5695 = vmatpush.msra.mxu0 %v487
        %5696 = vmatpush.msra.mxu0 %v485
        %5697 = vmatmul.f32.gmra.mxu0 %v3490
        %v5698 = vpop.f32.mrf.mxu0
        %v5699 = vadd.f32 %v5679, %v5698
        %5700 = vdwg.mxu0
        %5701 = vmatpush.msra.mxu0 %v547
        %5702 = vmatpush.msra.mxu0 %v545
        %5703 = vmatpush.msra.mxu0 %v543
        %5704 = vmatpush.msra.mxu0 %v541
        %5705 = vmatpush.msra.mxu0 %v539
        %5706 = vmatpush.msra.mxu0 %v537
        %5707 = vmatpush.msra.mxu0 %v535
        %5708 = vmatpush.msra.mxu0 %v533
        %5709 = vmatpush.msra.mxu0 %v531
        %5710 = vmatpush.msra.mxu0 %v529
        %5711 = vmatpush.msra.mxu0 %v527
        %5712 = vmatpush.msra.mxu0 %v525
        %5713 = vmatpush.msra.mxu0 %v523
        %5714 = vmatpush.msra.mxu0 %v521
        %5715 = vmatpush.msra.mxu0 %v519
        %5716 = vmatpush.msra.mxu0 %v517
        %5717 = vmatmul.f32.gmra.mxu0 %v3491
        %v5718 = vpop.f32.mrf.mxu0
        %v5719 = vadd.f32 %v5699, %v5718
        %5720 = vdwg.mxu0
        %5721 = vmatpush.msra.mxu0 %v579
        %5722 = vmatpush.msra.mxu0 %v577
        %5723 = vmatpush.msra.mxu0 %v575
        %5724 = vmatpush.msra.mxu0 %v573
        %5725 = vmatpush.msra.mxu0 %v571
        %5726 = vmatpush.msra.mxu0 %v569
        %5727 = vmatpush.msra.mxu0 %v567
        %5728 = vmatpush.msra.mxu0 %v565
        %5729 = vmatpush.msra.mxu0 %v563
        %5730 = vmatpush.msra.mxu0 %v561
        %5731 = vmatpush.msra.mxu0 %v559
        %5732 = vmatpush.msra.mxu0 %v557
        %5733 = vmatpush.msra.mxu0 %v555
        %5734 = vmatpush.msra.mxu0 %v553
        %5735 = vmatpush.msra.mxu0 %v551
        %5736 = vmatpush.msra.mxu0 %v549
        %5737 = vmatmul.f32.gmra.mxu0 %v3492
        %v5738 = vpop.f32.mrf.mxu0
        %v5739 = vadd.f32 %v5719, %v5738
        %5740 = vdwg.mxu0
        %5741 = vmatpush.msra.mxu0 %v611
        %5742 = vmatpush.msra.mxu0 %v609
        %5743 = vmatpush.msra.mxu0 %v607
        %5744 = vmatpush.msra.mxu0 %v605
        %5745 = vmatpush.msra.mxu0 %v603
        %5746 = vmatpush.msra.mxu0 %v601
        %5747 = vmatpush.msra.mxu0 %v599
        %5748 = vmatpush.msra.mxu0 %v597
        %5749 = vmatpush.msra.mxu0 %v595
        %5750 = vmatpush.msra.mxu0 %v593
        %5751 = vmatpush.msra.mxu0 %v591
        %5752 = vmatpush.msra.mxu0 %v589
        %5753 = vmatpush.msra.mxu0 %v587
        %5754 = vmatpush.msra.mxu0 %v585
        %5755 = vmatpush.msra.mxu0 %v583
        %5756 = vmatpush.msra.mxu0 %v581
        %5757 = vmatmul.f32.gmra.mxu0 %v3493
        %v5758 = vpop.f32.mrf.mxu0
        %v5759 = vadd.f32 %v5739, %v5758
        %5760 = vdwg.mxu0
        %5761 = vmatpush.msra.mxu0 %v643
        %5762 = vmatpush.msra.mxu0 %v641
        %5763 = vmatpush.msra.mxu0 %v639
        %5764 = vmatpush.msra.mxu0 %v637
        %5765 = vmatpush.msra.mxu0 %v635
        %5766 = vmatpush.msra.mxu0 %v633
        %5767 = vmatpush.msra.mxu0 %v631
        %5768 = vmatpush.msra.mxu0 %v629
        %5769 = vmatpush.msra.mxu0 %v627
        %5770 = vmatpush.msra.mxu0 %v625
        %5771 = vmatpush.msra.mxu0 %v623
        %5772 = vmatpush.msra.mxu0 %v621
        %5773 = vmatpush.msra.mxu0 %v619
        %5774 = vmatpush.msra.mxu0 %v617
        %5775 = vmatpush.msra.mxu0 %v615
        %5776 = vmatpush.msra.mxu0 %v613
        %5777 = vmatmul.f32.gmra.mxu0 %v3494
        %v5778 = vpop.f32.mrf.mxu0
        %v5779 = vadd.f32 %v5759, %v5778
        %5780 = vdwg.mxu0
        %5781 = vmatpush.msra.mxu0 %v675
        %5782 = vmatpush.msra.mxu0 %v673
        %5783 = vmatpush.msra.mxu0 %v671
        %5784 = vmatpush.msra.mxu0 %v669
        %5785 = vmatpush.msra.mxu0 %v667
        %5786 = vmatpush.msra.mxu0 %v665
        %5787 = vmatpush.msra.mxu0 %v663
        %5788 = vmatpush.msra.mxu0 %v661
        %5789 = vmatpush.msra.mxu0 %v659
        %5790 = vmatpush.msra.mxu0 %v657
        %5791 = vmatpush.msra.mxu0 %v655
        %5792 = vmatpush.msra.mxu0 %v653
        %5793 = vmatpush.msra.mxu0 %v651
        %5794 = vmatpush.msra.mxu0 %v649
        %5795 = vmatpush.msra.mxu0 %v647
        %5796 = vmatpush.msra.mxu0 %v645
        %5797 = vmatmul.f32.gmra.mxu0 %v3497
        %v5798 = vpop.f32.mrf.mxu0
        %v5799 = vadd.f32 %v5779, %v5798
        %5800 = vdwg.mxu0
        %5801 = vmatpush.msra.mxu0 %v707
        %5802 = vmatpush.msra.mxu0 %v705
        %5803 = vmatpush.msra.mxu0 %v703
        %5804 = vmatpush.msra.mxu0 %v701
        %5805 = vmatpush.msra.mxu0 %v699
        %5806 = vmatpush.msra.mxu0 %v697
        %5807 = vmatpush.msra.mxu0 %v695
        %5808 = vmatpush.msra.mxu0 %v693
        %5809 = vmatpush.msra.mxu0 %v691
        %5810 = vmatpush.msra.mxu0 %v689
        %5811 = vmatpush.msra.mxu0 %v687
        %5812 = vmatpush.msra.mxu0 %v685
        %5813 = vmatpush.msra.mxu0 %v683
        %5814 = vmatpush.msra.mxu0 %v681
        %5815 = vmatpush.msra.mxu0 %v679
        %5816 = vmatpush.msra.mxu0 %v677
        %5817 = vmatmul.f32.gmra.mxu0 %v3498
        %v5818 = vpop.f32.mrf.mxu0
        %v5819 = vadd.f32 %v5799, %v5818
        %5820 = vdwg.mxu0
        %5821 = vmatpush.msra.mxu0 %v739
        %5822 = vmatpush.msra.mxu0 %v737
        %5823 = vmatpush.msra.mxu0 %v735
        %5824 = vmatpush.msra.mxu0 %v733
        %5825 = vmatpush.msra.mxu0 %v731
        %5826 = vmatpush.msra.mxu0 %v729
        %5827 = vmatpush.msra.mxu0 %v727
        %5828 = vmatpush.msra.mxu0 %v725
        %5829 = vmatpush.msra.mxu0 %v723
        %5830 = vmatpush.msra.mxu0 %v721
        %5831 = vmatpush.msra.mxu0 %v719
        %5832 = vmatpush.msra.mxu0 %v717
        %5833 = vmatpush.msra.mxu0 %v715
        %5834 = vmatpush.msra.mxu0 %v713
        %5835 = vmatpush.msra.mxu0 %v711
        %5836 = vmatpush.msra.mxu0 %v709
        %5837 = vmatmul.f32.gmra.mxu0 %v3499
        %v5838 = vpop.f32.mrf.mxu0
        %v5839 = vadd.f32 %v5819, %v5838
        %5840 = vdwg.mxu0
        %5841 = vmatpush.msra.mxu0 %v771
        %5842 = vmatpush.msra.mxu0 %v769
        %5843 = vmatpush.msra.mxu0 %v767
        %5844 = vmatpush.msra.mxu0 %v765
        %5845 = vmatpush.msra.mxu0 %v763
        %5846 = vmatpush.msra.mxu0 %v761
        %5847 = vmatpush.msra.mxu0 %v759
        %5848 = vmatpush.msra.mxu0 %v757
        %5849 = vmatpush.msra.mxu0 %v755
        %5850 = vmatpush.msra.mxu0 %v753
        %5851 = vmatpush.msra.mxu0 %v751
        %5852 = vmatpush.msra.mxu0 %v749
        %5853 = vmatpush.msra.mxu0 %v747
        %5854 = vmatpush.msra.mxu0 %v745
        %5855 = vmatpush.msra.mxu0 %v743
        %5856 = vmatpush.msra.mxu0 %v741
        %5857 = vmatmul.f32.gmra.mxu0 %v3500
        %v5858 = vpop.f32.mrf.mxu0
        %v5859 = vadd.f32 %v5839, %v5858
        %5860 = vdwg.mxu0
        %5861 = vmatpush.msra.mxu0 %v803
        %5862 = vmatpush.msra.mxu0 %v801
        %5863 = vmatpush.msra.mxu0 %v799
        %5864 = vmatpush.msra.mxu0 %v797
        %5865 = vmatpush.msra.mxu0 %v795
        %5866 = vmatpush.msra.mxu0 %v793
        %5867 = vmatpush.msra.mxu0 %v791
        %5868 = vmatpush.msra.mxu0 %v789
        %5869 = vmatpush.msra.mxu0 %v787
        %5870 = vmatpush.msra.mxu0 %v785
        %5871 = vmatpush.msra.mxu0 %v783
        %5872 = vmatpush.msra.mxu0 %v781
        %5873 = vmatpush.msra.mxu0 %v779
        %5874 = vmatpush.msra.mxu0 %v777
        %5875 = vmatpush.msra.mxu0 %v775
        %5876 = vmatpush.msra.mxu0 %v773
        %5877 = vmatmul.f32.gmra.mxu0 %v3501
        %v5878 = vpop.f32.mrf.mxu0
        %v5879 = vadd.f32 %v5859, %v5878
        %5880 = vdwg.mxu0
        %5881 = vmatpush.msra.mxu0 %v835
        %5882 = vmatpush.msra.mxu0 %v833
        %5883 = vmatpush.msra.mxu0 %v831
        %5884 = vmatpush.msra.mxu0 %v829
        %5885 = vmatpush.msra.mxu0 %v827
        %5886 = vmatpush.msra.mxu0 %v825
        %5887 = vmatpush.msra.mxu0 %v823
        %5888 = vmatpush.msra.mxu0 %v821
        %5889 = vmatpush.msra.mxu0 %v819
        %5890 = vmatpush.msra.mxu0 %v817
        %5891 = vmatpush.msra.mxu0 %v815
        %5892 = vmatpush.msra.mxu0 %v813
        %5893 = vmatpush.msra.mxu0 %v811
        %5894 = vmatpush.msra.mxu0 %v809
        %5895 = vmatpush.msra.mxu0 %v807
        %5896 = vmatpush.msra.mxu0 %v805
        %5897 = vmatmul.f32.gmra.mxu0 %v3502
        %v5898 = vpop.f32.mrf.mxu0
        %v5899 = vadd.f32 %v5879, %v5898
        %5900 = vdwg.mxu0
        %5901 = vmatpush.msra.mxu0 %v867
        %5902 = vmatpush.msra.mxu0 %v865
        %5903 = vmatpush.msra.mxu0 %v863
        %5904 = vmatpush.msra.mxu0 %v861
        %5905 = vmatpush.msra.mxu0 %v859
        %5906 = vmatpush.msra.mxu0 %v857
        %5907 = vmatpush.msra.mxu0 %v855
        %5908 = vmatpush.msra.mxu0 %v853
        %5909 = vmatpush.msra.mxu0 %v851
        %5910 = vmatpush.msra.mxu0 %v849
        %5911 = vmatpush.msra.mxu0 %v847
        %5912 = vmatpush.msra.mxu0 %v845
        %5913 = vmatpush.msra.mxu0 %v843
        %5914 = vmatpush.msra.mxu0 %v841
        %5915 = vmatpush.msra.mxu0 %v839
        %5916 = vmatpush.msra.mxu0 %v837
        %5917 = vmatmul.f32.gmra.mxu0 %v3503
        %v5918 = vpop.f32.mrf.mxu0
        %v5919 = vadd.f32 %v5899, %v5918
        %5920 = vdwg.mxu0
        %5921 = vmatpush.msra.mxu0 %v899
        %5922 = vmatpush.msra.mxu0 %v897
        %5923 = vmatpush.msra.mxu0 %v895
        %5924 = vmatpush.msra.mxu0 %v893
        %5925 = vmatpush.msra.mxu0 %v891
        %5926 = vmatpush.msra.mxu0 %v889
        %5927 = vmatpush.msra.mxu0 %v887
        %5928 = vmatpush.msra.mxu0 %v885
        %5929 = vmatpush.msra.mxu0 %v883
        %5930 = vmatpush.msra.mxu0 %v881
        %5931 = vmatpush.msra.mxu0 %v879
        %5932 = vmatpush.msra.mxu0 %v877
        %5933 = vmatpush.msra.mxu0 %v875
        %5934 = vmatpush.msra.mxu0 %v873
        %5935 = vmatpush.msra.mxu0 %v871
        %5936 = vmatpush.msra.mxu0 %v869
        %5937 = vmatmul.f32.gmra.mxu0 %v3504
        %v5938 = vpop.f32.mrf.mxu0
        %v5939 = vadd.f32 %v5919, %v5938
        %5940 = vdwg.mxu0
        %5941 = vmatpush.msra.mxu0 %v931
        %5942 = vmatpush.msra.mxu0 %v929
        %5943 = vmatpush.msra.mxu0 %v927
        %5944 = vmatpush.msra.mxu0 %v925
        %5945 = vmatpush.msra.mxu0 %v923
        %5946 = vmatpush.msra.mxu0 %v921
        %5947 = vmatpush.msra.mxu0 %v919
        %5948 = vmatpush.msra.mxu0 %v917
        %5949 = vmatpush.msra.mxu0 %v915
        %5950 = vmatpush.msra.mxu0 %v913
        %5951 = vmatpush.msra.mxu0 %v911
        %5952 = vmatpush.msra.mxu0 %v909
        %5953 = vmatpush.msra.mxu0 %v907
        %5954 = vmatpush.msra.mxu0 %v905
        %5955 = vmatpush.msra.mxu0 %v903
        %5956 = vmatpush.msra.mxu0 %v901
        %5957 = vmatmul.f32.gmra.mxu0 %v3507
        %v5958 = vpop.f32.mrf.mxu0
        %v5959 = vadd.f32 %v5939, %v5958
        %5960 = vdwg.mxu0
        %5961 = vmatpush.msra.mxu0 %v963
        %5962 = vmatpush.msra.mxu0 %v961
        %5963 = vmatpush.msra.mxu0 %v959
        %5964 = vmatpush.msra.mxu0 %v957
        %5965 = vmatpush.msra.mxu0 %v955
        %5966 = vmatpush.msra.mxu0 %v953
        %5967 = vmatpush.msra.mxu0 %v951
        %5968 = vmatpush.msra.mxu0 %v949
        %5969 = vmatpush.msra.mxu0 %v947
        %5970 = vmatpush.msra.mxu0 %v945
        %5971 = vmatpush.msra.mxu0 %v943
        %5972 = vmatpush.msra.mxu0 %v941
        %5973 = vmatpush.msra.mxu0 %v939
        %5974 = vmatpush.msra.mxu0 %v937
        %5975 = vmatpush.msra.mxu0 %v935
        %5976 = vmatpush.msra.mxu0 %v933
        %5977 = vmatmul.f32.gmra.mxu0 %v3508
        %v5978 = vpop.f32.mrf.mxu0
        %v5979 = vadd.f32 %v5959, %v5978
        %5980 = vdwg.mxu0
        %5981 = vmatpush.msra.mxu0 %v995
        %5982 = vmatpush.msra.mxu0 %v993
        %5983 = vmatpush.msra.mxu0 %v991
        %5984 = vmatpush.msra.mxu0 %v989
        %5985 = vmatpush.msra.mxu0 %v987
        %5986 = vmatpush.msra.mxu0 %v985
        %5987 = vmatpush.msra.mxu0 %v983
        %5988 = vmatpush.msra.mxu0 %v981
        %5989 = vmatpush.msra.mxu0 %v979
        %5990 = vmatpush.msra.mxu0 %v977
        %5991 = vmatpush.msra.mxu0 %v975
        %5992 = vmatpush.msra.mxu0 %v973
        %5993 = vmatpush.msra.mxu0 %v971
        %5994 = vmatpush.msra.mxu0 %v969
        %5995 = vmatpush.msra.mxu0 %v967
        %5996 = vmatpush.msra.mxu0 %v965
        %5997 = vmatmul.f32.gmra.mxu0 %v3509
        %v5998 = vpop.f32.mrf.mxu0
        %v5999 = vadd.f32 %v5979, %v5998
        %6000 = vdwg.mxu0
        %6001 = vmatpush.msra.mxu0 %v1027
        %6002 = vmatpush.msra.mxu0 %v1025
        %6003 = vmatpush.msra.mxu0 %v1023
        %6004 = vmatpush.msra.mxu0 %v1021
        %6005 = vmatpush.msra.mxu0 %v1019
        %6006 = vmatpush.msra.mxu0 %v1017
        %6007 = vmatpush.msra.mxu0 %v1015
        %6008 = vmatpush.msra.mxu0 %v1013
        %6009 = vmatpush.msra.mxu0 %v1011
        %6010 = vmatpush.msra.mxu0 %v1009
        %6011 = vmatpush.msra.mxu0 %v1007
        %6012 = vmatpush.msra.mxu0 %v1005
        %6013 = vmatpush.msra.mxu0 %v1003
        %6014 = vmatpush.msra.mxu0 %v1001
        %6015 = vmatpush.msra.mxu0 %v999
        %6016 = vmatpush.msra.mxu0 %v997
        %6017 = vmatmul.f32.gmra.mxu0 %v3510
        %v6018 = vpop.f32.mrf.mxu0
        %v6019 = vadd.f32 %v5999, %v6018
        %6020 = vdwg.mxu0
        %6021 = vmatpush.msra.mxu0 %v1059
        %6022 = vmatpush.msra.mxu0 %v1057
        %6023 = vmatpush.msra.mxu0 %v1055
        %6024 = vmatpush.msra.mxu0 %v1053
        %6025 = vmatpush.msra.mxu0 %v1051
        %6026 = vmatpush.msra.mxu0 %v1049
        %6027 = vmatpush.msra.mxu0 %v1047
        %6028 = vmatpush.msra.mxu0 %v1045
        %6029 = vmatpush.msra.mxu0 %v1043
        %6030 = vmatpush.msra.mxu0 %v1041
        %6031 = vmatpush.msra.mxu0 %v1039
        %6032 = vmatpush.msra.mxu0 %v1037
        %6033 = vmatpush.msra.mxu0 %v1035
        %6034 = vmatpush.msra.mxu0 %v1033
        %6035 = vmatpush.msra.mxu0 %v1031
        %6036 = vmatpush.msra.mxu0 %v1029
        %6037 = vmatmul.f32.gmra.mxu0 %v3511
        %v6038 = vpop.f32.mrf.mxu0
        %v6039 = vadd.f32 %v6019, %v6038
        %6040 = vdwg.mxu0
        %6041 = vmatpush.msra.mxu0 %v1091
        %6042 = vmatpush.msra.mxu0 %v1089
        %6043 = vmatpush.msra.mxu0 %v1087
        %6044 = vmatpush.msra.mxu0 %v1085
        %6045 = vmatpush.msra.mxu0 %v1083
        %6046 = vmatpush.msra.mxu0 %v1081
        %6047 = vmatpush.msra.mxu0 %v1079
        %6048 = vmatpush.msra.mxu0 %v1077
        %6049 = vmatpush.msra.mxu0 %v1075
        %6050 = vmatpush.msra.mxu0 %v1073
        %6051 = vmatpush.msra.mxu0 %v1071
        %6052 = vmatpush.msra.mxu0 %v1069
        %6053 = vmatpush.msra.mxu0 %v1067
        %6054 = vmatpush.msra.mxu0 %v1065
        %6055 = vmatpush.msra.mxu0 %v1063
        %6056 = vmatpush.msra.mxu0 %v1061
        %6057 = vmatmul.f32.gmra.mxu0 %v3512
        %v6058 = vpop.f32.mrf.mxu0
        %v6059 = vadd.f32 %v6039, %v6058
        %6060 = vdwg.mxu0
        %6061 = vmatpush.msra.mxu0 %v1123
        %6062 = vmatpush.msra.mxu0 %v1121
        %6063 = vmatpush.msra.mxu0 %v1119
        %6064 = vmatpush.msra.mxu0 %v1117
        %6065 = vmatpush.msra.mxu0 %v1115
        %6066 = vmatpush.msra.mxu0 %v1113
        %6067 = vmatpush.msra.mxu0 %v1111
        %6068 = vmatpush.msra.mxu0 %v1109
        %6069 = vmatpush.msra.mxu0 %v1107
        %6070 = vmatpush.msra.mxu0 %v1105
        %6071 = vmatpush.msra.mxu0 %v1103
        %6072 = vmatpush.msra.mxu0 %v1101
        %6073 = vmatpush.msra.mxu0 %v1099
        %6074 = vmatpush.msra.mxu0 %v1097
        %6075 = vmatpush.msra.mxu0 %v1095
        %6076 = vmatpush.msra.mxu0 %v1093
        %6077 = vmatmul.f32.gmra.mxu0 %v3513
        %v6078 = vpop.f32.mrf.mxu0
        %v6079 = vadd.f32 %v6059, %v6078
        %6080 = vdwg.mxu0
        %6081 = vmatpush.msra.mxu0 %v1155
        %6082 = vmatpush.msra.mxu0 %v1153
        %6083 = vmatpush.msra.mxu0 %v1151
        %6084 = vmatpush.msra.mxu0 %v1149
        %6085 = vmatpush.msra.mxu0 %v1147
        %6086 = vmatpush.msra.mxu0 %v1145
        %6087 = vmatpush.msra.mxu0 %v1143
        %6088 = vmatpush.msra.mxu0 %v1141
        %6089 = vmatpush.msra.mxu0 %v1139
        %6090 = vmatpush.msra.mxu0 %v1137
        %6091 = vmatpush.msra.mxu0 %v1135
        %6092 = vmatpush.msra.mxu0 %v1133
        %6093 = vmatpush.msra.mxu0 %v1131
        %6094 = vmatpush.msra.mxu0 %v1129
        %6095 = vmatpush.msra.mxu0 %v1127
        %6096 = vmatpush.msra.mxu0 %v1125
        %6097 = vmatmul.f32.gmra.mxu0 %v3514
        %v6098 = vpop.f32.mrf.mxu0
        %v6099 = vadd.f32 %v6079, %v6098
        %6100 = vdwg.mxu0
        %6101 = vmatpush.msra.mxu0 %v1187
        %6102 = vmatpush.msra.mxu0 %v1185
        %6103 = vmatpush.msra.mxu0 %v1183
        %6104 = vmatpush.msra.mxu0 %v1181
        %6105 = vmatpush.msra.mxu0 %v1179
        %6106 = vmatpush.msra.mxu0 %v1177
        %6107 = vmatpush.msra.mxu0 %v1175
        %6108 = vmatpush.msra.mxu0 %v1173
        %6109 = vmatpush.msra.mxu0 %v1171
        %6110 = vmatpush.msra.mxu0 %v1169
        %6111 = vmatpush.msra.mxu0 %v1167
        %6112 = vmatpush.msra.mxu0 %v1165
        %6113 = vmatpush.msra.mxu0 %v1163
        %6114 = vmatpush.msra.mxu0 %v1161
        %6115 = vmatpush.msra.mxu0 %v1159
        %6116 = vmatpush.msra.mxu0 %v1157
        %6117 = vmatmul.f32.gmra.mxu0 %v3517
        %v6118 = vpop.f32.mrf.mxu0
        %v6119 = vadd.f32 %v6099, %v6118
        %6120 = vdwg.mxu0
        %6121 = vmatpush.msra.mxu0 %v1219
        %6122 = vmatpush.msra.mxu0 %v1217
        %6123 = vmatpush.msra.mxu0 %v1215
        %6124 = vmatpush.msra.mxu0 %v1213
        %6125 = vmatpush.msra.mxu0 %v1211
        %6126 = vmatpush.msra.mxu0 %v1209
        %6127 = vmatpush.msra.mxu0 %v1207
        %6128 = vmatpush.msra.mxu0 %v1205
        %6129 = vmatpush.msra.mxu0 %v1203
        %6130 = vmatpush.msra.mxu0 %v1201
        %6131 = vmatpush.msra.mxu0 %v1199
        %6132 = vmatpush.msra.mxu0 %v1197
        %6133 = vmatpush.msra.mxu0 %v1195
        %6134 = vmatpush.msra.mxu0 %v1193
        %6135 = vmatpush.msra.mxu0 %v1191
        %6136 = vmatpush.msra.mxu0 %v1189
        %6137 = vmatmul.f32.gmra.mxu0 %v3518
        %v6138 = vpop.f32.mrf.mxu0
        %v6139 = vadd.f32 %v6119, %v6138
        %6140 = vdwg.mxu0
        %6141 = vmatpush.msra.mxu0 %v1251
        %6142 = vmatpush.msra.mxu0 %v1249
        %6143 = vmatpush.msra.mxu0 %v1247
        %6144 = vmatpush.msra.mxu0 %v1245
        %6145 = vmatpush.msra.mxu0 %v1243
        %6146 = vmatpush.msra.mxu0 %v1241
        %6147 = vmatpush.msra.mxu0 %v1239
        %6148 = vmatpush.msra.mxu0 %v1237
        %6149 = vmatpush.msra.mxu0 %v1235
        %6150 = vmatpush.msra.mxu0 %v1233
        %6151 = vmatpush.msra.mxu0 %v1231
        %6152 = vmatpush.msra.mxu0 %v1229
        %6153 = vmatpush.msra.mxu0 %v1227
        %6154 = vmatpush.msra.mxu0 %v1225
        %6155 = vmatpush.msra.mxu0 %v1223
        %6156 = vmatpush.msra.mxu0 %v1221
        %6157 = vmatmul.f32.gmra.mxu0 %v3519
        %v6158 = vpop.f32.mrf.mxu0
        %v6159 = vadd.f32 %v6139, %v6158
        %6160 = vdwg.mxu0
        %6161 = vmatpush.msra.mxu0 %v1283
        %6162 = vmatpush.msra.mxu0 %v1281
        %6163 = vmatpush.msra.mxu0 %v1279
        %6164 = vmatpush.msra.mxu0 %v1277
        %6165 = vmatpush.msra.mxu0 %v1275
        %6166 = vmatpush.msra.mxu0 %v1273
        %6167 = vmatpush.msra.mxu0 %v1271
        %6168 = vmatpush.msra.mxu0 %v1269
        %6169 = vmatpush.msra.mxu0 %v1267
        %6170 = vmatpush.msra.mxu0 %v1265
        %6171 = vmatpush.msra.mxu0 %v1263
        %6172 = vmatpush.msra.mxu0 %v1261
        %6173 = vmatpush.msra.mxu0 %v1259
        %6174 = vmatpush.msra.mxu0 %v1257
        %6175 = vmatpush.msra.mxu0 %v1255
        %6176 = vmatpush.msra.mxu0 %v1253
        %6177 = vmatmul.f32.gmra.mxu0 %v3520
        %v6178 = vpop.f32.mrf.mxu0
        %v6179 = vadd.f32 %v6159, %v6178
        %6180 = vdwg.mxu0
        %6181 = vmatpush.msra.mxu0 %v1315
        %6182 = vmatpush.msra.mxu0 %v1313
        %6183 = vmatpush.msra.mxu0 %v1311
        %6184 = vmatpush.msra.mxu0 %v1309
        %6185 = vmatpush.msra.mxu0 %v1307
        %6186 = vmatpush.msra.mxu0 %v1305
        %6187 = vmatpush.msra.mxu0 %v1303
        %6188 = vmatpush.msra.mxu0 %v1301
        %6189 = vmatpush.msra.mxu0 %v1299
        %6190 = vmatpush.msra.mxu0 %v1297
        %6191 = vmatpush.msra.mxu0 %v1295
        %6192 = vmatpush.msra.mxu0 %v1293
        %6193 = vmatpush.msra.mxu0 %v1291
        %6194 = vmatpush.msra.mxu0 %v1289
        %6195 = vmatpush.msra.mxu0 %v1287
        %6196 = vmatpush.msra.mxu0 %v1285
        %6197 = vmatmul.f32.gmra.mxu0 %v3521
        %v6198 = vpop.f32.mrf.mxu0
        %v6199 = vadd.f32 %v6179, %v6198
        %6200 = vdwg.mxu0
        %6201 = vmatpush.msra.mxu0 %v1347
        %6202 = vmatpush.msra.mxu0 %v1345
        %6203 = vmatpush.msra.mxu0 %v1343
        %6204 = vmatpush.msra.mxu0 %v1341
        %6205 = vmatpush.msra.mxu0 %v1339
        %6206 = vmatpush.msra.mxu0 %v1337
        %6207 = vmatpush.msra.mxu0 %v1335
        %6208 = vmatpush.msra.mxu0 %v1333
        %6209 = vmatpush.msra.mxu0 %v1331
        %6210 = vmatpush.msra.mxu0 %v1329
        %6211 = vmatpush.msra.mxu0 %v1327
        %6212 = vmatpush.msra.mxu0 %v1325
        %6213 = vmatpush.msra.mxu0 %v1323
        %6214 = vmatpush.msra.mxu0 %v1321
        %6215 = vmatpush.msra.mxu0 %v1319
        %6216 = vmatpush.msra.mxu0 %v1317
        %6217 = vmatmul.f32.gmra.mxu0 %v3522
        %v6218 = vpop.f32.mrf.mxu0
        %v6219 = vadd.f32 %v6199, %v6218
        %6220 = vdwg.mxu0
        %6221 = vmatpush.msra.mxu0 %v1379
        %6222 = vmatpush.msra.mxu0 %v1377
        %6223 = vmatpush.msra.mxu0 %v1375
        %6224 = vmatpush.msra.mxu0 %v1373
        %6225 = vmatpush.msra.mxu0 %v1371
        %6226 = vmatpush.msra.mxu0 %v1369
        %6227 = vmatpush.msra.mxu0 %v1367
        %6228 = vmatpush.msra.mxu0 %v1365
        %6229 = vmatpush.msra.mxu0 %v1363
        %6230 = vmatpush.msra.mxu0 %v1361
        %6231 = vmatpush.msra.mxu0 %v1359
        %6232 = vmatpush.msra.mxu0 %v1357
        %6233 = vmatpush.msra.mxu0 %v1355
        %6234 = vmatpush.msra.mxu0 %v1353
        %6235 = vmatpush.msra.mxu0 %v1351
        %6236 = vmatpush.msra.mxu0 %v1349
        %6237 = vmatmul.f32.gmra.mxu0 %v3523
        %v6238 = vpop.f32.mrf.mxu0
        %v6239 = vadd.f32 %v6219, %v6238
        %6240 = vdwg.mxu0
        %6241 = vmatpush.msra.mxu0 %v1411
        %6242 = vmatpush.msra.mxu0 %v1409
        %6243 = vmatpush.msra.mxu0 %v1407
        %6244 = vmatpush.msra.mxu0 %v1405
        %6245 = vmatpush.msra.mxu0 %v1403
        %6246 = vmatpush.msra.mxu0 %v1401
        %6247 = vmatpush.msra.mxu0 %v1399
        %6248 = vmatpush.msra.mxu0 %v1397
        %6249 = vmatpush.msra.mxu0 %v1395
        %6250 = vmatpush.msra.mxu0 %v1393
        %6251 = vmatpush.msra.mxu0 %v1391
        %6252 = vmatpush.msra.mxu0 %v1389
        %6253 = vmatpush.msra.mxu0 %v1387
        %6254 = vmatpush.msra.mxu0 %v1385
        %6255 = vmatpush.msra.mxu0 %v1383
        %6256 = vmatpush.msra.mxu0 %v1381
        %6257 = vmatmul.f32.gmra.mxu0 %v3524
        %v6258 = vpop.f32.mrf.mxu0
        %v6259 = vadd.f32 %v6239, %v6258
        %6260 = vdwg.mxu0
        %6261 = vmatpush.msra.mxu0 %v1443
        %6262 = vmatpush.msra.mxu0 %v1441
        %6263 = vmatpush.msra.mxu0 %v1439
        %6264 = vmatpush.msra.mxu0 %v1437
        %6265 = vmatpush.msra.mxu0 %v1435
        %6266 = vmatpush.msra.mxu0 %v1433
        %6267 = vmatpush.msra.mxu0 %v1431
        %6268 = vmatpush.msra.mxu0 %v1429
        %6269 = vmatpush.msra.mxu0 %v1427
        %6270 = vmatpush.msra.mxu0 %v1425
        %6271 = vmatpush.msra.mxu0 %v1423
        %6272 = vmatpush.msra.mxu0 %v1421
        %6273 = vmatpush.msra.mxu0 %v1419
        %6274 = vmatpush.msra.mxu0 %v1417
        %6275 = vmatpush.msra.mxu0 %v1415
        %6276 = vmatpush.msra.mxu0 %v1413
        %6277 = vmatmul.f32.gmra.mxu0 %v3527
        %v6278 = vpop.f32.mrf.mxu0
        %v6279 = vadd.f32 %v6259, %v6278
        %6280 = vdwg.mxu0
        %6281 = vmatpush.msra.mxu0 %v1475
        %6282 = vmatpush.msra.mxu0 %v1473
        %6283 = vmatpush.msra.mxu0 %v1471
        %6284 = vmatpush.msra.mxu0 %v1469
        %6285 = vmatpush.msra.mxu0 %v1467
        %6286 = vmatpush.msra.mxu0 %v1465
        %6287 = vmatpush.msra.mxu0 %v1463
        %6288 = vmatpush.msra.mxu0 %v1461
        %6289 = vmatpush.msra.mxu0 %v1459
        %6290 = vmatpush.msra.mxu0 %v1457
        %6291 = vmatpush.msra.mxu0 %v1455
        %6292 = vmatpush.msra.mxu0 %v1453
        %6293 = vmatpush.msra.mxu0 %v1451
        %6294 = vmatpush.msra.mxu0 %v1449
        %6295 = vmatpush.msra.mxu0 %v1447
        %6296 = vmatpush.msra.mxu0 %v1445
        %6297 = vmatmul.f32.gmra.mxu0 %v3528
        %v6298 = vpop.f32.mrf.mxu0
        %v6299 = vadd.f32 %v6279, %v6298
        %6300 = vdwg.mxu0
        %6301 = vmatpush.msra.mxu0 %v1507
        %6302 = vmatpush.msra.mxu0 %v1505
        %6303 = vmatpush.msra.mxu0 %v1503
        %6304 = vmatpush.msra.mxu0 %v1501
        %6305 = vmatpush.msra.mxu0 %v1499
        %6306 = vmatpush.msra.mxu0 %v1497
        %6307 = vmatpush.msra.mxu0 %v1495
        %6308 = vmatpush.msra.mxu0 %v1493
        %6309 = vmatpush.msra.mxu0 %v1491
        %6310 = vmatpush.msra.mxu0 %v1489
        %6311 = vmatpush.msra.mxu0 %v1487
        %6312 = vmatpush.msra.mxu0 %v1485
        %6313 = vmatpush.msra.mxu0 %v1483
        %6314 = vmatpush.msra.mxu0 %v1481
        %6315 = vmatpush.msra.mxu0 %v1479
        %6316 = vmatpush.msra.mxu0 %v1477
        %6317 = vmatmul.f32.gmra.mxu0 %v3529
        %v6318 = vpop.f32.mrf.mxu0
        %v6319 = vadd.f32 %v6299, %v6318
        %6320 = vdwg.mxu0
        %6321 = vmatpush.msra.mxu0 %v1539
        %6322 = vmatpush.msra.mxu0 %v1537
        %6323 = vmatpush.msra.mxu0 %v1535
        %6324 = vmatpush.msra.mxu0 %v1533
        %6325 = vmatpush.msra.mxu0 %v1531
        %6326 = vmatpush.msra.mxu0 %v1529
        %6327 = vmatpush.msra.mxu0 %v1527
        %6328 = vmatpush.msra.mxu0 %v1525
        %6329 = vmatpush.msra.mxu0 %v1523
        %6330 = vmatpush.msra.mxu0 %v1521
        %6331 = vmatpush.msra.mxu0 %v1519
        %6332 = vmatpush.msra.mxu0 %v1517
        %6333 = vmatpush.msra.mxu0 %v1515
        %6334 = vmatpush.msra.mxu0 %v1513
        %6335 = vmatpush.msra.mxu0 %v1511
        %6336 = vmatpush.msra.mxu0 %v1509
        %6337 = vmatmul.f32.gmra.mxu0 %v3530
        %v6338 = vpop.f32.mrf.mxu0
        %v6339 = vadd.f32 %v6319, %v6338
        %6340 = vdwg.mxu0
        %6341 = vmatpush.msra.mxu0 %v1571
        %6342 = vmatpush.msra.mxu0 %v1569
        %6343 = vmatpush.msra.mxu0 %v1567
        %6344 = vmatpush.msra.mxu0 %v1565
        %6345 = vmatpush.msra.mxu0 %v1563
        %6346 = vmatpush.msra.mxu0 %v1561
        %6347 = vmatpush.msra.mxu0 %v1559
        %6348 = vmatpush.msra.mxu0 %v1557
        %6349 = vmatpush.msra.mxu0 %v1555
        %6350 = vmatpush.msra.mxu0 %v1553
        %6351 = vmatpush.msra.mxu0 %v1551
        %6352 = vmatpush.msra.mxu0 %v1549
        %6353 = vmatpush.msra.mxu0 %v1547
        %6354 = vmatpush.msra.mxu0 %v1545
        %6355 = vmatpush.msra.mxu0 %v1543
        %6356 = vmatpush.msra.mxu0 %v1541
        %6357 = vmatmul.f32.gmra.mxu0 %v3531
        %v6358 = vpop.f32.mrf.mxu0
        %v6359 = vadd.f32 %v6339, %v6358
        %6360 = vdwg.mxu0
        %6361 = vmatpush.msra.mxu0 %v1603
        %6362 = vmatpush.msra.mxu0 %v1601
        %6363 = vmatpush.msra.mxu0 %v1599
        %6364 = vmatpush.msra.mxu0 %v1597
        %6365 = vmatpush.msra.mxu0 %v1595
        %6366 = vmatpush.msra.mxu0 %v1593
        %6367 = vmatpush.msra.mxu0 %v1591
        %6368 = vmatpush.msra.mxu0 %v1589
        %6369 = vmatpush.msra.mxu0 %v1587
        %6370 = vmatpush.msra.mxu0 %v1585
        %6371 = vmatpush.msra.mxu0 %v1583
        %6372 = vmatpush.msra.mxu0 %v1581
        %6373 = vmatpush.msra.mxu0 %v1579
        %6374 = vmatpush.msra.mxu0 %v1577
        %6375 = vmatpush.msra.mxu0 %v1575
        %6376 = vmatpush.msra.mxu0 %v1573
        %6377 = vmatmul.f32.gmra.mxu0 %v3532
        %v6378 = vpop.f32.mrf.mxu0
        %v6379 = vadd.f32 %v6359, %v6378
        %6380 = vdwg.mxu0
        %6381 = vmatpush.msra.mxu0 %v1635
        %6382 = vmatpush.msra.mxu0 %v1633
        %6383 = vmatpush.msra.mxu0 %v1631
        %6384 = vmatpush.msra.mxu0 %v1629
        %6385 = vmatpush.msra.mxu0 %v1627
        %6386 = vmatpush.msra.mxu0 %v1625
        %6387 = vmatpush.msra.mxu0 %v1623
        %6388 = vmatpush.msra.mxu0 %v1621
        %6389 = vmatpush.msra.mxu0 %v1619
        %6390 = vmatpush.msra.mxu0 %v1617
        %6391 = vmatpush.msra.mxu0 %v1615
        %6392 = vmatpush.msra.mxu0 %v1613
        %6393 = vmatpush.msra.mxu0 %v1611
        %6394 = vmatpush.msra.mxu0 %v1609
        %6395 = vmatpush.msra.mxu0 %v1607
        %6396 = vmatpush.msra.mxu0 %v1605
        %6397 = vmatmul.f32.gmra.mxu0 %v3533
        %v6398 = vpop.f32.mrf.mxu0
        %v6399 = vadd.f32 %v6379, %v6398
        %6400 = vdwg.mxu0
        %6401 = vmatpush.msra.mxu0 %v1667
        %6402 = vmatpush.msra.mxu0 %v1665
        %6403 = vmatpush.msra.mxu0 %v1663
        %6404 = vmatpush.msra.mxu0 %v1661
        %6405 = vmatpush.msra.mxu0 %v1659
        %6406 = vmatpush.msra.mxu0 %v1657
        %6407 = vmatpush.msra.mxu0 %v1655
        %6408 = vmatpush.msra.mxu0 %v1653
        %6409 = vmatpush.msra.mxu0 %v1651
        %6410 = vmatpush.msra.mxu0 %v1649
        %6411 = vmatpush.msra.mxu0 %v1647
        %6412 = vmatpush.msra.mxu0 %v1645
        %6413 = vmatpush.msra.mxu0 %v1643
        %6414 = vmatpush.msra.mxu0 %v1641
        %6415 = vmatpush.msra.mxu0 %v1639
        %6416 = vmatpush.msra.mxu0 %v1637
        %6417 = vmatmul.f32.gmra.mxu0 %v3534
        %v6418 = vpop.f32.mrf.mxu0
        %v6419 = vadd.f32 %v6399, %v6418
        %6420 = vdwg.mxu0
        %6421 = vmatpush.msra.mxu0 %v1699
        %6422 = vmatpush.msra.mxu0 %v1697
        %6423 = vmatpush.msra.mxu0 %v1695
        %6424 = vmatpush.msra.mxu0 %v1693
        %6425 = vmatpush.msra.mxu0 %v1691
        %6426 = vmatpush.msra.mxu0 %v1689
        %6427 = vmatpush.msra.mxu0 %v1687
        %6428 = vmatpush.msra.mxu0 %v1685
        %6429 = vmatpush.msra.mxu0 %v1683
        %6430 = vmatpush.msra.mxu0 %v1681
        %6431 = vmatpush.msra.mxu0 %v1679
        %6432 = vmatpush.msra.mxu0 %v1677
        %6433 = vmatpush.msra.mxu0 %v1675
        %6434 = vmatpush.msra.mxu0 %v1673
        %6435 = vmatpush.msra.mxu0 %v1671
        %6436 = vmatpush.msra.mxu0 %v1669
        %6437 = vmatmul.f32.gmra.mxu0 %v3537
        %v6438 = vpop.f32.mrf.mxu0
        %v6439 = vadd.f32 %v6419, %v6438
        %6440 = vdwg.mxu0
        %6441 = vmatpush.msra.mxu0 %v1731
        %6442 = vmatpush.msra.mxu0 %v1729
        %6443 = vmatpush.msra.mxu0 %v1727
        %6444 = vmatpush.msra.mxu0 %v1725
        %6445 = vmatpush.msra.mxu0 %v1723
        %6446 = vmatpush.msra.mxu0 %v1721
        %6447 = vmatpush.msra.mxu0 %v1719
        %6448 = vmatpush.msra.mxu0 %v1717
        %6449 = vmatpush.msra.mxu0 %v1715
        %6450 = vmatpush.msra.mxu0 %v1713
        %6451 = vmatpush.msra.mxu0 %v1711
        %6452 = vmatpush.msra.mxu0 %v1709
        %6453 = vmatpush.msra.mxu0 %v1707
        %6454 = vmatpush.msra.mxu0 %v1705
        %6455 = vmatpush.msra.mxu0 %v1703
        %6456 = vmatpush.msra.mxu0 %v1701
        %6457 = vmatmul.f32.gmra.mxu0 %v3538
        %v6458 = vpop.f32.mrf.mxu0
        %v6459 = vadd.f32 %v6439, %v6458
        %6460 = vdwg.mxu0
        %6461 = vmatpush.msra.mxu0 %v1763
        %6462 = vmatpush.msra.mxu0 %v1761
        %6463 = vmatpush.msra.mxu0 %v1759
        %6464 = vmatpush.msra.mxu0 %v1757
        %6465 = vmatpush.msra.mxu0 %v1755
        %6466 = vmatpush.msra.mxu0 %v1753
        %6467 = vmatpush.msra.mxu0 %v1751
        %6468 = vmatpush.msra.mxu0 %v1749
        %6469 = vmatpush.msra.mxu0 %v1747
        %6470 = vmatpush.msra.mxu0 %v1745
        %6471 = vmatpush.msra.mxu0 %v1743
        %6472 = vmatpush.msra.mxu0 %v1741
        %6473 = vmatpush.msra.mxu0 %v1739
        %6474 = vmatpush.msra.mxu0 %v1737
        %6475 = vmatpush.msra.mxu0 %v1735
        %6476 = vmatpush.msra.mxu0 %v1733
        %6477 = vmatmul.f32.gmra.mxu0 %v3539
        %v6478 = vpop.f32.mrf.mxu0
        %v6479 = vadd.f32 %v6459, %v6478
        %6480 = vdwg.mxu0
        %6481 = vmatpush.msra.mxu0 %v1795
        %6482 = vmatpush.msra.mxu0 %v1793
        %6483 = vmatpush.msra.mxu0 %v1791
        %6484 = vmatpush.msra.mxu0 %v1789
        %6485 = vmatpush.msra.mxu0 %v1787
        %6486 = vmatpush.msra.mxu0 %v1785
        %6487 = vmatpush.msra.mxu0 %v1783
        %6488 = vmatpush.msra.mxu0 %v1781
        %6489 = vmatpush.msra.mxu0 %v1779
        %6490 = vmatpush.msra.mxu0 %v1777
        %6491 = vmatpush.msra.mxu0 %v1775
        %6492 = vmatpush.msra.mxu0 %v1773
        %6493 = vmatpush.msra.mxu0 %v1771
        %6494 = vmatpush.msra.mxu0 %v1769
        %6495 = vmatpush.msra.mxu0 %v1767
        %6496 = vmatpush.msra.mxu0 %v1765
        %6497 = vmatmul.f32.gmra.mxu0 %v3540
        %v6498 = vpop.f32.mrf.mxu0
        %v6499 = vadd.f32 %v6479, %v6498
        %6500 = vdwg.mxu0
        %6501 = vmatpush.msra.mxu0 %v1827
        %6502 = vmatpush.msra.mxu0 %v1825
        %6503 = vmatpush.msra.mxu0 %v1823
        %6504 = vmatpush.msra.mxu0 %v1821
        %6505 = vmatpush.msra.mxu0 %v1819
        %6506 = vmatpush.msra.mxu0 %v1817
        %6507 = vmatpush.msra.mxu0 %v1815
        %6508 = vmatpush.msra.mxu0 %v1813
        %6509 = vmatpush.msra.mxu0 %v1811
        %6510 = vmatpush.msra.mxu0 %v1809
        %6511 = vmatpush.msra.mxu0 %v1807
        %6512 = vmatpush.msra.mxu0 %v1805
        %6513 = vmatpush.msra.mxu0 %v1803
        %6514 = vmatpush.msra.mxu0 %v1801
        %6515 = vmatpush.msra.mxu0 %v1799
        %6516 = vmatpush.msra.mxu0 %v1797
        %6517 = vmatmul.f32.gmra.mxu0 %v3541
        %v6518 = vpop.f32.mrf.mxu0
        %v6519 = vadd.f32 %v6499, %v6518
        %6520 = vdwg.mxu0
        %6521 = vmatpush.msra.mxu0 %v1859
        %6522 = vmatpush.msra.mxu0 %v1857
        %6523 = vmatpush.msra.mxu0 %v1855
        %6524 = vmatpush.msra.mxu0 %v1853
        %6525 = vmatpush.msra.mxu0 %v1851
        %6526 = vmatpush.msra.mxu0 %v1849
        %6527 = vmatpush.msra.mxu0 %v1847
        %6528 = vmatpush.msra.mxu0 %v1845
        %6529 = vmatpush.msra.mxu0 %v1843
        %6530 = vmatpush.msra.mxu0 %v1841
        %6531 = vmatpush.msra.mxu0 %v1839
        %6532 = vmatpush.msra.mxu0 %v1837
        %6533 = vmatpush.msra.mxu0 %v1835
        %6534 = vmatpush.msra.mxu0 %v1833
        %6535 = vmatpush.msra.mxu0 %v1831
        %6536 = vmatpush.msra.mxu0 %v1829
        %6537 = vmatmul.f32.gmra.mxu0 %v3542
        %v6538 = vpop.f32.mrf.mxu0
        %v6539 = vadd.f32 %v6519, %v6538
        %6540 = vdwg.mxu0
        %6541 = vmatpush.msra.mxu0 %v1891
        %6542 = vmatpush.msra.mxu0 %v1889
        %6543 = vmatpush.msra.mxu0 %v1887
        %6544 = vmatpush.msra.mxu0 %v1885
        %6545 = vmatpush.msra.mxu0 %v1883
        %6546 = vmatpush.msra.mxu0 %v1881
        %6547 = vmatpush.msra.mxu0 %v1879
        %6548 = vmatpush.msra.mxu0 %v1877
        %6549 = vmatpush.msra.mxu0 %v1875
        %6550 = vmatpush.msra.mxu0 %v1873
        %6551 = vmatpush.msra.mxu0 %v1871
        %6552 = vmatpush.msra.mxu0 %v1869
        %6553 = vmatpush.msra.mxu0 %v1867
        %6554 = vmatpush.msra.mxu0 %v1865
        %6555 = vmatpush.msra.mxu0 %v1863
        %6556 = vmatpush.msra.mxu0 %v1861
        %6557 = vmatmul.f32.gmra.mxu0 %v3543
        %v6558 = vpop.f32.mrf.mxu0
        %v6559 = vadd.f32 %v6539, %v6558
        %6560 = vdwg.mxu0
        %6561 = vmatpush.msra.mxu0 %v1923
        %6562 = vmatpush.msra.mxu0 %v1921
        %6563 = vmatpush.msra.mxu0 %v1919
        %6564 = vmatpush.msra.mxu0 %v1917
        %6565 = vmatpush.msra.mxu0 %v1915
        %6566 = vmatpush.msra.mxu0 %v1913
        %6567 = vmatpush.msra.mxu0 %v1911
        %6568 = vmatpush.msra.mxu0 %v1909
        %6569 = vmatpush.msra.mxu0 %v1907
        %6570 = vmatpush.msra.mxu0 %v1905
        %6571 = vmatpush.msra.mxu0 %v1903
        %6572 = vmatpush.msra.mxu0 %v1901
        %6573 = vmatpush.msra.mxu0 %v1899
        %6574 = vmatpush.msra.mxu0 %v1897
        %6575 = vmatpush.msra.mxu0 %v1895
        %6576 = vmatpush.msra.mxu0 %v1893
        %6577 = vmatmul.f32.gmra.mxu0 %v3544
        %v6578 = vpop.f32.mrf.mxu0
        %v6579 = vadd.f32 %v6559, %v6578
        %6580 = vdwg.mxu0
        %6581 = vmatpush.msra.mxu0 %v1955
        %6582 = vmatpush.msra.mxu0 %v1953
        %6583 = vmatpush.msra.mxu0 %v1951
        %6584 = vmatpush.msra.mxu0 %v1949
        %6585 = vmatpush.msra.mxu0 %v1947
        %6586 = vmatpush.msra.mxu0 %v1945
        %6587 = vmatpush.msra.mxu0 %v1943
        %6588 = vmatpush.msra.mxu0 %v1941
        %6589 = vmatpush.msra.mxu0 %v1939
        %6590 = vmatpush.msra.mxu0 %v1937
        %6591 = vmatpush.msra.mxu0 %v1935
        %6592 = vmatpush.msra.mxu0 %v1933
        %6593 = vmatpush.msra.mxu0 %v1931
        %6594 = vmatpush.msra.mxu0 %v1929
        %6595 = vmatpush.msra.mxu0 %v1927
        %6596 = vmatpush.msra.mxu0 %v1925
        %6597 = vmatmul.f32.gmra.mxu0 %v3547
        %v6598 = vpop.f32.mrf.mxu0
        %v6599 = vadd.f32 %v6579, %v6598
        %6600 = vdwg.mxu0
        %6601 = vmatpush.msra.mxu0 %v1987
        %6602 = vmatpush.msra.mxu0 %v1985
        %6603 = vmatpush.msra.mxu0 %v1983
        %6604 = vmatpush.msra.mxu0 %v1981
        %6605 = vmatpush.msra.mxu0 %v1979
        %6606 = vmatpush.msra.mxu0 %v1977
        %6607 = vmatpush.msra.mxu0 %v1975
        %6608 = vmatpush.msra.mxu0 %v1973
        %6609 = vmatpush.msra.mxu0 %v1971
        %6610 = vmatpush.msra.mxu0 %v1969
        %6611 = vmatpush.msra.mxu0 %v1967
        %6612 = vmatpush.msra.mxu0 %v1965
        %6613 = vmatpush.msra.mxu0 %v1963
        %6614 = vmatpush.msra.mxu0 %v1961
        %6615 = vmatpush.msra.mxu0 %v1959
        %6616 = vmatpush.msra.mxu0 %v1957
        %6617 = vmatmul.f32.gmra.mxu0 %v3548
        %v6618 = vpop.f32.mrf.mxu0
        %v6619 = vadd.f32 %v6599, %v6618
        %6620 = vdwg.mxu0
        %6621 = vmatpush.msra.mxu0 %v2019
        %6622 = vmatpush.msra.mxu0 %v2017
        %6623 = vmatpush.msra.mxu0 %v2015
        %6624 = vmatpush.msra.mxu0 %v2013
        %6625 = vmatpush.msra.mxu0 %v2011
        %6626 = vmatpush.msra.mxu0 %v2009
        %6627 = vmatpush.msra.mxu0 %v2007
        %6628 = vmatpush.msra.mxu0 %v2005
        %6629 = vmatpush.msra.mxu0 %v2003
        %6630 = vmatpush.msra.mxu0 %v2001
        %6631 = vmatpush.msra.mxu0 %v1999
        %6632 = vmatpush.msra.mxu0 %v1997
        %6633 = vmatpush.msra.mxu0 %v1995
        %6634 = vmatpush.msra.mxu0 %v1993
        %6635 = vmatpush.msra.mxu0 %v1991
        %6636 = vmatpush.msra.mxu0 %v1989
        %6637 = vmatmul.f32.gmra.mxu0 %v3549
        %v6638 = vpop.f32.mrf.mxu0
        %v6639 = vadd.f32 %v6619, %v6638
        %6640 = vdwg.mxu0
        %6641 = vmatpush.msra.mxu0 %v2051
        %6642 = vmatpush.msra.mxu0 %v2049
        %6643 = vmatpush.msra.mxu0 %v2047
        %6644 = vmatpush.msra.mxu0 %v2045
        %6645 = vmatpush.msra.mxu0 %v2043
        %6646 = vmatpush.msra.mxu0 %v2041
        %6647 = vmatpush.msra.mxu0 %v2039
        %6648 = vmatpush.msra.mxu0 %v2037
        %6649 = vmatpush.msra.mxu0 %v2035
        %6650 = vmatpush.msra.mxu0 %v2033
        %6651 = vmatpush.msra.mxu0 %v2031
        %6652 = vmatpush.msra.mxu0 %v2029
        %6653 = vmatpush.msra.mxu0 %v2027
        %6654 = vmatpush.msra.mxu0 %v2025
        %6655 = vmatpush.msra.mxu0 %v2023
        %6656 = vmatpush.msra.mxu0 %v2021
        %6657 = vmatmul.f32.gmra.mxu0 %v3550
        %v6658 = vpop.f32.mrf.mxu0
        %v6659 = vadd.f32 %v6639, %v6658
        %6660 = vdwg.mxu0
        %6661 = vmatpush.msra.mxu0 %v2083
        %6662 = vmatpush.msra.mxu0 %v2081
        %6663 = vmatpush.msra.mxu0 %v2079
        %6664 = vmatpush.msra.mxu0 %v2077
        %6665 = vmatpush.msra.mxu0 %v2075
        %6666 = vmatpush.msra.mxu0 %v2073
        %6667 = vmatpush.msra.mxu0 %v2071
        %6668 = vmatpush.msra.mxu0 %v2069
        %6669 = vmatpush.msra.mxu0 %v2067
        %6670 = vmatpush.msra.mxu0 %v2065
        %6671 = vmatpush.msra.mxu0 %v2063
        %6672 = vmatpush.msra.mxu0 %v2061
        %6673 = vmatpush.msra.mxu0 %v2059
        %6674 = vmatpush.msra.mxu0 %v2057
        %6675 = vmatpush.msra.mxu0 %v2055
        %6676 = vmatpush.msra.mxu0 %v2053
        %6677 = vmatmul.f32.gmra.mxu0 %v3551
        %v6678 = vpop.f32.mrf.mxu0
        %v6679 = vadd.f32 %v6659, %v6678
        %6680 = vdwg.mxu0
        %6681 = vmatpush.msra.mxu0 %v2115
        %6682 = vmatpush.msra.mxu0 %v2113
        %6683 = vmatpush.msra.mxu0 %v2111
        %6684 = vmatpush.msra.mxu0 %v2109
        %6685 = vmatpush.msra.mxu0 %v2107
        %6686 = vmatpush.msra.mxu0 %v2105
        %6687 = vmatpush.msra.mxu0 %v2103
        %6688 = vmatpush.msra.mxu0 %v2101
        %6689 = vmatpush.msra.mxu0 %v2099
        %6690 = vmatpush.msra.mxu0 %v2097
        %6691 = vmatpush.msra.mxu0 %v2095
        %6692 = vmatpush.msra.mxu0 %v2093
        %6693 = vmatpush.msra.mxu0 %v2091
        %6694 = vmatpush.msra.mxu0 %v2089
        %6695 = vmatpush.msra.mxu0 %v2087
        %6696 = vmatpush.msra.mxu0 %v2085
        %6697 = vmatmul.f32.gmra.mxu0 %v3552
        %v6698 = vpop.f32.mrf.mxu0
        %v6699 = vadd.f32 %v6679, %v6698
        %6700 = vdwg.mxu0
        %6701 = vmatpush.msra.mxu0 %v2147
        %6702 = vmatpush.msra.mxu0 %v2145
        %6703 = vmatpush.msra.mxu0 %v2143
        %6704 = vmatpush.msra.mxu0 %v2141
        %6705 = vmatpush.msra.mxu0 %v2139
        %6706 = vmatpush.msra.mxu0 %v2137
        %6707 = vmatpush.msra.mxu0 %v2135
        %6708 = vmatpush.msra.mxu0 %v2133
        %6709 = vmatpush.msra.mxu0 %v2131
        %6710 = vmatpush.msra.mxu0 %v2129
        %6711 = vmatpush.msra.mxu0 %v2127
        %6712 = vmatpush.msra.mxu0 %v2125
        %6713 = vmatpush.msra.mxu0 %v2123
        %6714 = vmatpush.msra.mxu0 %v2121
        %6715 = vmatpush.msra.mxu0 %v2119
        %6716 = vmatpush.msra.mxu0 %v2117
        %6717 = vmatmul.f32.gmra.mxu0 %v3553
        %v6718 = vpop.f32.mrf.mxu0
        %v6719 = vadd.f32 %v6699, %v6718
        %6720 = vdwg.mxu0
        %6721 = vmatpush.msra.mxu0 %v2179
        %6722 = vmatpush.msra.mxu0 %v2177
        %6723 = vmatpush.msra.mxu0 %v2175
        %6724 = vmatpush.msra.mxu0 %v2173
        %6725 = vmatpush.msra.mxu0 %v2171
        %6726 = vmatpush.msra.mxu0 %v2169
        %6727 = vmatpush.msra.mxu0 %v2167
        %6728 = vmatpush.msra.mxu0 %v2165
        %6729 = vmatpush.msra.mxu0 %v2163
        %6730 = vmatpush.msra.mxu0 %v2161
        %6731 = vmatpush.msra.mxu0 %v2159
        %6732 = vmatpush.msra.mxu0 %v2157
        %6733 = vmatpush.msra.mxu0 %v2155
        %6734 = vmatpush.msra.mxu0 %v2153
        %6735 = vmatpush.msra.mxu0 %v2151
        %6736 = vmatpush.msra.mxu0 %v2149
        %6737 = vmatmul.f32.gmra.mxu0 %v3554
        %v6738 = vpop.f32.mrf.mxu0
        %v6739 = vadd.f32 %v6719, %v6738
        %6740 = vdwg.mxu0
        %6741 = vmatpush.msra.mxu0 %v2211
        %6742 = vmatpush.msra.mxu0 %v2209
        %6743 = vmatpush.msra.mxu0 %v2207
        %6744 = vmatpush.msra.mxu0 %v2205
        %6745 = vmatpush.msra.mxu0 %v2203
        %6746 = vmatpush.msra.mxu0 %v2201
        %6747 = vmatpush.msra.mxu0 %v2199
        %6748 = vmatpush.msra.mxu0 %v2197
        %6749 = vmatpush.msra.mxu0 %v2195
        %6750 = vmatpush.msra.mxu0 %v2193
        %6751 = vmatpush.msra.mxu0 %v2191
        %6752 = vmatpush.msra.mxu0 %v2189
        %6753 = vmatpush.msra.mxu0 %v2187
        %6754 = vmatpush.msra.mxu0 %v2185
        %6755 = vmatpush.msra.mxu0 %v2183
        %6756 = vmatpush.msra.mxu0 %v2181
        %6757 = vmatmul.f32.gmra.mxu0 %v3557
        %v6758 = vpop.f32.mrf.mxu0
        %v6759 = vadd.f32 %v6739, %v6758
        %6760 = vdwg.mxu0
        %6761 = vmatpush.msra.mxu0 %v2243
        %6762 = vmatpush.msra.mxu0 %v2241
        %6763 = vmatpush.msra.mxu0 %v2239
        %6764 = vmatpush.msra.mxu0 %v2237
        %6765 = vmatpush.msra.mxu0 %v2235
        %6766 = vmatpush.msra.mxu0 %v2233
        %6767 = vmatpush.msra.mxu0 %v2231
        %6768 = vmatpush.msra.mxu0 %v2229
        %6769 = vmatpush.msra.mxu0 %v2227
        %6770 = vmatpush.msra.mxu0 %v2225
        %6771 = vmatpush.msra.mxu0 %v2223
        %6772 = vmatpush.msra.mxu0 %v2221
        %6773 = vmatpush.msra.mxu0 %v2219
        %6774 = vmatpush.msra.mxu0 %v2217
        %6775 = vmatpush.msra.mxu0 %v2215
        %6776 = vmatpush.msra.mxu0 %v2213
        %6777 = vmatmul.f32.gmra.mxu0 %v3558
        %v6778 = vpop.f32.mrf.mxu0
        %v6779 = vadd.f32 %v6759, %v6778
        %6780 = vdwg.mxu0
        %6781 = vmatpush.msra.mxu0 %v2275
        %6782 = vmatpush.msra.mxu0 %v2273
        %6783 = vmatpush.msra.mxu0 %v2271
        %6784 = vmatpush.msra.mxu0 %v2269
        %6785 = vmatpush.msra.mxu0 %v2267
        %6786 = vmatpush.msra.mxu0 %v2265
        %6787 = vmatpush.msra.mxu0 %v2263
        %6788 = vmatpush.msra.mxu0 %v2261
        %6789 = vmatpush.msra.mxu0 %v2259
        %6790 = vmatpush.msra.mxu0 %v2257
        %6791 = vmatpush.msra.mxu0 %v2255
        %6792 = vmatpush.msra.mxu0 %v2253
        %6793 = vmatpush.msra.mxu0 %v2251
        %6794 = vmatpush.msra.mxu0 %v2249
        %6795 = vmatpush.msra.mxu0 %v2247
        %6796 = vmatpush.msra.mxu0 %v2245
        %6797 = vmatmul.f32.gmra.mxu0 %v3559
        %v6798 = vpop.f32.mrf.mxu0
        %v6799 = vadd.f32 %v6779, %v6798
        %6800 = vdwg.mxu0
        %6801 = vmatpush.msra.mxu0 %v2307
        %6802 = vmatpush.msra.mxu0 %v2305
        %6803 = vmatpush.msra.mxu0 %v2303
        %6804 = vmatpush.msra.mxu0 %v2301
        %6805 = vmatpush.msra.mxu0 %v2299
        %6806 = vmatpush.msra.mxu0 %v2297
        %6807 = vmatpush.msra.mxu0 %v2295
        %6808 = vmatpush.msra.mxu0 %v2293
        %6809 = vmatpush.msra.mxu0 %v2291
        %6810 = vmatpush.msra.mxu0 %v2289
        %6811 = vmatpush.msra.mxu0 %v2287
        %6812 = vmatpush.msra.mxu0 %v2285
        %6813 = vmatpush.msra.mxu0 %v2283
        %6814 = vmatpush.msra.mxu0 %v2281
        %6815 = vmatpush.msra.mxu0 %v2279
        %6816 = vmatpush.msra.mxu0 %v2277
        %6817 = vmatmul.f32.gmra.mxu0 %v3560
        %v6818 = vpop.f32.mrf.mxu0
        %v6819 = vadd.f32 %v6799, %v6818
        %6820 = vdwg.mxu0
        %6821 = vmatpush.msra.mxu0 %v2339
        %6822 = vmatpush.msra.mxu0 %v2337
        %6823 = vmatpush.msra.mxu0 %v2335
        %6824 = vmatpush.msra.mxu0 %v2333
        %6825 = vmatpush.msra.mxu0 %v2331
        %6826 = vmatpush.msra.mxu0 %v2329
        %6827 = vmatpush.msra.mxu0 %v2327
        %6828 = vmatpush.msra.mxu0 %v2325
        %6829 = vmatpush.msra.mxu0 %v2323
        %6830 = vmatpush.msra.mxu0 %v2321
        %6831 = vmatpush.msra.mxu0 %v2319
        %6832 = vmatpush.msra.mxu0 %v2317
        %6833 = vmatpush.msra.mxu0 %v2315
        %6834 = vmatpush.msra.mxu0 %v2313
        %6835 = vmatpush.msra.mxu0 %v2311
        %6836 = vmatpush.msra.mxu0 %v2309
        %6837 = vmatmul.f32.gmra.mxu0 %v3561
        %v6838 = vpop.f32.mrf.mxu0
        %v6839 = vadd.f32 %v6819, %v6838
        %6840 = vdwg.mxu0
        %6841 = vmatpush.msra.mxu0 %v2371
        %6842 = vmatpush.msra.mxu0 %v2369
        %6843 = vmatpush.msra.mxu0 %v2367
        %6844 = vmatpush.msra.mxu0 %v2365
        %6845 = vmatpush.msra.mxu0 %v2363
        %6846 = vmatpush.msra.mxu0 %v2361
        %6847 = vmatpush.msra.mxu0 %v2359
        %6848 = vmatpush.msra.mxu0 %v2357
        %6849 = vmatpush.msra.mxu0 %v2355
        %6850 = vmatpush.msra.mxu0 %v2353
        %6851 = vmatpush.msra.mxu0 %v2351
        %6852 = vmatpush.msra.mxu0 %v2349
        %6853 = vmatpush.msra.mxu0 %v2347
        %6854 = vmatpush.msra.mxu0 %v2345
        %6855 = vmatpush.msra.mxu0 %v2343
        %6856 = vmatpush.msra.mxu0 %v2341
        %6857 = vmatmul.f32.gmra.mxu0 %v3562
        %v6858 = vpop.f32.mrf.mxu0
        %v6859 = vadd.f32 %v6839, %v6858
        %6860 = vdwg.mxu0
        %6861 = vmatpush.msra.mxu0 %v2403
        %6862 = vmatpush.msra.mxu0 %v2401
        %6863 = vmatpush.msra.mxu0 %v2399
        %6864 = vmatpush.msra.mxu0 %v2397
        %6865 = vmatpush.msra.mxu0 %v2395
        %6866 = vmatpush.msra.mxu0 %v2393
        %6867 = vmatpush.msra.mxu0 %v2391
        %6868 = vmatpush.msra.mxu0 %v2389
        %6869 = vmatpush.msra.mxu0 %v2387
        %6870 = vmatpush.msra.mxu0 %v2385
        %6871 = vmatpush.msra.mxu0 %v2383
        %6872 = vmatpush.msra.mxu0 %v2381
        %6873 = vmatpush.msra.mxu0 %v2379
        %6874 = vmatpush.msra.mxu0 %v2377
        %6875 = vmatpush.msra.mxu0 %v2375
        %6876 = vmatpush.msra.mxu0 %v2373
        %6877 = vmatmul.f32.gmra.mxu0 %v3563
        %v6878 = vpop.f32.mrf.mxu0
        %v6879 = vadd.f32 %v6859, %v6878
        %6880 = vdwg.mxu0
        %6881 = vmatpush.msra.mxu0 %v2435
        %6882 = vmatpush.msra.mxu0 %v2433
        %6883 = vmatpush.msra.mxu0 %v2431
        %6884 = vmatpush.msra.mxu0 %v2429
        %6885 = vmatpush.msra.mxu0 %v2427
        %6886 = vmatpush.msra.mxu0 %v2425
        %6887 = vmatpush.msra.mxu0 %v2423
        %6888 = vmatpush.msra.mxu0 %v2421
        %6889 = vmatpush.msra.mxu0 %v2419
        %6890 = vmatpush.msra.mxu0 %v2417
        %6891 = vmatpush.msra.mxu0 %v2415
        %6892 = vmatpush.msra.mxu0 %v2413
        %6893 = vmatpush.msra.mxu0 %v2411
        %6894 = vmatpush.msra.mxu0 %v2409
        %6895 = vmatpush.msra.mxu0 %v2407
        %6896 = vmatpush.msra.mxu0 %v2405
        %6897 = vmatmul.f32.gmra.mxu0 %v3564
        %v6898 = vpop.f32.mrf.mxu0
        %v6899 = vadd.f32 %v6879, %v6898
        %6900 = vdwg.mxu0
        %6901 = vmatpush.msra.mxu0 %v2467
        %6902 = vmatpush.msra.mxu0 %v2465
        %6903 = vmatpush.msra.mxu0 %v2463
        %6904 = vmatpush.msra.mxu0 %v2461
        %6905 = vmatpush.msra.mxu0 %v2459
        %6906 = vmatpush.msra.mxu0 %v2457
        %6907 = vmatpush.msra.mxu0 %v2455
        %6908 = vmatpush.msra.mxu0 %v2453
        %6909 = vmatpush.msra.mxu0 %v2451
        %6910 = vmatpush.msra.mxu0 %v2449
        %6911 = vmatpush.msra.mxu0 %v2447
        %6912 = vmatpush.msra.mxu0 %v2445
        %6913 = vmatpush.msra.mxu0 %v2443
        %6914 = vmatpush.msra.mxu0 %v2441
        %6915 = vmatpush.msra.mxu0 %v2439
        %6916 = vmatpush.msra.mxu0 %v2437
        %6917 = vmatmul.f32.gmra.mxu0 %v3567
        %v6918 = vpop.f32.mrf.mxu0
        %v6919 = vadd.f32 %v6899, %v6918
        %6920 = vdwg.mxu0
        %6921 = vmatpush.msra.mxu0 %v2499
        %6922 = vmatpush.msra.mxu0 %v2497
        %6923 = vmatpush.msra.mxu0 %v2495
        %6924 = vmatpush.msra.mxu0 %v2493
        %6925 = vmatpush.msra.mxu0 %v2491
        %6926 = vmatpush.msra.mxu0 %v2489
        %6927 = vmatpush.msra.mxu0 %v2487
        %6928 = vmatpush.msra.mxu0 %v2485
        %6929 = vmatpush.msra.mxu0 %v2483
        %6930 = vmatpush.msra.mxu0 %v2481
        %6931 = vmatpush.msra.mxu0 %v2479
        %6932 = vmatpush.msra.mxu0 %v2477
        %6933 = vmatpush.msra.mxu0 %v2475
        %6934 = vmatpush.msra.mxu0 %v2473
        %6935 = vmatpush.msra.mxu0 %v2471
        %6936 = vmatpush.msra.mxu0 %v2469
        %6937 = vmatmul.f32.gmra.mxu0 %v3568
        %v6938 = vpop.f32.mrf.mxu0
        %v6939 = vadd.f32 %v6919, %v6938
        %6940 = vdwg.mxu0
        %6941 = vmatpush.msra.mxu0 %v2531
        %6942 = vmatpush.msra.mxu0 %v2529
        %6943 = vmatpush.msra.mxu0 %v2527
        %6944 = vmatpush.msra.mxu0 %v2525
        %6945 = vmatpush.msra.mxu0 %v2523
        %6946 = vmatpush.msra.mxu0 %v2521
        %6947 = vmatpush.msra.mxu0 %v2519
        %6948 = vmatpush.msra.mxu0 %v2517
        %6949 = vmatpush.msra.mxu0 %v2515
        %6950 = vmatpush.msra.mxu0 %v2513
        %6951 = vmatpush.msra.mxu0 %v2511
        %6952 = vmatpush.msra.mxu0 %v2509
        %6953 = vmatpush.msra.mxu0 %v2507
        %6954 = vmatpush.msra.mxu0 %v2505
        %6955 = vmatpush.msra.mxu0 %v2503
        %6956 = vmatpush.msra.mxu0 %v2501
        %6957 = vmatmul.f32.gmra.mxu0 %v3569
        %v6958 = vpop.f32.mrf.mxu0
        %v6959 = vadd.f32 %v6939, %v6958
        %6960 = vdwg.mxu0
        %6961 = vmatpush.msra.mxu0 %v2563
        %6962 = vmatpush.msra.mxu0 %v2561
        %6963 = vmatpush.msra.mxu0 %v2559
        %6964 = vmatpush.msra.mxu0 %v2557
        %6965 = vmatpush.msra.mxu0 %v2555
        %6966 = vmatpush.msra.mxu0 %v2553
        %6967 = vmatpush.msra.mxu0 %v2551
        %6968 = vmatpush.msra.mxu0 %v2549
        %6969 = vmatpush.msra.mxu0 %v2547
        %6970 = vmatpush.msra.mxu0 %v2545
        %6971 = vmatpush.msra.mxu0 %v2543
        %6972 = vmatpush.msra.mxu0 %v2541
        %6973 = vmatpush.msra.mxu0 %v2539
        %6974 = vmatpush.msra.mxu0 %v2537
        %6975 = vmatpush.msra.mxu0 %v2535
        %6976 = vmatpush.msra.mxu0 %v2533
        %6977 = vmatmul.f32.gmra.mxu0 %v3570
        %v6978 = vpop.f32.mrf.mxu0
        %v6979 = vadd.f32 %v6959, %v6978
        %6980 = vdwg.mxu0
        %6981 = vmatpush.msra.mxu0 %v2595
        %6982 = vmatpush.msra.mxu0 %v2593
        %6983 = vmatpush.msra.mxu0 %v2591
        %6984 = vmatpush.msra.mxu0 %v2589
        %6985 = vmatpush.msra.mxu0 %v2587
        %6986 = vmatpush.msra.mxu0 %v2585
        %6987 = vmatpush.msra.mxu0 %v2583
        %6988 = vmatpush.msra.mxu0 %v2581
        %6989 = vmatpush.msra.mxu0 %v2579
        %6990 = vmatpush.msra.mxu0 %v2577
        %6991 = vmatpush.msra.mxu0 %v2575
        %6992 = vmatpush.msra.mxu0 %v2573
        %6993 = vmatpush.msra.mxu0 %v2571
        %6994 = vmatpush.msra.mxu0 %v2569
        %6995 = vmatpush.msra.mxu0 %v2567
        %6996 = vmatpush.msra.mxu0 %v2565
        %6997 = vmatmul.f32.gmra.mxu0 %v3571
        %v6998 = vpop.f32.mrf.mxu0
        %v6999 = vadd.f32 %v6979, %v6998
        %7000 = vdwg.mxu0
        %7001 = vmatpush.msra.mxu0 %v2627
        %7002 = vmatpush.msra.mxu0 %v2625
        %7003 = vmatpush.msra.mxu0 %v2623
        %7004 = vmatpush.msra.mxu0 %v2621
        %7005 = vmatpush.msra.mxu0 %v2619
        %7006 = vmatpush.msra.mxu0 %v2617
        %7007 = vmatpush.msra.mxu0 %v2615
        %7008 = vmatpush.msra.mxu0 %v2613
        %7009 = vmatpush.msra.mxu0 %v2611
        %7010 = vmatpush.msra.mxu0 %v2609
        %7011 = vmatpush.msra.mxu0 %v2607
        %7012 = vmatpush.msra.mxu0 %v2605
        %7013 = vmatpush.msra.mxu0 %v2603
        %7014 = vmatpush.msra.mxu0 %v2601
        %7015 = vmatpush.msra.mxu0 %v2599
        %7016 = vmatpush.msra.mxu0 %v2597
        %7017 = vmatmul.f32.gmra.mxu0 %v3572
        %v7018 = vpop.f32.mrf.mxu0
        %v7019 = vadd.f32 %v6999, %v7018
        %7020 = vdwg.mxu0
        %7021 = vmatpush.msra.mxu0 %v2659
        %7022 = vmatpush.msra.mxu0 %v2657
        %7023 = vmatpush.msra.mxu0 %v2655
        %7024 = vmatpush.msra.mxu0 %v2653
        %7025 = vmatpush.msra.mxu0 %v2651
        %7026 = vmatpush.msra.mxu0 %v2649
        %7027 = vmatpush.msra.mxu0 %v2647
        %7028 = vmatpush.msra.mxu0 %v2645
        %7029 = vmatpush.msra.mxu0 %v2643
        %7030 = vmatpush.msra.mxu0 %v2641
        %7031 = vmatpush.msra.mxu0 %v2639
        %7032 = vmatpush.msra.mxu0 %v2637
        %7033 = vmatpush.msra.mxu0 %v2635
        %7034 = vmatpush.msra.mxu0 %v2633
        %7035 = vmatpush.msra.mxu0 %v2631
        %7036 = vmatpush.msra.mxu0 %v2629
        %7037 = vmatmul.f32.gmra.mxu0 %v3573
        %v7038 = vpop.f32.mrf.mxu0
        %v7039 = vadd.f32 %v7019, %v7038
        %7040 = vdwg.mxu0
        %7041 = vmatpush.msra.mxu0 %v2691
        %7042 = vmatpush.msra.mxu0 %v2689
        %7043 = vmatpush.msra.mxu0 %v2687
        %7044 = vmatpush.msra.mxu0 %v2685
        %7045 = vmatpush.msra.mxu0 %v2683
        %7046 = vmatpush.msra.mxu0 %v2681
        %7047 = vmatpush.msra.mxu0 %v2679
        %7048 = vmatpush.msra.mxu0 %v2677
        %7049 = vmatpush.msra.mxu0 %v2675
        %7050 = vmatpush.msra.mxu0 %v2673
        %7051 = vmatpush.msra.mxu0 %v2671
        %7052 = vmatpush.msra.mxu0 %v2669
        %7053 = vmatpush.msra.mxu0 %v2667
        %7054 = vmatpush.msra.mxu0 %v2665
        %7055 = vmatpush.msra.mxu0 %v2663
        %7056 = vmatpush.msra.mxu0 %v2661
        %7057 = vmatmul.f32.gmra.mxu0 %v3574
        %v7058 = vpop.f32.mrf.mxu0
        %v7059 = vadd.f32 %v7039, %v7058
        %7060 = vdwg.mxu0
        %7061 = vmatpush.msra.mxu0 %v2723
        %7062 = vmatpush.msra.mxu0 %v2721
        %7063 = vmatpush.msra.mxu0 %v2719
        %7064 = vmatpush.msra.mxu0 %v2717
        %7065 = vmatpush.msra.mxu0 %v2715
        %7066 = vmatpush.msra.mxu0 %v2713
        %7067 = vmatpush.msra.mxu0 %v2711
        %7068 = vmatpush.msra.mxu0 %v2709
        %7069 = vmatpush.msra.mxu0 %v2707
        %7070 = vmatpush.msra.mxu0 %v2705
        %7071 = vmatpush.msra.mxu0 %v2703
        %7072 = vmatpush.msra.mxu0 %v2701
        %7073 = vmatpush.msra.mxu0 %v2699
        %7074 = vmatpush.msra.mxu0 %v2697
        %7075 = vmatpush.msra.mxu0 %v2695
        %7076 = vmatpush.msra.mxu0 %v2693
        %7077 = vmatmul.f32.gmra.mxu0 %v3577
        %v7078 = vpop.f32.mrf.mxu0
        %v7079 = vadd.f32 %v7059, %v7078
        %7080 = vdwg.mxu0
        %7081 = vmatpush.msra.mxu0 %v2755
        %7082 = vmatpush.msra.mxu0 %v2753
        %7083 = vmatpush.msra.mxu0 %v2751
        %7084 = vmatpush.msra.mxu0 %v2749
        %7085 = vmatpush.msra.mxu0 %v2747
        %7086 = vmatpush.msra.mxu0 %v2745
        %7087 = vmatpush.msra.mxu0 %v2743
        %7088 = vmatpush.msra.mxu0 %v2741
        %7089 = vmatpush.msra.mxu0 %v2739
        %7090 = vmatpush.msra.mxu0 %v2737
        %7091 = vmatpush.msra.mxu0 %v2735
        %7092 = vmatpush.msra.mxu0 %v2733
        %7093 = vmatpush.msra.mxu0 %v2731
        %7094 = vmatpush.msra.mxu0 %v2729
        %7095 = vmatpush.msra.mxu0 %v2727
        %7096 = vmatpush.msra.mxu0 %v2725
        %7097 = vmatmul.f32.gmra.mxu0 %v3578
        %v7098 = vpop.f32.mrf.mxu0
        %v7099 = vadd.f32 %v7079, %v7098
        %7100 = vdwg.mxu0
        %7101 = vmatpush.msra.mxu0 %v2787
        %7102 = vmatpush.msra.mxu0 %v2785
        %7103 = vmatpush.msra.mxu0 %v2783
        %7104 = vmatpush.msra.mxu0 %v2781
        %7105 = vmatpush.msra.mxu0 %v2779
        %7106 = vmatpush.msra.mxu0 %v2777
        %7107 = vmatpush.msra.mxu0 %v2775
        %7108 = vmatpush.msra.mxu0 %v2773
        %7109 = vmatpush.msra.mxu0 %v2771
        %7110 = vmatpush.msra.mxu0 %v2769
        %7111 = vmatpush.msra.mxu0 %v2767
        %7112 = vmatpush.msra.mxu0 %v2765
        %7113 = vmatpush.msra.mxu0 %v2763
        %7114 = vmatpush.msra.mxu0 %v2761
        %7115 = vmatpush.msra.mxu0 %v2759
        %7116 = vmatpush.msra.mxu0 %v2757
        %7117 = vmatmul.f32.gmra.mxu0 %v3579
        %v7118 = vpop.f32.mrf.mxu0
        %v7119 = vadd.f32 %v7099, %v7118
        %7120 = vdwg.mxu0
        %7121 = vmatpush.msra.mxu0 %v2819
        %7122 = vmatpush.msra.mxu0 %v2817
        %7123 = vmatpush.msra.mxu0 %v2815
        %7124 = vmatpush.msra.mxu0 %v2813
        %7125 = vmatpush.msra.mxu0 %v2811
        %7126 = vmatpush.msra.mxu0 %v2809
        %7127 = vmatpush.msra.mxu0 %v2807
        %7128 = vmatpush.msra.mxu0 %v2805
        %7129 = vmatpush.msra.mxu0 %v2803
        %7130 = vmatpush.msra.mxu0 %v2801
        %7131 = vmatpush.msra.mxu0 %v2799
        %7132 = vmatpush.msra.mxu0 %v2797
        %7133 = vmatpush.msra.mxu0 %v2795
        %7134 = vmatpush.msra.mxu0 %v2793
        %7135 = vmatpush.msra.mxu0 %v2791
        %7136 = vmatpush.msra.mxu0 %v2789
        %7137 = vmatmul.f32.gmra.mxu0 %v3580
        %v7138 = vpop.f32.mrf.mxu0
        %v7139 = vadd.f32 %v7119, %v7138
        %7140 = vdwg.mxu0
        %7141 = vmatpush.msra.mxu0 %v2851
        %7142 = vmatpush.msra.mxu0 %v2849
        %7143 = vmatpush.msra.mxu0 %v2847
        %7144 = vmatpush.msra.mxu0 %v2845
        %7145 = vmatpush.msra.mxu0 %v2843
        %7146 = vmatpush.msra.mxu0 %v2841
        %7147 = vmatpush.msra.mxu0 %v2839
        %7148 = vmatpush.msra.mxu0 %v2837
        %7149 = vmatpush.msra.mxu0 %v2835
        %7150 = vmatpush.msra.mxu0 %v2833
        %7151 = vmatpush.msra.mxu0 %v2831
        %7152 = vmatpush.msra.mxu0 %v2829
        %7153 = vmatpush.msra.mxu0 %v2827
        %7154 = vmatpush.msra.mxu0 %v2825
        %7155 = vmatpush.msra.mxu0 %v2823
        %7156 = vmatpush.msra.mxu0 %v2821
        %7157 = vmatmul.f32.gmra.mxu0 %v3581
        %v7158 = vpop.f32.mrf.mxu0
        %v7159 = vadd.f32 %v7139, %v7158
        %7160 = vdwg.mxu0
        %7161 = vmatpush.msra.mxu0 %v2883
        %7162 = vmatpush.msra.mxu0 %v2881
        %7163 = vmatpush.msra.mxu0 %v2879
        %7164 = vmatpush.msra.mxu0 %v2877
        %7165 = vmatpush.msra.mxu0 %v2875
        %7166 = vmatpush.msra.mxu0 %v2873
        %7167 = vmatpush.msra.mxu0 %v2871
        %7168 = vmatpush.msra.mxu0 %v2869
        %7169 = vmatpush.msra.mxu0 %v2867
        %7170 = vmatpush.msra.mxu0 %v2865
        %7171 = vmatpush.msra.mxu0 %v2863
        %7172 = vmatpush.msra.mxu0 %v2861
        %7173 = vmatpush.msra.mxu0 %v2859
        %7174 = vmatpush.msra.mxu0 %v2857
        %7175 = vmatpush.msra.mxu0 %v2855
        %7176 = vmatpush.msra.mxu0 %v2853
        %7177 = vmatmul.f32.gmra.mxu0 %v3582
        %v7178 = vpop.f32.mrf.mxu0
        %v7179 = vadd.f32 %v7159, %v7178
        %7180 = vdwg.mxu0
        %7181 = vmatpush.msra.mxu0 %v2915
        %7182 = vmatpush.msra.mxu0 %v2913
        %7183 = vmatpush.msra.mxu0 %v2911
        %7184 = vmatpush.msra.mxu0 %v2909
        %7185 = vmatpush.msra.mxu0 %v2907
        %7186 = vmatpush.msra.mxu0 %v2905
        %7187 = vmatpush.msra.mxu0 %v2903
        %7188 = vmatpush.msra.mxu0 %v2901
        %7189 = vmatpush.msra.mxu0 %v2899
        %7190 = vmatpush.msra.mxu0 %v2897
        %7191 = vmatpush.msra.mxu0 %v2895
        %7192 = vmatpush.msra.mxu0 %v2893
        %7193 = vmatpush.msra.mxu0 %v2891
        %7194 = vmatpush.msra.mxu0 %v2889
        %7195 = vmatpush.msra.mxu0 %v2887
        %7196 = vmatpush.msra.mxu0 %v2885
        %7197 = vmatmul.f32.gmra.mxu0 %v3583
        %v7198 = vpop.f32.mrf.mxu0
        %v7199 = vadd.f32 %v7179, %v7198
        %7200 = vdwg.mxu0
        %7201 = vmatpush.msra.mxu0 %v2947
        %7202 = vmatpush.msra.mxu0 %v2945
        %7203 = vmatpush.msra.mxu0 %v2943
        %7204 = vmatpush.msra.mxu0 %v2941
        %7205 = vmatpush.msra.mxu0 %v2939
        %7206 = vmatpush.msra.mxu0 %v2937
        %7207 = vmatpush.msra.mxu0 %v2935
        %7208 = vmatpush.msra.mxu0 %v2933
        %7209 = vmatpush.msra.mxu0 %v2931
        %7210 = vmatpush.msra.mxu0 %v2929
        %7211 = vmatpush.msra.mxu0 %v2927
        %7212 = vmatpush.msra.mxu0 %v2925
        %7213 = vmatpush.msra.mxu0 %v2923
        %7214 = vmatpush.msra.mxu0 %v2921
        %7215 = vmatpush.msra.mxu0 %v2919
        %7216 = vmatpush.msra.mxu0 %v2917
        %7217 = vmatmul.f32.gmra.mxu0 %v3584
        %v7218 = vpop.f32.mrf.mxu0
        %v7219 = vadd.f32 %v7199, %v7218
        %7220 = vdwg.mxu0
        %7221 = vmatpush.msra.mxu0 %v2979
        %7222 = vmatpush.msra.mxu0 %v2977
        %7223 = vmatpush.msra.mxu0 %v2975
        %7224 = vmatpush.msra.mxu0 %v2973
        %7225 = vmatpush.msra.mxu0 %v2971
        %7226 = vmatpush.msra.mxu0 %v2969
        %7227 = vmatpush.msra.mxu0 %v2967
        %7228 = vmatpush.msra.mxu0 %v2965
        %7229 = vmatpush.msra.mxu0 %v2963
        %7230 = vmatpush.msra.mxu0 %v2961
        %7231 = vmatpush.msra.mxu0 %v2959
        %7232 = vmatpush.msra.mxu0 %v2957
        %7233 = vmatpush.msra.mxu0 %v2955
        %7234 = vmatpush.msra.mxu0 %v2953
        %7235 = vmatpush.msra.mxu0 %v2951
        %7236 = vmatpush.msra.mxu0 %v2949
        %7237 = vmatmul.f32.gmra.mxu0 %v3587
        %v7238 = vpop.f32.mrf.mxu0
        %v7239 = vadd.f32 %v7219, %v7238
        %7240 = vdwg.mxu0
        %7241 = vmatpush.msra.mxu0 %v3011
        %7242 = vmatpush.msra.mxu0 %v3009
        %7243 = vmatpush.msra.mxu0 %v3007
        %7244 = vmatpush.msra.mxu0 %v3005
        %7245 = vmatpush.msra.mxu0 %v3003
        %7246 = vmatpush.msra.mxu0 %v3001
        %7247 = vmatpush.msra.mxu0 %v2999
        %7248 = vmatpush.msra.mxu0 %v2997
        %7249 = vmatpush.msra.mxu0 %v2995
        %7250 = vmatpush.msra.mxu0 %v2993
        %7251 = vmatpush.msra.mxu0 %v2991
        %7252 = vmatpush.msra.mxu0 %v2989
        %7253 = vmatpush.msra.mxu0 %v2987
        %7254 = vmatpush.msra.mxu0 %v2985
        %7255 = vmatpush.msra.mxu0 %v2983
        %7256 = vmatpush.msra.mxu0 %v2981
        %7257 = vmatmul.f32.gmra.mxu0 %v3588
        %v7258 = vpop.f32.mrf.mxu0
        %v7259 = vadd.f32 %v7239, %v7258
        %7260 = vdwg.mxu0
        %7261 = vmatpush.msra.mxu0 %v3043
        %7262 = vmatpush.msra.mxu0 %v3041
        %7263 = vmatpush.msra.mxu0 %v3039
        %7264 = vmatpush.msra.mxu0 %v3037
        %7265 = vmatpush.msra.mxu0 %v3035
        %7266 = vmatpush.msra.mxu0 %v3033
        %7267 = vmatpush.msra.mxu0 %v3031
        %7268 = vmatpush.msra.mxu0 %v3029
        %7269 = vmatpush.msra.mxu0 %v3027
        %7270 = vmatpush.msra.mxu0 %v3025
        %7271 = vmatpush.msra.mxu0 %v3023
        %7272 = vmatpush.msra.mxu0 %v3021
        %7273 = vmatpush.msra.mxu0 %v3019
        %7274 = vmatpush.msra.mxu0 %v3017
        %7275 = vmatpush.msra.mxu0 %v3015
        %7276 = vmatpush.msra.mxu0 %v3013
        %7277 = vmatmul.f32.gmra.mxu0 %v3589
        %v7278 = vpop.f32.mrf.mxu0
        %v7279 = vadd.f32 %v7259, %v7278
        %7280 = vdwg.mxu0
        %7281 = vmatpush.msra.mxu0 %v3075
        %7282 = vmatpush.msra.mxu0 %v3073
        %7283 = vmatpush.msra.mxu0 %v3071
        %7284 = vmatpush.msra.mxu0 %v3069
        %7285 = vmatpush.msra.mxu0 %v3067
        %7286 = vmatpush.msra.mxu0 %v3065
        %7287 = vmatpush.msra.mxu0 %v3063
        %7288 = vmatpush.msra.mxu0 %v3061
        %7289 = vmatpush.msra.mxu0 %v3059
        %7290 = vmatpush.msra.mxu0 %v3057
        %7291 = vmatpush.msra.mxu0 %v3055
        %7292 = vmatpush.msra.mxu0 %v3053
        %7293 = vmatpush.msra.mxu0 %v3051
        %7294 = vmatpush.msra.mxu0 %v3049
        %7295 = vmatpush.msra.mxu0 %v3047
        %7296 = vmatpush.msra.mxu0 %v3045
        %7297 = vmatmul.f32.gmra.mxu0 %v3590
        %v7298 = vpop.f32.mrf.mxu0
        %v7299 = vadd.f32 %v7279, %v7298
        %7300 = vdwg.mxu0
        %7301 = vmatpush.msra.mxu0 %v3107
        %7302 = vmatpush.msra.mxu0 %v3105
        %7303 = vmatpush.msra.mxu0 %v3103
        %7304 = vmatpush.msra.mxu0 %v3101
        %7305 = vmatpush.msra.mxu0 %v3099
        %7306 = vmatpush.msra.mxu0 %v3097
        %7307 = vmatpush.msra.mxu0 %v3095
        %7308 = vmatpush.msra.mxu0 %v3093
        %7309 = vmatpush.msra.mxu0 %v3091
        %7310 = vmatpush.msra.mxu0 %v3089
        %7311 = vmatpush.msra.mxu0 %v3087
        %7312 = vmatpush.msra.mxu0 %v3085
        %7313 = vmatpush.msra.mxu0 %v3083
        %7314 = vmatpush.msra.mxu0 %v3081
        %7315 = vmatpush.msra.mxu0 %v3079
        %7316 = vmatpush.msra.mxu0 %v3077
        %7317 = vmatmul.f32.gmra.mxu0 %v3591
        %v7318 = vpop.f32.mrf.mxu0
        %v7319 = vadd.f32 %v7299, %v7318
        %7320 = vdwg.mxu0
        %7321 = vmatpush.msra.mxu0 %v3139
        %7322 = vmatpush.msra.mxu0 %v3137
        %7323 = vmatpush.msra.mxu0 %v3135
        %7324 = vmatpush.msra.mxu0 %v3133
        %7325 = vmatpush.msra.mxu0 %v3131
        %7326 = vmatpush.msra.mxu0 %v3129
        %7327 = vmatpush.msra.mxu0 %v3127
        %7328 = vmatpush.msra.mxu0 %v3125
        %7329 = vmatpush.msra.mxu0 %v3123
        %7330 = vmatpush.msra.mxu0 %v3121
        %7331 = vmatpush.msra.mxu0 %v3119
        %7332 = vmatpush.msra.mxu0 %v3117
        %7333 = vmatpush.msra.mxu0 %v3115
        %7334 = vmatpush.msra.mxu0 %v3113
        %7335 = vmatpush.msra.mxu0 %v3111
        %7336 = vmatpush.msra.mxu0 %v3109
        %7337 = vmatmul.f32.gmra.mxu0 %v3592
        %v7338 = vpop.f32.mrf.mxu0
        %v7339 = vadd.f32 %v7319, %v7338
        %7340 = vdwg.mxu0
        %7341 = vmatpush.msra.mxu0 %v3171
        %7342 = vmatpush.msra.mxu0 %v3169
        %7343 = vmatpush.msra.mxu0 %v3167
        %7344 = vmatpush.msra.mxu0 %v3165
        %7345 = vmatpush.msra.mxu0 %v3163
        %7346 = vmatpush.msra.mxu0 %v3161
        %7347 = vmatpush.msra.mxu0 %v3159
        %7348 = vmatpush.msra.mxu0 %v3157
        %7349 = vmatpush.msra.mxu0 %v3155
        %7350 = vmatpush.msra.mxu0 %v3153
        %7351 = vmatpush.msra.mxu0 %v3151
        %7352 = vmatpush.msra.mxu0 %v3149
        %7353 = vmatpush.msra.mxu0 %v3147
        %7354 = vmatpush.msra.mxu0 %v3145
        %7355 = vmatpush.msra.mxu0 %v3143
        %7356 = vmatpush.msra.mxu0 %v3141
        %7357 = vmatmul.f32.gmra.mxu0 %v3593
        %v7358 = vpop.f32.mrf.mxu0
        %v7359 = vadd.f32 %v7339, %v7358
        %7360 = vdwg.mxu0
        %7361 = vmatpush.msra.mxu0 %v3203
        %7362 = vmatpush.msra.mxu0 %v3201
        %7363 = vmatpush.msra.mxu0 %v3199
        %7364 = vmatpush.msra.mxu0 %v3197
        %7365 = vmatpush.msra.mxu0 %v3195
        %7366 = vmatpush.msra.mxu0 %v3193
        %7367 = vmatpush.msra.mxu0 %v3191
        %7368 = vmatpush.msra.mxu0 %v3189
        %7369 = vmatpush.msra.mxu0 %v3187
        %7370 = vmatpush.msra.mxu0 %v3185
        %7371 = vmatpush.msra.mxu0 %v3183
        %7372 = vmatpush.msra.mxu0 %v3181
        %7373 = vmatpush.msra.mxu0 %v3179
        %7374 = vmatpush.msra.mxu0 %v3177
        %7375 = vmatpush.msra.mxu0 %v3175
        %7376 = vmatpush.msra.mxu0 %v3173
        %7377 = vmatmul.f32.gmra.mxu0 %v3594
        %v7378 = vpop.f32.mrf.mxu0
        %v7379 = vadd.f32 %v7359, %v7378
        %7380 = vdwg.mxu0
        %7381 = vmatpush.msra.mxu0 %v3235
        %7382 = vmatpush.msra.mxu0 %v3233
        %7383 = vmatpush.msra.mxu0 %v3231
        %7384 = vmatpush.msra.mxu0 %v3229
        %7385 = vmatpush.msra.mxu0 %v3227
        %7386 = vmatpush.msra.mxu0 %v3225
        %7387 = vmatpush.msra.mxu0 %v3223
        %7388 = vmatpush.msra.mxu0 %v3221
        %7389 = vmatpush.msra.mxu0 %v3219
        %7390 = vmatpush.msra.mxu0 %v3217
        %7391 = vmatpush.msra.mxu0 %v3215
        %7392 = vmatpush.msra.mxu0 %v3213
        %7393 = vmatpush.msra.mxu0 %v3211
        %7394 = vmatpush.msra.mxu0 %v3209
        %7395 = vmatpush.msra.mxu0 %v3207
        %7396 = vmatpush.msra.mxu0 %v3205
        %7397 = vmatmul.f32.gmra.mxu0 %v3597
        %v7398 = vpop.f32.mrf.mxu0
        %v7399 = vadd.f32 %v7379, %v7398
        %7400 = vdwg.mxu0
        %7401 = vmatpush.msra.mxu0 %v3267
        %7402 = vmatpush.msra.mxu0 %v3265
        %7403 = vmatpush.msra.mxu0 %v3263
        %7404 = vmatpush.msra.mxu0 %v3261
        %7405 = vmatpush.msra.mxu0 %v3259
        %7406 = vmatpush.msra.mxu0 %v3257
        %7407 = vmatpush.msra.mxu0 %v3255
        %7408 = vmatpush.msra.mxu0 %v3253
        %7409 = vmatpush.msra.mxu0 %v3251
        %7410 = vmatpush.msra.mxu0 %v3249
        %7411 = vmatpush.msra.mxu0 %v3247
        %7412 = vmatpush.msra.mxu0 %v3245
        %7413 = vmatpush.msra.mxu0 %v3243
        %7414 = vmatpush.msra.mxu0 %v3241
        %7415 = vmatpush.msra.mxu0 %v3239
        %7416 = vmatpush.msra.mxu0 %v3237
        %7417 = vmatmul.f32.gmra.mxu0 %v3598
        %v7418 = vpop.f32.mrf.mxu0
        %v7419 = vadd.f32 %v7399, %v7418
        %7420 = vdwg.mxu0
        %7421 = vmatpush.msra.mxu0 %v3299
        %7422 = vmatpush.msra.mxu0 %v3297
        %7423 = vmatpush.msra.mxu0 %v3295
        %7424 = vmatpush.msra.mxu0 %v3293
        %7425 = vmatpush.msra.mxu0 %v3291
        %7426 = vmatpush.msra.mxu0 %v3289
        %7427 = vmatpush.msra.mxu0 %v3287
        %7428 = vmatpush.msra.mxu0 %v3285
        %7429 = vmatpush.msra.mxu0 %v3283
        %7430 = vmatpush.msra.mxu0 %v3281
        %7431 = vmatpush.msra.mxu0 %v3279
        %7432 = vmatpush.msra.mxu0 %v3277
        %7433 = vmatpush.msra.mxu0 %v3275
        %7434 = vmatpush.msra.mxu0 %v3273
        %7435 = vmatpush.msra.mxu0 %v3271
        %7436 = vmatpush.msra.mxu0 %v3269
        %7437 = vmatmul.f32.gmra.mxu0 %v3599
        %v7438 = vpop.f32.mrf.mxu0
        %v7439 = vadd.f32 %v7419, %v7438
        %7440 = vdwg.mxu0
        %7441 = vmatpush.msra.mxu0 %v3331
        %7442 = vmatpush.msra.mxu0 %v3329
        %7443 = vmatpush.msra.mxu0 %v3327
        %7444 = vmatpush.msra.mxu0 %v3325
        %7445 = vmatpush.msra.mxu0 %v3323
        %7446 = vmatpush.msra.mxu0 %v3321
        %7447 = vmatpush.msra.mxu0 %v3319
        %7448 = vmatpush.msra.mxu0 %v3317
        %7449 = vmatpush.msra.mxu0 %v3315
        %7450 = vmatpush.msra.mxu0 %v3313
        %7451 = vmatpush.msra.mxu0 %v3311
        %7452 = vmatpush.msra.mxu0 %v3309
        %7453 = vmatpush.msra.mxu0 %v3307
        %7454 = vmatpush.msra.mxu0 %v3305
        %7455 = vmatpush.msra.mxu0 %v3303
        %7456 = vmatpush.msra.mxu0 %v3301
        %7457 = vmatmul.f32.gmra.mxu0 %v3600
        %v7458 = vpop.f32.mrf.mxu0
        %v7459 = vadd.f32 %v7439, %v7458
        %7460 = vdwg.mxu0
        %7461 = vmatpush.msra.mxu0 %v3363
        %7462 = vmatpush.msra.mxu0 %v3361
        %7463 = vmatpush.msra.mxu0 %v3359
        %7464 = vmatpush.msra.mxu0 %v3357
        %7465 = vmatpush.msra.mxu0 %v3355
        %7466 = vmatpush.msra.mxu0 %v3353
        %7467 = vmatpush.msra.mxu0 %v3351
        %7468 = vmatpush.msra.mxu0 %v3349
        %7469 = vmatpush.msra.mxu0 %v3347
        %7470 = vmatpush.msra.mxu0 %v3345
        %7471 = vmatpush.msra.mxu0 %v3343
        %7472 = vmatpush.msra.mxu0 %v3341
        %7473 = vmatpush.msra.mxu0 %v3339
        %7474 = vmatpush.msra.mxu0 %v3337
        %7475 = vmatpush.msra.mxu0 %v3335
        %7476 = vmatpush.msra.mxu0 %v3333
        %7477 = vmatmul.f32.gmra.mxu0 %v3601
        %v7478 = vpop.f32.mrf.mxu0
        %v7479 = vadd.f32 %v7459, %v7478
        %7480 = vdwg.mxu0
        %7481 = vmatpush.msra.mxu0 %v3395
        %7482 = vmatpush.msra.mxu0 %v3393
        %7483 = vmatpush.msra.mxu0 %v3391
        %7484 = vmatpush.msra.mxu0 %v3389
        %7485 = vmatpush.msra.mxu0 %v3387
        %7486 = vmatpush.msra.mxu0 %v3385
        %7487 = vmatpush.msra.mxu0 %v3383
        %7488 = vmatpush.msra.mxu0 %v3381
        %7489 = vmatpush.msra.mxu0 %v3379
        %7490 = vmatpush.msra.mxu0 %v3377
        %7491 = vmatpush.msra.mxu0 %v3375
        %7492 = vmatpush.msra.mxu0 %v3373
        %7493 = vmatpush.msra.mxu0 %v3371
        %7494 = vmatpush.msra.mxu0 %v3369
        %7495 = vmatpush.msra.mxu0 %v3367
        %7496 = vmatpush.msra.mxu0 %v3365
        %7497 = vmatmul.f32.gmra.mxu0 %v3602
        %v7498 = vpop.f32.mrf.mxu0
        %v7499 = vadd.f32 %v7479, %v7498
        %7500 = vdwg.mxu0
        %7501 = vmatpush.msra.mxu0 %v3427
        %7502 = vmatpush.msra.mxu0 %v3425
        %7503 = vmatpush.msra.mxu0 %v3423
        %7504 = vmatpush.msra.mxu0 %v3421
        %7505 = vmatpush.msra.mxu0 %v3419
        %7506 = vmatpush.msra.mxu0 %v3417
        %7507 = vmatpush.msra.mxu0 %v3415
        %7508 = vmatpush.msra.mxu0 %v3413
        %7509 = vmatpush.msra.mxu0 %v3411
        %7510 = vmatpush.msra.mxu0 %v3409
        %7511 = vmatpush.msra.mxu0 %v3407
        %7512 = vmatpush.msra.mxu0 %v3405
        %7513 = vmatpush.msra.mxu0 %v3403
        %7514 = vmatpush.msra.mxu0 %v3401
        %7515 = vmatpush.msra.mxu0 %v3399
        %7516 = vmatpush.msra.mxu0 %v3397
        %7517 = vmatmul.f32.gmra.mxu0 %v3603
        %v7518 = vpop.f32.mrf.mxu0
        %v7519 = vadd.f32 %v7499, %v7518
        %7520 = vdwg.mxu0
        %7521 = vmatpush.msra.mxu0 %v3459
        %7522 = vmatpush.msra.mxu0 %v3457
        %7523 = vmatpush.msra.mxu0 %v3455
        %7524 = vmatpush.msra.mxu0 %v3453
        %7525 = vmatpush.msra.mxu0 %v3451
        %7526 = vmatpush.msra.mxu0 %v3449
        %7527 = vmatpush.msra.mxu0 %v3447
        %7528 = vmatpush.msra.mxu0 %v3445
        %7529 = vmatpush.msra.mxu0 %v3443
        %7530 = vmatpush.msra.mxu0 %v3441
        %7531 = vmatpush.msra.mxu0 %v3439
        %7532 = vmatpush.msra.mxu0 %v3437
        %7533 = vmatpush.msra.mxu0 %v3435
        %7534 = vmatpush.msra.mxu0 %v3433
        %7535 = vmatpush.msra.mxu0 %v3431
        %7536 = vmatpush.msra.mxu0 %v3429
        %7537 = vmatmul.f32.gmra.mxu0 %v3604
        %v7538 = vpop.f32.mrf.mxu0
        %v7539 = vadd.f32 %v7519, %v7538
        %7540 = vdwg.mxu0
        %v7543 = vrot.slane %v7539, 6
        %vm7544 = vcmask 1041408
        %v7545 = vsel %vm7544, %v5619, %v7543
        %v7547 = vadd.f32 %v360, %v7545
        %7548 = vst [vmem:[#allocation2] sm:$0xf] %v7547
        %p7549 = scmp.eq.s32.totalorder %s29, 8
        // Predicated region
        $region61: #{tpu_custom_call.1} parent=39 // pred_check
          %p7550 = pneg %p7549
        $region62: #{tpu_custom_call.1} parent=39 // pred_check_branch
          %7552 = sbr.rel (%p7550) target = $region64
        $region63: #{tpu_custom_call.1} parent=39 // pred_region
          %v7553 = vld [vmem:[#allocation2] sm:$0xf]
          %v7554 = vld [vmem:[%s303] sm:$0x3]
          %v7556 = vperm.slane %v7554, 0
          %v7557 = vperm.slane %v7554, 1
          %v7558 = vrot.slane %v7557, 6
          %v7559 = vsel %vm7544, %v7556, %v7558
          %v7561 = vadd.f32 %v7553, %v7559
          %v7562 = vmax.f32 %v7561, 0.0
          %v7563 = vld [vmem:[%s353] sm:$0xff]
          %v7564 = vld [vmem:[%s353 + $0x8] sm:$0xff]
          %v7565 = vld [vmem:[%s353 + $0x10] sm:$0xff]
          %v7566 = vld [vmem:[%s353 + $0x18] sm:$0xff]
          %v7567 = vld [vmem:[%s353 + $0x20] sm:$0xff]
          %v7568 = vld [vmem:[%s353 + $0x28] sm:$0xff]
          %v7569 = vld [vmem:[%s353 + $0x30] sm:$0xff]
          %v7570 = vld [vmem:[%s353 + $0x38] sm:$0xff]
          %v7571 = vld [vmem:[%s353 + $0x40] sm:$0xff]
          %v7572 = vld [vmem:[%s353 + $0x48] sm:$0xff]
          %v7573 = vld [vmem:[%s353 + $0x50] sm:$0xff]
          %v7574 = vld [vmem:[%s353 + $0x58] sm:$0xff]
          %v7575 = vld [vmem:[%s353 + $0x60] sm:$0xff]
          %v7576 = vld [vmem:[%s353 + $0x68] sm:$0xff]
          %v7577 = vld [vmem:[%s353 + $0x70] sm:$0xff]
          %v7578 = vld [vmem:[%s353 + $0x78] sm:$0xff]
          %v7579 = vld [vmem:[%s353 + $0x80] sm:$0xff]
          %v7580 = vld [vmem:[%s353 + $0x88] sm:$0xff]
          %v7581 = vld [vmem:[%s353 + $0x90] sm:$0xff]
          %v7582 = vld [vmem:[%s353 + $0x98] sm:$0xff]
          %v7583 = vld [vmem:[%s353 + $0xa0] sm:$0xff]
          %v7584 = vld [vmem:[%s353 + $0xa8] sm:$0xff]
          %v7585 = vld [vmem:[%s353 + $0xb0] sm:$0xff]
          %v7586 = vld [vmem:[%s353 + $0xb8] sm:$0xff]
          %v7587 = vld [vmem:[%s353 + $0xc0] sm:$0xff]
          %v7588 = vld [vmem:[%s353 + $0xc8] sm:$0xff]
          %v7589 = vld [vmem:[%s353 + $0xd0] sm:$0xff]
          %v7590 = vld [vmem:[%s353 + $0xd8] sm:$0xff]
          %v7591 = vld [vmem:[%s353 + $0xe0] sm:$0xff]
          %v7592 = vld [vmem:[%s353 + $0xe8] sm:$0xff]
          %v7593 = vld [vmem:[%s353 + $0xf0] sm:$0xff]
          %v7594 = vld [vmem:[%s353 + $0xf8] sm:$0xff]
          %p7595 = scmp.eq.s32.totalorder %s28, 0
          %v7596 = vld [vmem:[#allocation9] sm:$0x1]
          %s7597 = scalar_select %p7595, 1, 0
          %v7598 = vstv %s7597
          %vm7599 = vcmp.eq.s32.totalorder %v7598, 1
          %v7600 = vsel %vm7599, %v7596, 0.0
          %v7602 = vperm.slane %v7600, 0
          %7605 = vst [vmem:[#allocation1] ss:$4 sm:$0xff] %v7562
          %v7606 = vld.sshfl [vmem:[#allocation1] sm:$0xff pattern:$0x73625140]
          %v7607 = vld.sshfl [vmem:[#allocation1 + $0x8] sm:$0xff pattern:$0x73625140]
          %7610 = vmatpush.msra.mxu0 %v7578
          %7611 = vmatpush.msra.mxu0 %v7577
          %7612 = vmatpush.msra.mxu0 %v7576
          %7613 = vmatpush.msra.mxu0 %v7575
          %7614 = vmatpush.msra.mxu0 %v7574
          %7615 = vmatpush.msra.mxu0 %v7573
          %7616 = vmatpush.msra.mxu0 %v7572
          %7617 = vmatpush.msra.mxu0 %v7571
          %7618 = vmatpush.msra.mxu0 %v7570
          %7619 = vmatpush.msra.mxu0 %v7569
          %7620 = vmatpush.msra.mxu0 %v7568
          %7621 = vmatpush.msra.mxu0 %v7567
          %7622 = vmatpush.msra.mxu0 %v7566
          %7623 = vmatpush.msra.mxu0 %v7565
          %7624 = vmatpush.msra.mxu0 %v7564
          %7625 = vmatpush.msra.mxu0 %v7563
          %7626 = vmatmul.f32.gmra.mxu0 %v7606
          %v7627 = vpop.f32.mrf.mxu0
          %v7628 = vadd.f32 %v7602, %v7627
          %7629 = vdwg.mxu0
          %7630 = vmatpush.msra.mxu0 %v7594
          %7631 = vmatpush.msra.mxu0 %v7593
          %7632 = vmatpush.msra.mxu0 %v7592
          %7633 = vmatpush.msra.mxu0 %v7591
          %7634 = vmatpush.msra.mxu0 %v7590
          %7635 = vmatpush.msra.mxu0 %v7589
          %7636 = vmatpush.msra.mxu0 %v7588
          %7637 = vmatpush.msra.mxu0 %v7587
          %7638 = vmatpush.msra.mxu0 %v7586
          %7639 = vmatpush.msra.mxu0 %v7585
          %7640 = vmatpush.msra.mxu0 %v7584
          %7641 = vmatpush.msra.mxu0 %v7583
          %7642 = vmatpush.msra.mxu0 %v7582
          %7643 = vmatpush.msra.mxu0 %v7581
          %7644 = vmatpush.msra.mxu0 %v7580
          %7645 = vmatpush.msra.mxu0 %v7579
          %7646 = vmatmul.f32.gmra.mxu0 %v7607
          %v7647 = vpop.f32.mrf.mxu0
          %v7648 = vadd.f32 %v7628, %v7647
          %7649 = vdwg.mxu0
          %vm7650 = vcmask 41984
          %7651 = vst.msk [vmem:[%s345] sm:$0x3] %vm7650, %v7648
        $region64: #{tpu_custom_call.1} parent=39 // pred_fallthru
          _
        %s7652 = sand.u32 %s166, 1
        %s7653 = scalar_lea.sflag [#allocation5], %s7652
        %s7654 = sand.u32 %s166, 1
        %s7655 = smul.addr %s7654, 2
        %s7656 = scalar_lea.vmem [#allocation11], %s7655
        // Predicated region
        $region65: #{tpu_custom_call.1} parent=39 // pred_check
          %p7657 = pneg %p176
        $region66: #{tpu_custom_call.1} parent=39 // pred_check_branch
          %7659 = sbr.rel (%p7657) target = $region68
        $region67: #{tpu_custom_call.1} parent=39 // pred_region
          %7661 = vsyncadd %s7653, 0
          %s7662 = smul.addr %s28, 2
          %s7663 = scalar_lea.hbm %s5, %s7662
          %s7665 = sshll.u32 %s7656, 4
          %s7666 = int_to_ptr.vmem [resolvable:$true] %s7665
          %s7667 = sshll.u32 %s7663, 4
          %s7668 = int_to_ptr.hbm [resolvable:$true] %s7667
          %7670 = dma.vmem_to_hbm [thread:$0]  %s7666, 32, %s7668, %s7653
        $region68: #{tpu_custom_call.1} parent=39 // pred_fallthru
          _
      $region40: #{tpu_custom_call.1} parent=5 // pred_fallthru
        _
      %p7671 = scmp.le.s32.totalorder 2, %s19
      // Predicated region
      $region69: #{tpu_custom_call.1} parent=5 // pred_check
        %p7672 = pneg %p7671
      $region70: #{tpu_custom_call.1} parent=5 // pred_check_branch
        %7674 = sbr.rel (%p7672) target = $region72
      $region71: #{tpu_custom_call.1} parent=5 // pred_region
        %s7675 = ssub.s32 %s19, 2
        // Predicated region
        $region73: #{tpu_custom_call.1} parent=71 // pred_check
          %p7676 = pneg %p182
        $region74: #{tpu_custom_call.1} parent=71 // pred_check_branch
          %7678 = sbr.rel (%p7676) target = $region76
        $region75: #{tpu_custom_call.1} parent=71 // pred_region
          %s7679 = sand.u32 %s167, 1
          %s7680 = scalar_lea.sflag [#allocation5], %s7679
          %s7681 = sand.u32 %s167, 1
          %s7682 = smul.addr %s7681, 2
          %s7683 = scalar_lea.vmem [#allocation11], %s7682
          %7685 = dma.done %s7680, 32
        $region76: #{tpu_custom_call.1} parent=71 // pred_fallthru
          _
      $region72: #{tpu_custom_call.1} parent=5 // pred_fallthru
        _
    $region6: #{tpu_custom_call.1} parent=1 // loop_footer
      %s23 = sadd.s32 1, %s19
    $region7: #{tpu_custom_call.1} parent=1 // loop_footer_branch
      %18 = sbr.rel target = $region3
    $region8: #{tpu_custom_call.1} parent=1 // loop_exit
      _
    %7686 = vsyncpa [#allocation4], 1
    %s7687 = scalar_lea.sflag [#allocation4], 1
    %7688 = vsyncpa %s7687, 1
    %7689 = vsyncpa [#allocation7], 1
    %s7690 = scalar_lea.sflag [#allocation7], 1
    %7691 = vsyncpa %s7690, 1
    %7692 = vsyncpa [#allocation10], 1
    %7693 = vsyncpa [#allocation5], 1
    %s7694 = scalar_lea.sflag [#allocation5], 1
    %7695 = vsyncpa %s7694, 1

</llo_original>
